<compile_context>
chip_gen: v5e
topology: v5e:2x2
jax: 0.10.0
libtpu: 0.0.40
codegen_flags: <defaults>
</compile_context>

<pallas_src>
import functools

import jax
import jax.numpy as jnp
from jax.experimental import pallas as pl
from jax.experimental.pallas import tpu as pltpu


# ---------------------------------------------------------------------------
# Pallas kernels
# ---------------------------------------------------------------------------
def _conv3x3_kernel(x_ref, w_ref, b_ref, o_ref, *, h, wp, cin, pool):
    """Fused 3x3 'same' conv + bias + ReLU (+ optional fused 2x2/2 max-pool).

    x_ref : (1, (h+3)*wp, cin)  zero-padded activation, rows flattened   (bf16)
    w_ref : (9, cin, cout)      one (cin, cout) tap per (dy, dx)         (bf16)
    b_ref : (1, cout)           bias                                     (f32)
    o_ref : (1, h*wp, cout)     conv output on the (h, wp) grid          (bf16)

    With rows flattened, tap (dy, dx) for every output position is the
    contiguous slice starting at dy*wp + dx, so the im2col gather never touches
    HBM.  Columns c in [W, wp) of each output row are don't-care positions that
    the wrapper strips.  When `pool` is set, two roll+max pairs turn position
    (r, c) into the 2x2 max over rows r..r+1 / cols c..c+1; the wrapper keeps
    the (even r, even c) phase.  Roll wrap-around only ever lands on
    don't-care positions.
    """
    n_out = h * wp
    xv = x_ref[0].astype(jnp.float32)          # f32 for robust unaligned slicing
    acc = None
    for t in range(9):
        dy, dx = divmod(t, 3)
        off = dy * wp + dx
        xi = xv[off:off + n_out, :]            # (n_out, cin) tap slice (VMEM only)
        w_t = w_ref[t]                         # (cin, cout) bf16
        if cin == 1:
            # outer product; avoids a degenerate K=1 matmul (exact in f32)
            contrib = xi * w_t.astype(jnp.float32)
        else:
            # bf16 MXU matmul, f32 accumulation
            contrib = jnp.dot(xi.astype(jnp.bfloat16), w_t,
                              preferred_element_type=jnp.float32)
        acc = contrib if acc is None else acc + contrib
    y = jnp.maximum(acc + b_ref[...], 0.0)     # bias + ReLU in f32
    if pool:
        y = jnp.maximum(y, pltpu.roll(y, n_out - 1, axis=0))   # max with col c+1
        y = jnp.maximum(y, pltpu.roll(y, n_out - wp, axis=0))  # max with row r+1
    o_ref[0] = y.astype(o_ref.dtype)


def _fc_kernel(x_ref, w_ref, b_ref, o_ref, acc_ref, *, relu, n_k):
    """Tiled y = x @ w + b (optional ReLU): bf16 MXU inputs, f32 accumulator."""
    k = pl.program_id(1)

    @pl.when(k == 0)
    def _():
        acc_ref[...] = jnp.zeros_like(acc_ref)

    acc_ref[...] += jnp.dot(x_ref[...], w_ref[...],
                            preferred_element_type=jnp.float32)

    @pl.when(k == n_k - 1)
    def _():
        y = acc_ref[...] + b_ref[...]
        if relu:
            y = jnp.maximum(y, 0.0)
        o_ref[...] = y.astype(o_ref.dtype)


# ---------------------------------------------------------------------------
# Pallas wrappers
# ---------------------------------------------------------------------------
def conv3x3(x_img, w, b, *, pool):
    """Fused conv3x3(+bias+ReLU[+maxpool2x2]).  x_img: (B,H,W,Cin) bf16 NHWC."""
    B, H, W, Cin = x_img.shape
    Cout = w.shape[-1]
    Wp = W + 2
    if pool:
        assert H % 2 == 0 and W % 2 == 0, "2x2 max-pool needs even H/W"
    # zero 'same' padding; one extra bottom row keeps every tap slice in-bounds
    xp = jnp.pad(x_img, ((0, 0), (1, 2), (1, 1), (0, 0)))
    xf = xp.reshape(B, (H + 3) * Wp, Cin)                 # free row-major reshape
    w9 = w.reshape(9, Cin, Cout).astype(jnp.bfloat16)     # (dy,dx) taps
    b2 = b.reshape(1, Cout).astype(jnp.float32)
    kernel = functools.partial(_conv3x3_kernel, h=H, wp=Wp, cin=Cin, pool=pool)
    flops = 2 * B * H * Wp * 9 * Cin * Cout
    bytes_accessed = 2 * xf.size + 2 * w9.size + 4 * b2.size + 2 * B * H * Wp * Cout
    yf = pl.pallas_call(
        kernel,
        out_shape=jax.ShapeDtypeStruct((B, H * Wp, Cout), jnp.bfloat16),
        grid=(B,),
        in_specs=[
            pl.BlockSpec((1, (H + 3) * Wp, Cin), lambda i: (i, 0, 0)),
            pl.BlockSpec((9, Cin, Cout), lambda i: (0, 0, 0)),
            pl.BlockSpec((1, Cout), lambda i: (0, 0)),
        ],
        out_specs=pl.BlockSpec((1, H * Wp, Cout), lambda i: (i, 0, 0)),
        compiler_params=pltpu.CompilerParams(dimension_semantics=("parallel",)),
        cost_estimate=pl.CostEstimate(flops=flops, transcendentals=0,
                                      bytes_accessed=bytes_accessed),
    )(xf, w9, b2)
    y = yf.reshape(B, H, Wp, Cout)            # free (row-major) reshape
    if pool:
        return y[:, 0::2, 0:W:2, :]           # keep the (even, even) pooled phase
    return y[:, :, :W, :]                     # strip the don't-care pad columns


def dense_tiled(x, w, b, *, relu, tm=128, tk=128):
    """x: (B,K) bf16, w: (K,M), b: (M,) -> (B,M) bf16.

    Tiled over (M, K): weight tiles stream through the pipeline, the tiny (B, tk)
    activation slab stays resident, K is accumulated into an f32 VMEM scratch.
    tm/tk are multiples of 128 (lane-dense) and would be raised to 256-1024
    depending on generation VMEM at real VGGish fc sizes.
    """
    B, K = x.shape
    M = w.shape[1]
    assert K % tk == 0 and M % tm == 0, (K, M, tk, tm)
    n_k = K // tk
    kernel = functools.partial(_fc_kernel, relu=relu, n_k=n_k)
    return pl.pallas_call(
        kernel,
        out_shape=jax.ShapeDtypeStruct((B, M), jnp.bfloat16),
        grid=(M // tm, n_k),
        in_specs=[
            pl.BlockSpec((B, tk), lambda j, k: (0, k)),
            pl.BlockSpec((tk, tm), lambda j, k: (k, j)),
            pl.BlockSpec((1, tm), lambda j, k: (0, j)),
        ],
        out_specs=pl.BlockSpec((B, tm), lambda j, k: (0, j)),
        scratch_shapes=[pltpu.VMEM((B, tm), jnp.float32)],
        compiler_params=pltpu.CompilerParams(
            dimension_semantics=("parallel", "arbitrary")),
        cost_estimate=pl.CostEstimate(
            flops=2 * B * K * M, transcendentals=0,
            bytes_accessed=2 * (B * K + K * M + B * M) + 4 * M),
    )(x.astype(jnp.bfloat16), w.astype(jnp.bfloat16),
      b.reshape(1, M).astype(jnp.float32))


# ---------------------------------------------------------------------------
# Model: parameters + forward
# ---------------------------------------------------------------------------
# scaled-down VGGish feature config: (Cin, Cout) per conv, 'P' = 2x2 maxpool
_VGG_CFG = [("C", 1, 8), ("P",),
            ("C", 8, 16), ("P",),
            ("C", 16, 32), ("C", 32, 32), ("P",),
            ("C", 32, 64), ("C", 64, 64), ("P",)]
_EMB_DIMS = [256, 256, 128]          # real VGGish: [4096, 4096, 128]
_VGG_FRAME = 1
_OUT_FEATURES = 1


def init_params(key, in_h, in_w):
    params = {}
    h, w, c = in_h, in_w, 1
    ci = 0
    for layer in _VGG_CFG:
        if layer[0] == "C":
            _, cin, cout = layer
            key, k1, k2 = jax.random.split(key, 3)
            scale = 1.0 / jnp.sqrt(9.0 * cin)
            params[f"conv{ci}_w"] = jax.random.normal(k1, (3, 3, cin, cout), jnp.float32) * scale
            params[f"conv{ci}_b"] = jax.random.normal(k2, (cout,), jnp.float32) * 0.01
            c = cout
            ci += 1
        else:
            h, w = h // 2, w // 2
    flat = h * w * c
    dims = [flat] + _EMB_DIMS
    for i in range(len(_EMB_DIMS)):
        key, k1, k2 = jax.random.split(key, 3)
        scale = 1.0 / jnp.sqrt(float(dims[i]))
        params[f"fc{i}_w"] = jax.random.normal(k1, (dims[i], dims[i + 1]), jnp.float32) * scale
        params[f"fc{i}_b"] = jax.random.normal(k2, (dims[i + 1],), jnp.float32) * 0.01
    key, k1, k2 = jax.random.split(key, 3)
    lin_in = _VGG_FRAME * _EMB_DIMS[-1]
    params["lin_w"] = jax.random.normal(k1, (lin_in, _OUT_FEATURES), jnp.float32) * (1.0 / jnp.sqrt(float(lin_in)))
    params["lin_b"] = jax.random.normal(k2, (_OUT_FEATURES,), jnp.float32) * 0.01
    return params


def vggish_linear_forward(x_nchw, params):
    """x_nchw: (B, 1, H, W) float32  ->  (B, out_features) float32."""
    x = jnp.transpose(x_nchw, (0, 2, 3, 1)).astype(jnp.bfloat16)   # NCHW -> NHWC
    # --- VGGish.features: conv(+pool fused into the conv kernel) ---
    ci = 0
    idx = 0
    while idx < len(_VGG_CFG):
        layer = _VGG_CFG[idx]
        if layer[0] == "P":      # standalone pool (not produced by this cfg)
            B, H, W, C = x.shape
            x = jnp.max(x.reshape(B, H // 2, 2, W // 2, 2, C), axis=(2, 4))
            idx += 1
            continue
        pool = idx + 1 < len(_VGG_CFG) and _VGG_CFG[idx + 1][0] == "P"
        x = conv3x3(x, params[f"conv{ci}_w"], params[f"conv{ci}_b"], pool=pool)
        ci += 1
        idx += 2 if pool else 1
    # --- VGGish flatten (torch permutes NCHW->NHWC then views; we are NHWC) ---
    B = x.shape[0]
    h = x.reshape(B, -1)
    # --- VGGish.embeddings: (Linear+ReLU) x 3 (tiled Pallas matmuls) ---
    for i in range(len(_EMB_DIMS)):
        h = dense_tiled(h, params[f"fc{i}_w"], params[f"fc{i}_b"], relu=True)
    # --- VGGishLinear head: out_features=1 (<128 lanes) -> plain JAX on purpose
    out = h.astype(jnp.float32) @ params["lin_w"] + params["lin_b"]
    return out


# ---------------------------------------------------------------------------
# Pure-XLA reference with matching bf16-input / f32-accumulate numerics
# ---------------------------------------------------------------------------
def _reference_forward(x_nchw, params):
    x = jnp.transpose(x_nchw, (0, 2, 3, 1)).astype(jnp.bfloat16)
    ci = 0
    for layer in _VGG_CFG:
        if layer[0] == "C":
            B, H, W, C = x.shape
            w = params[f"conv{ci}_w"].reshape(9 * C, -1).astype(jnp.bfloat16)
            b = params[f"conv{ci}_b"].astype(jnp.float32)
            xp = jnp.pad(x, ((0, 0), (1, 1), (1, 1), (0, 0)))
            cols = [xp[:, dy:dy + H, dx:dx + W, :]
                    for dy in range(3) for dx in range(3)]
            patches = jnp.concatenate(cols, axis=-1)              # (B,H,W,9C)
            y = jnp.einsum("bhwk,ko->bhwo", patches, w,
                           preferred_element_type=jnp.float32)
            x = jnp.maximum(y + b, 0.0).astype(jnp.bfloat16)
            ci += 1
        else:
            B, H, W, C = x.shape
            x = jnp.max(x.reshape(B, H // 2, 2, W // 2, 2, C), axis=(2, 4))
    h = x.reshape(x.shape[0], -1)
    for i in range(len(_EMB_DIMS)):
        w = params[f"fc{i}_w"].astype(jnp.bfloat16)
        b = params[f"fc{i}_b"].astype(jnp.float32)
        h = jnp.maximum(jnp.dot(h, w, preferred_element_type=jnp.float32) + b,
                        0.0).astype(jnp.bfloat16)
    return h.astype(jnp.float32) @ params["lin_w"] + params["lin_b"]


# ---------------------------------------------------------------------------
if __name__ == "__main__":
    # small-shape analogue of the 1-second log-mel patch (real: (B, 1, 96, 64))
    B, H, W = 2, 32, 16
    key = jax.random.PRNGKey(0)
    key_x, key_p = jax.random.split(key)
    x = jax.random.normal(key_x, (B, 1, H, W), jnp.float32)
    params = init_params(key_p, H, W)

    fwd = jax.jit(vggish_linear_forward)
    y = fwd(x, params)
    jax.block_until_ready(y)
    assert y.shape == (B, _OUT_FEATURES) and y.dtype == jnp.float32

    # numerical check vs. an XLA reference with the same bf16/f32 numerics
    y_ref = jax.jit(_reference_forward)(x, params)
    jax.block_until_ready(y_ref)
    err = float(jnp.max(jnp.abs(y - y_ref)))
    assert err < 0.1, f"mismatch vs reference: max abs err = {err}"

    print("KERNEL_OK")
</pallas_src>

<mosaic_0001>
module attributes {stable_mosaic.version = 11 : i64} {
  func.func @_conv3x3_kernel(%arg0: i32, %arg1: memref<1x630x1xbf16, #tpu.memory_space<vmem>>, %arg2: memref<9x1x8xbf16, #tpu.memory_space<vmem>>, %arg3: memref<1x8xf32, #tpu.memory_space<vmem>>, %arg4: memref<1x576x8xbf16, #tpu.memory_space<vmem>>) attributes {dimension_semantics = [#tpu.dimension_semantics<parallel>], iteration_bounds = array<i64: 2>, scalar_prefetch = 0 : i64, scratch_operands = 0 : i64, tpu.core_type = #tpu.core_type<tc>, window_params = [{transform_indices = @transform_0, window_bounds = array<i64: 1, 630, 1>}, {pipeline_mode = #tpu.pipeline_mode<synchronous>, transform_indices = @transform_1, window_bounds = array<i64: 9, 1, 8>}, {pipeline_mode = #tpu.pipeline_mode<synchronous>, transform_indices = @transform_2, window_bounds = array<i64: 1, 8>}, {transform_indices = @transform_3, window_bounds = array<i64: 1, 576, 8>}]} {
    %c0 = arith.constant 0 : index
    %c0_0 = arith.constant 0 : index
    %c0_1 = arith.constant 0 : index
    %0 = vector.load %arg1[%c0, %c0_0, %c0_1] : memref<1x630x1xbf16, #tpu.memory_space<vmem>>, vector<1x630x1xbf16>
    %1 = vector.shape_cast %0 : vector<1x630x1xbf16> to vector<630x1xbf16>
    %2 = arith.extf %1 : vector<630x1xbf16> to vector<630x1xf32>
    %3 = vector.extract_strided_slice %2 {offsets = [0, 0], sizes = [576, 1], strides = [1, 1]} : vector<630x1xf32> to vector<576x1xf32>
    %c0_2 = arith.constant 0 : index
    %c0_3 = arith.constant 0 : index
    %c0_4 = arith.constant 0 : index
    %4 = vector.load %arg2[%c0_2, %c0_3, %c0_4] : memref<9x1x8xbf16, #tpu.memory_space<vmem>>, vector<1x1x8xbf16>
    %5 = vector.shape_cast %4 : vector<1x1x8xbf16> to vector<1x8xbf16>
    %6 = arith.extf %5 : vector<1x8xbf16> to vector<1x8xf32>
    %7 = vector.broadcast %3 : vector<576x1xf32> to vector<576x8xf32>
    %8 = vector.broadcast %6 : vector<1x8xf32> to vector<576x8xf32>
    %9 = arith.mulf %7, %8 : vector<576x8xf32>
    %10 = vector.extract_strided_slice %2 {offsets = [1, 0], sizes = [576, 1], strides = [1, 1]} : vector<630x1xf32> to vector<576x1xf32>
    %c1 = arith.constant 1 : index
    %c0_5 = arith.constant 0 : index
    %c0_6 = arith.constant 0 : index
    %11 = vector.load %arg2[%c1, %c0_5, %c0_6] : memref<9x1x8xbf16, #tpu.memory_space<vmem>>, vector<1x1x8xbf16>
    %12 = vector.shape_cast %11 : vector<1x1x8xbf16> to vector<1x8xbf16>
    %13 = arith.extf %12 : vector<1x8xbf16> to vector<1x8xf32>
    %14 = vector.broadcast %10 : vector<576x1xf32> to vector<576x8xf32>
    %15 = vector.broadcast %13 : vector<1x8xf32> to vector<576x8xf32>
    %16 = arith.mulf %14, %15 : vector<576x8xf32>
    %17 = arith.addf %9, %16 : vector<576x8xf32>
    %18 = vector.extract_strided_slice %2 {offsets = [2, 0], sizes = [576, 1], strides = [1, 1]} : vector<630x1xf32> to vector<576x1xf32>
    %c2 = arith.constant 2 : index
    %c0_7 = arith.constant 0 : index
    %c0_8 = arith.constant 0 : index
    %19 = vector.load %arg2[%c2, %c0_7, %c0_8] : memref<9x1x8xbf16, #tpu.memory_space<vmem>>, vector<1x1x8xbf16>
    %20 = vector.shape_cast %19 : vector<1x1x8xbf16> to vector<1x8xbf16>
    %21 = arith.extf %20 : vector<1x8xbf16> to vector<1x8xf32>
    %22 = vector.broadcast %18 : vector<576x1xf32> to vector<576x8xf32>
    %23 = vector.broadcast %21 : vector<1x8xf32> to vector<576x8xf32>
    %24 = arith.mulf %22, %23 : vector<576x8xf32>
    %25 = arith.addf %17, %24 : vector<576x8xf32>
    %26 = vector.extract_strided_slice %2 {offsets = [18, 0], sizes = [576, 1], strides = [1, 1]} : vector<630x1xf32> to vector<576x1xf32>
    %c3 = arith.constant 3 : index
    %c0_9 = arith.constant 0 : index
    %c0_10 = arith.constant 0 : index
    %27 = vector.load %arg2[%c3, %c0_9, %c0_10] : memref<9x1x8xbf16, #tpu.memory_space<vmem>>, vector<1x1x8xbf16>
    %28 = vector.shape_cast %27 : vector<1x1x8xbf16> to vector<1x8xbf16>
    %29 = arith.extf %28 : vector<1x8xbf16> to vector<1x8xf32>
    %30 = vector.broadcast %26 : vector<576x1xf32> to vector<576x8xf32>
    %31 = vector.broadcast %29 : vector<1x8xf32> to vector<576x8xf32>
    %32 = arith.mulf %30, %31 : vector<576x8xf32>
    %33 = arith.addf %25, %32 : vector<576x8xf32>
    %34 = vector.extract_strided_slice %2 {offsets = [19, 0], sizes = [576, 1], strides = [1, 1]} : vector<630x1xf32> to vector<576x1xf32>
    %c4 = arith.constant 4 : index
    %c0_11 = arith.constant 0 : index
    %c0_12 = arith.constant 0 : index
    %35 = vector.load %arg2[%c4, %c0_11, %c0_12] : memref<9x1x8xbf16, #tpu.memory_space<vmem>>, vector<1x1x8xbf16>
    %36 = vector.shape_cast %35 : vector<1x1x8xbf16> to vector<1x8xbf16>
    %37 = arith.extf %36 : vector<1x8xbf16> to vector<1x8xf32>
    %38 = vector.broadcast %34 : vector<576x1xf32> to vector<576x8xf32>
    %39 = vector.broadcast %37 : vector<1x8xf32> to vector<576x8xf32>
    %40 = arith.mulf %38, %39 : vector<576x8xf32>
    %41 = arith.addf %33, %40 : vector<576x8xf32>
    %42 = vector.extract_strided_slice %2 {offsets = [20, 0], sizes = [576, 1], strides = [1, 1]} : vector<630x1xf32> to vector<576x1xf32>
    %c5 = arith.constant 5 : index
    %c0_13 = arith.constant 0 : index
    %c0_14 = arith.constant 0 : index
    %43 = vector.load %arg2[%c5, %c0_13, %c0_14] : memref<9x1x8xbf16, #tpu.memory_space<vmem>>, vector<1x1x8xbf16>
    %44 = vector.shape_cast %43 : vector<1x1x8xbf16> to vector<1x8xbf16>
    %45 = arith.extf %44 : vector<1x8xbf16> to vector<1x8xf32>
    %46 = vector.broadcast %42 : vector<576x1xf32> to vector<576x8xf32>
    %47 = vector.broadcast %45 : vector<1x8xf32> to vector<576x8xf32>
    %48 = arith.mulf %46, %47 : vector<576x8xf32>
    %49 = arith.addf %41, %48 : vector<576x8xf32>
    %50 = vector.extract_strided_slice %2 {offsets = [36, 0], sizes = [576, 1], strides = [1, 1]} : vector<630x1xf32> to vector<576x1xf32>
    %c6 = arith.constant 6 : index
    %c0_15 = arith.constant 0 : index
    %c0_16 = arith.constant 0 : index
    %51 = vector.load %arg2[%c6, %c0_15, %c0_16] : memref<9x1x8xbf16, #tpu.memory_space<vmem>>, vector<1x1x8xbf16>
    %52 = vector.shape_cast %51 : vector<1x1x8xbf16> to vector<1x8xbf16>
    %53 = arith.extf %52 : vector<1x8xbf16> to vector<1x8xf32>
    %54 = vector.broadcast %50 : vector<576x1xf32> to vector<576x8xf32>
    %55 = vector.broadcast %53 : vector<1x8xf32> to vector<576x8xf32>
    %56 = arith.mulf %54, %55 : vector<576x8xf32>
    %57 = arith.addf %49, %56 : vector<576x8xf32>
    %58 = vector.extract_strided_slice %2 {offsets = [37, 0], sizes = [576, 1], strides = [1, 1]} : vector<630x1xf32> to vector<576x1xf32>
    %c7 = arith.constant 7 : index
    %c0_17 = arith.constant 0 : index
    %c0_18 = arith.constant 0 : index
    %59 = vector.load %arg2[%c7, %c0_17, %c0_18] : memref<9x1x8xbf16, #tpu.memory_space<vmem>>, vector<1x1x8xbf16>
    %60 = vector.shape_cast %59 : vector<1x1x8xbf16> to vector<1x8xbf16>
    %61 = arith.extf %60 : vector<1x8xbf16> to vector<1x8xf32>
    %62 = vector.broadcast %58 : vector<576x1xf32> to vector<576x8xf32>
    %63 = vector.broadcast %61 : vector<1x8xf32> to vector<576x8xf32>
    %64 = arith.mulf %62, %63 : vector<576x8xf32>
    %65 = arith.addf %57, %64 : vector<576x8xf32>
    %66 = vector.extract_strided_slice %2 {offsets = [38, 0], sizes = [576, 1], strides = [1, 1]} : vector<630x1xf32> to vector<576x1xf32>
    %c8 = arith.constant 8 : index
    %c0_19 = arith.constant 0 : index
    %c0_20 = arith.constant 0 : index
    %67 = vector.load %arg2[%c8, %c0_19, %c0_20] : memref<9x1x8xbf16, #tpu.memory_space<vmem>>, vector<1x1x8xbf16>
    %68 = vector.shape_cast %67 : vector<1x1x8xbf16> to vector<1x8xbf16>
    %69 = arith.extf %68 : vector<1x8xbf16> to vector<1x8xf32>
    %70 = vector.broadcast %66 : vector<576x1xf32> to vector<576x8xf32>
    %71 = vector.broadcast %69 : vector<1x8xf32> to vector<576x8xf32>
    %72 = arith.mulf %70, %71 : vector<576x8xf32>
    %73 = arith.addf %65, %72 : vector<576x8xf32>
    %c0_21 = arith.constant 0 : index
    %c0_22 = arith.constant 0 : index
    %74 = vector.load %arg3[%c0_21, %c0_22] : memref<1x8xf32, #tpu.memory_space<vmem>>, vector<1x8xf32>
    %75 = vector.broadcast %74 : vector<1x8xf32> to vector<576x8xf32>
    %76 = arith.addf %73, %75 : vector<576x8xf32>
    %cst = arith.constant 0.000000e+00 : f32
    %77 = vector.broadcast %cst : f32 to vector<576x8xf32>
    %78 = arith.maximumf %76, %77 : vector<576x8xf32>
    %c575_i32 = arith.constant 575 : i32
    %79 = tpu.dynamic_rotate %78 by %c575_i32 dim 0 : vector<576x8xf32>, i32 -> vector<576x8xf32>
    %80 = arith.maximumf %78, %79 : vector<576x8xf32>
    %c558_i32 = arith.constant 558 : i32
    %81 = tpu.dynamic_rotate %80 by %c558_i32 dim 0 : vector<576x8xf32>, i32 -> vector<576x8xf32>
    %82 = arith.maximumf %80, %81 : vector<576x8xf32>
    %83 = arith.truncf %82 : vector<576x8xf32> to vector<576x8xbf16>
    %c0_23 = arith.constant 0 : index
    %c0_24 = arith.constant 0 : index
    %c0_25 = arith.constant 0 : index
    %84 = vector.load %arg4[%c0_23, %c0_24, %c0_25] : memref<1x576x8xbf16, #tpu.memory_space<vmem>>, vector<1x576x8xbf16>
    %85 = vector.shape_cast %84 : vector<1x576x8xbf16> to vector<576x8xbf16>
    %86 = vector.shape_cast %83 : vector<576x8xbf16> to vector<1x576x8xbf16>
    tpu.vector_store %arg4[%c0_23, %c0_24, %c0_25], %86 {strides = array<i32>} : memref<1x576x8xbf16, #tpu.memory_space<vmem>>, vector<1x576x8xbf16>,
    return
  }
  func.func @transform_0(%arg0: i32) -> (i32, i32, i32) {
    %c0_i32 = arith.constant 0 : i32
    %c0_i32_0 = arith.constant 0 : i32
    %c0_i32_1 = arith.constant 0 : i32
    return %arg0, %c0_i32, %c0_i32_0 : i32, i32, i32
  }
  func.func @transform_1(%arg0: i32) -> (i32, i32, i32) {
    %c0_i32 = arith.constant 0 : i32
    %c0_i32_0 = arith.constant 0 : i32
    %c0_i32_1 = arith.constant 0 : i32
    %c0_i32_2 = arith.constant 0 : i32
    return %c0_i32, %c0_i32_0, %c0_i32_1 : i32, i32, i32
  }
  func.func @transform_2(%arg0: i32) -> (i32, i32) {
    %c0_i32 = arith.constant 0 : i32
    %c0_i32_0 = arith.constant 0 : i32
    %c0_i32_1 = arith.constant 0 : i32
    return %c0_i32, %c0_i32_0 : i32, i32
  }
  func.func @transform_3(%arg0: i32) -> (i32, i32, i32) {
    %c0_i32 = arith.constant 0 : i32
    %c0_i32_0 = arith.constant 0 : i32
    %c0_i32_1 = arith.constant 0 : i32
    return %arg0, %c0_i32, %c0_i32_0 : i32, i32, i32
  }
}

module attributes {stable_mosaic.version = 11 : i64} {
  func.func @_conv3x3_kernel(%arg0: i32, %arg1: memref<1x190x8xbf16, #tpu.memory_space<vmem>>, %arg2: memref<9x8x16xbf16, #tpu.memory_space<vmem>>, %arg3: memref<1x16xf32, #tpu.memory_space<vmem>>, %arg4: memref<1x160x16xbf16, #tpu.memory_space<vmem>>) attributes {dimension_semantics = [#tpu.dimension_semantics<parallel>], iteration_bounds = array<i64: 2>, scalar_prefetch = 0 : i64, scratch_operands = 0 : i64, tpu.core_type = #tpu.core_type<tc>, window_params = [{transform_indices = @transform_0, window_bounds = array<i64: 1, 190, 8>}, {pipeline_mode = #tpu.pipeline_mode<synchronous>, transform_indices = @transform_1, window_bounds = array<i64: 9, 8, 16>}, {pipeline_mode = #tpu.pipeline_mode<synchronous>, transform_indices = @transform_2, window_bounds = array<i64: 1, 16>}, {transform_indices = @transform_3, window_bounds = array<i64: 1, 160, 16>}]} {
    %c0 = arith.constant 0 : index
    %c0_0 = arith.constant 0 : index
    %c0_1 = arith.constant 0 : index
    %0 = vector.load %arg1[%c0, %c0_0, %c0_1] : memref<1x190x8xbf16, #tpu.memory_space<vmem>>, vector<1x190x8xbf16>
    %1 = vector.shape_cast %0 : vector<1x190x8xbf16> to vector<190x8xbf16>
    %2 = arith.extf %1 : vector<190x8xbf16> to vector<190x8xf32>
    %3 = vector.extract_strided_slice %2 {offsets = [0, 0], sizes = [160, 8], strides = [1, 1]} : vector<190x8xf32> to vector<160x8xf32>
    %c0_2 = arith.constant 0 : index
    %c0_3 = arith.constant 0 : index
    %c0_4 = arith.constant 0 : index
    %4 = vector.load %arg2[%c0_2, %c0_3, %c0_4] : memref<9x8x16xbf16, #tpu.memory_space<vmem>>, vector<1x8x16xbf16>
    %5 = vector.shape_cast %4 : vector<1x8x16xbf16> to vector<8x16xbf16>
    %6 = arith.truncf %3 : vector<160x8xf32> to vector<160x8xbf16>
    %cst = arith.constant dense<0.000000e+00> : vector<160x16xf32>
    %7 = tpu.matmul %6, %5, %cst {dimension_numbers = #tpu.dot_dimension_numbers<[1], [0], [0], [1], [0, 0, 1, 1], [], []>} : vector<160x8xbf16>, vector<8x16xbf16>, vector<160x16xf32> -> vector<160x16xf32>
    %8 = vector.extract_strided_slice %2 {offsets = [1, 0], sizes = [160, 8], strides = [1, 1]} : vector<190x8xf32> to vector<160x8xf32>
    %c1 = arith.constant 1 : index
    %c0_5 = arith.constant 0 : index
    %c0_6 = arith.constant 0 : index
    %9 = vector.load %arg2[%c1, %c0_5, %c0_6] : memref<9x8x16xbf16, #tpu.memory_space<vmem>>, vector<1x8x16xbf16>
    %10 = vector.shape_cast %9 : vector<1x8x16xbf16> to vector<8x16xbf16>
    %11 = arith.truncf %8 : vector<160x8xf32> to vector<160x8xbf16>
    %cst_7 = arith.constant dense<0.000000e+00> : vector<160x16xf32>
    %12 = tpu.matmul %11, %10, %cst_7 {dimension_numbers = #tpu.dot_dimension_numbers<[1], [0], [0], [1], [0, 0, 1, 1], [], []>} : vector<160x8xbf16>, vector<8x16xbf16>, vector<160x16xf32> -> vector<160x16xf32>
    %13 = arith.addf %7, %12 : vector<160x16xf32>
    %14 = vector.extract_strided_slice %2 {offsets = [2, 0], sizes = [160, 8], strides = [1, 1]} : vector<190x8xf32> to vector<160x8xf32>
    %c2 = arith.constant 2 : index
    %c0_8 = arith.constant 0 : index
    %c0_9 = arith.constant 0 : index
    %15 = vector.load %arg2[%c2, %c0_8, %c0_9] : memref<9x8x16xbf16, #tpu.memory_space<vmem>>, vector<1x8x16xbf16>
    %16 = vector.shape_cast %15 : vector<1x8x16xbf16> to vector<8x16xbf16>
    %17 = arith.truncf %14 : vector<160x8xf32> to vector<160x8xbf16>
    %cst_10 = arith.constant dense<0.000000e+00> : vector<160x16xf32>
    %18 = tpu.matmul %17, %16, %cst_10 {dimension_numbers = #tpu.dot_dimension_numbers<[1], [0], [0], [1], [0, 0, 1, 1], [], []>} : vector<160x8xbf16>, vector<8x16xbf16>, vector<160x16xf32> -> vector<160x16xf32>
    %19 = arith.addf %13, %18 : vector<160x16xf32>
    %20 = vector.extract_strided_slice %2 {offsets = [10, 0], sizes = [160, 8], strides = [1, 1]} : vector<190x8xf32> to vector<160x8xf32>
    %c3 = arith.constant 3 : index
    %c0_11 = arith.constant 0 : index
    %c0_12 = arith.constant 0 : index
    %21 = vector.load %arg2[%c3, %c0_11, %c0_12] : memref<9x8x16xbf16, #tpu.memory_space<vmem>>, vector<1x8x16xbf16>
    %22 = vector.shape_cast %21 : vector<1x8x16xbf16> to vector<8x16xbf16>
    %23 = arith.truncf %20 : vector<160x8xf32> to vector<160x8xbf16>
    %cst_13 = arith.constant dense<0.000000e+00> : vector<160x16xf32>
    %24 = tpu.matmul %23, %22, %cst_13 {dimension_numbers = #tpu.dot_dimension_numbers<[1], [0], [0], [1], [0, 0, 1, 1], [], []>} : vector<160x8xbf16>, vector<8x16xbf16>, vector<160x16xf32> -> vector<160x16xf32>
    %25 = arith.addf %19, %24 : vector<160x16xf32>
    %26 = vector.extract_strided_slice %2 {offsets = [11, 0], sizes = [160, 8], strides = [1, 1]} : vector<190x8xf32> to vector<160x8xf32>
    %c4 = arith.constant 4 : index
    %c0_14 = arith.constant 0 : index
    %c0_15 = arith.constant 0 : index
    %27 = vector.load %arg2[%c4, %c0_14, %c0_15] : memref<9x8x16xbf16, #tpu.memory_space<vmem>>, vector<1x8x16xbf16>
    %28 = vector.shape_cast %27 : vector<1x8x16xbf16> to vector<8x16xbf16>
    %29 = arith.truncf %26 : vector<160x8xf32> to vector<160x8xbf16>
    %cst_16 = arith.constant dense<0.000000e+00> : vector<160x16xf32>
    %30 = tpu.matmul %29, %28, %cst_16 {dimension_numbers = #tpu.dot_dimension_numbers<[1], [0], [0], [1], [0, 0, 1, 1], [], []>} : vector<160x8xbf16>, vector<8x16xbf16>, vector<160x16xf32> -> vector<160x16xf32>
    %31 = arith.addf %25, %30 : vector<160x16xf32>
    %32 = vector.extract_strided_slice %2 {offsets = [12, 0], sizes = [160, 8], strides = [1, 1]} : vector<190x8xf32> to vector<160x8xf32>
    %c5 = arith.constant 5 : index
    %c0_17 = arith.constant 0 : index
    %c0_18 = arith.constant 0 : index
    %33 = vector.load %arg2[%c5, %c0_17, %c0_18] : memref<9x8x16xbf16, #tpu.memory_space<vmem>>, vector<1x8x16xbf16>
    %34 = vector.shape_cast %33 : vector<1x8x16xbf16> to vector<8x16xbf16>
    %35 = arith.truncf %32 : vector<160x8xf32> to vector<160x8xbf16>
    %cst_19 = arith.constant dense<0.000000e+00> : vector<160x16xf32>
    %36 = tpu.matmul %35, %34, %cst_19 {dimension_numbers = #tpu.dot_dimension_numbers<[1], [0], [0], [1], [0, 0, 1, 1], [], []>} : vector<160x8xbf16>, vector<8x16xbf16>, vector<160x16xf32> -> vector<160x16xf32>
    %37 = arith.addf %31, %36 : vector<160x16xf32>
    %38 = vector.extract_strided_slice %2 {offsets = [20, 0], sizes = [160, 8], strides = [1, 1]} : vector<190x8xf32> to vector<160x8xf32>
    %c6 = arith.constant 6 : index
    %c0_20 = arith.constant 0 : index
    %c0_21 = arith.constant 0 : index
    %39 = vector.load %arg2[%c6, %c0_20, %c0_21] : memref<9x8x16xbf16, #tpu.memory_space<vmem>>, vector<1x8x16xbf16>
    %40 = vector.shape_cast %39 : vector<1x8x16xbf16> to vector<8x16xbf16>
    %41 = arith.truncf %38 : vector<160x8xf32> to vector<160x8xbf16>
    %cst_22 = arith.constant dense<0.000000e+00> : vector<160x16xf32>
    %42 = tpu.matmul %41, %40, %cst_22 {dimension_numbers = #tpu.dot_dimension_numbers<[1], [0], [0], [1], [0, 0, 1, 1], [], []>} : vector<160x8xbf16>, vector<8x16xbf16>, vector<160x16xf32> -> vector<160x16xf32>
    %43 = arith.addf %37, %42 : vector<160x16xf32>
    %44 = vector.extract_strided_slice %2 {offsets = [21, 0], sizes = [160, 8], strides = [1, 1]} : vector<190x8xf32> to vector<160x8xf32>
    %c7 = arith.constant 7 : index
    %c0_23 = arith.constant 0 : index
    %c0_24 = arith.constant 0 : index
    %45 = vector.load %arg2[%c7, %c0_23, %c0_24] : memref<9x8x16xbf16, #tpu.memory_space<vmem>>, vector<1x8x16xbf16>
    %46 = vector.shape_cast %45 : vector<1x8x16xbf16> to vector<8x16xbf16>
    %47 = arith.truncf %44 : vector<160x8xf32> to vector<160x8xbf16>
    %cst_25 = arith.constant dense<0.000000e+00> : vector<160x16xf32>
    %48 = tpu.matmul %47, %46, %cst_25 {dimension_numbers = #tpu.dot_dimension_numbers<[1], [0], [0], [1], [0, 0, 1, 1], [], []>} : vector<160x8xbf16>, vector<8x16xbf16>, vector<160x16xf32> -> vector<160x16xf32>
    %49 = arith.addf %43, %48 : vector<160x16xf32>
    %50 = vector.extract_strided_slice %2 {offsets = [22, 0], sizes = [160, 8], strides = [1, 1]} : vector<190x8xf32> to vector<160x8xf32>
    %c8 = arith.constant 8 : index
    %c0_26 = arith.constant 0 : index
    %c0_27 = arith.constant 0 : index
    %51 = vector.load %arg2[%c8, %c0_26, %c0_27] : memref<9x8x16xbf16, #tpu.memory_space<vmem>>, vector<1x8x16xbf16>
    %52 = vector.shape_cast %51 : vector<1x8x16xbf16> to vector<8x16xbf16>
    %53 = arith.truncf %50 : vector<160x8xf32> to vector<160x8xbf16>
    %cst_28 = arith.constant dense<0.000000e+00> : vector<160x16xf32>
    %54 = tpu.matmul %53, %52, %cst_28 {dimension_numbers = #tpu.dot_dimension_numbers<[1], [0], [0], [1], [0, 0, 1, 1], [], []>} : vector<160x8xbf16>, vector<8x16xbf16>, vector<160x16xf32> -> vector<160x16xf32>
    %55 = arith.addf %49, %54 : vector<160x16xf32>
    %c0_29 = arith.constant 0 : index
    %c0_30 = arith.constant 0 : index
    %56 = vector.load %arg3[%c0_29, %c0_30] : memref<1x16xf32, #tpu.memory_space<vmem>>, vector<1x16xf32>
    %57 = vector.broadcast %56 : vector<1x16xf32> to vector<160x16xf32>
    %58 = arith.addf %55, %57 : vector<160x16xf32>
    %cst_31 = arith.constant 0.000000e+00 : f32
    %59 = vector.broadcast %cst_31 : f32 to vector<160x16xf32>
    %60 = arith.maximumf %58, %59 : vector<160x16xf32>
    %c159_i32 = arith.constant 159 : i32
    %61 = tpu.dynamic_rotate %60 by %c159_i32 dim 0 : vector<160x16xf32>, i32 -> vector<160x16xf32>
    %62 = arith.maximumf %60, %61 : vector<160x16xf32>
    %c150_i32 = arith.constant 150 : i32
    %63 = tpu.dynamic_rotate %62 by %c150_i32 dim 0 : vector<160x16xf32>, i32 -> vector<160x16xf32>
    %64 = arith.maximumf %62, %63 : vector<160x16xf32>
    %65 = arith.truncf %64 : vector<160x16xf32> to vector<160x16xbf16>
    %c0_32 = arith.constant 0 : index
    %c0_33 = arith.constant 0 : index
    %c0_34 = arith.constant 0 : index
    %66 = vector.load %arg4[%c0_32, %c0_33, %c0_34] : memref<1x160x16xbf16, #tpu.memory_space<vmem>>, vector<1x160x16xbf16>
    %67 = vector.shape_cast %66 : vector<1x160x16xbf16> to vector<160x16xbf16>
    %68 = vector.shape_cast %65 : vector<160x16xbf16> to vector<1x160x16xbf16>
    tpu.vector_store %arg4[%c0_32, %c0_33, %c0_34], %68 {strides = array<i32>} : memref<1x160x16xbf16, #tpu.memory_space<vmem>>, vector<1x160x16xbf16>,
    return
  }
  func.func @transform_0(%arg0: i32) -> (i32, i32, i32) {
    %c0_i32 = arith.constant 0 : i32
    %c0_i32_0 = arith.constant 0 : i32
    %c0_i32_1 = arith.constant 0 : i32
    return %arg0, %c0_i32, %c0_i32_0 : i32, i32, i32
  }
  func.func @transform_1(%arg0: i32) -> (i32, i32, i32) {
    %c0_i32 = arith.constant 0 : i32
    %c0_i32_0 = arith.constant 0 : i32
    %c0_i32_1 = arith.constant 0 : i32
    %c0_i32_2 = arith.constant 0 : i32
    return %c0_i32, %c0_i32_0, %c0_i32_1 : i32, i32, i32
  }
  func.func @transform_2(%arg0: i32) -> (i32, i32) {
    %c0_i32 = arith.constant 0 : i32
    %c0_i32_0 = arith.constant 0 : i32
    %c0_i32_1 = arith.constant 0 : i32
    return %c0_i32, %c0_i32_0 : i32, i32
  }
  func.func @transform_3(%arg0: i32) -> (i32, i32, i32) {
    %c0_i32 = arith.constant 0 : i32
    %c0_i32_0 = arith.constant 0 : i32
    %c0_i32_1 = arith.constant 0 : i32
    return %arg0, %c0_i32, %c0_i32_0 : i32, i32, i32
  }
}

module attributes {stable_mosaic.version = 11 : i64} {
  func.func @_conv3x3_kernel(%arg0: i32, %arg1: memref<1x66x16xbf16, #tpu.memory_space<vmem>>, %arg2: memref<9x16x32xbf16, #tpu.memory_space<vmem>>, %arg3: memref<1x32xf32, #tpu.memory_space<vmem>>, %arg4: memref<1x48x32xbf16, #tpu.memory_space<vmem>>) attributes {dimension_semantics = [#tpu.dimension_semantics<parallel>], iteration_bounds = array<i64: 2>, scalar_prefetch = 0 : i64, scratch_operands = 0 : i64, tpu.core_type = #tpu.core_type<tc>, window_params = [{transform_indices = @transform_0, window_bounds = array<i64: 1, 66, 16>}, {pipeline_mode = #tpu.pipeline_mode<synchronous>, transform_indices = @transform_1, window_bounds = array<i64: 9, 16, 32>}, {pipeline_mode = #tpu.pipeline_mode<synchronous>, transform_indices = @transform_2, window_bounds = array<i64: 1, 32>}, {transform_indices = @transform_3, window_bounds = array<i64: 1, 48, 32>}]} {
    %c0 = arith.constant 0 : index
    %c0_0 = arith.constant 0 : index
    %c0_1 = arith.constant 0 : index
    %0 = vector.load %arg1[%c0, %c0_0, %c0_1] : memref<1x66x16xbf16, #tpu.memory_space<vmem>>, vector<1x66x16xbf16>
    %1 = vector.shape_cast %0 : vector<1x66x16xbf16> to vector<66x16xbf16>
    %2 = arith.extf %1 : vector<66x16xbf16> to vector<66x16xf32>
    %3 = vector.extract_strided_slice %2 {offsets = [0, 0], sizes = [48, 16], strides = [1, 1]} : vector<66x16xf32> to vector<48x16xf32>
    %c0_2 = arith.constant 0 : index
    %c0_3 = arith.constant 0 : index
    %c0_4 = arith.constant 0 : index
    %4 = vector.load %arg2[%c0_2, %c0_3, %c0_4] : memref<9x16x32xbf16, #tpu.memory_space<vmem>>, vector<1x16x32xbf16>
    %5 = vector.shape_cast %4 : vector<1x16x32xbf16> to vector<16x32xbf16>
    %6 = arith.truncf %3 : vector<48x16xf32> to vector<48x16xbf16>
    %cst = arith.constant dense<0.000000e+00> : vector<48x32xf32>
    %7 = tpu.matmul %6, %5, %cst {dimension_numbers = #tpu.dot_dimension_numbers<[1], [0], [0], [1], [0, 0, 1, 1], [], []>} : vector<48x16xbf16>, vector<16x32xbf16>, vector<48x32xf32> -> vector<48x32xf32>
    %8 = vector.extract_strided_slice %2 {offsets = [1, 0], sizes = [48, 16], strides = [1, 1]} : vector<66x16xf32> to vector<48x16xf32>
    %c1 = arith.constant 1 : index
    %c0_5 = arith.constant 0 : index
    %c0_6 = arith.constant 0 : index
    %9 = vector.load %arg2[%c1, %c0_5, %c0_6] : memref<9x16x32xbf16, #tpu.memory_space<vmem>>, vector<1x16x32xbf16>
    %10 = vector.shape_cast %9 : vector<1x16x32xbf16> to vector<16x32xbf16>
    %11 = arith.truncf %8 : vector<48x16xf32> to vector<48x16xbf16>
    %cst_7 = arith.constant dense<0.000000e+00> : vector<48x32xf32>
    %12 = tpu.matmul %11, %10, %cst_7 {dimension_numbers = #tpu.dot_dimension_numbers<[1], [0], [0], [1], [0, 0, 1, 1], [], []>} : vector<48x16xbf16>, vector<16x32xbf16>, vector<48x32xf32> -> vector<48x32xf32>
    %13 = arith.addf %7, %12 : vector<48x32xf32>
    %14 = vector.extract_strided_slice %2 {offsets = [2, 0], sizes = [48, 16], strides = [1, 1]} : vector<66x16xf32> to vector<48x16xf32>
    %c2 = arith.constant 2 : index
    %c0_8 = arith.constant 0 : index
    %c0_9 = arith.constant 0 : index
    %15 = vector.load %arg2[%c2, %c0_8, %c0_9] : memref<9x16x32xbf16, #tpu.memory_space<vmem>>, vector<1x16x32xbf16>
    %16 = vector.shape_cast %15 : vector<1x16x32xbf16> to vector<16x32xbf16>
    %17 = arith.truncf %14 : vector<48x16xf32> to vector<48x16xbf16>
    %cst_10 = arith.constant dense<0.000000e+00> : vector<48x32xf32>
    %18 = tpu.matmul %17, %16, %cst_10 {dimension_numbers = #tpu.dot_dimension_numbers<[1], [0], [0], [1], [0, 0, 1, 1], [], []>} : vector<48x16xbf16>, vector<16x32xbf16>, vector<48x32xf32> -> vector<48x32xf32>
    %19 = arith.addf %13, %18 : vector<48x32xf32>
    %20 = vector.extract_strided_slice %2 {offsets = [6, 0], sizes = [48, 16], strides = [1, 1]} : vector<66x16xf32> to vector<48x16xf32>
    %c3 = arith.constant 3 : index
    %c0_11 = arith.constant 0 : index
    %c0_12 = arith.constant 0 : index
    %21 = vector.load %arg2[%c3, %c0_11, %c0_12] : memref<9x16x32xbf16, #tpu.memory_space<vmem>>, vector<1x16x32xbf16>
    %22 = vector.shape_cast %21 : vector<1x16x32xbf16> to vector<16x32xbf16>
    %23 = arith.truncf %20 : vector<48x16xf32> to vector<48x16xbf16>
    %cst_13 = arith.constant dense<0.000000e+00> : vector<48x32xf32>
    %24 = tpu.matmul %23, %22, %cst_13 {dimension_numbers = #tpu.dot_dimension_numbers<[1], [0], [0], [1], [0, 0, 1, 1], [], []>} : vector<48x16xbf16>, vector<16x32xbf16>, vector<48x32xf32> -> vector<48x32xf32>
    %25 = arith.addf %19, %24 : vector<48x32xf32>
    %26 = vector.extract_strided_slice %2 {offsets = [7, 0], sizes = [48, 16], strides = [1, 1]} : vector<66x16xf32> to vector<48x16xf32>
    %c4 = arith.constant 4 : index
    %c0_14 = arith.constant 0 : index
    %c0_15 = arith.constant 0 : index
    %27 = vector.load %arg2[%c4, %c0_14, %c0_15] : memref<9x16x32xbf16, #tpu.memory_space<vmem>>, vector<1x16x32xbf16>
    %28 = vector.shape_cast %27 : vector<1x16x32xbf16> to vector<16x32xbf16>
    %29 = arith.truncf %26 : vector<48x16xf32> to vector<48x16xbf16>
    %cst_16 = arith.constant dense<0.000000e+00> : vector<48x32xf32>
    %30 = tpu.matmul %29, %28, %cst_16 {dimension_numbers = #tpu.dot_dimension_numbers<[1], [0], [0], [1], [0, 0, 1, 1], [], []>} : vector<48x16xbf16>, vector<16x32xbf16>, vector<48x32xf32> -> vector<48x32xf32>
    %31 = arith.addf %25, %30 : vector<48x32xf32>
    %32 = vector.extract_strided_slice %2 {offsets = [8, 0], sizes = [48, 16], strides = [1, 1]} : vector<66x16xf32> to vector<48x16xf32>
    %c5 = arith.constant 5 : index
    %c0_17 = arith.constant 0 : index
    %c0_18 = arith.constant 0 : index
    %33 = vector.load %arg2[%c5, %c0_17, %c0_18] : memref<9x16x32xbf16, #tpu.memory_space<vmem>>, vector<1x16x32xbf16>
    %34 = vector.shape_cast %33 : vector<1x16x32xbf16> to vector<16x32xbf16>
    %35 = arith.truncf %32 : vector<48x16xf32> to vector<48x16xbf16>
    %cst_19 = arith.constant dense<0.000000e+00> : vector<48x32xf32>
    %36 = tpu.matmul %35, %34, %cst_19 {dimension_numbers = #tpu.dot_dimension_numbers<[1], [0], [0], [1], [0, 0, 1, 1], [], []>} : vector<48x16xbf16>, vector<16x32xbf16>, vector<48x32xf32> -> vector<48x32xf32>
    %37 = arith.addf %31, %36 : vector<48x32xf32>
    %38 = vector.extract_strided_slice %2 {offsets = [12, 0], sizes = [48, 16], strides = [1, 1]} : vector<66x16xf32> to vector<48x16xf32>
    %c6 = arith.constant 6 : index
    %c0_20 = arith.constant 0 : index
    %c0_21 = arith.constant 0 : index
    %39 = vector.load %arg2[%c6, %c0_20, %c0_21] : memref<9x16x32xbf16, #tpu.memory_space<vmem>>, vector<1x16x32xbf16>
    %40 = vector.shape_cast %39 : vector<1x16x32xbf16> to vector<16x32xbf16>
    %41 = arith.truncf %38 : vector<48x16xf32> to vector<48x16xbf16>
    %cst_22 = arith.constant dense<0.000000e+00> : vector<48x32xf32>
    %42 = tpu.matmul %41, %40, %cst_22 {dimension_numbers = #tpu.dot_dimension_numbers<[1], [0], [0], [1], [0, 0, 1, 1], [], []>} : vector<48x16xbf16>, vector<16x32xbf16>, vector<48x32xf32> -> vector<48x32xf32>
    %43 = arith.addf %37, %42 : vector<48x32xf32>
    %44 = vector.extract_strided_slice %2 {offsets = [13, 0], sizes = [48, 16], strides = [1, 1]} : vector<66x16xf32> to vector<48x16xf32>
    %c7 = arith.constant 7 : index
    %c0_23 = arith.constant 0 : index
    %c0_24 = arith.constant 0 : index
    %45 = vector.load %arg2[%c7, %c0_23, %c0_24] : memref<9x16x32xbf16, #tpu.memory_space<vmem>>, vector<1x16x32xbf16>
    %46 = vector.shape_cast %45 : vector<1x16x32xbf16> to vector<16x32xbf16>
    %47 = arith.truncf %44 : vector<48x16xf32> to vector<48x16xbf16>
    %cst_25 = arith.constant dense<0.000000e+00> : vector<48x32xf32>
    %48 = tpu.matmul %47, %46, %cst_25 {dimension_numbers = #tpu.dot_dimension_numbers<[1], [0], [0], [1], [0, 0, 1, 1], [], []>} : vector<48x16xbf16>, vector<16x32xbf16>, vector<48x32xf32> -> vector<48x32xf32>
    %49 = arith.addf %43, %48 : vector<48x32xf32>
    %50 = vector.extract_strided_slice %2 {offsets = [14, 0], sizes = [48, 16], strides = [1, 1]} : vector<66x16xf32> to vector<48x16xf32>
    %c8 = arith.constant 8 : index
    %c0_26 = arith.constant 0 : index
    %c0_27 = arith.constant 0 : index
    %51 = vector.load %arg2[%c8, %c0_26, %c0_27] : memref<9x16x32xbf16, #tpu.memory_space<vmem>>, vector<1x16x32xbf16>
    %52 = vector.shape_cast %51 : vector<1x16x32xbf16> to vector<16x32xbf16>
    %53 = arith.truncf %50 : vector<48x16xf32> to vector<48x16xbf16>
    %cst_28 = arith.constant dense<0.000000e+00> : vector<48x32xf32>
    %54 = tpu.matmul %53, %52, %cst_28 {dimension_numbers = #tpu.dot_dimension_numbers<[1], [0], [0], [1], [0, 0, 1, 1], [], []>} : vector<48x16xbf16>, vector<16x32xbf16>, vector<48x32xf32> -> vector<48x32xf32>
    %55 = arith.addf %49, %54 : vector<48x32xf32>
    %c0_29 = arith.constant 0 : index
    %c0_30 = arith.constant 0 : index
    %56 = vector.load %arg3[%c0_29, %c0_30] : memref<1x32xf32, #tpu.memory_space<vmem>>, vector<1x32xf32>
    %57 = vector.broadcast %56 : vector<1x32xf32> to vector<48x32xf32>
    %58 = arith.addf %55, %57 : vector<48x32xf32>
    %cst_31 = arith.constant 0.000000e+00 : f32
    %59 = vector.broadcast %cst_31 : f32 to vector<48x32xf32>
    %60 = arith.maximumf %58, %59 : vector<48x32xf32>
    %61 = arith.truncf %60 : vector<48x32xf32> to vector<48x32xbf16>
    %c0_32 = arith.constant 0 : index
    %c0_33 = arith.constant 0 : index
    %c0_34 = arith.constant 0 : index
    %62 = vector.load %arg4[%c0_32, %c0_33, %c0_34] : memref<1x48x32xbf16, #tpu.memory_space<vmem>>, vector<1x48x32xbf16>
    %63 = vector.shape_cast %62 : vector<1x48x32xbf16> to vector<48x32xbf16>
    %64 = vector.shape_cast %61 : vector<48x32xbf16> to vector<1x48x32xbf16>
    tpu.vector_store %arg4[%c0_32, %c0_33, %c0_34], %64 {strides = array<i32>} : memref<1x48x32xbf16, #tpu.memory_space<vmem>>, vector<1x48x32xbf16>,
    return
  }
  func.func @transform_0(%arg0: i32) -> (i32, i32, i32) {
    %c0_i32 = arith.constant 0 : i32
    %c0_i32_0 = arith.constant 0 : i32
    %c0_i32_1 = arith.constant 0 : i32
    return %arg0, %c0_i32, %c0_i32_0 : i32, i32, i32
  }
  func.func @transform_1(%arg0: i32) -> (i32, i32, i32) {
    %c0_i32 = arith.constant 0 : i32
    %c0_i32_0 = arith.constant 0 : i32
    %c0_i32_1 = arith.constant 0 : i32
    %c0_i32_2 = arith.constant 0 : i32
    return %c0_i32, %c0_i32_0, %c0_i32_1 : i32, i32, i32
  }
  func.func @transform_2(%arg0: i32) -> (i32, i32) {
    %c0_i32 = arith.constant 0 : i32
    %c0_i32_0 = arith.constant 0 : i32
    %c0_i32_1 = arith.constant 0 : i32
    return %c0_i32, %c0_i32_0 : i32, i32
  }
  func.func @transform_3(%arg0: i32) -> (i32, i32, i32) {
    %c0_i32 = arith.constant 0 : i32
    %c0_i32_0 = arith.constant 0 : i32
    %c0_i32_1 = arith.constant 0 : i32
    return %arg0, %c0_i32, %c0_i32_0 : i32, i32, i32
  }
}

module attributes {stable_mosaic.version = 11 : i64} {
  func.func @_conv3x3_kernel(%arg0: i32, %arg1: memref<1x66x32xbf16, #tpu.memory_space<vmem>>, %arg2: memref<9x32x32xbf16, #tpu.memory_space<vmem>>, %arg3: memref<1x32xf32, #tpu.memory_space<vmem>>, %arg4: memref<1x48x32xbf16, #tpu.memory_space<vmem>>) attributes {dimension_semantics = [#tpu.dimension_semantics<parallel>], iteration_bounds = array<i64: 2>, scalar_prefetch = 0 : i64, scratch_operands = 0 : i64, tpu.core_type = #tpu.core_type<tc>, window_params = [{transform_indices = @transform_0, window_bounds = array<i64: 1, 66, 32>}, {pipeline_mode = #tpu.pipeline_mode<synchronous>, transform_indices = @transform_1, window_bounds = array<i64: 9, 32, 32>}, {pipeline_mode = #tpu.pipeline_mode<synchronous>, transform_indices = @transform_2, window_bounds = array<i64: 1, 32>}, {transform_indices = @transform_3, window_bounds = array<i64: 1, 48, 32>}]} {
    %c0 = arith.constant 0 : index
    %c0_0 = arith.constant 0 : index
    %c0_1 = arith.constant 0 : index
    %0 = vector.load %arg1[%c0, %c0_0, %c0_1] : memref<1x66x32xbf16, #tpu.memory_space<vmem>>, vector<1x66x32xbf16>
    %1 = vector.shape_cast %0 : vector<1x66x32xbf16> to vector<66x32xbf16>
    %2 = arith.extf %1 : vector<66x32xbf16> to vector<66x32xf32>
    %3 = vector.extract_strided_slice %2 {offsets = [0, 0], sizes = [48, 32], strides = [1, 1]} : vector<66x32xf32> to vector<48x32xf32>
    %c0_2 = arith.constant 0 : index
    %c0_3 = arith.constant 0 : index
    %c0_4 = arith.constant 0 : index
    %4 = vector.load %arg2[%c0_2, %c0_3, %c0_4] : memref<9x32x32xbf16, #tpu.memory_space<vmem>>, vector<1x32x32xbf16>
    %5 = vector.shape_cast %4 : vector<1x32x32xbf16> to vector<32x32xbf16>
    %6 = arith.truncf %3 : vector<48x32xf32> to vector<48x32xbf16>
    %cst = arith.constant dense<0.000000e+00> : vector<48x32xf32>
    %7 = tpu.matmul %6, %5, %cst {dimension_numbers = #tpu.dot_dimension_numbers<[1], [0], [0], [1], [0, 0, 1, 1], [], []>} : vector<48x32xbf16>, vector<32x32xbf16>, vector<48x32xf32> -> vector<48x32xf32>
    %8 = vector.extract_strided_slice %2 {offsets = [1, 0], sizes = [48, 32], strides = [1, 1]} : vector<66x32xf32> to vector<48x32xf32>
    %c1 = arith.constant 1 : index
    %c0_5 = arith.constant 0 : index
    %c0_6 = arith.constant 0 : index
    %9 = vector.load %arg2[%c1, %c0_5, %c0_6] : memref<9x32x32xbf16, #tpu.memory_space<vmem>>, vector<1x32x32xbf16>
    %10 = vector.shape_cast %9 : vector<1x32x32xbf16> to vector<32x32xbf16>
    %11 = arith.truncf %8 : vector<48x32xf32> to vector<48x32xbf16>
    %cst_7 = arith.constant dense<0.000000e+00> : vector<48x32xf32>
    %12 = tpu.matmul %11, %10, %cst_7 {dimension_numbers = #tpu.dot_dimension_numbers<[1], [0], [0], [1], [0, 0, 1, 1], [], []>} : vector<48x32xbf16>, vector<32x32xbf16>, vector<48x32xf32> -> vector<48x32xf32>
    %13 = arith.addf %7, %12 : vector<48x32xf32>
    %14 = vector.extract_strided_slice %2 {offsets = [2, 0], sizes = [48, 32], strides = [1, 1]} : vector<66x32xf32> to vector<48x32xf32>
    %c2 = arith.constant 2 : index
    %c0_8 = arith.constant 0 : index
    %c0_9 = arith.constant 0 : index
    %15 = vector.load %arg2[%c2, %c0_8, %c0_9] : memref<9x32x32xbf16, #tpu.memory_space<vmem>>, vector<1x32x32xbf16>
    %16 = vector.shape_cast %15 : vector<1x32x32xbf16> to vector<32x32xbf16>
    %17 = arith.truncf %14 : vector<48x32xf32> to vector<48x32xbf16>
    %cst_10 = arith.constant dense<0.000000e+00> : vector<48x32xf32>
    %18 = tpu.matmul %17, %16, %cst_10 {dimension_numbers = #tpu.dot_dimension_numbers<[1], [0], [0], [1], [0, 0, 1, 1], [], []>} : vector<48x32xbf16>, vector<32x32xbf16>, vector<48x32xf32> -> vector<48x32xf32>
    %19 = arith.addf %13, %18 : vector<48x32xf32>
    %20 = vector.extract_strided_slice %2 {offsets = [6, 0], sizes = [48, 32], strides = [1, 1]} : vector<66x32xf32> to vector<48x32xf32>
    %c3 = arith.constant 3 : index
    %c0_11 = arith.constant 0 : index
    %c0_12 = arith.constant 0 : index
    %21 = vector.load %arg2[%c3, %c0_11, %c0_12] : memref<9x32x32xbf16, #tpu.memory_space<vmem>>, vector<1x32x32xbf16>
    %22 = vector.shape_cast %21 : vector<1x32x32xbf16> to vector<32x32xbf16>
    %23 = arith.truncf %20 : vector<48x32xf32> to vector<48x32xbf16>
    %cst_13 = arith.constant dense<0.000000e+00> : vector<48x32xf32>
    %24 = tpu.matmul %23, %22, %cst_13 {dimension_numbers = #tpu.dot_dimension_numbers<[1], [0], [0], [1], [0, 0, 1, 1], [], []>} : vector<48x32xbf16>, vector<32x32xbf16>, vector<48x32xf32> -> vector<48x32xf32>
    %25 = arith.addf %19, %24 : vector<48x32xf32>
    %26 = vector.extract_strided_slice %2 {offsets = [7, 0], sizes = [48, 32], strides = [1, 1]} : vector<66x32xf32> to vector<48x32xf32>
    %c4 = arith.constant 4 : index
    %c0_14 = arith.constant 0 : index
    %c0_15 = arith.constant 0 : index
    %27 = vector.load %arg2[%c4, %c0_14, %c0_15] : memref<9x32x32xbf16, #tpu.memory_space<vmem>>, vector<1x32x32xbf16>
    %28 = vector.shape_cast %27 : vector<1x32x32xbf16> to vector<32x32xbf16>
    %29 = arith.truncf %26 : vector<48x32xf32> to vector<48x32xbf16>
    %cst_16 = arith.constant dense<0.000000e+00> : vector<48x32xf32>
    %30 = tpu.matmul %29, %28, %cst_16 {dimension_numbers = #tpu.dot_dimension_numbers<[1], [0], [0], [1], [0, 0, 1, 1], [], []>} : vector<48x32xbf16>, vector<32x32xbf16>, vector<48x32xf32> -> vector<48x32xf32>
    %31 = arith.addf %25, %30 : vector<48x32xf32>
    %32 = vector.extract_strided_slice %2 {offsets = [8, 0], sizes = [48, 32], strides = [1, 1]} : vector<66x32xf32> to vector<48x32xf32>
    %c5 = arith.constant 5 : index
    %c0_17 = arith.constant 0 : index
    %c0_18 = arith.constant 0 : index
    %33 = vector.load %arg2[%c5, %c0_17, %c0_18] : memref<9x32x32xbf16, #tpu.memory_space<vmem>>, vector<1x32x32xbf16>
    %34 = vector.shape_cast %33 : vector<1x32x32xbf16> to vector<32x32xbf16>
    %35 = arith.truncf %32 : vector<48x32xf32> to vector<48x32xbf16>
    %cst_19 = arith.constant dense<0.000000e+00> : vector<48x32xf32>
    %36 = tpu.matmul %35, %34, %cst_19 {dimension_numbers = #tpu.dot_dimension_numbers<[1], [0], [0], [1], [0, 0, 1, 1], [], []>} : vector<48x32xbf16>, vector<32x32xbf16>, vector<48x32xf32> -> vector<48x32xf32>
    %37 = arith.addf %31, %36 : vector<48x32xf32>
    %38 = vector.extract_strided_slice %2 {offsets = [12, 0], sizes = [48, 32], strides = [1, 1]} : vector<66x32xf32> to vector<48x32xf32>
    %c6 = arith.constant 6 : index
    %c0_20 = arith.constant 0 : index
    %c0_21 = arith.constant 0 : index
    %39 = vector.load %arg2[%c6, %c0_20, %c0_21] : memref<9x32x32xbf16, #tpu.memory_space<vmem>>, vector<1x32x32xbf16>
    %40 = vector.shape_cast %39 : vector<1x32x32xbf16> to vector<32x32xbf16>
    %41 = arith.truncf %38 : vector<48x32xf32> to vector<48x32xbf16>
    %cst_22 = arith.constant dense<0.000000e+00> : vector<48x32xf32>
    %42 = tpu.matmul %41, %40, %cst_22 {dimension_numbers = #tpu.dot_dimension_numbers<[1], [0], [0], [1], [0, 0, 1, 1], [], []>} : vector<48x32xbf16>, vector<32x32xbf16>, vector<48x32xf32> -> vector<48x32xf32>
    %43 = arith.addf %37, %42 : vector<48x32xf32>
    %44 = vector.extract_strided_slice %2 {offsets = [13, 0], sizes = [48, 32], strides = [1, 1]} : vector<66x32xf32> to vector<48x32xf32>
    %c7 = arith.constant 7 : index
    %c0_23 = arith.constant 0 : index
    %c0_24 = arith.constant 0 : index
    %45 = vector.load %arg2[%c7, %c0_23, %c0_24] : memref<9x32x32xbf16, #tpu.memory_space<vmem>>, vector<1x32x32xbf16>
    %46 = vector.shape_cast %45 : vector<1x32x32xbf16> to vector<32x32xbf16>
    %47 = arith.truncf %44 : vector<48x32xf32> to vector<48x32xbf16>
    %cst_25 = arith.constant dense<0.000000e+00> : vector<48x32xf32>
    %48 = tpu.matmul %47, %46, %cst_25 {dimension_numbers = #tpu.dot_dimension_numbers<[1], [0], [0], [1], [0, 0, 1, 1], [], []>} : vector<48x32xbf16>, vector<32x32xbf16>, vector<48x32xf32> -> vector<48x32xf32>
    %49 = arith.addf %43, %48 : vector<48x32xf32>
    %50 = vector.extract_strided_slice %2 {offsets = [14, 0], sizes = [48, 32], strides = [1, 1]} : vector<66x32xf32> to vector<48x32xf32>
    %c8 = arith.constant 8 : index
    %c0_26 = arith.constant 0 : index
    %c0_27 = arith.constant 0 : index
    %51 = vector.load %arg2[%c8, %c0_26, %c0_27] : memref<9x32x32xbf16, #tpu.memory_space<vmem>>, vector<1x32x32xbf16>
    %52 = vector.shape_cast %51 : vector<1x32x32xbf16> to vector<32x32xbf16>
    %53 = arith.truncf %50 : vector<48x32xf32> to vector<48x32xbf16>
    %cst_28 = arith.constant dense<0.000000e+00> : vector<48x32xf32>
    %54 = tpu.matmul %53, %52, %cst_28 {dimension_numbers = #tpu.dot_dimension_numbers<[1], [0], [0], [1], [0, 0, 1, 1], [], []>} : vector<48x32xbf16>, vector<32x32xbf16>, vector<48x32xf32> -> vector<48x32xf32>
    %55 = arith.addf %49, %54 : vector<48x32xf32>
    %c0_29 = arith.constant 0 : index
    %c0_30 = arith.constant 0 : index
    %56 = vector.load %arg3[%c0_29, %c0_30] : memref<1x32xf32, #tpu.memory_space<vmem>>, vector<1x32xf32>
    %57 = vector.broadcast %56 : vector<1x32xf32> to vector<48x32xf32>
    %58 = arith.addf %55, %57 : vector<48x32xf32>
    %cst_31 = arith.constant 0.000000e+00 : f32
    %59 = vector.broadcast %cst_31 : f32 to vector<48x32xf32>
    %60 = arith.maximumf %58, %59 : vector<48x32xf32>
    %c47_i32 = arith.constant 47 : i32
    %61 = tpu.dynamic_rotate %60 by %c47_i32 dim 0 : vector<48x32xf32>, i32 -> vector<48x32xf32>
    %62 = arith.maximumf %60, %61 : vector<48x32xf32>
    %c42_i32 = arith.constant 42 : i32
    %63 = tpu.dynamic_rotate %62 by %c42_i32 dim 0 : vector<48x32xf32>, i32 -> vector<48x32xf32>
    %64 = arith.maximumf %62, %63 : vector<48x32xf32>
    %65 = arith.truncf %64 : vector<48x32xf32> to vector<48x32xbf16>
    %c0_32 = arith.constant 0 : index
    %c0_33 = arith.constant 0 : index
    %c0_34 = arith.constant 0 : index
    %66 = vector.load %arg4[%c0_32, %c0_33, %c0_34] : memref<1x48x32xbf16, #tpu.memory_space<vmem>>, vector<1x48x32xbf16>
    %67 = vector.shape_cast %66 : vector<1x48x32xbf16> to vector<48x32xbf16>
    %68 = vector.shape_cast %65 : vector<48x32xbf16> to vector<1x48x32xbf16>
    tpu.vector_store %arg4[%c0_32, %c0_33, %c0_34], %68 {strides = array<i32>} : memref<1x48x32xbf16, #tpu.memory_space<vmem>>, vector<1x48x32xbf16>,
    return
  }
  func.func @transform_0(%arg0: i32) -> (i32, i32, i32) {
    %c0_i32 = arith.constant 0 : i32
    %c0_i32_0 = arith.constant 0 : i32
    %c0_i32_1 = arith.constant 0 : i32
    return %arg0, %c0_i32, %c0_i32_0 : i32, i32, i32
  }
  func.func @transform_1(%arg0: i32) -> (i32, i32, i32) {
    %c0_i32 = arith.constant 0 : i32
    %c0_i32_0 = arith.constant 0 : i32
    %c0_i32_1 = arith.constant 0 : i32
    %c0_i32_2 = arith.constant 0 : i32
    return %c0_i32, %c0_i32_0, %c0_i32_1 : i32, i32, i32
  }
  func.func @transform_2(%arg0: i32) -> (i32, i32) {
    %c0_i32 = arith.constant 0 : i32
    %c0_i32_0 = arith.constant 0 : i32
    %c0_i32_1 = arith.constant 0 : i32
    return %c0_i32, %c0_i32_0 : i32, i32
  }
  func.func @transform_3(%arg0: i32) -> (i32, i32, i32) {
    %c0_i32 = arith.constant 0 : i32
    %c0_i32_0 = arith.constant 0 : i32
    %c0_i32_1 = arith.constant 0 : i32
    return %arg0, %c0_i32, %c0_i32_0 : i32, i32, i32
  }
}

module attributes {stable_mosaic.version = 11 : i64} {
  func.func @_conv3x3_kernel(%arg0: i32, %arg1: memref<1x28x32xbf16, #tpu.memory_space<vmem>>, %arg2: memref<9x32x64xbf16, #tpu.memory_space<vmem>>, %arg3: memref<1x64xf32, #tpu.memory_space<vmem>>, %arg4: memref<1x16x64xbf16, #tpu.memory_space<vmem>>) attributes {dimension_semantics = [#tpu.dimension_semantics<parallel>], iteration_bounds = array<i64: 2>, scalar_prefetch = 0 : i64, scratch_operands = 0 : i64, tpu.core_type = #tpu.core_type<tc>, window_params = [{transform_indices = @transform_0, window_bounds = array<i64: 1, 28, 32>}, {pipeline_mode = #tpu.pipeline_mode<synchronous>, transform_indices = @transform_1, window_bounds = array<i64: 9, 32, 64>}, {pipeline_mode = #tpu.pipeline_mode<synchronous>, transform_indices = @transform_2, window_bounds = array<i64: 1, 64>}, {transform_indices = @transform_3, window_bounds = array<i64: 1, 16, 64>}]} {
    %c0 = arith.constant 0 : index
    %c0_0 = arith.constant 0 : index
    %c0_1 = arith.constant 0 : index
    %0 = vector.load %arg1[%c0, %c0_0, %c0_1] : memref<1x28x32xbf16, #tpu.memory_space<vmem>>, vector<1x28x32xbf16>
    %1 = vector.shape_cast %0 : vector<1x28x32xbf16> to vector<28x32xbf16>
    %2 = arith.extf %1 : vector<28x32xbf16> to vector<28x32xf32>
    %3 = vector.extract_strided_slice %2 {offsets = [0, 0], sizes = [16, 32], strides = [1, 1]} : vector<28x32xf32> to vector<16x32xf32>
    %c0_2 = arith.constant 0 : index
    %c0_3 = arith.constant 0 : index
    %c0_4 = arith.constant 0 : index
    %4 = vector.load %arg2[%c0_2, %c0_3, %c0_4] : memref<9x32x64xbf16, #tpu.memory_space<vmem>>, vector<1x32x64xbf16>
    %5 = vector.shape_cast %4 : vector<1x32x64xbf16> to vector<32x64xbf16>
    %6 = arith.truncf %3 : vector<16x32xf32> to vector<16x32xbf16>
    %cst = arith.constant dense<0.000000e+00> : vector<16x64xf32>
    %7 = tpu.matmul %6, %5, %cst {dimension_numbers = #tpu.dot_dimension_numbers<[1], [0], [0], [1], [0, 0, 1, 1], [], []>} : vector<16x32xbf16>, vector<32x64xbf16>, vector<16x64xf32> -> vector<16x64xf32>
    %8 = vector.extract_strided_slice %2 {offsets = [1, 0], sizes = [16, 32], strides = [1, 1]} : vector<28x32xf32> to vector<16x32xf32>
    %c1 = arith.constant 1 : index
    %c0_5 = arith.constant 0 : index
    %c0_6 = arith.constant 0 : index
    %9 = vector.load %arg2[%c1, %c0_5, %c0_6] : memref<9x32x64xbf16, #tpu.memory_space<vmem>>, vector<1x32x64xbf16>
    %10 = vector.shape_cast %9 : vector<1x32x64xbf16> to vector<32x64xbf16>
    %11 = arith.truncf %8 : vector<16x32xf32> to vector<16x32xbf16>
    %cst_7 = arith.constant dense<0.000000e+00> : vector<16x64xf32>
    %12 = tpu.matmul %11, %10, %cst_7 {dimension_numbers = #tpu.dot_dimension_numbers<[1], [0], [0], [1], [0, 0, 1, 1], [], []>} : vector<16x32xbf16>, vector<32x64xbf16>, vector<16x64xf32> -> vector<16x64xf32>
    %13 = arith.addf %7, %12 : vector<16x64xf32>
    %14 = vector.extract_strided_slice %2 {offsets = [2, 0], sizes = [16, 32], strides = [1, 1]} : vector<28x32xf32> to vector<16x32xf32>
    %c2 = arith.constant 2 : index
    %c0_8 = arith.constant 0 : index
    %c0_9 = arith.constant 0 : index
    %15 = vector.load %arg2[%c2, %c0_8, %c0_9] : memref<9x32x64xbf16, #tpu.memory_space<vmem>>, vector<1x32x64xbf16>
    %16 = vector.shape_cast %15 : vector<1x32x64xbf16> to vector<32x64xbf16>
    %17 = arith.truncf %14 : vector<16x32xf32> to vector<16x32xbf16>
    %cst_10 = arith.constant dense<0.000000e+00> : vector<16x64xf32>
    %18 = tpu.matmul %17, %16, %cst_10 {dimension_numbers = #tpu.dot_dimension_numbers<[1], [0], [0], [1], [0, 0, 1, 1], [], []>} : vector<16x32xbf16>, vector<32x64xbf16>, vector<16x64xf32> -> vector<16x64xf32>
    %19 = arith.addf %13, %18 : vector<16x64xf32>
    %20 = vector.extract_strided_slice %2 {offsets = [4, 0], sizes = [16, 32], strides = [1, 1]} : vector<28x32xf32> to vector<16x32xf32>
    %c3 = arith.constant 3 : index
    %c0_11 = arith.constant 0 : index
    %c0_12 = arith.constant 0 : index
    %21 = vector.load %arg2[%c3, %c0_11, %c0_12] : memref<9x32x64xbf16, #tpu.memory_space<vmem>>, vector<1x32x64xbf16>
    %22 = vector.shape_cast %21 : vector<1x32x64xbf16> to vector<32x64xbf16>
    %23 = arith.truncf %20 : vector<16x32xf32> to vector<16x32xbf16>
    %cst_13 = arith.constant dense<0.000000e+00> : vector<16x64xf32>
    %24 = tpu.matmul %23, %22, %cst_13 {dimension_numbers = #tpu.dot_dimension_numbers<[1], [0], [0], [1], [0, 0, 1, 1], [], []>} : vector<16x32xbf16>, vector<32x64xbf16>, vector<16x64xf32> -> vector<16x64xf32>
    %25 = arith.addf %19, %24 : vector<16x64xf32>
    %26 = vector.extract_strided_slice %2 {offsets = [5, 0], sizes = [16, 32], strides = [1, 1]} : vector<28x32xf32> to vector<16x32xf32>
    %c4 = arith.constant 4 : index
    %c0_14 = arith.constant 0 : index
    %c0_15 = arith.constant 0 : index
    %27 = vector.load %arg2[%c4, %c0_14, %c0_15] : memref<9x32x64xbf16, #tpu.memory_space<vmem>>, vector<1x32x64xbf16>
    %28 = vector.shape_cast %27 : vector<1x32x64xbf16> to vector<32x64xbf16>
    %29 = arith.truncf %26 : vector<16x32xf32> to vector<16x32xbf16>
    %cst_16 = arith.constant dense<0.000000e+00> : vector<16x64xf32>
    %30 = tpu.matmul %29, %28, %cst_16 {dimension_numbers = #tpu.dot_dimension_numbers<[1], [0], [0], [1], [0, 0, 1, 1], [], []>} : vector<16x32xbf16>, vector<32x64xbf16>, vector<16x64xf32> -> vector<16x64xf32>
    %31 = arith.addf %25, %30 : vector<16x64xf32>
    %32 = vector.extract_strided_slice %2 {offsets = [6, 0], sizes = [16, 32], strides = [1, 1]} : vector<28x32xf32> to vector<16x32xf32>
    %c5 = arith.constant 5 : index
    %c0_17 = arith.constant 0 : index
    %c0_18 = arith.constant 0 : index
    %33 = vector.load %arg2[%c5, %c0_17, %c0_18] : memref<9x32x64xbf16, #tpu.memory_space<vmem>>, vector<1x32x64xbf16>
    %34 = vector.shape_cast %33 : vector<1x32x64xbf16> to vector<32x64xbf16>
    %35 = arith.truncf %32 : vector<16x32xf32> to vector<16x32xbf16>
    %cst_19 = arith.constant dense<0.000000e+00> : vector<16x64xf32>
    %36 = tpu.matmul %35, %34, %cst_19 {dimension_numbers = #tpu.dot_dimension_numbers<[1], [0], [0], [1], [0, 0, 1, 1], [], []>} : vector<16x32xbf16>, vector<32x64xbf16>, vector<16x64xf32> -> vector<16x64xf32>
    %37 = arith.addf %31, %36 : vector<16x64xf32>
    %38 = vector.extract_strided_slice %2 {offsets = [8, 0], sizes = [16, 32], strides = [1, 1]} : vector<28x32xf32> to vector<16x32xf32>
    %c6 = arith.constant 6 : index
    %c0_20 = arith.constant 0 : index
    %c0_21 = arith.constant 0 : index
    %39 = vector.load %arg2[%c6, %c0_20, %c0_21] : memref<9x32x64xbf16, #tpu.memory_space<vmem>>, vector<1x32x64xbf16>
    %40 = vector.shape_cast %39 : vector<1x32x64xbf16> to vector<32x64xbf16>
    %41 = arith.truncf %38 : vector<16x32xf32> to vector<16x32xbf16>
    %cst_22 = arith.constant dense<0.000000e+00> : vector<16x64xf32>
    %42 = tpu.matmul %41, %40, %cst_22 {dimension_numbers = #tpu.dot_dimension_numbers<[1], [0], [0], [1], [0, 0, 1, 1], [], []>} : vector<16x32xbf16>, vector<32x64xbf16>, vector<16x64xf32> -> vector<16x64xf32>
    %43 = arith.addf %37, %42 : vector<16x64xf32>
    %44 = vector.extract_strided_slice %2 {offsets = [9, 0], sizes = [16, 32], strides = [1, 1]} : vector<28x32xf32> to vector<16x32xf32>
    %c7 = arith.constant 7 : index
    %c0_23 = arith.constant 0 : index
    %c0_24 = arith.constant 0 : index
    %45 = vector.load %arg2[%c7, %c0_23, %c0_24] : memref<9x32x64xbf16, #tpu.memory_space<vmem>>, vector<1x32x64xbf16>
    %46 = vector.shape_cast %45 : vector<1x32x64xbf16> to vector<32x64xbf16>
    %47 = arith.truncf %44 : vector<16x32xf32> to vector<16x32xbf16>
    %cst_25 = arith.constant dense<0.000000e+00> : vector<16x64xf32>
    %48 = tpu.matmul %47, %46, %cst_25 {dimension_numbers = #tpu.dot_dimension_numbers<[1], [0], [0], [1], [0, 0, 1, 1], [], []>} : vector<16x32xbf16>, vector<32x64xbf16>, vector<16x64xf32> -> vector<16x64xf32>
    %49 = arith.addf %43, %48 : vector<16x64xf32>
    %50 = vector.extract_strided_slice %2 {offsets = [10, 0], sizes = [16, 32], strides = [1, 1]} : vector<28x32xf32> to vector<16x32xf32>
    %c8 = arith.constant 8 : index
    %c0_26 = arith.constant 0 : index
    %c0_27 = arith.constant 0 : index
    %51 = vector.load %arg2[%c8, %c0_26, %c0_27] : memref<9x32x64xbf16, #tpu.memory_space<vmem>>, vector<1x32x64xbf16>
    %52 = vector.shape_cast %51 : vector<1x32x64xbf16> to vector<32x64xbf16>
    %53 = arith.truncf %50 : vector<16x32xf32> to vector<16x32xbf16>
    %cst_28 = arith.constant dense<0.000000e+00> : vector<16x64xf32>
    %54 = tpu.matmul %53, %52, %cst_28 {dimension_numbers = #tpu.dot_dimension_numbers<[1], [0], [0], [1], [0, 0, 1, 1], [], []>} : vector<16x32xbf16>, vector<32x64xbf16>, vector<16x64xf32> -> vector<16x64xf32>
    %55 = arith.addf %49, %54 : vector<16x64xf32>
    %c0_29 = arith.constant 0 : index
    %c0_30 = arith.constant 0 : index
    %56 = vector.load %arg3[%c0_29, %c0_30] : memref<1x64xf32, #tpu.memory_space<vmem>>, vector<1x64xf32>
    %57 = vector.broadcast %56 : vector<1x64xf32> to vector<16x64xf32>
    %58 = arith.addf %55, %57 : vector<16x64xf32>
    %cst_31 = arith.constant 0.000000e+00 : f32
    %59 = vector.broadcast %cst_31 : f32 to vector<16x64xf32>
    %60 = arith.maximumf %58, %59 : vector<16x64xf32>
    %61 = arith.truncf %60 : vector<16x64xf32> to vector<16x64xbf16>
    %c0_32 = arith.constant 0 : index
    %c0_33 = arith.constant 0 : index
    %c0_34 = arith.constant 0 : index
    %62 = vector.load %arg4[%c0_32, %c0_33, %c0_34] : memref<1x16x64xbf16, #tpu.memory_space<vmem>>, vector<1x16x64xbf16>
    %63 = vector.shape_cast %62 : vector<1x16x64xbf16> to vector<16x64xbf16>
    %64 = vector.shape_cast %61 : vector<16x64xbf16> to vector<1x16x64xbf16>
    tpu.vector_store %arg4[%c0_32, %c0_33, %c0_34], %64 {strides = array<i32>} : memref<1x16x64xbf16, #tpu.memory_space<vmem>>, vector<1x16x64xbf16>,
    return
  }
  func.func @transform_0(%arg0: i32) -> (i32, i32, i32) {
    %c0_i32 = arith.constant 0 : i32
    %c0_i32_0 = arith.constant 0 : i32
    %c0_i32_1 = arith.constant 0 : i32
    return %arg0, %c0_i32, %c0_i32_0 : i32, i32, i32
  }
  func.func @transform_1(%arg0: i32) -> (i32, i32, i32) {
    %c0_i32 = arith.constant 0 : i32
    %c0_i32_0 = arith.constant 0 : i32
    %c0_i32_1 = arith.constant 0 : i32
    %c0_i32_2 = arith.constant 0 : i32
    return %c0_i32, %c0_i32_0, %c0_i32_1 : i32, i32, i32
  }
  func.func @transform_2(%arg0: i32) -> (i32, i32) {
    %c0_i32 = arith.constant 0 : i32
    %c0_i32_0 = arith.constant 0 : i32
    %c0_i32_1 = arith.constant 0 : i32
    return %c0_i32, %c0_i32_0 : i32, i32
  }
  func.func @transform_3(%arg0: i32) -> (i32, i32, i32) {
    %c0_i32 = arith.constant 0 : i32
    %c0_i32_0 = arith.constant 0 : i32
    %c0_i32_1 = arith.constant 0 : i32
    return %arg0, %c0_i32, %c0_i32_0 : i32, i32, i32
  }
}

module attributes {stable_mosaic.version = 11 : i64} {
  func.func @_conv3x3_kernel(%arg0: i32, %arg1: memref<1x28x64xbf16, #tpu.memory_space<vmem>>, %arg2: memref<9x64x64xbf16, #tpu.memory_space<vmem>>, %arg3: memref<1x64xf32, #tpu.memory_space<vmem>>, %arg4: memref<1x16x64xbf16, #tpu.memory_space<vmem>>) attributes {dimension_semantics = [#tpu.dimension_semantics<parallel>], iteration_bounds = array<i64: 2>, scalar_prefetch = 0 : i64, scratch_operands = 0 : i64, tpu.core_type = #tpu.core_type<tc>, window_params = [{transform_indices = @transform_0, window_bounds = array<i64: 1, 28, 64>}, {pipeline_mode = #tpu.pipeline_mode<synchronous>, transform_indices = @transform_1, window_bounds = array<i64: 9, 64, 64>}, {pipeline_mode = #tpu.pipeline_mode<synchronous>, transform_indices = @transform_2, window_bounds = array<i64: 1, 64>}, {transform_indices = @transform_3, window_bounds = array<i64: 1, 16, 64>}]} {
    %c0 = arith.constant 0 : index
    %c0_0 = arith.constant 0 : index
    %c0_1 = arith.constant 0 : index
    %0 = vector.load %arg1[%c0, %c0_0, %c0_1] : memref<1x28x64xbf16, #tpu.memory_space<vmem>>, vector<1x28x64xbf16>
    %1 = vector.shape_cast %0 : vector<1x28x64xbf16> to vector<28x64xbf16>
    %2 = arith.extf %1 : vector<28x64xbf16> to vector<28x64xf32>
    %3 = vector.extract_strided_slice %2 {offsets = [0, 0], sizes = [16, 64], strides = [1, 1]} : vector<28x64xf32> to vector<16x64xf32>
    %c0_2 = arith.constant 0 : index
    %c0_3 = arith.constant 0 : index
    %c0_4 = arith.constant 0 : index
    %4 = vector.load %arg2[%c0_2, %c0_3, %c0_4] : memref<9x64x64xbf16, #tpu.memory_space<vmem>>, vector<1x64x64xbf16>
    %5 = vector.shape_cast %4 : vector<1x64x64xbf16> to vector<64x64xbf16>
    %6 = arith.truncf %3 : vector<16x64xf32> to vector<16x64xbf16>
    %cst = arith.constant dense<0.000000e+00> : vector<16x64xf32>
    %7 = tpu.matmul %6, %5, %cst {dimension_numbers = #tpu.dot_dimension_numbers<[1], [0], [0], [1], [0, 0, 1, 1], [], []>} : vector<16x64xbf16>, vector<64x64xbf16>, vector<16x64xf32> -> vector<16x64xf32>
    %8 = vector.extract_strided_slice %2 {offsets = [1, 0], sizes = [16, 64], strides = [1, 1]} : vector<28x64xf32> to vector<16x64xf32>
    %c1 = arith.constant 1 : index
    %c0_5 = arith.constant 0 : index
    %c0_6 = arith.constant 0 : index
    %9 = vector.load %arg2[%c1, %c0_5, %c0_6] : memref<9x64x64xbf16, #tpu.memory_space<vmem>>, vector<1x64x64xbf16>
    %10 = vector.shape_cast %9 : vector<1x64x64xbf16> to vector<64x64xbf16>
    %11 = arith.truncf %8 : vector<16x64xf32> to vector<16x64xbf16>
    %cst_7 = arith.constant dense<0.000000e+00> : vector<16x64xf32>
    %12 = tpu.matmul %11, %10, %cst_7 {dimension_numbers = #tpu.dot_dimension_numbers<[1], [0], [0], [1], [0, 0, 1, 1], [], []>} : vector<16x64xbf16>, vector<64x64xbf16>, vector<16x64xf32> -> vector<16x64xf32>
    %13 = arith.addf %7, %12 : vector<16x64xf32>
    %14 = vector.extract_strided_slice %2 {offsets = [2, 0], sizes = [16, 64], strides = [1, 1]} : vector<28x64xf32> to vector<16x64xf32>
    %c2 = arith.constant 2 : index
    %c0_8 = arith.constant 0 : index
    %c0_9 = arith.constant 0 : index
    %15 = vector.load %arg2[%c2, %c0_8, %c0_9] : memref<9x64x64xbf16, #tpu.memory_space<vmem>>, vector<1x64x64xbf16>
    %16 = vector.shape_cast %15 : vector<1x64x64xbf16> to vector<64x64xbf16>
    %17 = arith.truncf %14 : vector<16x64xf32> to vector<16x64xbf16>
    %cst_10 = arith.constant dense<0.000000e+00> : vector<16x64xf32>
    %18 = tpu.matmul %17, %16, %cst_10 {dimension_numbers = #tpu.dot_dimension_numbers<[1], [0], [0], [1], [0, 0, 1, 1], [], []>} : vector<16x64xbf16>, vector<64x64xbf16>, vector<16x64xf32> -> vector<16x64xf32>
    %19 = arith.addf %13, %18 : vector<16x64xf32>
    %20 = vector.extract_strided_slice %2 {offsets = [4, 0], sizes = [16, 64], strides = [1, 1]} : vector<28x64xf32> to vector<16x64xf32>
    %c3 = arith.constant 3 : index
    %c0_11 = arith.constant 0 : index
    %c0_12 = arith.constant 0 : index
    %21 = vector.load %arg2[%c3, %c0_11, %c0_12] : memref<9x64x64xbf16, #tpu.memory_space<vmem>>, vector<1x64x64xbf16>
    %22 = vector.shape_cast %21 : vector<1x64x64xbf16> to vector<64x64xbf16>
    %23 = arith.truncf %20 : vector<16x64xf32> to vector<16x64xbf16>
    %cst_13 = arith.constant dense<0.000000e+00> : vector<16x64xf32>
    %24 = tpu.matmul %23, %22, %cst_13 {dimension_numbers = #tpu.dot_dimension_numbers<[1], [0], [0], [1], [0, 0, 1, 1], [], []>} : vector<16x64xbf16>, vector<64x64xbf16>, vector<16x64xf32> -> vector<16x64xf32>
    %25 = arith.addf %19, %24 : vector<16x64xf32>
    %26 = vector.extract_strided_slice %2 {offsets = [5, 0], sizes = [16, 64], strides = [1, 1]} : vector<28x64xf32> to vector<16x64xf32>
    %c4 = arith.constant 4 : index
    %c0_14 = arith.constant 0 : index
    %c0_15 = arith.constant 0 : index
    %27 = vector.load %arg2[%c4, %c0_14, %c0_15] : memref<9x64x64xbf16, #tpu.memory_space<vmem>>, vector<1x64x64xbf16>
    %28 = vector.shape_cast %27 : vector<1x64x64xbf16> to vector<64x64xbf16>
    %29 = arith.truncf %26 : vector<16x64xf32> to vector<16x64xbf16>
    %cst_16 = arith.constant dense<0.000000e+00> : vector<16x64xf32>
    %30 = tpu.matmul %29, %28, %cst_16 {dimension_numbers = #tpu.dot_dimension_numbers<[1], [0], [0], [1], [0, 0, 1, 1], [], []>} : vector<16x64xbf16>, vector<64x64xbf16>, vector<16x64xf32> -> vector<16x64xf32>
    %31 = arith.addf %25, %30 : vector<16x64xf32>
    %32 = vector.extract_strided_slice %2 {offsets = [6, 0], sizes = [16, 64], strides = [1, 1]} : vector<28x64xf32> to vector<16x64xf32>
    %c5 = arith.constant 5 : index
    %c0_17 = arith.constant 0 : index
    %c0_18 = arith.constant 0 : index
    %33 = vector.load %arg2[%c5, %c0_17, %c0_18] : memref<9x64x64xbf16, #tpu.memory_space<vmem>>, vector<1x64x64xbf16>
    %34 = vector.shape_cast %33 : vector<1x64x64xbf16> to vector<64x64xbf16>
    %35 = arith.truncf %32 : vector<16x64xf32> to vector<16x64xbf16>
    %cst_19 = arith.constant dense<0.000000e+00> : vector<16x64xf32>
    %36 = tpu.matmul %35, %34, %cst_19 {dimension_numbers = #tpu.dot_dimension_numbers<[1], [0], [0], [1], [0, 0, 1, 1], [], []>} : vector<16x64xbf16>, vector<64x64xbf16>, vector<16x64xf32> -> vector<16x64xf32>
    %37 = arith.addf %31, %36 : vector<16x64xf32>
    %38 = vector.extract_strided_slice %2 {offsets = [8, 0], sizes = [16, 64], strides = [1, 1]} : vector<28x64xf32> to vector<16x64xf32>
    %c6 = arith.constant 6 : index
    %c0_20 = arith.constant 0 : index
    %c0_21 = arith.constant 0 : index
    %39 = vector.load %arg2[%c6, %c0_20, %c0_21] : memref<9x64x64xbf16, #tpu.memory_space<vmem>>, vector<1x64x64xbf16>
    %40 = vector.shape_cast %39 : vector<1x64x64xbf16> to vector<64x64xbf16>
    %41 = arith.truncf %38 : vector<16x64xf32> to vector<16x64xbf16>
    %cst_22 = arith.constant dense<0.000000e+00> : vector<16x64xf32>
    %42 = tpu.matmul %41, %40, %cst_22 {dimension_numbers = #tpu.dot_dimension_numbers<[1], [0], [0], [1], [0, 0, 1, 1], [], []>} : vector<16x64xbf16>, vector<64x64xbf16>, vector<16x64xf32> -> vector<16x64xf32>
    %43 = arith.addf %37, %42 : vector<16x64xf32>
    %44 = vector.extract_strided_slice %2 {offsets = [9, 0], sizes = [16, 64], strides = [1, 1]} : vector<28x64xf32> to vector<16x64xf32>
    %c7 = arith.constant 7 : index
    %c0_23 = arith.constant 0 : index
    %c0_24 = arith.constant 0 : index
    %45 = vector.load %arg2[%c7, %c0_23, %c0_24] : memref<9x64x64xbf16, #tpu.memory_space<vmem>>, vector<1x64x64xbf16>
    %46 = vector.shape_cast %45 : vector<1x64x64xbf16> to vector<64x64xbf16>
    %47 = arith.truncf %44 : vector<16x64xf32> to vector<16x64xbf16>
    %cst_25 = arith.constant dense<0.000000e+00> : vector<16x64xf32>
    %48 = tpu.matmul %47, %46, %cst_25 {dimension_numbers = #tpu.dot_dimension_numbers<[1], [0], [0], [1], [0, 0, 1, 1], [], []>} : vector<16x64xbf16>, vector<64x64xbf16>, vector<16x64xf32> -> vector<16x64xf32>
    %49 = arith.addf %43, %48 : vector<16x64xf32>
    %50 = vector.extract_strided_slice %2 {offsets = [10, 0], sizes = [16, 64], strides = [1, 1]} : vector<28x64xf32> to vector<16x64xf32>
    %c8 = arith.constant 8 : index
    %c0_26 = arith.constant 0 : index
    %c0_27 = arith.constant 0 : index
    %51 = vector.load %arg2[%c8, %c0_26, %c0_27] : memref<9x64x64xbf16, #tpu.memory_space<vmem>>, vector<1x64x64xbf16>
    %52 = vector.shape_cast %51 : vector<1x64x64xbf16> to vector<64x64xbf16>
    %53 = arith.truncf %50 : vector<16x64xf32> to vector<16x64xbf16>
    %cst_28 = arith.constant dense<0.000000e+00> : vector<16x64xf32>
    %54 = tpu.matmul %53, %52, %cst_28 {dimension_numbers = #tpu.dot_dimension_numbers<[1], [0], [0], [1], [0, 0, 1, 1], [], []>} : vector<16x64xbf16>, vector<64x64xbf16>, vector<16x64xf32> -> vector<16x64xf32>
    %55 = arith.addf %49, %54 : vector<16x64xf32>
    %c0_29 = arith.constant 0 : index
    %c0_30 = arith.constant 0 : index
    %56 = vector.load %arg3[%c0_29, %c0_30] : memref<1x64xf32, #tpu.memory_space<vmem>>, vector<1x64xf32>
    %57 = vector.broadcast %56 : vector<1x64xf32> to vector<16x64xf32>
    %58 = arith.addf %55, %57 : vector<16x64xf32>
    %cst_31 = arith.constant 0.000000e+00 : f32
    %59 = vector.broadcast %cst_31 : f32 to vector<16x64xf32>
    %60 = arith.maximumf %58, %59 : vector<16x64xf32>
    %c15_i32 = arith.constant 15 : i32
    %61 = tpu.dynamic_rotate %60 by %c15_i32 dim 0 : vector<16x64xf32>, i32 -> vector<16x64xf32>
    %62 = arith.maximumf %60, %61 : vector<16x64xf32>
    %c12_i32 = arith.constant 12 : i32
    %63 = tpu.dynamic_rotate %62 by %c12_i32 dim 0 : vector<16x64xf32>, i32 -> vector<16x64xf32>
    %64 = arith.maximumf %62, %63 : vector<16x64xf32>
    %65 = arith.truncf %64 : vector<16x64xf32> to vector<16x64xbf16>
    %c0_32 = arith.constant 0 : index
    %c0_33 = arith.constant 0 : index
    %c0_34 = arith.constant 0 : index
    %66 = vector.load %arg4[%c0_32, %c0_33, %c0_34] : memref<1x16x64xbf16, #tpu.memory_space<vmem>>, vector<1x16x64xbf16>
    %67 = vector.shape_cast %66 : vector<1x16x64xbf16> to vector<16x64xbf16>
    %68 = vector.shape_cast %65 : vector<16x64xbf16> to vector<1x16x64xbf16>
    tpu.vector_store %arg4[%c0_32, %c0_33, %c0_34], %68 {strides = array<i32>} : memref<1x16x64xbf16, #tpu.memory_space<vmem>>, vector<1x16x64xbf16>,
    return
  }
  func.func @transform_0(%arg0: i32) -> (i32, i32, i32) {
    %c0_i32 = arith.constant 0 : i32
    %c0_i32_0 = arith.constant 0 : i32
    %c0_i32_1 = arith.constant 0 : i32
    return %arg0, %c0_i32, %c0_i32_0 : i32, i32, i32
  }
  func.func @transform_1(%arg0: i32) -> (i32, i32, i32) {
    %c0_i32 = arith.constant 0 : i32
    %c0_i32_0 = arith.constant 0 : i32
    %c0_i32_1 = arith.constant 0 : i32
    %c0_i32_2 = arith.constant 0 : i32
    return %c0_i32, %c0_i32_0, %c0_i32_1 : i32, i32, i32
  }
  func.func @transform_2(%arg0: i32) -> (i32, i32) {
    %c0_i32 = arith.constant 0 : i32
    %c0_i32_0 = arith.constant 0 : i32
    %c0_i32_1 = arith.constant 0 : i32
    return %c0_i32, %c0_i32_0 : i32, i32
  }
  func.func @transform_3(%arg0: i32) -> (i32, i32, i32) {
    %c0_i32 = arith.constant 0 : i32
    %c0_i32_0 = arith.constant 0 : i32
    %c0_i32_1 = arith.constant 0 : i32
    return %arg0, %c0_i32, %c0_i32_0 : i32, i32, i32
  }
}

module attributes {stable_mosaic.version = 11 : i64} {
  func.func @_fc_kernel(%arg0: i32, %arg1: i32, %arg2: memref<2x128xbf16, #tpu.memory_space<vmem>>, %arg3: memref<128x128xbf16, #tpu.memory_space<vmem>>, %arg4: memref<1x128xf32, #tpu.memory_space<vmem>>, %arg5: memref<2x128xbf16, #tpu.memory_space<vmem>>, %arg6: memref<2x128xf32, #tpu.memory_space<vmem>>) attributes {dimension_semantics = [#tpu.dimension_semantics<parallel>, #tpu.dimension_semantics<arbitrary>], iteration_bounds = array<i64: 2, 1>, scalar_prefetch = 0 : i64, scratch_operands = 1 : i64, tpu.core_type = #tpu.core_type<tc>, window_params = [{transform_indices = @transform_0, window_bounds = array<i64: 2, 128>}, {transform_indices = @transform_1, window_bounds = array<i64: 128, 128>}, {transform_indices = @transform_2, window_bounds = array<i64: 1, 128>}, {transform_indices = @transform_3, window_bounds = array<i64: 2, 128>}]} {
    %c0_i32 = arith.constant 0 : i32
    %0 = arith.cmpi eq, %arg1, %c0_i32 : i32
    %1 = arith.extui %0 : i1 to i32
    %c0_i32_0 = arith.constant 0 : i32
    %2 = arith.cmpi ne, %1, %c0_i32_0 : i32
    scf.if %2 {
      %cst_10 = arith.constant 0.000000e+00 : f32
      %12 = vector.broadcast %cst_10 : f32 to vector<2x128xf32>
      %c0_11 = arith.constant 0 : index
      %c0_12 = arith.constant 0 : index
      %13 = vector.load %arg6[%c0_11, %c0_12] : memref<2x128xf32, #tpu.memory_space<vmem>>, vector<2x128xf32>
      tpu.vector_store %arg6[%c0_11, %c0_12], %12 {strides = array<i32>} : memref<2x128xf32, #tpu.memory_space<vmem>>, vector<2x128xf32>,
    } else {
    }
    %c0 = arith.constant 0 : index
    %c0_1 = arith.constant 0 : index
    %3 = vector.load %arg6[%c0, %c0_1] : memref<2x128xf32, #tpu.memory_space<vmem>>, vector<2x128xf32>
    %c0_2 = arith.constant 0 : index
    %c0_3 = arith.constant 0 : index
    %4 = vector.load %arg2[%c0_2, %c0_3] : memref<2x128xbf16, #tpu.memory_space<vmem>>, vector<2x128xbf16>
    %c0_4 = arith.constant 0 : index
    %c0_5 = arith.constant 0 : index
    %5 = vector.load %arg3[%c0_4, %c0_5] : memref<128x128xbf16, #tpu.memory_space<vmem>>, vector<128x128xbf16>
    %cst = arith.constant dense<0.000000e+00> : vector<2x128xf32>
    %6 = tpu.matmul %4, %5, %cst {dimension_numbers = #tpu.dot_dimension_numbers<[1], [0], [0], [1], [0, 0, 1, 1], [], []>} : vector<2x128xbf16>, vector<128x128xbf16>, vector<2x128xf32> -> vector<2x128xf32>
    %7 = arith.addf %3, %6 : vector<2x128xf32>
    %c0_6 = arith.constant 0 : index
    %c0_7 = arith.constant 0 : index
    %8 = vector.load %arg6[%c0_6, %c0_7] : memref<2x128xf32, #tpu.memory_space<vmem>>, vector<2x128xf32>
    tpu.vector_store %arg6[%c0_6, %c0_7], %7 {strides = array<i32>} : memref<2x128xf32, #tpu.memory_space<vmem>>, vector<2x128xf32>,
    %c0_i32_8 = arith.constant 0 : i32
    %9 = arith.cmpi eq, %arg1, %c0_i32_8 : i32
    %10 = arith.extui %9 : i1 to i32
    %c0_i32_9 = arith.constant 0 : i32
    %11 = arith.cmpi ne, %10, %c0_i32_9 : i32
    scf.if %11 {
      %c0_10 = arith.constant 0 : index
      %c0_11 = arith.constant 0 : index
      %12 = vector.load %arg6[%c0_10, %c0_11] : memref<2x128xf32, #tpu.memory_space<vmem>>, vector<2x128xf32>
      %c0_12 = arith.constant 0 : index
      %c0_13 = arith.constant 0 : index
      %13 = vector.load %arg4[%c0_12, %c0_13] : memref<1x128xf32, #tpu.memory_space<vmem>>, vector<1x128xf32>
      %14 = vector.broadcast %13 : vector<1x128xf32> to vector<2x128xf32>
      %15 = arith.addf %12, %14 : vector<2x128xf32>
      %cst_14 = arith.constant 0.000000e+00 : f32
      %16 = vector.broadcast %cst_14 : f32 to vector<2x128xf32>
      %17 = arith.maximumf %15, %16 : vector<2x128xf32>
      %18 = arith.truncf %17 : vector<2x128xf32> to vector<2x128xbf16>
      %c0_15 = arith.constant 0 : index
      %c0_16 = arith.constant 0 : index
      %19 = vector.load %arg5[%c0_15, %c0_16] : memref<2x128xbf16, #tpu.memory_space<vmem>>, vector<2x128xbf16>
      tpu.vector_store %arg5[%c0_15, %c0_16], %18 {strides = array<i32>} : memref<2x128xbf16, #tpu.memory_space<vmem>>, vector<2x128xbf16>,
    } else {
    }
    return
  }
  func.func @transform_0(%arg0: i32, %arg1: i32) -> (i32, i32) {
    %c0_i32 = arith.constant 0 : i32
    %c0_i32_0 = arith.constant 0 : i32
    return %c0_i32, %arg1 : i32, i32
  }
  func.func @transform_1(%arg0: i32, %arg1: i32) -> (i32, i32) {
    %c0_i32 = arith.constant 0 : i32
    return %arg1, %arg0 : i32, i32
  }
  func.func @transform_2(%arg0: i32, %arg1: i32) -> (i32, i32) {
    %c0_i32 = arith.constant 0 : i32
    %c0_i32_0 = arith.constant 0 : i32
    return %c0_i32, %arg0 : i32, i32
  }
  func.func @transform_3(%arg0: i32, %arg1: i32) -> (i32, i32) {
    %c0_i32 = arith.constant 0 : i32
    %c0_i32_0 = arith.constant 0 : i32
    return %c0_i32, %arg0 : i32, i32
  }
}

module attributes {stable_mosaic.version = 11 : i64} {
  func.func @_fc_kernel(%arg0: i32, %arg1: i32, %arg2: memref<2x128xbf16, #tpu.memory_space<vmem>>, %arg3: memref<128x128xbf16, #tpu.memory_space<vmem>>, %arg4: memref<1x128xf32, #tpu.memory_space<vmem>>, %arg5: memref<2x128xbf16, #tpu.memory_space<vmem>>, %arg6: memref<2x128xf32, #tpu.memory_space<vmem>>) attributes {dimension_semantics = [#tpu.dimension_semantics<parallel>, #tpu.dimension_semantics<arbitrary>], iteration_bounds = array<i64: 2, 2>, scalar_prefetch = 0 : i64, scratch_operands = 1 : i64, tpu.core_type = #tpu.core_type<tc>, window_params = [{transform_indices = @transform_0, window_bounds = array<i64: 2, 128>}, {transform_indices = @transform_1, window_bounds = array<i64: 128, 128>}, {transform_indices = @transform_2, window_bounds = array<i64: 1, 128>}, {transform_indices = @transform_3, window_bounds = array<i64: 2, 128>}]} {
    %c0_i32 = arith.constant 0 : i32
    %0 = arith.cmpi eq, %arg1, %c0_i32 : i32
    %1 = arith.extui %0 : i1 to i32
    %c0_i32_0 = arith.constant 0 : i32
    %2 = arith.cmpi ne, %1, %c0_i32_0 : i32
    scf.if %2 {
      %cst_9 = arith.constant 0.000000e+00 : f32
      %12 = vector.broadcast %cst_9 : f32 to vector<2x128xf32>
      %c0_10 = arith.constant 0 : index
      %c0_11 = arith.constant 0 : index
      %13 = vector.load %arg6[%c0_10, %c0_11] : memref<2x128xf32, #tpu.memory_space<vmem>>, vector<2x128xf32>
      tpu.vector_store %arg6[%c0_10, %c0_11], %12 {strides = array<i32>} : memref<2x128xf32, #tpu.memory_space<vmem>>, vector<2x128xf32>,
    } else {
    }
    %c0 = arith.constant 0 : index
    %c0_1 = arith.constant 0 : index
    %3 = vector.load %arg6[%c0, %c0_1] : memref<2x128xf32, #tpu.memory_space<vmem>>, vector<2x128xf32>
    %c0_2 = arith.constant 0 : index
    %c0_3 = arith.constant 0 : index
    %4 = vector.load %arg2[%c0_2, %c0_3] : memref<2x128xbf16, #tpu.memory_space<vmem>>, vector<2x128xbf16>
    %c0_4 = arith.constant 0 : index
    %c0_5 = arith.constant 0 : index
    %5 = vector.load %arg3[%c0_4, %c0_5] : memref<128x128xbf16, #tpu.memory_space<vmem>>, vector<128x128xbf16>
    %cst = arith.constant dense<0.000000e+00> : vector<2x128xf32>
    %6 = tpu.matmul %4, %5, %cst {dimension_numbers = #tpu.dot_dimension_numbers<[1], [0], [0], [1], [0, 0, 1, 1], [], []>} : vector<2x128xbf16>, vector<128x128xbf16>, vector<2x128xf32> -> vector<2x128xf32>
    %7 = arith.addf %3, %6 : vector<2x128xf32>
    %c0_6 = arith.constant 0 : index
    %c0_7 = arith.constant 0 : index
    %8 = vector.load %arg6[%c0_6, %c0_7] : memref<2x128xf32, #tpu.memory_space<vmem>>, vector<2x128xf32>
    tpu.vector_store %arg6[%c0_6, %c0_7], %7 {strides = array<i32>} : memref<2x128xf32, #tpu.memory_space<vmem>>, vector<2x128xf32>,
    %c1_i32 = arith.constant 1 : i32
    %9 = arith.cmpi eq, %arg1, %c1_i32 : i32
    %10 = arith.extui %9 : i1 to i32
    %c0_i32_8 = arith.constant 0 : i32
    %11 = arith.cmpi ne, %10, %c0_i32_8 : i32
    scf.if %11 {
      %c0_9 = arith.constant 0 : index
      %c0_10 = arith.constant 0 : index
      %12 = vector.load %arg6[%c0_9, %c0_10] : memref<2x128xf32, #tpu.memory_space<vmem>>, vector<2x128xf32>
      %c0_11 = arith.constant 0 : index
      %c0_12 = arith.constant 0 : index
      %13 = vector.load %arg4[%c0_11, %c0_12] : memref<1x128xf32, #tpu.memory_space<vmem>>, vector<1x128xf32>
      %14 = vector.broadcast %13 : vector<1x128xf32> to vector<2x128xf32>
      %15 = arith.addf %12, %14 : vector<2x128xf32>
      %cst_13 = arith.constant 0.000000e+00 : f32
      %16 = vector.broadcast %cst_13 : f32 to vector<2x128xf32>
      %17 = arith.maximumf %15, %16 : vector<2x128xf32>
      %18 = arith.truncf %17 : vector<2x128xf32> to vector<2x128xbf16>
      %c0_14 = arith.constant 0 : index
      %c0_15 = arith.constant 0 : index
      %19 = vector.load %arg5[%c0_14, %c0_15] : memref<2x128xbf16, #tpu.memory_space<vmem>>, vector<2x128xbf16>
      tpu.vector_store %arg5[%c0_14, %c0_15], %18 {strides = array<i32>} : memref<2x128xbf16, #tpu.memory_space<vmem>>, vector<2x128xbf16>,
    } else {
    }
    return
  }
  func.func @transform_0(%arg0: i32, %arg1: i32) -> (i32, i32) {
    %c0_i32 = arith.constant 0 : i32
    %c0_i32_0 = arith.constant 0 : i32
    return %c0_i32, %arg1 : i32, i32
  }
  func.func @transform_1(%arg0: i32, %arg1: i32) -> (i32, i32) {
    %c0_i32 = arith.constant 0 : i32
    return %arg1, %arg0 : i32, i32
  }
  func.func @transform_2(%arg0: i32, %arg1: i32) -> (i32, i32) {
    %c0_i32 = arith.constant 0 : i32
    %c0_i32_0 = arith.constant 0 : i32
    return %c0_i32, %arg0 : i32, i32
  }
  func.func @transform_3(%arg0: i32, %arg1: i32) -> (i32, i32) {
    %c0_i32 = arith.constant 0 : i32
    %c0_i32_0 = arith.constant 0 : i32
    return %c0_i32, %arg0 : i32, i32
  }
}

module attributes {stable_mosaic.version = 11 : i64} {
  func.func @_fc_kernel(%arg0: i32, %arg1: i32, %arg2: memref<2x128xbf16, #tpu.memory_space<vmem>>, %arg3: memref<128x128xbf16, #tpu.memory_space<vmem>>, %arg4: memref<1x128xf32, #tpu.memory_space<vmem>>, %arg5: memref<2x128xbf16, #tpu.memory_space<vmem>>, %arg6: memref<2x128xf32, #tpu.memory_space<vmem>>) attributes {dimension_semantics = [#tpu.dimension_semantics<parallel>, #tpu.dimension_semantics<arbitrary>], iteration_bounds = array<i64: 1, 2>, scalar_prefetch = 0 : i64, scratch_operands = 1 : i64, tpu.core_type = #tpu.core_type<tc>, window_params = [{transform_indices = @transform_0, window_bounds = array<i64: 2, 128>}, {transform_indices = @transform_1, window_bounds = array<i64: 128, 128>}, {transform_indices = @transform_2, window_bounds = array<i64: 1, 128>}, {transform_indices = @transform_3, window_bounds = array<i64: 2, 128>}]} {
    %c0_i32 = arith.constant 0 : i32
    %0 = arith.cmpi eq, %arg1, %c0_i32 : i32
    %1 = arith.extui %0 : i1 to i32
    %c0_i32_0 = arith.constant 0 : i32
    %2 = arith.cmpi ne, %1, %c0_i32_0 : i32
    scf.if %2 {
      %cst_9 = arith.constant 0.000000e+00 : f32
      %12 = vector.broadcast %cst_9 : f32 to vector<2x128xf32>
      %c0_10 = arith.constant 0 : index
      %c0_11 = arith.constant 0 : index
      %13 = vector.load %arg6[%c0_10, %c0_11] : memref<2x128xf32, #tpu.memory_space<vmem>>, vector<2x128xf32>
      tpu.vector_store %arg6[%c0_10, %c0_11], %12 {strides = array<i32>} : memref<2x128xf32, #tpu.memory_space<vmem>>, vector<2x128xf32>,
    } else {
    }
    %c0 = arith.constant 0 : index
    %c0_1 = arith.constant 0 : index
    %3 = vector.load %arg6[%c0, %c0_1] : memref<2x128xf32, #tpu.memory_space<vmem>>, vector<2x128xf32>
    %c0_2 = arith.constant 0 : index
    %c0_3 = arith.constant 0 : index
    %4 = vector.load %arg2[%c0_2, %c0_3] : memref<2x128xbf16, #tpu.memory_space<vmem>>, vector<2x128xbf16>
    %c0_4 = arith.constant 0 : index
    %c0_5 = arith.constant 0 : index
    %5 = vector.load %arg3[%c0_4, %c0_5] : memref<128x128xbf16, #tpu.memory_space<vmem>>, vector<128x128xbf16>
    %cst = arith.constant dense<0.000000e+00> : vector<2x128xf32>
    %6 = tpu.matmul %4, %5, %cst {dimension_numbers = #tpu.dot_dimension_numbers<[1], [0], [0], [1], [0, 0, 1, 1], [], []>} : vector<2x128xbf16>, vector<128x128xbf16>, vector<2x128xf32> -> vector<2x128xf32>
    %7 = arith.addf %3, %6 : vector<2x128xf32>
    %c0_6 = arith.constant 0 : index
    %c0_7 = arith.constant 0 : index
    %8 = vector.load %arg6[%c0_6, %c0_7] : memref<2x128xf32, #tpu.memory_space<vmem>>, vector<2x128xf32>
    tpu.vector_store %arg6[%c0_6, %c0_7], %7 {strides = array<i32>} : memref<2x128xf32, #tpu.memory_space<vmem>>, vector<2x128xf32>,
    %c1_i32 = arith.constant 1 : i32
    %9 = arith.cmpi eq, %arg1, %c1_i32 : i32
    %10 = arith.extui %9 : i1 to i32
    %c0_i32_8 = arith.constant 0 : i32
    %11 = arith.cmpi ne, %10, %c0_i32_8 : i32
    scf.if %11 {
      %c0_9 = arith.constant 0 : index
      %c0_10 = arith.constant 0 : index
      %12 = vector.load %arg6[%c0_9, %c0_10] : memref<2x128xf32, #tpu.memory_space<vmem>>, vector<2x128xf32>
      %c0_11 = arith.constant 0 : index
      %c0_12 = arith.constant 0 : index
      %13 = vector.load %arg4[%c0_11, %c0_12] : memref<1x128xf32, #tpu.memory_space<vmem>>, vector<1x128xf32>
      %14 = vector.broadcast %13 : vector<1x128xf32> to vector<2x128xf32>
      %15 = arith.addf %12, %14 : vector<2x128xf32>
      %cst_13 = arith.constant 0.000000e+00 : f32
      %16 = vector.broadcast %cst_13 : f32 to vector<2x128xf32>
      %17 = arith.maximumf %15, %16 : vector<2x128xf32>
      %18 = arith.truncf %17 : vector<2x128xf32> to vector<2x128xbf16>
      %c0_14 = arith.constant 0 : index
      %c0_15 = arith.constant 0 : index
      %19 = vector.load %arg5[%c0_14, %c0_15] : memref<2x128xbf16, #tpu.memory_space<vmem>>, vector<2x128xbf16>
      tpu.vector_store %arg5[%c0_14, %c0_15], %18 {strides = array<i32>} : memref<2x128xbf16, #tpu.memory_space<vmem>>, vector<2x128xbf16>,
    } else {
    }
    return
  }
  func.func @transform_0(%arg0: i32, %arg1: i32) -> (i32, i32) {
    %c0_i32 = arith.constant 0 : i32
    %c0_i32_0 = arith.constant 0 : i32
    return %c0_i32, %arg1 : i32, i32
  }
  func.func @transform_1(%arg0: i32, %arg1: i32) -> (i32, i32) {
    %c0_i32 = arith.constant 0 : i32
    return %arg1, %arg0 : i32, i32
  }
  func.func @transform_2(%arg0: i32, %arg1: i32) -> (i32, i32) {
    %c0_i32 = arith.constant 0 : i32
    %c0_i32_0 = arith.constant 0 : i32
    return %c0_i32, %arg0 : i32, i32
  }
  func.func @transform_3(%arg0: i32, %arg1: i32) -> (i32, i32) {
    %c0_i32 = arith.constant 0 : i32
    %c0_i32_0 = arith.constant 0 : i32
    return %c0_i32, %arg0 : i32, i32
  }
}

</mosaic_0001>

<llo_original>
// kernel: vggish_linear_forward.10
$region0: #{vggish_linear_forward.10}
  #allocation0 [shape = 'u32[]', space=smem, size = 0x4, offset = 0x4, fixed_abs, tag = 'smem constant byte address 0x4 - core index']
  #allocation1 [shape = 'u32[72,128]{1,0:T(1,128)}', space=vmem, size = 0x9000, scoped, tag = 'internal scratch']
  %s0 = inlined_call_operand.vmem [shape: bf16[2,190,8], index: 0, kind: input, shape index: {}]
  %s1 = inlined_call_operand.vmem [shape: bf16[9,8,16], index: 1, kind: input, shape index: {}]
  %s2 = inlined_call_operand.vmem [shape: f32[1,16], index: 2, kind: input, shape index: {}]
  %s3 = inlined_call_operand.vmem [shape: bf16[2,160,16], index: 3, kind: output, shape index: {}]
  %s4 = sld [smem:[#allocation0]]
  $region45: #{vggish_linear_forward.10} parent=0
    _
  %s6 = ssub.s32 1, %s4
  %s7 = scalar_select 0, %s6, %s4
  loop: start=0, step=1, limit=4
  $region2: #{vggish_linear_forward.10} parent=0 // loop_pre_header
    _
  $region3: #{vggish_linear_forward.10} parent=0 // loop_header
    %s9 = sphi 0, %s13
    %p10 = scmp.ge.s32.totalorder %s9, 4
    %s19 = sphi 0, %s21
    %s22 = sphi 0, %s19
    %s23 = sphi 0, %s22
    %s39 = sphi 0, %s23
    %s43 = sphi 0, %s43
    %s45 = sphi 0, %s43
    %s46 = sphi 0, %s45
    %s60 = sphi 0, %s46
    %s64 = sphi 0, %s64
    %s66 = sphi 0, %s64
    %s67 = sphi 0, %s66
    %s81 = sphi 0, %s67
    %s87 = sphi 0, %s89
    %s90 = sphi 0, %s87
    %s91 = sphi 0, %s90
    %s107 = sphi 0, %s91
  $region4: #{vggish_linear_forward.10} parent=0 // loop_header_branch
    %12 = sbr.rel (%p10) target = $region8
  $region5: #{vggish_linear_forward.10} parent=0 // loop_body
    %s14 = ssub.s32 %s9, 1
    %s15 = ssub.s32 %s9, 2
    %s16 = sadd.s32 %s9, 1
    %s17 = ssub.s32 %s9, %s16
    %p18 = scmp.eq.s32.totalorder %s17, 0
    %s20 = sadd.s32 %s19, 1
    %s21 = scalar_select %p18, %s19, %s20
    %p24 = pneg %p18
    %p25 = scmp.eq.s32.totalorder %s9, 1
    %p26 = por %p24, %p25
    %p27 = scmp.ne.s32.totalorder %s19, %s22
    %p28 = scmp.eq.s32.totalorder %s9, 0
    %p29 = por %p27, %p28
    %p30 = scmp.ne.s32.totalorder %s19, %s22
    %p31 = scmp.eq.s32.totalorder %s14, 1
    %p32 = por %p30, %p31
    %p33 = scmp.ne.s32.totalorder %s22, %s23
    %p34 = scmp.eq.s32.totalorder %s14, 0
    %p35 = por %p33, %p34
    %p36 = scmp.ne.s32.totalorder %s22, %s23
    %p37 = scmp.eq.s32.totalorder %s15, 1
    %p38 = por %p36, %p37
    %p40 = scmp.ne.s32.totalorder %s23, %s39
    %p41 = scmp.eq.s32.totalorder %s15, 0
    %p42 = por %p40, %p41
    %s44 = sadd.s32 %s43, 1
    %p47 = scmp.eq.s32.totalorder %s9, 1
    %p48 = scmp.ne.s32.totalorder %s43, %s45
    %p49 = scmp.eq.s32.totalorder %s9, 0
    %p50 = por %p48, %p49
    %p51 = scmp.ne.s32.totalorder %s43, %s45
    %p52 = scmp.eq.s32.totalorder %s14, 1
    %p53 = por %p51, %p52
    %p54 = scmp.ne.s32.totalorder %s45, %s46
    %p55 = scmp.eq.s32.totalorder %s14, 0
    %p56 = por %p54, %p55
    %p57 = scmp.ne.s32.totalorder %s45, %s46
    %p58 = scmp.eq.s32.totalorder %s15, 1
    %p59 = por %p57, %p58
    %p61 = scmp.ne.s32.totalorder %s46, %s60
    %p62 = scmp.eq.s32.totalorder %s15, 0
    %p63 = por %p61, %p62
    %s65 = sadd.s32 %s64, 1
    %p68 = scmp.eq.s32.totalorder %s9, 1
    %p69 = scmp.ne.s32.totalorder %s64, %s66
    %p70 = scmp.eq.s32.totalorder %s9, 0
    %p71 = por %p69, %p70
    %p72 = scmp.ne.s32.totalorder %s64, %s66
    %p73 = scmp.eq.s32.totalorder %s14, 1
    %p74 = por %p72, %p73
    %p75 = scmp.ne.s32.totalorder %s66, %s67
    %p76 = scmp.eq.s32.totalorder %s14, 0
    %p77 = por %p75, %p76
    %p78 = scmp.ne.s32.totalorder %s66, %s67
    %p79 = scmp.eq.s32.totalorder %s15, 1
    %p80 = por %p78, %p79
    %p82 = scmp.ne.s32.totalorder %s67, %s81
    %p83 = scmp.eq.s32.totalorder %s15, 0
    %p84 = por %p82, %p83
    %s85 = ssub.s32 %s9, %s16
    %p86 = scmp.eq.s32.totalorder %s85, 0
    %s88 = sadd.s32 %s87, 1
    %s89 = scalar_select %p86, %s87, %s88
    %p92 = pneg %p86
    %p93 = scmp.eq.s32.totalorder %s9, 1
    %p94 = por %p92, %p93
    %p95 = scmp.ne.s32.totalorder %s87, %s90
    %p96 = scmp.eq.s32.totalorder %s9, 0
    %p97 = por %p95, %p96
    %p98 = scmp.ne.s32.totalorder %s87, %s90
    %p99 = scmp.eq.s32.totalorder %s14, 1
    %p100 = por %p98, %p99
    %p101 = scmp.ne.s32.totalorder %s90, %s91
    %p102 = scmp.eq.s32.totalorder %s14, 0
    %p103 = por %p101, %p102
    %p104 = scmp.ne.s32.totalorder %s90, %s91
    %p105 = scmp.eq.s32.totalorder %s15, 1
    %p106 = por %p104, %p105
    %p108 = scmp.ne.s32.totalorder %s91, %s107
    %p109 = scmp.eq.s32.totalorder %s15, 0
    %p110 = por %p108, %p109
    %p111 = scmp.le.s32.totalorder 1, %s9
    %p112 = scmp.lt.s32.totalorder %s9, 3
    %p113 = pnand %p111, %p112
    %p114 = pneg %p113
    // Predicated region
    $region9: #{vggish_linear_forward.10} parent=5 // pred_check
      _
    $region10: #{vggish_linear_forward.10} parent=5 // pred_check_branch
      %116 = sbr.rel (%p113) target = $region12
    $region11: #{vggish_linear_forward.10} parent=5 // pred_region
      %s117 = ssub.s32 %s9, 1
      // Predicated region
      $region13: #{vggish_linear_forward.10} parent=11 // pred_check
        %p118 = pneg %p56
      $region14: #{vggish_linear_forward.10} parent=11 // pred_check_branch
        %120 = sbr.rel (%p118) target = $region16
      $region15: #{vggish_linear_forward.10} parent=11 // pred_region
        _
      $region16: #{vggish_linear_forward.10} parent=11 // pred_fallthru
        _
      // Predicated region
      $region17: #{vggish_linear_forward.10} parent=11 // pred_check
        %p121 = pneg %p77
      $region18: #{vggish_linear_forward.10} parent=11 // pred_check_branch
        %123 = sbr.rel (%p121) target = $region20
      $region19: #{vggish_linear_forward.10} parent=11 // pred_region
        _
      $region20: #{vggish_linear_forward.10} parent=11 // pred_fallthru
        _
    $region12: #{vggish_linear_forward.10} parent=5 // pred_fallthru
      _
    %p124 = scmp.lt.s32.totalorder %s9, 2
    // Predicated region
    $region21: #{vggish_linear_forward.10} parent=5 // pred_check
      %p125 = pneg %p124
    $region22: #{vggish_linear_forward.10} parent=5 // pred_check_branch
      %127 = sbr.rel (%p125) target = $region24
    $region23: #{vggish_linear_forward.10} parent=5 // pred_region
      // Predicated region
      $region25: #{vggish_linear_forward.10} parent=23 // pred_check
        %p128 = pneg %p29
      $region26: #{vggish_linear_forward.10} parent=23 // pred_check_branch
        %130 = sbr.rel (%p128) target = $region28
      $region27: #{vggish_linear_forward.10} parent=23 // pred_region
        %p131 = scmp.lt.s32.totalorder %s9, 1
        %s132 = scalar_select %p131, %s9, 1
        %s133 = smul.addr %s132, 24
        %s134 = smul.addr %s133, 4
        %s135 = scalar_lea.vmem %s0, %s134
      $region28: #{vggish_linear_forward.10} parent=23 // pred_fallthru
        _
    $region24: #{vggish_linear_forward.10} parent=5 // pred_fallthru
      _
    %p136 = scmp.le.s32.totalorder 1, %s9
    %p137 = scmp.lt.s32.totalorder %s9, 3
    %p138 = pnand %p136, %p137
    %p139 = pneg %p138
    // Predicated region
    $region29: #{vggish_linear_forward.10} parent=5 // pred_check
      _
    $region30: #{vggish_linear_forward.10} parent=5 // pred_check_branch
      %141 = sbr.rel (%p138) target = $region32
    $region31: #{vggish_linear_forward.10} parent=5 // pred_region
      %s142 = ssub.s32 %s9, 1
      %p143 = scmp.lt.s32.totalorder %s14, 1
      %s144 = scalar_select %p143, %s14, 1
      %s145 = smul.addr %s144, 24
      %s146 = smul.addr %s145, 4
      %s147 = scalar_lea.vmem %s0, %s146
      %p148 = pneg %p35
      %p149 = pneg %p32
      %p150 = pneg %p56
      %p151 = pneg %p53
      %p152 = pneg %p77
      %p153 = pneg %p74
      %p154 = pneg %p103
      %p155 = pneg %p100
      %p156 = scmp.lt.s32.totalorder %s14, 1
      %s157 = scalar_select %p156, %s14, 1
      %s158 = smul.addr %s157, 20
      %s159 = smul.addr %s158, 4
      %s160 = scalar_lea.vmem %s3, %s159
      %p161 = scmp.lt.s32.totalorder %s14, 1
      %s162 = scalar_select %p161, %s14, 1
      %s163 = smul.addr %s162, 24
      %s164 = smul.addr %s163, 4
      %s165 = scalar_lea.vmem %s0, %s164
      %p166 = scmp.lt.s32.totalorder %s14, 1
      %s167 = scalar_select %p166, %s14, 1
      %s168 = smul.addr %s167, 20
      %s169 = smul.addr %s168, 4
      %s170 = scalar_lea.vmem %s3, %s169
      %v172 = vld [vmem:[%s165] sm:$0xf]
      %v173 = vld [vmem:[%s165 + $0x4] sm:$0xf]
      %v174 = vld [vmem:[%s165 + $0x8] sm:$0xf]
      %v175 = vld [vmem:[%s165 + $0xc] sm:$0xf]
      %v176 = vld [vmem:[%s165 + $0x10] sm:$0xf]
      %v177 = vld [vmem:[%s165 + $0x14] sm:$0xf]
      %v178 = vld [vmem:[%s165 + $0x18] sm:$0xf]
      %v179 = vld [vmem:[%s165 + $0x1c] sm:$0xf]
      %v180 = vld [vmem:[%s165 + $0x20] sm:$0xf]
      %v181 = vld [vmem:[%s165 + $0x24] sm:$0xf]
      %v182 = vld [vmem:[%s165 + $0x28] sm:$0xf]
      %v183 = vld [vmem:[%s165 + $0x2c] sm:$0xf]
      %v184 = vld [vmem:[%s165 + $0x30] sm:$0xf]
      %v185 = vld [vmem:[%s165 + $0x34] sm:$0xf]
      %v186 = vld [vmem:[%s165 + $0x38] sm:$0xf]
      %v187 = vld [vmem:[%s165 + $0x3c] sm:$0xf]
      %v188 = vld [vmem:[%s165 + $0x40] sm:$0xf]
      %v189 = vld [vmem:[%s165 + $0x44] sm:$0xf]
      %v190 = vld [vmem:[%s165 + $0x48] sm:$0xf]
      %v191 = vld [vmem:[%s165 + $0x4c] sm:$0xf]
      %v192 = vld [vmem:[%s165 + $0x50] sm:$0xf]
      %v193 = vld [vmem:[%s165 + $0x54] sm:$0xf]
      %v194 = vld [vmem:[%s165 + $0x58] sm:$0xf]
      %v195 = vunpack.c.l.bf16 %v172
      %v196 = vunpack.c.l.bf16 %v173
      %v197 = vunpack.c.l.bf16 %v174
      %v198 = vunpack.c.l.bf16 %v175
      %v199 = vunpack.c.l.bf16 %v176
      %v200 = vunpack.c.l.bf16 %v177
      %v201 = vunpack.c.l.bf16 %v178
      %v202 = vunpack.c.l.bf16 %v179
      %v203 = vunpack.c.l.bf16 %v180
      %v204 = vunpack.c.l.bf16 %v181
      %v205 = vunpack.c.l.bf16 %v182
      %v206 = vunpack.c.l.bf16 %v183
      %v207 = vunpack.c.l.bf16 %v184
      %v208 = vunpack.c.l.bf16 %v185
      %v209 = vunpack.c.l.bf16 %v186
      %v210 = vunpack.c.l.bf16 %v187
      %v211 = vunpack.c.l.bf16 %v188
      %v212 = vunpack.c.l.bf16 %v189
      %v213 = vunpack.c.l.bf16 %v190
      %v214 = vunpack.c.l.bf16 %v191
      %v215 = vunpack.c.l.bf16 %v192
      %v216 = vunpack.c.l.bf16 %v193
      %v217 = vunpack.c.l.bf16 %v194
      %v218 = vld [vmem:[%s1] sm:$0xf]
      %v219 = vpack.c.bf16 %v196, %v195
      %v220 = vpack.c.bf16 %v198, %v197
      %v221 = vpack.c.bf16 %v200, %v199
      %v222 = vpack.c.bf16 %v202, %v201
      %v223 = vpack.c.bf16 %v204, %v203
      %v224 = vpack.c.bf16 %v206, %v205
      %v225 = vpack.c.bf16 %v208, %v207
      %v226 = vpack.c.bf16 %v210, %v209
      %v227 = vpack.c.bf16 %v212, %v211
      %v228 = vpack.c.bf16 %v214, %v213
      %s229 = scalar_lea.vmem %s1, 4
      %v230 = vld [vmem:[%s229] sm:$0xf]
      %v231 = vpack.c.bf16 %v215, %v215
      %vm232 = vsmask.f32 7424
      %v234 = vshrl.u32 %v219, 16
      %v236 = vshll.u32 %v219, 16
      %v238 = vrot.slane %v236, 1
      %v239 = vor.u32 %v234, %v238
      %v241 = vshll.u32 %v220, 16
      %v243 = vrot.slane %v241, 1
      %v244 = vsel %vm232, %v239, %v243
      %v245 = vshrl.u32 %v220, 16
      %v247 = vor.u32 %v245, %v243
      %v249 = vshll.u32 %v221, 16
      %v251 = vrot.slane %v249, 1
      %v252 = vsel %vm232, %v247, %v251
      %v253 = vshrl.u32 %v221, 16
      %v255 = vor.u32 %v253, %v251
      %v257 = vshll.u32 %v222, 16
      %v259 = vrot.slane %v257, 1
      %v260 = vsel %vm232, %v255, %v259
      %v261 = vshrl.u32 %v222, 16
      %v263 = vor.u32 %v261, %v259
      %v265 = vshll.u32 %v223, 16
      %v267 = vrot.slane %v265, 1
      %v268 = vsel %vm232, %v263, %v267
      %v269 = vshrl.u32 %v223, 16
      %v271 = vor.u32 %v269, %v267
      %v273 = vshll.u32 %v224, 16
      %v275 = vrot.slane %v273, 1
      %v276 = vsel %vm232, %v271, %v275
      %v277 = vshrl.u32 %v224, 16
      %v279 = vor.u32 %v277, %v275
      %v281 = vshll.u32 %v225, 16
      %v283 = vrot.slane %v281, 1
      %v284 = vsel %vm232, %v279, %v283
      %v285 = vshrl.u32 %v225, 16
      %v287 = vor.u32 %v285, %v283
      %v289 = vshll.u32 %v226, 16
      %v291 = vrot.slane %v289, 1
      %v292 = vsel %vm232, %v287, %v291
      %v293 = vshrl.u32 %v226, 16
      %v295 = vor.u32 %v293, %v291
      %v297 = vshll.u32 %v227, 16
      %v299 = vrot.slane %v297, 1
      %v300 = vsel %vm232, %v295, %v299
      %v301 = vshrl.u32 %v227, 16
      %v303 = vor.u32 %v301, %v299
      %v305 = vshll.u32 %v228, 16
      %v307 = vrot.slane %v305, 1
      %v308 = vsel %vm232, %v303, %v307
      %v309 = vshrl.u32 %v228, 16
      %v311 = vor.u32 %v309, %v307
      %v313 = vshll.u32 %v231, 16
      %v315 = vrot.slane %v313, 1
      %v316 = vsel %vm232, %v311, %v315
      %vm317 = vcmask 64512
      %v319 = vsel %vm317, %v244, 0
      %v322 = vsel %vm317, %v252, 0
      %v325 = vsel %vm317, %v260, 0
      %v328 = vsel %vm317, %v268, 0
      %v331 = vsel %vm317, %v276, 0
      %v334 = vsel %vm317, %v284, 0
      %v337 = vsel %vm317, %v292, 0
      %v340 = vsel %vm317, %v300, 0
      %v343 = vsel %vm317, %v308, 0
      %v346 = vsel %vm317, %v316, 0
      %vm348 = vcmask 1043456
      %v350 = vsel %vm348, %v230, 0
      %352 = vmatpush.bf16.msra.mxu0 0
      %353 = vmatpush.bf16.msra.mxu0 0
      %354 = vmatpush.bf16.msra.mxu0 0
      %355 = vmatpush.bf16.msra.mxu0 0
      %356 = vmatpush.bf16.msra.mxu0 0
      %357 = vmatpush.bf16.msra.mxu0 0
      %358 = vmatpush.bf16.msra.mxu0 0
      %359 = vmatpush.bf16.msra.mxu0 %v350
      %360 = vmatmul.bf16.gmra.mxu0 %v319
      %v361 = vpop.f32.mrf.mxu0
      %v362 = vadd.f32 0.0, %v361
      %v363 = vpop.f32.mrf.mxu0
      %v364 = vadd.f32 0.0, %v363
      %365 = vmatmul.bf16.gmra.mxu0 %v322
      %v366 = vpop.f32.mrf.mxu0
      %v367 = vadd.f32 0.0, %v366
      %v368 = vpop.f32.mrf.mxu0
      %v369 = vadd.f32 0.0, %v368
      %370 = vmatmul.bf16.gmra.mxu0 %v325
      %v371 = vpop.f32.mrf.mxu0
      %v372 = vadd.f32 0.0, %v371
      %v373 = vpop.f32.mrf.mxu0
      %v374 = vadd.f32 0.0, %v373
      %375 = vmatmul.bf16.gmra.mxu0 %v328
      %v376 = vpop.f32.mrf.mxu0
      %v377 = vadd.f32 0.0, %v376
      %v378 = vpop.f32.mrf.mxu0
      %v379 = vadd.f32 0.0, %v378
      %380 = vmatmul.bf16.gmra.mxu0 %v331
      %v381 = vpop.f32.mrf.mxu0
      %v382 = vadd.f32 0.0, %v381
      %v383 = vpop.f32.mrf.mxu0
      %v384 = vadd.f32 0.0, %v383
      %385 = vmatmul.bf16.gmra.mxu0 %v334
      %v386 = vpop.f32.mrf.mxu0
      %v387 = vadd.f32 0.0, %v386
      %v388 = vpop.f32.mrf.mxu0
      %v389 = vadd.f32 0.0, %v388
      %390 = vmatmul.bf16.gmra.mxu0 %v337
      %v391 = vpop.f32.mrf.mxu0
      %v392 = vadd.f32 0.0, %v391
      %v393 = vpop.f32.mrf.mxu0
      %v394 = vadd.f32 0.0, %v393
      %395 = vmatmul.bf16.gmra.mxu0 %v340
      %v396 = vpop.f32.mrf.mxu0
      %v397 = vadd.f32 0.0, %v396
      %v398 = vpop.f32.mrf.mxu0
      %v399 = vadd.f32 0.0, %v398
      %400 = vmatmul.bf16.gmra.mxu0 %v343
      %v401 = vpop.f32.mrf.mxu0
      %v402 = vadd.f32 0.0, %v401
      %v403 = vpop.f32.mrf.mxu0
      %v404 = vadd.f32 0.0, %v403
      %405 = vmatmul.bf16.gmra.mxu0 %v346
      %v406 = vpop.f32.mrf.mxu0
      %v407 = vadd.f32 0.0, %v406
      %v408 = vpop.f32.mrf.mxu0
      %v409 = vadd.f32 0.0, %v408
      %410 = vdwg.mxu0
      %v411 = vsel %vm317, %v219, 0
      %v413 = vsel %vm317, %v220, 0
      %v415 = vsel %vm317, %v221, 0
      %v417 = vsel %vm317, %v222, 0
      %v419 = vsel %vm317, %v223, 0
      %v421 = vsel %vm317, %v224, 0
      %v423 = vsel %vm317, %v225, 0
      %v425 = vsel %vm317, %v226, 0
      %v427 = vsel %vm317, %v227, 0
      %v429 = vsel %vm317, %v228, 0
      %v432 = vsel %vm348, %v218, 0
      %434 = vmatpush.bf16.msra.mxu0 0
      %435 = vmatpush.bf16.msra.mxu0 0
      %436 = vmatpush.bf16.msra.mxu0 0
      %437 = vmatpush.bf16.msra.mxu0 0
      %438 = vmatpush.bf16.msra.mxu0 0
      %439 = vmatpush.bf16.msra.mxu0 0
      %440 = vmatpush.bf16.msra.mxu0 0
      %441 = vmatpush.bf16.msra.mxu0 %v432
      %442 = vmatmul.bf16.gmra.mxu0 %v411
      %v443 = vpop.f32.mrf.mxu0
      %v444 = vadd.f32 %v362, %v443
      %v445 = vpop.f32.mrf.mxu0
      %v446 = vadd.f32 %v364, %v445
      %447 = vmatmul.bf16.gmra.mxu0 %v413
      %v448 = vpop.f32.mrf.mxu0
      %v449 = vadd.f32 %v367, %v448
      %v450 = vpop.f32.mrf.mxu0
      %v451 = vadd.f32 %v369, %v450
      %452 = vmatmul.bf16.gmra.mxu0 %v415
      %v453 = vpop.f32.mrf.mxu0
      %v454 = vadd.f32 %v372, %v453
      %v455 = vpop.f32.mrf.mxu0
      %v456 = vadd.f32 %v374, %v455
      %457 = vmatmul.bf16.gmra.mxu0 %v417
      %v458 = vpop.f32.mrf.mxu0
      %v459 = vadd.f32 %v377, %v458
      %v460 = vpop.f32.mrf.mxu0
      %v461 = vadd.f32 %v379, %v460
      %462 = vmatmul.bf16.gmra.mxu0 %v419
      %v463 = vpop.f32.mrf.mxu0
      %v464 = vadd.f32 %v382, %v463
      %v465 = vpop.f32.mrf.mxu0
      %v466 = vadd.f32 %v384, %v465
      %467 = vmatmul.bf16.gmra.mxu0 %v421
      %v468 = vpop.f32.mrf.mxu0
      %v469 = vadd.f32 %v387, %v468
      %v470 = vpop.f32.mrf.mxu0
      %v471 = vadd.f32 %v389, %v470
      %472 = vmatmul.bf16.gmra.mxu0 %v423
      %v473 = vpop.f32.mrf.mxu0
      %v474 = vadd.f32 %v392, %v473
      %v475 = vpop.f32.mrf.mxu0
      %v476 = vadd.f32 %v394, %v475
      %477 = vmatmul.bf16.gmra.mxu0 %v425
      %v478 = vpop.f32.mrf.mxu0
      %v479 = vadd.f32 %v397, %v478
      %v480 = vpop.f32.mrf.mxu0
      %v481 = vadd.f32 %v399, %v480
      %482 = vmatmul.bf16.gmra.mxu0 %v427
      %v483 = vpop.f32.mrf.mxu0
      %v484 = vadd.f32 %v402, %v483
      %v485 = vpop.f32.mrf.mxu0
      %v486 = vadd.f32 %v404, %v485
      %487 = vmatmul.bf16.gmra.mxu0 %v429
      %v488 = vpop.f32.mrf.mxu0
      %v489 = vadd.f32 %v407, %v488
      %v490 = vpop.f32.mrf.mxu0
      %v491 = vadd.f32 %v409, %v490
      %492 = vdwg.mxu0
      %s493 = scalar_lea.vmem %s1, 8
      %v494 = vld [vmem:[%s493] sm:$0xf]
      %vm506 = vcmask 1046528
      %v507 = vrot.slane %v219, 1
      %v508 = vrot.slane %v220, 1
      %v509 = vsel %vm506, %v507, %v508
      %v510 = vrot.slane %v221, 1
      %v511 = vsel %vm506, %v508, %v510
      %v512 = vrot.slane %v222, 1
      %v513 = vsel %vm506, %v510, %v512
      %v514 = vrot.slane %v223, 1
      %v515 = vsel %vm506, %v512, %v514
      %v516 = vrot.slane %v224, 1
      %v517 = vsel %vm506, %v514, %v516
      %v518 = vrot.slane %v225, 1
      %v519 = vsel %vm506, %v516, %v518
      %v520 = vrot.slane %v226, 1
      %v521 = vsel %vm506, %v518, %v520
      %v522 = vrot.slane %v227, 1
      %v523 = vsel %vm506, %v520, %v522
      %v524 = vrot.slane %v228, 1
      %v525 = vsel %vm506, %v522, %v524
      %v526 = vrot.slane %v231, 1
      %v527 = vsel %vm506, %v524, %v526
      %v529 = vsel %vm317, %v509, 0
      %v532 = vsel %vm317, %v511, 0
      %v535 = vsel %vm317, %v513, 0
      %v538 = vsel %vm317, %v515, 0
      %v541 = vsel %vm317, %v517, 0
      %v544 = vsel %vm317, %v519, 0
      %v547 = vsel %vm317, %v521, 0
      %v550 = vsel %vm317, %v523, 0
      %v553 = vsel %vm317, %v525, 0
      %v556 = vsel %vm317, %v527, 0
      %v559 = vsel %vm348, %v494, 0
      %561 = vmatpush.bf16.msra.mxu0 0
      %562 = vmatpush.bf16.msra.mxu0 0
      %563 = vmatpush.bf16.msra.mxu0 0
      %564 = vmatpush.bf16.msra.mxu0 0
      %565 = vmatpush.bf16.msra.mxu0 0
      %566 = vmatpush.bf16.msra.mxu0 0
      %567 = vmatpush.bf16.msra.mxu0 0
      %568 = vmatpush.bf16.msra.mxu0 %v559
      %569 = vmatmul.bf16.gmra.mxu0 %v529
      %v570 = vpop.f32.mrf.mxu0
      %v571 = vadd.f32 0.0, %v570
      %v572 = vpop.f32.mrf.mxu0
      %v573 = vadd.f32 0.0, %v572
      %574 = vmatmul.bf16.gmra.mxu0 %v532
      %v575 = vpop.f32.mrf.mxu0
      %v576 = vadd.f32 0.0, %v575
      %v577 = vpop.f32.mrf.mxu0
      %v578 = vadd.f32 0.0, %v577
      %579 = vmatmul.bf16.gmra.mxu0 %v535
      %v580 = vpop.f32.mrf.mxu0
      %v581 = vadd.f32 0.0, %v580
      %v582 = vpop.f32.mrf.mxu0
      %v583 = vadd.f32 0.0, %v582
      %584 = vmatmul.bf16.gmra.mxu0 %v538
      %v585 = vpop.f32.mrf.mxu0
      %v586 = vadd.f32 0.0, %v585
      %v587 = vpop.f32.mrf.mxu0
      %v588 = vadd.f32 0.0, %v587
      %589 = vmatmul.bf16.gmra.mxu0 %v541
      %v590 = vpop.f32.mrf.mxu0
      %v591 = vadd.f32 0.0, %v590
      %v592 = vpop.f32.mrf.mxu0
      %v593 = vadd.f32 0.0, %v592
      %594 = vmatmul.bf16.gmra.mxu0 %v544
      %v595 = vpop.f32.mrf.mxu0
      %v596 = vadd.f32 0.0, %v595
      %v597 = vpop.f32.mrf.mxu0
      %v598 = vadd.f32 0.0, %v597
      %599 = vmatmul.bf16.gmra.mxu0 %v547
      %v600 = vpop.f32.mrf.mxu0
      %v601 = vadd.f32 0.0, %v600
      %v602 = vpop.f32.mrf.mxu0
      %v603 = vadd.f32 0.0, %v602
      %604 = vmatmul.bf16.gmra.mxu0 %v550
      %v605 = vpop.f32.mrf.mxu0
      %v606 = vadd.f32 0.0, %v605
      %v607 = vpop.f32.mrf.mxu0
      %v608 = vadd.f32 0.0, %v607
      %609 = vmatmul.bf16.gmra.mxu0 %v553
      %v610 = vpop.f32.mrf.mxu0
      %v611 = vadd.f32 0.0, %v610
      %v612 = vpop.f32.mrf.mxu0
      %v613 = vadd.f32 0.0, %v612
      %614 = vmatmul.bf16.gmra.mxu0 %v556
      %v615 = vpop.f32.mrf.mxu0
      %v616 = vadd.f32 0.0, %v615
      %v617 = vpop.f32.mrf.mxu0
      %v618 = vadd.f32 0.0, %v617
      %619 = vdwg.mxu0
      %v620 = vadd.f32 %v444, %v571
      %v621 = vadd.f32 %v446, %v573
      %v622 = vadd.f32 %v449, %v576
      %v623 = vadd.f32 %v451, %v578
      %v624 = vadd.f32 %v454, %v581
      %v625 = vadd.f32 %v456, %v583
      %v626 = vadd.f32 %v459, %v586
      %v627 = vadd.f32 %v461, %v588
      %v628 = vadd.f32 %v464, %v591
      %v629 = vadd.f32 %v466, %v593
      %v630 = vadd.f32 %v469, %v596
      %v631 = vadd.f32 %v471, %v598
      %v632 = vadd.f32 %v474, %v601
      %v633 = vadd.f32 %v476, %v603
      %v634 = vadd.f32 %v479, %v606
      %v635 = vadd.f32 %v481, %v608
      %v636 = vadd.f32 %v484, %v611
      %v637 = vadd.f32 %v486, %v613
      %v638 = vadd.f32 %v489, %v616
      %v639 = vadd.f32 %v491, %v618
      %s640 = scalar_lea.vmem %s1, 12
      %v641 = vld [vmem:[%s640] sm:$0xf]
      %v642 = vpack.c.bf16 %v197, %v196
      %v643 = vpack.c.bf16 %v199, %v198
      %v644 = vpack.c.bf16 %v201, %v200
      %v645 = vpack.c.bf16 %v203, %v202
      %v646 = vpack.c.bf16 %v205, %v204
      %v647 = vpack.c.bf16 %v207, %v206
      %v648 = vpack.c.bf16 %v209, %v208
      %v649 = vpack.c.bf16 %v211, %v210
      %v650 = vpack.c.bf16 %v213, %v212
      %v651 = vpack.c.bf16 %v215, %v214
      %v652 = vpack.c.bf16 %v216, %v216
      %v664 = vrot.slane %v642, 1
      %v665 = vrot.slane %v643, 1
      %v666 = vsel %vm506, %v664, %v665
      %v667 = vrot.slane %v644, 1
      %v668 = vsel %vm506, %v665, %v667
      %v669 = vrot.slane %v645, 1
      %v670 = vsel %vm506, %v667, %v669
      %v671 = vrot.slane %v646, 1
      %v672 = vsel %vm506, %v669, %v671
      %v673 = vrot.slane %v647, 1
      %v674 = vsel %vm506, %v671, %v673
      %v675 = vrot.slane %v648, 1
      %v676 = vsel %vm506, %v673, %v675
      %v677 = vrot.slane %v649, 1
      %v678 = vsel %vm506, %v675, %v677
      %v679 = vrot.slane %v650, 1
      %v680 = vsel %vm506, %v677, %v679
      %v681 = vrot.slane %v651, 1
      %v682 = vsel %vm506, %v679, %v681
      %v683 = vrot.slane %v652, 1
      %v684 = vsel %vm506, %v681, %v683
      %v686 = vsel %vm317, %v666, 0
      %v689 = vsel %vm317, %v668, 0
      %v692 = vsel %vm317, %v670, 0
      %v695 = vsel %vm317, %v672, 0
      %v698 = vsel %vm317, %v674, 0
      %v701 = vsel %vm317, %v676, 0
      %v704 = vsel %vm317, %v678, 0
      %v707 = vsel %vm317, %v680, 0
      %v710 = vsel %vm317, %v682, 0
      %v713 = vsel %vm317, %v684, 0
      %v716 = vsel %vm348, %v641, 0
      %718 = vmatpush.bf16.msra.mxu0 0
      %719 = vmatpush.bf16.msra.mxu0 0
      %720 = vmatpush.bf16.msra.mxu0 0
      %721 = vmatpush.bf16.msra.mxu0 0
      %722 = vmatpush.bf16.msra.mxu0 0
      %723 = vmatpush.bf16.msra.mxu0 0
      %724 = vmatpush.bf16.msra.mxu0 0
      %725 = vmatpush.bf16.msra.mxu0 %v716
      %726 = vmatmul.bf16.gmra.mxu0 %v686
      %v727 = vpop.f32.mrf.mxu0
      %v728 = vadd.f32 0.0, %v727
      %v729 = vpop.f32.mrf.mxu0
      %v730 = vadd.f32 0.0, %v729
      %731 = vmatmul.bf16.gmra.mxu0 %v689
      %v732 = vpop.f32.mrf.mxu0
      %v733 = vadd.f32 0.0, %v732
      %v734 = vpop.f32.mrf.mxu0
      %v735 = vadd.f32 0.0, %v734
      %736 = vmatmul.bf16.gmra.mxu0 %v692
      %v737 = vpop.f32.mrf.mxu0
      %v738 = vadd.f32 0.0, %v737
      %v739 = vpop.f32.mrf.mxu0
      %v740 = vadd.f32 0.0, %v739
      %741 = vmatmul.bf16.gmra.mxu0 %v695
      %v742 = vpop.f32.mrf.mxu0
      %v743 = vadd.f32 0.0, %v742
      %v744 = vpop.f32.mrf.mxu0
      %v745 = vadd.f32 0.0, %v744
      %746 = vmatmul.bf16.gmra.mxu0 %v698
      %v747 = vpop.f32.mrf.mxu0
      %v748 = vadd.f32 0.0, %v747
      %v749 = vpop.f32.mrf.mxu0
      %v750 = vadd.f32 0.0, %v749
      %751 = vmatmul.bf16.gmra.mxu0 %v701
      %v752 = vpop.f32.mrf.mxu0
      %v753 = vadd.f32 0.0, %v752
      %v754 = vpop.f32.mrf.mxu0
      %v755 = vadd.f32 0.0, %v754
      %756 = vmatmul.bf16.gmra.mxu0 %v704
      %v757 = vpop.f32.mrf.mxu0
      %v758 = vadd.f32 0.0, %v757
      %v759 = vpop.f32.mrf.mxu0
      %v760 = vadd.f32 0.0, %v759
      %761 = vmatmul.bf16.gmra.mxu0 %v707
      %v762 = vpop.f32.mrf.mxu0
      %v763 = vadd.f32 0.0, %v762
      %v764 = vpop.f32.mrf.mxu0
      %v765 = vadd.f32 0.0, %v764
      %766 = vmatmul.bf16.gmra.mxu0 %v710
      %v767 = vpop.f32.mrf.mxu0
      %v768 = vadd.f32 0.0, %v767
      %v769 = vpop.f32.mrf.mxu0
      %v770 = vadd.f32 0.0, %v769
      %771 = vmatmul.bf16.gmra.mxu0 %v713
      %v772 = vpop.f32.mrf.mxu0
      %v773 = vadd.f32 0.0, %v772
      %v774 = vpop.f32.mrf.mxu0
      %v775 = vadd.f32 0.0, %v774
      %776 = vdwg.mxu0
      %v777 = vadd.f32 %v620, %v728
      %v778 = vadd.f32 %v621, %v730
      %v779 = vadd.f32 %v622, %v733
      %v780 = vadd.f32 %v623, %v735
      %v781 = vadd.f32 %v624, %v738
      %v782 = vadd.f32 %v625, %v740
      %v783 = vadd.f32 %v626, %v743
      %v784 = vadd.f32 %v627, %v745
      %v785 = vadd.f32 %v628, %v748
      %v786 = vadd.f32 %v629, %v750
      %v787 = vadd.f32 %v630, %v753
      %v788 = vadd.f32 %v631, %v755
      %v789 = vadd.f32 %v632, %v758
      %v790 = vadd.f32 %v633, %v760
      %v791 = vadd.f32 %v634, %v763
      %v792 = vadd.f32 %v635, %v765
      %v793 = vadd.f32 %v636, %v768
      %v794 = vadd.f32 %v637, %v770
      %v795 = vadd.f32 %v638, %v773
      %v796 = vadd.f32 %v639, %v775
      %s797 = scalar_lea.vmem %s1, 16
      %v798 = vld [vmem:[%s797] sm:$0xf]
      %vm799 = vsmask.f32 6400
      %v801 = vshrl.u32 %v642, 16
      %v803 = vrot.slane %v801, 1
      %v804 = vshll.u32 %v642, 16
      %v806 = vrot.slane %v804, 2
      %v807 = vor.u32 %v803, %v806
      %v809 = vshrl.u32 %v643, 16
      %v811 = vrot.slane %v809, 1
      %v812 = vshll.u32 %v643, 16
      %v814 = vrot.slane %v812, 2
      %v815 = vor.u32 %v811, %v814
      %v816 = vsel %vm799, %v807, %v815
      %v818 = vshrl.u32 %v644, 16
      %v820 = vrot.slane %v818, 1
      %v821 = vshll.u32 %v644, 16
      %v823 = vrot.slane %v821, 2
      %v824 = vor.u32 %v820, %v823
      %v825 = vsel %vm799, %v815, %v824
      %v827 = vshrl.u32 %v645, 16
      %v829 = vrot.slane %v827, 1
      %v830 = vshll.u32 %v645, 16
      %v832 = vrot.slane %v830, 2
      %v833 = vor.u32 %v829, %v832
      %v834 = vsel %vm799, %v824, %v833
      %v836 = vshrl.u32 %v646, 16
      %v838 = vrot.slane %v836, 1
      %v839 = vshll.u32 %v646, 16
      %v841 = vrot.slane %v839, 2
      %v842 = vor.u32 %v838, %v841
      %v843 = vsel %vm799, %v833, %v842
      %v845 = vshrl.u32 %v647, 16
      %v847 = vrot.slane %v845, 1
      %v848 = vshll.u32 %v647, 16
      %v850 = vrot.slane %v848, 2
      %v851 = vor.u32 %v847, %v850
      %v852 = vsel %vm799, %v842, %v851
      %v854 = vshrl.u32 %v648, 16
      %v856 = vrot.slane %v854, 1
      %v857 = vshll.u32 %v648, 16
      %v859 = vrot.slane %v857, 2
      %v860 = vor.u32 %v856, %v859
      %v861 = vsel %vm799, %v851, %v860
      %v863 = vshrl.u32 %v649, 16
      %v865 = vrot.slane %v863, 1
      %v866 = vshll.u32 %v649, 16
      %v868 = vrot.slane %v866, 2
      %v869 = vor.u32 %v865, %v868
      %v870 = vsel %vm799, %v860, %v869
      %v872 = vshrl.u32 %v650, 16
      %v874 = vrot.slane %v872, 1
      %v875 = vshll.u32 %v650, 16
      %v877 = vrot.slane %v875, 2
      %v878 = vor.u32 %v874, %v877
      %v879 = vsel %vm799, %v869, %v878
      %v881 = vshrl.u32 %v651, 16
      %v883 = vrot.slane %v881, 1
      %v884 = vshll.u32 %v651, 16
      %v886 = vrot.slane %v884, 2
      %v887 = vor.u32 %v883, %v886
      %v888 = vsel %vm799, %v878, %v887
      %v890 = vshrl.u32 %v652, 16
      %v892 = vrot.slane %v890, 1
      %v893 = vshll.u32 %v652, 16
      %v895 = vrot.slane %v893, 2
      %v896 = vor.u32 %v892, %v895
      %v897 = vsel %vm799, %v887, %v896
      %v899 = vsel %vm317, %v816, 0
      %v902 = vsel %vm317, %v825, 0
      %v905 = vsel %vm317, %v834, 0
      %v908 = vsel %vm317, %v843, 0
      %v911 = vsel %vm317, %v852, 0
      %v914 = vsel %vm317, %v861, 0
      %v917 = vsel %vm317, %v870, 0
      %v920 = vsel %vm317, %v879, 0
      %v923 = vsel %vm317, %v888, 0
      %v926 = vsel %vm317, %v897, 0
      %v929 = vsel %vm348, %v798, 0
      %931 = vmatpush.bf16.msra.mxu0 0
      %932 = vmatpush.bf16.msra.mxu0 0
      %933 = vmatpush.bf16.msra.mxu0 0
      %934 = vmatpush.bf16.msra.mxu0 0
      %935 = vmatpush.bf16.msra.mxu0 0
      %936 = vmatpush.bf16.msra.mxu0 0
      %937 = vmatpush.bf16.msra.mxu0 0
      %938 = vmatpush.bf16.msra.mxu0 %v929
      %939 = vmatmul.bf16.gmra.mxu0 %v899
      %v940 = vpop.f32.mrf.mxu0
      %v941 = vadd.f32 0.0, %v940
      %v942 = vpop.f32.mrf.mxu0
      %v943 = vadd.f32 0.0, %v942
      %944 = vmatmul.bf16.gmra.mxu0 %v902
      %v945 = vpop.f32.mrf.mxu0
      %v946 = vadd.f32 0.0, %v945
      %v947 = vpop.f32.mrf.mxu0
      %v948 = vadd.f32 0.0, %v947
      %949 = vmatmul.bf16.gmra.mxu0 %v905
      %v950 = vpop.f32.mrf.mxu0
      %v951 = vadd.f32 0.0, %v950
      %v952 = vpop.f32.mrf.mxu0
      %v953 = vadd.f32 0.0, %v952
      %954 = vmatmul.bf16.gmra.mxu0 %v908
      %v955 = vpop.f32.mrf.mxu0
      %v956 = vadd.f32 0.0, %v955
      %v957 = vpop.f32.mrf.mxu0
      %v958 = vadd.f32 0.0, %v957
      %959 = vmatmul.bf16.gmra.mxu0 %v911
      %v960 = vpop.f32.mrf.mxu0
      %v961 = vadd.f32 0.0, %v960
      %v962 = vpop.f32.mrf.mxu0
      %v963 = vadd.f32 0.0, %v962
      %964 = vmatmul.bf16.gmra.mxu0 %v914
      %v965 = vpop.f32.mrf.mxu0
      %v966 = vadd.f32 0.0, %v965
      %v967 = vpop.f32.mrf.mxu0
      %v968 = vadd.f32 0.0, %v967
      %969 = vmatmul.bf16.gmra.mxu0 %v917
      %v970 = vpop.f32.mrf.mxu0
      %v971 = vadd.f32 0.0, %v970
      %v972 = vpop.f32.mrf.mxu0
      %v973 = vadd.f32 0.0, %v972
      %974 = vmatmul.bf16.gmra.mxu0 %v920
      %v975 = vpop.f32.mrf.mxu0
      %v976 = vadd.f32 0.0, %v975
      %v977 = vpop.f32.mrf.mxu0
      %v978 = vadd.f32 0.0, %v977
      %979 = vmatmul.bf16.gmra.mxu0 %v923
      %v980 = vpop.f32.mrf.mxu0
      %v981 = vadd.f32 0.0, %v980
      %v982 = vpop.f32.mrf.mxu0
      %v983 = vadd.f32 0.0, %v982
      %984 = vmatmul.bf16.gmra.mxu0 %v926
      %v985 = vpop.f32.mrf.mxu0
      %v986 = vadd.f32 0.0, %v985
      %v987 = vpop.f32.mrf.mxu0
      %v988 = vadd.f32 0.0, %v987
      %989 = vdwg.mxu0
      %v990 = vadd.f32 %v777, %v941
      %v991 = vadd.f32 %v778, %v943
      %v992 = vadd.f32 %v779, %v946
      %v993 = vadd.f32 %v780, %v948
      %v994 = vadd.f32 %v781, %v951
      %v995 = vadd.f32 %v782, %v953
      %v996 = vadd.f32 %v783, %v956
      %v997 = vadd.f32 %v784, %v958
      %v998 = vadd.f32 %v785, %v961
      %v999 = vadd.f32 %v786, %v963
      %v1000 = vadd.f32 %v787, %v966
      %v1001 = vadd.f32 %v788, %v968
      %v1002 = vadd.f32 %v789, %v971
      %v1003 = vadd.f32 %v790, %v973
      %v1004 = vadd.f32 %v791, %v976
      %v1005 = vadd.f32 %v792, %v978
      %v1006 = vadd.f32 %v793, %v981
      %v1007 = vadd.f32 %v794, %v983
      %v1008 = vadd.f32 %v795, %v986
      %v1009 = vadd.f32 %v796, %v988
      %s1010 = scalar_lea.vmem %s1, 20
      %v1011 = vld [vmem:[%s1010] sm:$0xf]
      %vm1012 = vcmask 1045504
      %v1013 = vrot.slane %v642, 2
      %v1014 = vrot.slane %v643, 2
      %v1015 = vsel %vm1012, %v1013, %v1014
      %v1016 = vrot.slane %v644, 2
      %v1017 = vsel %vm1012, %v1014, %v1016
      %v1018 = vrot.slane %v645, 2
      %v1019 = vsel %vm1012, %v1016, %v1018
      %v1020 = vrot.slane %v646, 2
      %v1021 = vsel %vm1012, %v1018, %v1020
      %v1022 = vrot.slane %v647, 2
      %v1023 = vsel %vm1012, %v1020, %v1022
      %v1024 = vrot.slane %v648, 2
      %v1025 = vsel %vm1012, %v1022, %v1024
      %v1026 = vrot.slane %v649, 2
      %v1027 = vsel %vm1012, %v1024, %v1026
      %v1028 = vrot.slane %v650, 2
      %v1029 = vsel %vm1012, %v1026, %v1028
      %v1030 = vrot.slane %v651, 2
      %v1031 = vsel %vm1012, %v1028, %v1030
      %v1032 = vrot.slane %v652, 2
      %v1033 = vsel %vm1012, %v1030, %v1032
      %v1035 = vsel %vm317, %v1015, 0
      %v1038 = vsel %vm317, %v1017, 0
      %v1041 = vsel %vm317, %v1019, 0
      %v1044 = vsel %vm317, %v1021, 0
      %v1047 = vsel %vm317, %v1023, 0
      %v1050 = vsel %vm317, %v1025, 0
      %v1053 = vsel %vm317, %v1027, 0
      %v1056 = vsel %vm317, %v1029, 0
      %v1059 = vsel %vm317, %v1031, 0
      %v1062 = vsel %vm317, %v1033, 0
      %v1065 = vsel %vm348, %v1011, 0
      %1067 = vmatpush.bf16.msra.mxu0 0
      %1068 = vmatpush.bf16.msra.mxu0 0
      %1069 = vmatpush.bf16.msra.mxu0 0
      %1070 = vmatpush.bf16.msra.mxu0 0
      %1071 = vmatpush.bf16.msra.mxu0 0
      %1072 = vmatpush.bf16.msra.mxu0 0
      %1073 = vmatpush.bf16.msra.mxu0 0
      %1074 = vmatpush.bf16.msra.mxu0 %v1065
      %1075 = vmatmul.bf16.gmra.mxu0 %v1035
      %v1076 = vpop.f32.mrf.mxu0
      %v1077 = vadd.f32 0.0, %v1076
      %v1078 = vpop.f32.mrf.mxu0
      %v1079 = vadd.f32 0.0, %v1078
      %1080 = vmatmul.bf16.gmra.mxu0 %v1038
      %v1081 = vpop.f32.mrf.mxu0
      %v1082 = vadd.f32 0.0, %v1081
      %v1083 = vpop.f32.mrf.mxu0
      %v1084 = vadd.f32 0.0, %v1083
      %1085 = vmatmul.bf16.gmra.mxu0 %v1041
      %v1086 = vpop.f32.mrf.mxu0
      %v1087 = vadd.f32 0.0, %v1086
      %v1088 = vpop.f32.mrf.mxu0
      %v1089 = vadd.f32 0.0, %v1088
      %1090 = vmatmul.bf16.gmra.mxu0 %v1044
      %v1091 = vpop.f32.mrf.mxu0
      %v1092 = vadd.f32 0.0, %v1091
      %v1093 = vpop.f32.mrf.mxu0
      %v1094 = vadd.f32 0.0, %v1093
      %1095 = vmatmul.bf16.gmra.mxu0 %v1047
      %v1096 = vpop.f32.mrf.mxu0
      %v1097 = vadd.f32 0.0, %v1096
      %v1098 = vpop.f32.mrf.mxu0
      %v1099 = vadd.f32 0.0, %v1098
      %1100 = vmatmul.bf16.gmra.mxu0 %v1050
      %v1101 = vpop.f32.mrf.mxu0
      %v1102 = vadd.f32 0.0, %v1101
      %v1103 = vpop.f32.mrf.mxu0
      %v1104 = vadd.f32 0.0, %v1103
      %1105 = vmatmul.bf16.gmra.mxu0 %v1053
      %v1106 = vpop.f32.mrf.mxu0
      %v1107 = vadd.f32 0.0, %v1106
      %v1108 = vpop.f32.mrf.mxu0
      %v1109 = vadd.f32 0.0, %v1108
      %1110 = vmatmul.bf16.gmra.mxu0 %v1056
      %v1111 = vpop.f32.mrf.mxu0
      %v1112 = vadd.f32 0.0, %v1111
      %v1113 = vpop.f32.mrf.mxu0
      %v1114 = vadd.f32 0.0, %v1113
      %1115 = vmatmul.bf16.gmra.mxu0 %v1059
      %v1116 = vpop.f32.mrf.mxu0
      %v1117 = vadd.f32 0.0, %v1116
      %v1118 = vpop.f32.mrf.mxu0
      %v1119 = vadd.f32 0.0, %v1118
      %1120 = vmatmul.bf16.gmra.mxu0 %v1062
      %v1121 = vpop.f32.mrf.mxu0
      %v1122 = vadd.f32 0.0, %v1121
      %v1123 = vpop.f32.mrf.mxu0
      %v1124 = vadd.f32 0.0, %v1123
      %1125 = vdwg.mxu0
      %v1126 = vadd.f32 %v990, %v1077
      %v1127 = vadd.f32 %v991, %v1079
      %v1128 = vadd.f32 %v992, %v1082
      %v1129 = vadd.f32 %v993, %v1084
      %v1130 = vadd.f32 %v994, %v1087
      %v1131 = vadd.f32 %v995, %v1089
      %v1132 = vadd.f32 %v996, %v1092
      %v1133 = vadd.f32 %v997, %v1094
      %v1134 = vadd.f32 %v998, %v1097
      %v1135 = vadd.f32 %v999, %v1099
      %v1136 = vadd.f32 %v1000, %v1102
      %v1137 = vadd.f32 %v1001, %v1104
      %v1138 = vadd.f32 %v1002, %v1107
      %v1139 = vadd.f32 %v1003, %v1109
      %v1140 = vadd.f32 %v1004, %v1112
      %v1141 = vadd.f32 %v1005, %v1114
      %v1142 = vadd.f32 %v1006, %v1117
      %v1143 = vadd.f32 %v1007, %v1119
      %v1144 = vadd.f32 %v1008, %v1122
      %v1145 = vadd.f32 %v1009, %v1124
      %s1146 = scalar_lea.vmem %s1, 24
      %v1147 = vld [vmem:[%s1146] sm:$0xf]
      %v1148 = vpack.c.bf16 %v216, %v215
      %v1149 = vpack.c.bf16 %v217, %v217
      %v1152 = vrot.slane %v220, 2
      %v1153 = vrot.slane %v221, 2
      %v1154 = vsel %vm1012, %v1152, %v1153
      %v1155 = vrot.slane %v222, 2
      %v1156 = vsel %vm1012, %v1153, %v1155
      %v1157 = vrot.slane %v223, 2
      %v1158 = vsel %vm1012, %v1155, %v1157
      %v1159 = vrot.slane %v224, 2
      %v1160 = vsel %vm1012, %v1157, %v1159
      %v1161 = vrot.slane %v225, 2
      %v1162 = vsel %vm1012, %v1159, %v1161
      %v1163 = vrot.slane %v226, 2
      %v1164 = vsel %vm1012, %v1161, %v1163
      %v1165 = vrot.slane %v227, 2
      %v1166 = vsel %vm1012, %v1163, %v1165
      %v1167 = vrot.slane %v228, 2
      %v1168 = vsel %vm1012, %v1165, %v1167
      %v1169 = vrot.slane %v1148, 2
      %v1170 = vsel %vm1012, %v1167, %v1169
      %v1171 = vrot.slane %v1149, 2
      %v1172 = vsel %vm1012, %v1169, %v1171
      %v1174 = vsel %vm317, %v1154, 0
      %v1177 = vsel %vm317, %v1156, 0
      %v1180 = vsel %vm317, %v1158, 0
      %v1183 = vsel %vm317, %v1160, 0
      %v1186 = vsel %vm317, %v1162, 0
      %v1189 = vsel %vm317, %v1164, 0
      %v1192 = vsel %vm317, %v1166, 0
      %v1195 = vsel %vm317, %v1168, 0
      %v1198 = vsel %vm317, %v1170, 0
      %v1201 = vsel %vm317, %v1172, 0
      %v1204 = vsel %vm348, %v1147, 0
      %1206 = vmatpush.bf16.msra.mxu0 0
      %1207 = vmatpush.bf16.msra.mxu0 0
      %1208 = vmatpush.bf16.msra.mxu0 0
      %1209 = vmatpush.bf16.msra.mxu0 0
      %1210 = vmatpush.bf16.msra.mxu0 0
      %1211 = vmatpush.bf16.msra.mxu0 0
      %1212 = vmatpush.bf16.msra.mxu0 0
      %1213 = vmatpush.bf16.msra.mxu0 %v1204
      %1214 = vmatmul.bf16.gmra.mxu0 %v1174
      %v1215 = vpop.f32.mrf.mxu0
      %v1216 = vadd.f32 0.0, %v1215
      %v1217 = vpop.f32.mrf.mxu0
      %v1218 = vadd.f32 0.0, %v1217
      %1219 = vmatmul.bf16.gmra.mxu0 %v1177
      %v1220 = vpop.f32.mrf.mxu0
      %v1221 = vadd.f32 0.0, %v1220
      %v1222 = vpop.f32.mrf.mxu0
      %v1223 = vadd.f32 0.0, %v1222
      %1224 = vmatmul.bf16.gmra.mxu0 %v1180
      %v1225 = vpop.f32.mrf.mxu0
      %v1226 = vadd.f32 0.0, %v1225
      %v1227 = vpop.f32.mrf.mxu0
      %v1228 = vadd.f32 0.0, %v1227
      %1229 = vmatmul.bf16.gmra.mxu0 %v1183
      %v1230 = vpop.f32.mrf.mxu0
      %v1231 = vadd.f32 0.0, %v1230
      %v1232 = vpop.f32.mrf.mxu0
      %v1233 = vadd.f32 0.0, %v1232
      %1234 = vmatmul.bf16.gmra.mxu0 %v1186
      %v1235 = vpop.f32.mrf.mxu0
      %v1236 = vadd.f32 0.0, %v1235
      %v1237 = vpop.f32.mrf.mxu0
      %v1238 = vadd.f32 0.0, %v1237
      %1239 = vmatmul.bf16.gmra.mxu0 %v1189
      %v1240 = vpop.f32.mrf.mxu0
      %v1241 = vadd.f32 0.0, %v1240
      %v1242 = vpop.f32.mrf.mxu0
      %v1243 = vadd.f32 0.0, %v1242
      %1244 = vmatmul.bf16.gmra.mxu0 %v1192
      %v1245 = vpop.f32.mrf.mxu0
      %v1246 = vadd.f32 0.0, %v1245
      %v1247 = vpop.f32.mrf.mxu0
      %v1248 = vadd.f32 0.0, %v1247
      %1249 = vmatmul.bf16.gmra.mxu0 %v1195
      %v1250 = vpop.f32.mrf.mxu0
      %v1251 = vadd.f32 0.0, %v1250
      %v1252 = vpop.f32.mrf.mxu0
      %v1253 = vadd.f32 0.0, %v1252
      %1254 = vmatmul.bf16.gmra.mxu0 %v1198
      %v1255 = vpop.f32.mrf.mxu0
      %v1256 = vadd.f32 0.0, %v1255
      %v1257 = vpop.f32.mrf.mxu0
      %v1258 = vadd.f32 0.0, %v1257
      %1259 = vmatmul.bf16.gmra.mxu0 %v1201
      %v1260 = vpop.f32.mrf.mxu0
      %v1261 = vadd.f32 0.0, %v1260
      %v1262 = vpop.f32.mrf.mxu0
      %v1263 = vadd.f32 0.0, %v1262
      %1264 = vdwg.mxu0
      %v1265 = vadd.f32 %v1126, %v1216
      %v1266 = vadd.f32 %v1127, %v1218
      %v1267 = vadd.f32 %v1128, %v1221
      %v1268 = vadd.f32 %v1129, %v1223
      %v1269 = vadd.f32 %v1130, %v1226
      %v1270 = vadd.f32 %v1131, %v1228
      %v1271 = vadd.f32 %v1132, %v1231
      %v1272 = vadd.f32 %v1133, %v1233
      %v1273 = vadd.f32 %v1134, %v1236
      %v1274 = vadd.f32 %v1135, %v1238
      %v1275 = vadd.f32 %v1136, %v1241
      %v1276 = vadd.f32 %v1137, %v1243
      %v1277 = vadd.f32 %v1138, %v1246
      %v1278 = vadd.f32 %v1139, %v1248
      %v1279 = vadd.f32 %v1140, %v1251
      %v1280 = vadd.f32 %v1141, %v1253
      %v1281 = vadd.f32 %v1142, %v1256
      %v1282 = vadd.f32 %v1143, %v1258
      %v1283 = vadd.f32 %v1144, %v1261
      %v1284 = vadd.f32 %v1145, %v1263
      %s1285 = scalar_lea.vmem %s1, 28
      %v1286 = vld [vmem:[%s1285] sm:$0xf]
      %vm1287 = vsmask.f32 5376
      %v1288 = vrot.slane %v245, 2
      %v1289 = vrot.slane %v241, 3
      %v1290 = vor.u32 %v1288, %v1289
      %v1291 = vrot.slane %v253, 2
      %v1292 = vrot.slane %v249, 3
      %v1293 = vor.u32 %v1291, %v1292
      %v1294 = vsel %vm1287, %v1290, %v1293
      %v1295 = vrot.slane %v261, 2
      %v1296 = vrot.slane %v257, 3
      %v1297 = vor.u32 %v1295, %v1296
      %v1298 = vsel %vm1287, %v1293, %v1297
      %v1299 = vrot.slane %v269, 2
      %v1300 = vrot.slane %v265, 3
      %v1301 = vor.u32 %v1299, %v1300
      %v1302 = vsel %vm1287, %v1297, %v1301
      %v1303 = vrot.slane %v277, 2
      %v1304 = vrot.slane %v273, 3
      %v1305 = vor.u32 %v1303, %v1304
      %v1306 = vsel %vm1287, %v1301, %v1305
      %v1307 = vrot.slane %v285, 2
      %v1308 = vrot.slane %v281, 3
      %v1309 = vor.u32 %v1307, %v1308
      %v1310 = vsel %vm1287, %v1305, %v1309
      %v1311 = vrot.slane %v293, 2
      %v1312 = vrot.slane %v289, 3
      %v1313 = vor.u32 %v1311, %v1312
      %v1314 = vsel %vm1287, %v1309, %v1313
      %v1315 = vrot.slane %v301, 2
      %v1316 = vrot.slane %v297, 3
      %v1317 = vor.u32 %v1315, %v1316
      %v1318 = vsel %vm1287, %v1313, %v1317
      %v1319 = vrot.slane %v309, 2
      %v1320 = vrot.slane %v305, 3
      %v1321 = vor.u32 %v1319, %v1320
      %v1322 = vsel %vm1287, %v1317, %v1321
      %v1324 = vshrl.u32 %v1148, 16
      %v1326 = vrot.slane %v1324, 2
      %v1327 = vshll.u32 %v1148, 16
      %v1329 = vrot.slane %v1327, 3
      %v1330 = vor.u32 %v1326, %v1329
      %v1331 = vsel %vm1287, %v1321, %v1330
      %v1333 = vshrl.u32 %v1149, 16
      %v1335 = vrot.slane %v1333, 2
      %v1336 = vshll.u32 %v1149, 16
      %v1338 = vrot.slane %v1336, 3
      %v1339 = vor.u32 %v1335, %v1338
      %v1340 = vsel %vm1287, %v1330, %v1339
      %v1342 = vsel %vm317, %v1294, 0
      %v1345 = vsel %vm317, %v1298, 0
      %v1348 = vsel %vm317, %v1302, 0
      %v1351 = vsel %vm317, %v1306, 0
      %v1354 = vsel %vm317, %v1310, 0
      %v1357 = vsel %vm317, %v1314, 0
      %v1360 = vsel %vm317, %v1318, 0
      %v1363 = vsel %vm317, %v1322, 0
      %v1366 = vsel %vm317, %v1331, 0
      %v1369 = vsel %vm317, %v1340, 0
      %v1372 = vsel %vm348, %v1286, 0
      %1374 = vmatpush.bf16.msra.mxu0 0
      %1375 = vmatpush.bf16.msra.mxu0 0
      %1376 = vmatpush.bf16.msra.mxu0 0
      %1377 = vmatpush.bf16.msra.mxu0 0
      %1378 = vmatpush.bf16.msra.mxu0 0
      %1379 = vmatpush.bf16.msra.mxu0 0
      %1380 = vmatpush.bf16.msra.mxu0 0
      %1381 = vmatpush.bf16.msra.mxu0 %v1372
      %1382 = vmatmul.bf16.gmra.mxu0 %v1342
      %v1383 = vpop.f32.mrf.mxu0
      %v1384 = vadd.f32 0.0, %v1383
      %v1385 = vpop.f32.mrf.mxu0
      %v1386 = vadd.f32 0.0, %v1385
      %1387 = vmatmul.bf16.gmra.mxu0 %v1345
      %v1388 = vpop.f32.mrf.mxu0
      %v1389 = vadd.f32 0.0, %v1388
      %v1390 = vpop.f32.mrf.mxu0
      %v1391 = vadd.f32 0.0, %v1390
      %1392 = vmatmul.bf16.gmra.mxu0 %v1348
      %v1393 = vpop.f32.mrf.mxu0
      %v1394 = vadd.f32 0.0, %v1393
      %v1395 = vpop.f32.mrf.mxu0
      %v1396 = vadd.f32 0.0, %v1395
      %1397 = vmatmul.bf16.gmra.mxu0 %v1351
      %v1398 = vpop.f32.mrf.mxu0
      %v1399 = vadd.f32 0.0, %v1398
      %v1400 = vpop.f32.mrf.mxu0
      %v1401 = vadd.f32 0.0, %v1400
      %1402 = vmatmul.bf16.gmra.mxu0 %v1354
      %v1403 = vpop.f32.mrf.mxu0
      %v1404 = vadd.f32 0.0, %v1403
      %v1405 = vpop.f32.mrf.mxu0
      %v1406 = vadd.f32 0.0, %v1405
      %1407 = vmatmul.bf16.gmra.mxu0 %v1357
      %v1408 = vpop.f32.mrf.mxu0
      %v1409 = vadd.f32 0.0, %v1408
      %v1410 = vpop.f32.mrf.mxu0
      %v1411 = vadd.f32 0.0, %v1410
      %1412 = vmatmul.bf16.gmra.mxu0 %v1360
      %v1413 = vpop.f32.mrf.mxu0
      %v1414 = vadd.f32 0.0, %v1413
      %v1415 = vpop.f32.mrf.mxu0
      %v1416 = vadd.f32 0.0, %v1415
      %1417 = vmatmul.bf16.gmra.mxu0 %v1363
      %v1418 = vpop.f32.mrf.mxu0
      %v1419 = vadd.f32 0.0, %v1418
      %v1420 = vpop.f32.mrf.mxu0
      %v1421 = vadd.f32 0.0, %v1420
      %1422 = vmatmul.bf16.gmra.mxu0 %v1366
      %v1423 = vpop.f32.mrf.mxu0
      %v1424 = vadd.f32 0.0, %v1423
      %v1425 = vpop.f32.mrf.mxu0
      %v1426 = vadd.f32 0.0, %v1425
      %1427 = vmatmul.bf16.gmra.mxu0 %v1369
      %v1428 = vpop.f32.mrf.mxu0
      %v1429 = vadd.f32 0.0, %v1428
      %v1430 = vpop.f32.mrf.mxu0
      %v1431 = vadd.f32 0.0, %v1430
      %1432 = vdwg.mxu0
      %v1433 = vadd.f32 %v1265, %v1384
      %v1434 = vadd.f32 %v1266, %v1386
      %v1435 = vadd.f32 %v1267, %v1389
      %v1436 = vadd.f32 %v1268, %v1391
      %v1437 = vadd.f32 %v1269, %v1394
      %v1438 = vadd.f32 %v1270, %v1396
      %v1439 = vadd.f32 %v1271, %v1399
      %v1440 = vadd.f32 %v1272, %v1401
      %v1441 = vadd.f32 %v1273, %v1404
      %v1442 = vadd.f32 %v1274, %v1406
      %v1443 = vadd.f32 %v1275, %v1409
      %v1444 = vadd.f32 %v1276, %v1411
      %v1445 = vadd.f32 %v1277, %v1414
      %v1446 = vadd.f32 %v1278, %v1416
      %v1447 = vadd.f32 %v1279, %v1419
      %v1448 = vadd.f32 %v1280, %v1421
      %v1449 = vadd.f32 %v1281, %v1424
      %v1450 = vadd.f32 %v1282, %v1426
      %v1451 = vadd.f32 %v1283, %v1429
      %v1452 = vadd.f32 %v1284, %v1431
      %s1453 = scalar_lea.vmem %s1, 32
      %v1454 = vld [vmem:[%s1453] sm:$0xf]
      %vm1455 = vcmask 1044480
      %v1456 = vrot.slane %v220, 3
      %v1457 = vrot.slane %v221, 3
      %v1458 = vsel %vm1455, %v1456, %v1457
      %v1459 = vrot.slane %v222, 3
      %v1460 = vsel %vm1455, %v1457, %v1459
      %v1461 = vrot.slane %v223, 3
      %v1462 = vsel %vm1455, %v1459, %v1461
      %v1463 = vrot.slane %v224, 3
      %v1464 = vsel %vm1455, %v1461, %v1463
      %v1465 = vrot.slane %v225, 3
      %v1466 = vsel %vm1455, %v1463, %v1465
      %v1467 = vrot.slane %v226, 3
      %v1468 = vsel %vm1455, %v1465, %v1467
      %v1469 = vrot.slane %v227, 3
      %v1470 = vsel %vm1455, %v1467, %v1469
      %v1471 = vrot.slane %v228, 3
      %v1472 = vsel %vm1455, %v1469, %v1471
      %v1473 = vrot.slane %v1148, 3
      %v1474 = vsel %vm1455, %v1471, %v1473
      %v1475 = vrot.slane %v1149, 3
      %v1476 = vsel %vm1455, %v1473, %v1475
      %v1478 = vsel %vm317, %v1458, 0
      %v1481 = vsel %vm317, %v1460, 0
      %v1484 = vsel %vm317, %v1462, 0
      %v1487 = vsel %vm317, %v1464, 0
      %v1490 = vsel %vm317, %v1466, 0
      %v1493 = vsel %vm317, %v1468, 0
      %v1496 = vsel %vm317, %v1470, 0
      %v1499 = vsel %vm317, %v1472, 0
      %v1502 = vsel %vm317, %v1474, 0
      %v1505 = vsel %vm317, %v1476, 0
      %v1508 = vsel %vm348, %v1454, 0
      %1510 = vmatpush.bf16.msra.mxu0 0
      %1511 = vmatpush.bf16.msra.mxu0 0
      %1512 = vmatpush.bf16.msra.mxu0 0
      %1513 = vmatpush.bf16.msra.mxu0 0
      %1514 = vmatpush.bf16.msra.mxu0 0
      %1515 = vmatpush.bf16.msra.mxu0 0
      %1516 = vmatpush.bf16.msra.mxu0 0
      %1517 = vmatpush.bf16.msra.mxu0 %v1508
      %1518 = vmatmul.bf16.gmra.mxu0 %v1478
      %v1519 = vpop.f32.mrf.mxu0
      %v1520 = vadd.f32 0.0, %v1519
      %v1521 = vpop.f32.mrf.mxu0
      %v1522 = vadd.f32 0.0, %v1521
      %1523 = vmatmul.bf16.gmra.mxu0 %v1481
      %v1524 = vpop.f32.mrf.mxu0
      %v1525 = vadd.f32 0.0, %v1524
      %v1526 = vpop.f32.mrf.mxu0
      %v1527 = vadd.f32 0.0, %v1526
      %1528 = vmatmul.bf16.gmra.mxu0 %v1484
      %v1529 = vpop.f32.mrf.mxu0
      %v1530 = vadd.f32 0.0, %v1529
      %v1531 = vpop.f32.mrf.mxu0
      %v1532 = vadd.f32 0.0, %v1531
      %1533 = vmatmul.bf16.gmra.mxu0 %v1487
      %v1534 = vpop.f32.mrf.mxu0
      %v1535 = vadd.f32 0.0, %v1534
      %v1536 = vpop.f32.mrf.mxu0
      %v1537 = vadd.f32 0.0, %v1536
      %1538 = vmatmul.bf16.gmra.mxu0 %v1490
      %v1539 = vpop.f32.mrf.mxu0
      %v1540 = vadd.f32 0.0, %v1539
      %v1541 = vpop.f32.mrf.mxu0
      %v1542 = vadd.f32 0.0, %v1541
      %1543 = vmatmul.bf16.gmra.mxu0 %v1493
      %v1544 = vpop.f32.mrf.mxu0
      %v1545 = vadd.f32 0.0, %v1544
      %v1546 = vpop.f32.mrf.mxu0
      %v1547 = vadd.f32 0.0, %v1546
      %1548 = vmatmul.bf16.gmra.mxu0 %v1496
      %v1549 = vpop.f32.mrf.mxu0
      %v1550 = vadd.f32 0.0, %v1549
      %v1551 = vpop.f32.mrf.mxu0
      %v1552 = vadd.f32 0.0, %v1551
      %1553 = vmatmul.bf16.gmra.mxu0 %v1499
      %v1554 = vpop.f32.mrf.mxu0
      %v1555 = vadd.f32 0.0, %v1554
      %v1556 = vpop.f32.mrf.mxu0
      %v1557 = vadd.f32 0.0, %v1556
      %1558 = vmatmul.bf16.gmra.mxu0 %v1502
      %v1559 = vpop.f32.mrf.mxu0
      %v1560 = vadd.f32 0.0, %v1559
      %v1561 = vpop.f32.mrf.mxu0
      %v1562 = vadd.f32 0.0, %v1561
      %1563 = vmatmul.bf16.gmra.mxu0 %v1505
      %v1564 = vpop.f32.mrf.mxu0
      %v1565 = vadd.f32 0.0, %v1564
      %v1566 = vpop.f32.mrf.mxu0
      %v1567 = vadd.f32 0.0, %v1566
      %1568 = vdwg.mxu0
      %v1569 = vadd.f32 %v1433, %v1520
      %v1570 = vadd.f32 %v1434, %v1522
      %v1571 = vadd.f32 %v1435, %v1525
      %v1572 = vadd.f32 %v1436, %v1527
      %v1573 = vadd.f32 %v1437, %v1530
      %v1574 = vadd.f32 %v1438, %v1532
      %v1575 = vadd.f32 %v1439, %v1535
      %v1576 = vadd.f32 %v1440, %v1537
      %v1577 = vadd.f32 %v1441, %v1540
      %v1578 = vadd.f32 %v1442, %v1542
      %v1579 = vadd.f32 %v1443, %v1545
      %v1580 = vadd.f32 %v1444, %v1547
      %v1581 = vadd.f32 %v1445, %v1550
      %v1582 = vadd.f32 %v1446, %v1552
      %v1583 = vadd.f32 %v1447, %v1555
      %v1584 = vadd.f32 %v1448, %v1557
      %v1585 = vadd.f32 %v1449, %v1560
      %v1586 = vadd.f32 %v1450, %v1562
      %v1587 = vadd.f32 %v1451, %v1565
      %v1588 = vadd.f32 %v1452, %v1567
      %v1589 = vld [vmem:[%s2] sm:$0x1]
      %v1591 = vperm.slane %v1589, 0
      %v1593 = vadd.f32 %v1569, %v1591
      %v1594 = vadd.f32 %v1570, %v1591
      %v1595 = vadd.f32 %v1571, %v1591
      %v1596 = vadd.f32 %v1572, %v1591
      %v1597 = vadd.f32 %v1573, %v1591
      %v1598 = vadd.f32 %v1574, %v1591
      %v1599 = vadd.f32 %v1575, %v1591
      %v1600 = vadd.f32 %v1576, %v1591
      %v1601 = vadd.f32 %v1577, %v1591
      %v1602 = vadd.f32 %v1578, %v1591
      %v1603 = vadd.f32 %v1579, %v1591
      %v1604 = vadd.f32 %v1580, %v1591
      %v1605 = vadd.f32 %v1581, %v1591
      %v1606 = vadd.f32 %v1582, %v1591
      %v1607 = vadd.f32 %v1583, %v1591
      %v1608 = vadd.f32 %v1584, %v1591
      %v1609 = vadd.f32 %v1585, %v1591
      %v1610 = vadd.f32 %v1586, %v1591
      %v1611 = vadd.f32 %v1587, %v1591
      %v1612 = vadd.f32 %v1588, %v1591
      %v1613 = vmax.f32 %v1593, 0.0
      %v1614 = vmax.f32 %v1594, 0.0
      %v1615 = vmax.f32 %v1595, 0.0
      %v1616 = vmax.f32 %v1596, 0.0
      %v1617 = vmax.f32 %v1597, 0.0
      %v1618 = vmax.f32 %v1598, 0.0
      %v1619 = vmax.f32 %v1599, 0.0
      %v1620 = vmax.f32 %v1600, 0.0
      %v1621 = vmax.f32 %v1601, 0.0
      %v1622 = vmax.f32 %v1602, 0.0
      %v1623 = vmax.f32 %v1603, 0.0
      %v1624 = vmax.f32 %v1604, 0.0
      %v1625 = vmax.f32 %v1605, 0.0
      %v1626 = vmax.f32 %v1606, 0.0
      %v1627 = vmax.f32 %v1607, 0.0
      %v1628 = vmax.f32 %v1608, 0.0
      %v1629 = vmax.f32 %v1609, 0.0
      %v1630 = vmax.f32 %v1610, 0.0
      %v1631 = vmax.f32 %v1611, 0.0
      %v1632 = vmax.f32 %v1612, 0.0
      %v1633 = vrot.slane %v1613, 1
      %v1634 = vrot.slane %v1614, 1
      %v1635 = vrot.slane %v1615, 1
      %v1636 = vrot.slane %v1616, 1
      %v1637 = vrot.slane %v1617, 1
      %v1638 = vrot.slane %v1618, 1
      %v1639 = vrot.slane %v1619, 1
      %v1640 = vrot.slane %v1620, 1
      %v1641 = vrot.slane %v1621, 1
      %v1642 = vrot.slane %v1622, 1
      %v1643 = vrot.slane %v1623, 1
      %v1644 = vrot.slane %v1624, 1
      %v1645 = vrot.slane %v1625, 1
      %v1646 = vrot.slane %v1626, 1
      %v1647 = vrot.slane %v1627, 1
      %v1648 = vrot.slane %v1628, 1
      %v1649 = vrot.slane %v1629, 1
      %v1650 = vrot.slane %v1630, 1
      %v1651 = vrot.slane %v1631, 1
      %v1652 = vrot.slane %v1632, 1
      %v1653 = vlaneseq
      %v1654 = vshrl.u32 %v1653, 7
      %vm1655 = vcmp.lt.s32.totalorder %v1654, 7
      %v1656 = vsel %vm1655, %v1651, %v1652
      %v1657 = vsel %vm1655, %v1650, %v1651
      %v1658 = vsel %vm1655, %v1649, %v1650
      %v1659 = vsel %vm1655, %v1648, %v1649
      %v1660 = vsel %vm1655, %v1647, %v1648
      %v1661 = vsel %vm1655, %v1646, %v1647
      %v1662 = vsel %vm1655, %v1645, %v1646
      %v1663 = vsel %vm1655, %v1644, %v1645
      %v1664 = vsel %vm1655, %v1643, %v1644
      %v1665 = vsel %vm1655, %v1642, %v1643
      %v1666 = vsel %vm1655, %v1641, %v1642
      %v1667 = vsel %vm1655, %v1640, %v1641
      %v1668 = vsel %vm1655, %v1639, %v1640
      %v1669 = vsel %vm1655, %v1638, %v1639
      %v1670 = vsel %vm1655, %v1637, %v1638
      %v1671 = vsel %vm1655, %v1636, %v1637
      %v1672 = vsel %vm1655, %v1635, %v1636
      %v1673 = vsel %vm1655, %v1634, %v1635
      %v1674 = vsel %vm1655, %v1633, %v1634
      %v1675 = vsel %vm1655, %v1652, %v1633
      %v1676 = vmax.f32 %v1613, %v1674
      %v1677 = vmax.f32 %v1614, %v1673
      %v1678 = vmax.f32 %v1615, %v1672
      %v1679 = vmax.f32 %v1616, %v1671
      %v1680 = vmax.f32 %v1617, %v1670
      %v1681 = vmax.f32 %v1618, %v1669
      %v1682 = vmax.f32 %v1619, %v1668
      %v1683 = vmax.f32 %v1620, %v1667
      %v1684 = vmax.f32 %v1621, %v1666
      %v1685 = vmax.f32 %v1622, %v1665
      %v1686 = vmax.f32 %v1623, %v1664
      %v1687 = vmax.f32 %v1624, %v1663
      %v1688 = vmax.f32 %v1625, %v1662
      %v1689 = vmax.f32 %v1626, %v1661
      %v1690 = vmax.f32 %v1627, %v1660
      %v1691 = vmax.f32 %v1628, %v1659
      %v1692 = vmax.f32 %v1629, %v1658
      %v1693 = vmax.f32 %v1630, %v1657
      %v1694 = vmax.f32 %v1631, %v1656
      %v1695 = vmax.f32 %v1632, %v1675
      %v1696 = vrot.slane %v1676, 2
      %v1697 = vrot.slane %v1677, 2
      %v1698 = vrot.slane %v1678, 2
      %v1699 = vrot.slane %v1679, 2
      %v1700 = vrot.slane %v1680, 2
      %v1701 = vrot.slane %v1681, 2
      %v1702 = vrot.slane %v1682, 2
      %v1703 = vrot.slane %v1683, 2
      %v1704 = vrot.slane %v1684, 2
      %v1705 = vrot.slane %v1685, 2
      %v1706 = vrot.slane %v1686, 2
      %v1707 = vrot.slane %v1687, 2
      %v1708 = vrot.slane %v1688, 2
      %v1709 = vrot.slane %v1689, 2
      %v1710 = vrot.slane %v1690, 2
      %v1711 = vrot.slane %v1691, 2
      %v1712 = vrot.slane %v1692, 2
      %v1713 = vrot.slane %v1693, 2
      %v1714 = vrot.slane %v1694, 2
      %v1715 = vrot.slane %v1695, 2
      %vm1716 = vcmp.lt.s32.totalorder %v1654, 6
      %v1717 = vsel %vm1716, %v1714, %v1715
      %v1718 = vsel %vm1716, %v1713, %v1714
      %v1719 = vsel %vm1716, %v1712, %v1713
      %v1720 = vsel %vm1716, %v1711, %v1712
      %v1721 = vsel %vm1716, %v1710, %v1711
      %v1722 = vsel %vm1716, %v1709, %v1710
      %v1723 = vsel %vm1716, %v1708, %v1709
      %v1724 = vsel %vm1716, %v1707, %v1708
      %v1725 = vsel %vm1716, %v1706, %v1707
      %v1726 = vsel %vm1716, %v1705, %v1706
      %v1727 = vsel %vm1716, %v1704, %v1705
      %v1728 = vsel %vm1716, %v1703, %v1704
      %v1729 = vsel %vm1716, %v1702, %v1703
      %v1730 = vsel %vm1716, %v1701, %v1702
      %v1731 = vsel %vm1716, %v1700, %v1701
      %v1732 = vsel %vm1716, %v1699, %v1700
      %v1733 = vsel %vm1716, %v1698, %v1699
      %v1734 = vsel %vm1716, %v1697, %v1698
      %v1735 = vsel %vm1716, %v1696, %v1697
      %v1736 = vsel %vm1716, %v1715, %v1696
      %v1737 = vmax.f32 %v1676, %v1734
      %v1738 = vmax.f32 %v1677, %v1733
      %v1739 = vmax.f32 %v1678, %v1732
      %v1740 = vmax.f32 %v1679, %v1731
      %v1741 = vmax.f32 %v1680, %v1730
      %v1742 = vmax.f32 %v1681, %v1729
      %v1743 = vmax.f32 %v1682, %v1728
      %v1744 = vmax.f32 %v1683, %v1727
      %v1745 = vmax.f32 %v1684, %v1726
      %v1746 = vmax.f32 %v1685, %v1725
      %v1747 = vmax.f32 %v1686, %v1724
      %v1748 = vmax.f32 %v1687, %v1723
      %v1749 = vmax.f32 %v1688, %v1722
      %v1750 = vmax.f32 %v1689, %v1721
      %v1751 = vmax.f32 %v1690, %v1720
      %v1752 = vmax.f32 %v1691, %v1719
      %v1753 = vmax.f32 %v1692, %v1718
      %v1754 = vmax.f32 %v1693, %v1717
      %v1755 = vmax.f32 %v1694, %v1736
      %v1756 = vmax.f32 %v1695, %v1735
      %v1757 = vpack.c.bf16 %v1737, %v1737
      %v1758 = vpack.c.bf16 %v1738, %v1738
      %v1759 = vpack.c.bf16 %v1739, %v1739
      %v1760 = vpack.c.bf16 %v1740, %v1740
      %v1761 = vpack.c.bf16 %v1741, %v1741
      %v1762 = vpack.c.bf16 %v1742, %v1742
      %v1763 = vpack.c.bf16 %v1743, %v1743
      %v1764 = vpack.c.bf16 %v1744, %v1744
      %v1765 = vpack.c.bf16 %v1745, %v1745
      %v1766 = vpack.c.bf16 %v1746, %v1746
      %v1767 = vpack.c.bf16 %v1747, %v1747
      %v1768 = vpack.c.bf16 %v1748, %v1748
      %v1769 = vpack.c.bf16 %v1749, %v1749
      %v1770 = vpack.c.bf16 %v1750, %v1750
      %v1771 = vpack.c.bf16 %v1751, %v1751
      %v1772 = vpack.c.bf16 %v1752, %v1752
      %v1773 = vpack.c.bf16 %v1753, %v1753
      %v1774 = vpack.c.bf16 %v1754, %v1754
      %v1775 = vpack.c.bf16 %v1755, %v1755
      %v1776 = vpack.c.bf16 %v1756, %v1756
      %vm1777 = vcmask 125952
      %1778 = vst.msk [vmem:[%s170] sm:$0xf] %vm1777, %v1757
      %1779 = vst.msk [vmem:[%s170 + $0x4] sm:$0xf] %vm1777, %v1758
      %1780 = vst.msk [vmem:[%s170 + $0x8] sm:$0xf] %vm1777, %v1759
      %1781 = vst.msk [vmem:[%s170 + $0xc] sm:$0xf] %vm1777, %v1760
      %1782 = vst.msk [vmem:[%s170 + $0x10] sm:$0xf] %vm1777, %v1761
      %1783 = vst.msk [vmem:[%s170 + $0x14] sm:$0xf] %vm1777, %v1762
      %1784 = vst.msk [vmem:[%s170 + $0x18] sm:$0xf] %vm1777, %v1763
      %1785 = vst.msk [vmem:[%s170 + $0x1c] sm:$0xf] %vm1777, %v1764
      %1786 = vst.msk [vmem:[%s170 + $0x20] sm:$0xf] %vm1777, %v1765
      %1787 = vst.msk [vmem:[%s170 + $0x24] sm:$0xf] %vm1777, %v1766
      %1788 = vst.msk [vmem:[%s170 + $0x28] sm:$0xf] %vm1777, %v1767
      %1789 = vst.msk [vmem:[%s170 + $0x2c] sm:$0xf] %vm1777, %v1768
      %1790 = vst.msk [vmem:[%s170 + $0x30] sm:$0xf] %vm1777, %v1769
      %1791 = vst.msk [vmem:[%s170 + $0x34] sm:$0xf] %vm1777, %v1770
      %1792 = vst.msk [vmem:[%s170 + $0x38] sm:$0xf] %vm1777, %v1771
      %1793 = vst.msk [vmem:[%s170 + $0x3c] sm:$0xf] %vm1777, %v1772
      %1794 = vst.msk [vmem:[%s170 + $0x40] sm:$0xf] %vm1777, %v1773
      %1795 = vst.msk [vmem:[%s170 + $0x44] sm:$0xf] %vm1777, %v1774
      %1796 = vst.msk [vmem:[%s170 + $0x48] sm:$0xf] %vm1777, %v1775
      %1797 = vst.msk [vmem:[%s170 + $0x4c] sm:$0xf] %vm1777, %v1776
      %p1798 = scmp.lt.s32.totalorder %s14, 1
      %s1799 = scalar_select %p1798, %s14, 1
      %s1800 = smul.addr %s1799, 20
      %s1801 = smul.addr %s1800, 4
      %s1802 = scalar_lea.vmem %s3, %s1801
      // Predicated region
      $region33: #{vggish_linear_forward.10} parent=31 // pred_check
        %p1803 = pneg %p100
      $region34: #{vggish_linear_forward.10} parent=31 // pred_check_branch
        %1805 = sbr.rel (%p1803) target = $region36
      $region35: #{vggish_linear_forward.10} parent=31 // pred_region
        _
      $region36: #{vggish_linear_forward.10} parent=31 // pred_fallthru
        _
    $region32: #{vggish_linear_forward.10} parent=5 // pred_fallthru
      _
    %p1806 = scmp.le.s32.totalorder 2, %s9
    // Predicated region
    $region37: #{vggish_linear_forward.10} parent=5 // pred_check
      %p1807 = pneg %p1806
    $region38: #{vggish_linear_forward.10} parent=5 // pred_check_branch
      %1809 = sbr.rel (%p1807) target = $region40
    $region39: #{vggish_linear_forward.10} parent=5 // pred_region
      %s1810 = ssub.s32 %s9, 2
      // Predicated region
      $region41: #{vggish_linear_forward.10} parent=39 // pred_check
        %p1811 = pneg %p106
      $region42: #{vggish_linear_forward.10} parent=39 // pred_check_branch
        %1813 = sbr.rel (%p1811) target = $region44
      $region43: #{vggish_linear_forward.10} parent=39 // pred_region
        %p1814 = scmp.lt.s32.totalorder %s15, 1
        %s1815 = scalar_select %p1814, %s15, 1
        %s1816 = smul.addr %s1815, 20
        %s1817 = smul.addr %s1816, 4
        %s1818 = scalar_lea.vmem %s3, %s1817
      $region44: #{vggish_linear_forward.10} parent=39 // pred_fallthru
        _
    $region40: #{vggish_linear_forward.10} parent=5 // pred_fallthru
      _
  $region6: #{vggish_linear_forward.10} parent=0 // loop_footer
    %s13 = sadd.s32 1, %s9
  $region7: #{vggish_linear_forward.10} parent=0 // loop_footer_branch
    %8 = sbr.rel target = $region3
  $region8: #{vggish_linear_forward.10} parent=0 // loop_exit
    _

// kernel: vggish_linear_forward.11
$region0: #{vggish_linear_forward.11}
  #allocation0 [shape = 'u32[]', space=smem, size = 0x4, offset = 0x4, fixed_abs, tag = 'smem constant byte address 0x4 - core index']
  #allocation1 [shape = 'u32[72,128]{1,0:T(1,128)}', space=vmem, size = 0x9000, scoped, tag = 'internal scratch']
  %s0 = inlined_call_operand.vmem [shape: bf16[2,66,16], index: 0, kind: input, shape index: {}]
  %s1 = inlined_call_operand.vmem [shape: bf16[9,16,32], index: 1, kind: input, shape index: {}]
  %s2 = inlined_call_operand.vmem [shape: f32[1,32], index: 2, kind: input, shape index: {}]
  %s3 = inlined_call_operand.vmem [shape: bf16[2,48,32], index: 3, kind: output, shape index: {}]
  %s4 = sld [smem:[#allocation0]]
  $region45: #{vggish_linear_forward.11} parent=0
    _
  %s6 = ssub.s32 1, %s4
  %s7 = scalar_select 0, %s6, %s4
  loop: start=0, step=1, limit=4
  $region2: #{vggish_linear_forward.11} parent=0 // loop_pre_header
    _
  $region3: #{vggish_linear_forward.11} parent=0 // loop_header
    %s9 = sphi 0, %s13
    %p10 = scmp.ge.s32.totalorder %s9, 4
    %s19 = sphi 0, %s21
    %s22 = sphi 0, %s19
    %s23 = sphi 0, %s22
    %s39 = sphi 0, %s23
    %s43 = sphi 0, %s43
    %s45 = sphi 0, %s43
    %s46 = sphi 0, %s45
    %s60 = sphi 0, %s46
    %s64 = sphi 0, %s64
    %s66 = sphi 0, %s64
    %s67 = sphi 0, %s66
    %s81 = sphi 0, %s67
    %s87 = sphi 0, %s89
    %s90 = sphi 0, %s87
    %s91 = sphi 0, %s90
    %s107 = sphi 0, %s91
  $region4: #{vggish_linear_forward.11} parent=0 // loop_header_branch
    %12 = sbr.rel (%p10) target = $region8
  $region5: #{vggish_linear_forward.11} parent=0 // loop_body
    %s14 = ssub.s32 %s9, 1
    %s15 = ssub.s32 %s9, 2
    %s16 = sadd.s32 %s9, 1
    %s17 = ssub.s32 %s9, %s16
    %p18 = scmp.eq.s32.totalorder %s17, 0
    %s20 = sadd.s32 %s19, 1
    %s21 = scalar_select %p18, %s19, %s20
    %p24 = pneg %p18
    %p25 = scmp.eq.s32.totalorder %s9, 1
    %p26 = por %p24, %p25
    %p27 = scmp.ne.s32.totalorder %s19, %s22
    %p28 = scmp.eq.s32.totalorder %s9, 0
    %p29 = por %p27, %p28
    %p30 = scmp.ne.s32.totalorder %s19, %s22
    %p31 = scmp.eq.s32.totalorder %s14, 1
    %p32 = por %p30, %p31
    %p33 = scmp.ne.s32.totalorder %s22, %s23
    %p34 = scmp.eq.s32.totalorder %s14, 0
    %p35 = por %p33, %p34
    %p36 = scmp.ne.s32.totalorder %s22, %s23
    %p37 = scmp.eq.s32.totalorder %s15, 1
    %p38 = por %p36, %p37
    %p40 = scmp.ne.s32.totalorder %s23, %s39
    %p41 = scmp.eq.s32.totalorder %s15, 0
    %p42 = por %p40, %p41
    %s44 = sadd.s32 %s43, 1
    %p47 = scmp.eq.s32.totalorder %s9, 1
    %p48 = scmp.ne.s32.totalorder %s43, %s45
    %p49 = scmp.eq.s32.totalorder %s9, 0
    %p50 = por %p48, %p49
    %p51 = scmp.ne.s32.totalorder %s43, %s45
    %p52 = scmp.eq.s32.totalorder %s14, 1
    %p53 = por %p51, %p52
    %p54 = scmp.ne.s32.totalorder %s45, %s46
    %p55 = scmp.eq.s32.totalorder %s14, 0
    %p56 = por %p54, %p55
    %p57 = scmp.ne.s32.totalorder %s45, %s46
    %p58 = scmp.eq.s32.totalorder %s15, 1
    %p59 = por %p57, %p58
    %p61 = scmp.ne.s32.totalorder %s46, %s60
    %p62 = scmp.eq.s32.totalorder %s15, 0
    %p63 = por %p61, %p62
    %s65 = sadd.s32 %s64, 1
    %p68 = scmp.eq.s32.totalorder %s9, 1
    %p69 = scmp.ne.s32.totalorder %s64, %s66
    %p70 = scmp.eq.s32.totalorder %s9, 0
    %p71 = por %p69, %p70
    %p72 = scmp.ne.s32.totalorder %s64, %s66
    %p73 = scmp.eq.s32.totalorder %s14, 1
    %p74 = por %p72, %p73
    %p75 = scmp.ne.s32.totalorder %s66, %s67
    %p76 = scmp.eq.s32.totalorder %s14, 0
    %p77 = por %p75, %p76
    %p78 = scmp.ne.s32.totalorder %s66, %s67
    %p79 = scmp.eq.s32.totalorder %s15, 1
    %p80 = por %p78, %p79
    %p82 = scmp.ne.s32.totalorder %s67, %s81
    %p83 = scmp.eq.s32.totalorder %s15, 0
    %p84 = por %p82, %p83
    %s85 = ssub.s32 %s9, %s16
    %p86 = scmp.eq.s32.totalorder %s85, 0
    %s88 = sadd.s32 %s87, 1
    %s89 = scalar_select %p86, %s87, %s88
    %p92 = pneg %p86
    %p93 = scmp.eq.s32.totalorder %s9, 1
    %p94 = por %p92, %p93
    %p95 = scmp.ne.s32.totalorder %s87, %s90
    %p96 = scmp.eq.s32.totalorder %s9, 0
    %p97 = por %p95, %p96
    %p98 = scmp.ne.s32.totalorder %s87, %s90
    %p99 = scmp.eq.s32.totalorder %s14, 1
    %p100 = por %p98, %p99
    %p101 = scmp.ne.s32.totalorder %s90, %s91
    %p102 = scmp.eq.s32.totalorder %s14, 0
    %p103 = por %p101, %p102
    %p104 = scmp.ne.s32.totalorder %s90, %s91
    %p105 = scmp.eq.s32.totalorder %s15, 1
    %p106 = por %p104, %p105
    %p108 = scmp.ne.s32.totalorder %s91, %s107
    %p109 = scmp.eq.s32.totalorder %s15, 0
    %p110 = por %p108, %p109
    %p111 = scmp.le.s32.totalorder 1, %s9
    %p112 = scmp.lt.s32.totalorder %s9, 3
    %p113 = pnand %p111, %p112
    %p114 = pneg %p113
    // Predicated region
    $region9: #{vggish_linear_forward.11} parent=5 // pred_check
      _
    $region10: #{vggish_linear_forward.11} parent=5 // pred_check_branch
      %116 = sbr.rel (%p113) target = $region12
    $region11: #{vggish_linear_forward.11} parent=5 // pred_region
      %s117 = ssub.s32 %s9, 1
      // Predicated region
      $region13: #{vggish_linear_forward.11} parent=11 // pred_check
        %p118 = pneg %p56
      $region14: #{vggish_linear_forward.11} parent=11 // pred_check_branch
        %120 = sbr.rel (%p118) target = $region16
      $region15: #{vggish_linear_forward.11} parent=11 // pred_region
        _
      $region16: #{vggish_linear_forward.11} parent=11 // pred_fallthru
        _
      // Predicated region
      $region17: #{vggish_linear_forward.11} parent=11 // pred_check
        %p121 = pneg %p77
      $region18: #{vggish_linear_forward.11} parent=11 // pred_check_branch
        %123 = sbr.rel (%p121) target = $region20
      $region19: #{vggish_linear_forward.11} parent=11 // pred_region
        _
      $region20: #{vggish_linear_forward.11} parent=11 // pred_fallthru
        _
    $region12: #{vggish_linear_forward.11} parent=5 // pred_fallthru
      _
    %p124 = scmp.lt.s32.totalorder %s9, 2
    // Predicated region
    $region21: #{vggish_linear_forward.11} parent=5 // pred_check
      %p125 = pneg %p124
    $region22: #{vggish_linear_forward.11} parent=5 // pred_check_branch
      %127 = sbr.rel (%p125) target = $region24
    $region23: #{vggish_linear_forward.11} parent=5 // pred_region
      // Predicated region
      $region25: #{vggish_linear_forward.11} parent=23 // pred_check
        %p128 = pneg %p29
      $region26: #{vggish_linear_forward.11} parent=23 // pred_check_branch
        %130 = sbr.rel (%p128) target = $region28
      $region27: #{vggish_linear_forward.11} parent=23 // pred_region
        %p131 = scmp.lt.s32.totalorder %s9, 1
        %s132 = scalar_select %p131, %s9, 1
        %s133 = smul.addr %s132, 9
        %s134 = smul.addr %s133, 4
        %s135 = scalar_lea.vmem %s0, %s134
      $region28: #{vggish_linear_forward.11} parent=23 // pred_fallthru
        _
    $region24: #{vggish_linear_forward.11} parent=5 // pred_fallthru
      _
    %p136 = scmp.le.s32.totalorder 1, %s9
    %p137 = scmp.lt.s32.totalorder %s9, 3
    %p138 = pnand %p136, %p137
    %p139 = pneg %p138
    // Predicated region
    $region29: #{vggish_linear_forward.11} parent=5 // pred_check
      _
    $region30: #{vggish_linear_forward.11} parent=5 // pred_check_branch
      %141 = sbr.rel (%p138) target = $region32
    $region31: #{vggish_linear_forward.11} parent=5 // pred_region
      %s142 = ssub.s32 %s9, 1
      %p143 = scmp.lt.s32.totalorder %s14, 1
      %s144 = scalar_select %p143, %s14, 1
      %s145 = smul.addr %s144, 9
      %s146 = smul.addr %s145, 4
      %s147 = scalar_lea.vmem %s0, %s146
      %p148 = pneg %p35
      %p149 = pneg %p32
      %p150 = pneg %p56
      %p151 = pneg %p53
      %p152 = pneg %p77
      %p153 = pneg %p74
      %p154 = pneg %p103
      %p155 = pneg %p100
      %p156 = scmp.lt.s32.totalorder %s14, 1
      %s157 = scalar_select %p156, %s14, 1
      %s158 = smul.addr %s157, 6
      %s159 = smul.addr %s158, 4
      %s160 = scalar_lea.vmem %s3, %s159
      %p161 = scmp.lt.s32.totalorder %s14, 1
      %s162 = scalar_select %p161, %s14, 1
      %s163 = smul.addr %s162, 9
      %s164 = smul.addr %s163, 4
      %s165 = scalar_lea.vmem %s0, %s164
      %p166 = scmp.lt.s32.totalorder %s14, 1
      %s167 = scalar_select %p166, %s14, 1
      %s168 = smul.addr %s167, 6
      %s169 = smul.addr %s168, 4
      %s170 = scalar_lea.vmem %s3, %s169
      %v172 = vld [vmem:[%s165] sm:$0xf]
      %v173 = vld [vmem:[%s165 + $0x4] sm:$0xf]
      %v174 = vld [vmem:[%s165 + $0x8] sm:$0xf]
      %v175 = vld [vmem:[%s165 + $0xc] sm:$0xf]
      %v176 = vld [vmem:[%s165 + $0x10] sm:$0xf]
      %v177 = vld [vmem:[%s165 + $0x14] sm:$0xf]
      %v178 = vld [vmem:[%s165 + $0x18] sm:$0xf]
      %v179 = vld [vmem:[%s165 + $0x1c] sm:$0xf]
      %v180 = vunpack.c.l.bf16 %v172
      %v181 = vunpack.c.l.bf16 %v173
      %v182 = vunpack.c.l.bf16 %v174
      %v183 = vunpack.c.l.bf16 %v175
      %v184 = vunpack.c.l.bf16 %v176
      %v185 = vunpack.c.l.bf16 %v177
      %v186 = vunpack.c.l.bf16 %v178
      %v187 = vunpack.c.l.bf16 %v179
      %v188 = vld [vmem:[%s1] sm:$0xf]
      %v189 = vld [vmem:[%s1 + $0x4] sm:$0xf]
      %v190 = vpack.c.bf16 %v181, %v180
      %v191 = vpack.c.bf16 %v183, %v182
      %v192 = vpack.c.bf16 %v185, %v184
      %s193 = scalar_lea.vmem %s1, 8
      %v194 = vld [vmem:[%s193] sm:$0xf]
      %v195 = vld [vmem:[%s193 + $0x4] sm:$0xf]
      %v196 = vpack.c.bf16 %v186, %v186
      %vm197 = vsmask.f32 7424
      %v199 = vshrl.u32 %v190, 16
      %v201 = vshll.u32 %v190, 16
      %v203 = vrot.slane %v201, 1
      %v204 = vor.u32 %v199, %v203
      %v206 = vshll.u32 %v191, 16
      %v208 = vrot.slane %v206, 1
      %v209 = vsel %vm197, %v204, %v208
      %v210 = vshrl.u32 %v191, 16
      %v212 = vor.u32 %v210, %v208
      %v214 = vshll.u32 %v192, 16
      %v216 = vrot.slane %v214, 1
      %v217 = vsel %vm197, %v212, %v216
      %v218 = vshrl.u32 %v192, 16
      %v220 = vor.u32 %v218, %v216
      %v222 = vshll.u32 %v196, 16
      %v224 = vrot.slane %v222, 1
      %v225 = vsel %vm197, %v220, %v224
      %v228 = vunpack.c.l.b16 %v194
      %v229 = vunpack.c.l.b16 %v195
      %v230 = vpack.c.b16 %v229, %v228
      %vm232 = vcmask 130048
      %v234 = vsel %vm232, %v209, 0
      %v237 = vsel %vm232, %v217, 0
      %v240 = vsel %vm232, %v225, 0
      %242 = vmatpush.bf16.msra.mxu0 0
      %243 = vmatpush.bf16.msra.mxu0 0
      %244 = vmatpush.bf16.msra.mxu0 0
      %245 = vmatpush.bf16.msra.mxu0 0
      %246 = vmatpush.bf16.msra.mxu0 0
      %247 = vmatpush.bf16.msra.mxu0 0
      %248 = vmatpush.bf16.msra.mxu0 0
      %249 = vmatpush.bf16.msra.mxu0 %v230
      %250 = vmatmul.bf16.gmra.mxu0 %v234
      %v251 = vpop.f32.mrf.mxu0
      %v252 = vadd.f32 0.0, %v251
      %v253 = vpop.f32.mrf.mxu0
      %v254 = vadd.f32 0.0, %v253
      %255 = vmatmul.bf16.gmra.mxu0 %v237
      %v256 = vpop.f32.mrf.mxu0
      %v257 = vadd.f32 0.0, %v256
      %v258 = vpop.f32.mrf.mxu0
      %v259 = vadd.f32 0.0, %v258
      %260 = vmatmul.bf16.gmra.mxu0 %v240
      %v261 = vpop.f32.mrf.mxu0
      %v262 = vadd.f32 0.0, %v261
      %v263 = vpop.f32.mrf.mxu0
      %v264 = vadd.f32 0.0, %v263
      %265 = vdwg.mxu0
      %v268 = vunpack.c.l.b16 %v188
      %v269 = vunpack.c.l.b16 %v189
      %v270 = vpack.c.b16 %v269, %v268
      %v272 = vsel %vm232, %v190, 0
      %v274 = vsel %vm232, %v191, 0
      %v276 = vsel %vm232, %v192, 0
      %278 = vmatpush.bf16.msra.mxu0 0
      %279 = vmatpush.bf16.msra.mxu0 0
      %280 = vmatpush.bf16.msra.mxu0 0
      %281 = vmatpush.bf16.msra.mxu0 0
      %282 = vmatpush.bf16.msra.mxu0 0
      %283 = vmatpush.bf16.msra.mxu0 0
      %284 = vmatpush.bf16.msra.mxu0 0
      %285 = vmatpush.bf16.msra.mxu0 %v270
      %286 = vmatmul.bf16.gmra.mxu0 %v272
      %v287 = vpop.f32.mrf.mxu0
      %v288 = vadd.f32 %v252, %v287
      %v289 = vpop.f32.mrf.mxu0
      %v290 = vadd.f32 %v254, %v289
      %291 = vmatmul.bf16.gmra.mxu0 %v274
      %v292 = vpop.f32.mrf.mxu0
      %v293 = vadd.f32 %v257, %v292
      %v294 = vpop.f32.mrf.mxu0
      %v295 = vadd.f32 %v259, %v294
      %296 = vmatmul.bf16.gmra.mxu0 %v276
      %v297 = vpop.f32.mrf.mxu0
      %v298 = vadd.f32 %v262, %v297
      %v299 = vpop.f32.mrf.mxu0
      %v300 = vadd.f32 %v264, %v299
      %301 = vdwg.mxu0
      %s302 = scalar_lea.vmem %s1, 16
      %v303 = vld [vmem:[%s302] sm:$0xf]
      %v304 = vld [vmem:[%s302 + $0x4] sm:$0xf]
      %vm309 = vcmask 1046528
      %v310 = vrot.slane %v190, 1
      %v311 = vrot.slane %v191, 1
      %v312 = vsel %vm309, %v310, %v311
      %v313 = vrot.slane %v192, 1
      %v314 = vsel %vm309, %v311, %v313
      %v315 = vrot.slane %v196, 1
      %v316 = vsel %vm309, %v313, %v315
      %v319 = vunpack.c.l.b16 %v303
      %v320 = vunpack.c.l.b16 %v304
      %v321 = vpack.c.b16 %v320, %v319
      %v324 = vsel %vm232, %v312, 0
      %v327 = vsel %vm232, %v314, 0
      %v330 = vsel %vm232, %v316, 0
      %332 = vmatpush.bf16.msra.mxu0 0
      %333 = vmatpush.bf16.msra.mxu0 0
      %334 = vmatpush.bf16.msra.mxu0 0
      %335 = vmatpush.bf16.msra.mxu0 0
      %336 = vmatpush.bf16.msra.mxu0 0
      %337 = vmatpush.bf16.msra.mxu0 0
      %338 = vmatpush.bf16.msra.mxu0 0
      %339 = vmatpush.bf16.msra.mxu0 %v321
      %340 = vmatmul.bf16.gmra.mxu0 %v324
      %v341 = vpop.f32.mrf.mxu0
      %v342 = vadd.f32 0.0, %v341
      %v343 = vpop.f32.mrf.mxu0
      %v344 = vadd.f32 0.0, %v343
      %345 = vmatmul.bf16.gmra.mxu0 %v327
      %v346 = vpop.f32.mrf.mxu0
      %v347 = vadd.f32 0.0, %v346
      %v348 = vpop.f32.mrf.mxu0
      %v349 = vadd.f32 0.0, %v348
      %350 = vmatmul.bf16.gmra.mxu0 %v330
      %v351 = vpop.f32.mrf.mxu0
      %v352 = vadd.f32 0.0, %v351
      %v353 = vpop.f32.mrf.mxu0
      %v354 = vadd.f32 0.0, %v353
      %355 = vdwg.mxu0
      %v356 = vadd.f32 %v288, %v342
      %v357 = vadd.f32 %v290, %v344
      %v358 = vadd.f32 %v293, %v347
      %v359 = vadd.f32 %v295, %v349
      %v360 = vadd.f32 %v298, %v352
      %v361 = vadd.f32 %v300, %v354
      %s362 = scalar_lea.vmem %s1, 24
      %v363 = vld [vmem:[%s362] sm:$0xf]
      %v364 = vld [vmem:[%s362 + $0x4] sm:$0xf]
      %vm365 = vcmask 1044480
      %v366 = vrot.slane %v190, 3
      %v367 = vrot.slane %v191, 3
      %v368 = vsel %vm365, %v366, %v367
      %v369 = vrot.slane %v192, 3
      %v370 = vsel %vm365, %v367, %v369
      %v371 = vrot.slane %v196, 3
      %v372 = vsel %vm365, %v369, %v371
      %v375 = vunpack.c.l.b16 %v363
      %v376 = vunpack.c.l.b16 %v364
      %v377 = vpack.c.b16 %v376, %v375
      %v380 = vsel %vm232, %v368, 0
      %v383 = vsel %vm232, %v370, 0
      %v386 = vsel %vm232, %v372, 0
      %388 = vmatpush.bf16.msra.mxu0 0
      %389 = vmatpush.bf16.msra.mxu0 0
      %390 = vmatpush.bf16.msra.mxu0 0
      %391 = vmatpush.bf16.msra.mxu0 0
      %392 = vmatpush.bf16.msra.mxu0 0
      %393 = vmatpush.bf16.msra.mxu0 0
      %394 = vmatpush.bf16.msra.mxu0 0
      %395 = vmatpush.bf16.msra.mxu0 %v377
      %396 = vmatmul.bf16.gmra.mxu0 %v380
      %v397 = vpop.f32.mrf.mxu0
      %v398 = vadd.f32 0.0, %v397
      %v399 = vpop.f32.mrf.mxu0
      %v400 = vadd.f32 0.0, %v399
      %401 = vmatmul.bf16.gmra.mxu0 %v383
      %v402 = vpop.f32.mrf.mxu0
      %v403 = vadd.f32 0.0, %v402
      %v404 = vpop.f32.mrf.mxu0
      %v405 = vadd.f32 0.0, %v404
      %406 = vmatmul.bf16.gmra.mxu0 %v386
      %v407 = vpop.f32.mrf.mxu0
      %v408 = vadd.f32 0.0, %v407
      %v409 = vpop.f32.mrf.mxu0
      %v410 = vadd.f32 0.0, %v409
      %411 = vdwg.mxu0
      %v412 = vadd.f32 %v356, %v398
      %v413 = vadd.f32 %v357, %v400
      %v414 = vadd.f32 %v358, %v403
      %v415 = vadd.f32 %v359, %v405
      %v416 = vadd.f32 %v360, %v408
      %v417 = vadd.f32 %v361, %v410
      %s418 = scalar_lea.vmem %s1, 32
      %v419 = vld [vmem:[%s418] sm:$0xf]
      %v420 = vld [vmem:[%s418 + $0x4] sm:$0xf]
      %vm421 = vsmask.f32 4352
      %v422 = vrot.slane %v199, 3
      %v423 = vrot.slane %v201, 4
      %v424 = vor.u32 %v422, %v423
      %v425 = vrot.slane %v210, 3
      %v426 = vrot.slane %v206, 4
      %v427 = vor.u32 %v425, %v426
      %v428 = vsel %vm421, %v424, %v427
      %v429 = vrot.slane %v218, 3
      %v430 = vrot.slane %v214, 4
      %v431 = vor.u32 %v429, %v430
      %v432 = vsel %vm421, %v427, %v431
      %v433 = vshrl.u32 %v196, 16
      %v435 = vrot.slane %v433, 3
      %v436 = vrot.slane %v222, 4
      %v437 = vor.u32 %v435, %v436
      %v438 = vsel %vm421, %v431, %v437
      %v441 = vunpack.c.l.b16 %v419
      %v442 = vunpack.c.l.b16 %v420
      %v443 = vpack.c.b16 %v442, %v441
      %v446 = vsel %vm232, %v428, 0
      %v449 = vsel %vm232, %v432, 0
      %v452 = vsel %vm232, %v438, 0
      %454 = vmatpush.bf16.msra.mxu0 0
      %455 = vmatpush.bf16.msra.mxu0 0
      %456 = vmatpush.bf16.msra.mxu0 0
      %457 = vmatpush.bf16.msra.mxu0 0
      %458 = vmatpush.bf16.msra.mxu0 0
      %459 = vmatpush.bf16.msra.mxu0 0
      %460 = vmatpush.bf16.msra.mxu0 0
      %461 = vmatpush.bf16.msra.mxu0 %v443
      %462 = vmatmul.bf16.gmra.mxu0 %v446
      %v463 = vpop.f32.mrf.mxu0
      %v464 = vadd.f32 0.0, %v463
      %v465 = vpop.f32.mrf.mxu0
      %v466 = vadd.f32 0.0, %v465
      %467 = vmatmul.bf16.gmra.mxu0 %v449
      %v468 = vpop.f32.mrf.mxu0
      %v469 = vadd.f32 0.0, %v468
      %v470 = vpop.f32.mrf.mxu0
      %v471 = vadd.f32 0.0, %v470
      %472 = vmatmul.bf16.gmra.mxu0 %v452
      %v473 = vpop.f32.mrf.mxu0
      %v474 = vadd.f32 0.0, %v473
      %v475 = vpop.f32.mrf.mxu0
      %v476 = vadd.f32 0.0, %v475
      %477 = vdwg.mxu0
      %v478 = vadd.f32 %v412, %v464
      %v479 = vadd.f32 %v413, %v466
      %v480 = vadd.f32 %v414, %v469
      %v481 = vadd.f32 %v415, %v471
      %v482 = vadd.f32 %v416, %v474
      %v483 = vadd.f32 %v417, %v476
      %s484 = scalar_lea.vmem %s1, 40
      %v485 = vld [vmem:[%s484] sm:$0xf]
      %v486 = vld [vmem:[%s484 + $0x4] sm:$0xf]
      %v487 = vpack.c.bf16 %v182, %v181
      %v488 = vpack.c.bf16 %v184, %v183
      %v489 = vpack.c.bf16 %v186, %v185
      %v492 = vunpack.c.l.b16 %v485
      %v493 = vunpack.c.l.b16 %v486
      %v494 = vpack.c.b16 %v493, %v492
      %v497 = vsel %vm232, %v487, 0
      %v500 = vsel %vm232, %v488, 0
      %v503 = vsel %vm232, %v489, 0
      %505 = vmatpush.bf16.msra.mxu0 0
      %506 = vmatpush.bf16.msra.mxu0 0
      %507 = vmatpush.bf16.msra.mxu0 0
      %508 = vmatpush.bf16.msra.mxu0 0
      %509 = vmatpush.bf16.msra.mxu0 0
      %510 = vmatpush.bf16.msra.mxu0 0
      %511 = vmatpush.bf16.msra.mxu0 0
      %512 = vmatpush.bf16.msra.mxu0 %v494
      %513 = vmatmul.bf16.gmra.mxu0 %v497
      %v514 = vpop.f32.mrf.mxu0
      %v515 = vadd.f32 0.0, %v514
      %v516 = vpop.f32.mrf.mxu0
      %v517 = vadd.f32 0.0, %v516
      %518 = vmatmul.bf16.gmra.mxu0 %v500
      %v519 = vpop.f32.mrf.mxu0
      %v520 = vadd.f32 0.0, %v519
      %v521 = vpop.f32.mrf.mxu0
      %v522 = vadd.f32 0.0, %v521
      %523 = vmatmul.bf16.gmra.mxu0 %v503
      %v524 = vpop.f32.mrf.mxu0
      %v525 = vadd.f32 0.0, %v524
      %v526 = vpop.f32.mrf.mxu0
      %v527 = vadd.f32 0.0, %v526
      %528 = vdwg.mxu0
      %v529 = vadd.f32 %v478, %v515
      %v530 = vadd.f32 %v479, %v517
      %v531 = vadd.f32 %v480, %v520
      %v532 = vadd.f32 %v481, %v522
      %v533 = vadd.f32 %v482, %v525
      %v534 = vadd.f32 %v483, %v527
      %s535 = scalar_lea.vmem %s1, 48
      %v536 = vld [vmem:[%s535] sm:$0xf]
      %v537 = vld [vmem:[%s535 + $0x4] sm:$0xf]
      %v538 = vpack.c.bf16 %v187, %v187
      %vm543 = vcmask 1045504
      %v544 = vrot.slane %v487, 2
      %v545 = vrot.slane %v488, 2
      %v546 = vsel %vm543, %v544, %v545
      %v547 = vrot.slane %v489, 2
      %v548 = vsel %vm543, %v545, %v547
      %v549 = vrot.slane %v538, 2
      %v550 = vsel %vm543, %v547, %v549
      %v553 = vunpack.c.l.b16 %v536
      %v554 = vunpack.c.l.b16 %v537
      %v555 = vpack.c.b16 %v554, %v553
      %v558 = vsel %vm232, %v546, 0
      %v561 = vsel %vm232, %v548, 0
      %v564 = vsel %vm232, %v550, 0
      %566 = vmatpush.bf16.msra.mxu0 0
      %567 = vmatpush.bf16.msra.mxu0 0
      %568 = vmatpush.bf16.msra.mxu0 0
      %569 = vmatpush.bf16.msra.mxu0 0
      %570 = vmatpush.bf16.msra.mxu0 0
      %571 = vmatpush.bf16.msra.mxu0 0
      %572 = vmatpush.bf16.msra.mxu0 0
      %573 = vmatpush.bf16.msra.mxu0 %v555
      %574 = vmatmul.bf16.gmra.mxu0 %v558
      %v575 = vpop.f32.mrf.mxu0
      %v576 = vadd.f32 0.0, %v575
      %v577 = vpop.f32.mrf.mxu0
      %v578 = vadd.f32 0.0, %v577
      %579 = vmatmul.bf16.gmra.mxu0 %v561
      %v580 = vpop.f32.mrf.mxu0
      %v581 = vadd.f32 0.0, %v580
      %v582 = vpop.f32.mrf.mxu0
      %v583 = vadd.f32 0.0, %v582
      %584 = vmatmul.bf16.gmra.mxu0 %v564
      %v585 = vpop.f32.mrf.mxu0
      %v586 = vadd.f32 0.0, %v585
      %v587 = vpop.f32.mrf.mxu0
      %v588 = vadd.f32 0.0, %v587
      %589 = vdwg.mxu0
      %v590 = vadd.f32 %v529, %v576
      %v591 = vadd.f32 %v530, %v578
      %v592 = vadd.f32 %v531, %v581
      %v593 = vadd.f32 %v532, %v583
      %v594 = vadd.f32 %v533, %v586
      %v595 = vadd.f32 %v534, %v588
      %s596 = scalar_lea.vmem %s1, 56
      %v597 = vld [vmem:[%s596] sm:$0xf]
      %v598 = vld [vmem:[%s596 + $0x4] sm:$0xf]
      %vm599 = vsmask.f32 5376
      %v600 = vshrl.u32 %v487, 16
      %v602 = vrot.slane %v600, 2
      %v603 = vshll.u32 %v487, 16
      %v605 = vrot.slane %v603, 3
      %v606 = vor.u32 %v602, %v605
      %v607 = vshrl.u32 %v488, 16
      %v609 = vrot.slane %v607, 2
      %v610 = vshll.u32 %v488, 16
      %v612 = vrot.slane %v610, 3
      %v613 = vor.u32 %v609, %v612
      %v614 = vsel %vm599, %v606, %v613
      %v615 = vshrl.u32 %v489, 16
      %v617 = vrot.slane %v615, 2
      %v618 = vshll.u32 %v489, 16
      %v620 = vrot.slane %v618, 3
      %v621 = vor.u32 %v617, %v620
      %v622 = vsel %vm599, %v613, %v621
      %v624 = vshrl.u32 %v538, 16
      %v626 = vrot.slane %v624, 2
      %v627 = vshll.u32 %v538, 16
      %v629 = vrot.slane %v627, 3
      %v630 = vor.u32 %v626, %v629
      %v631 = vsel %vm599, %v621, %v630
      %v634 = vunpack.c.l.b16 %v597
      %v635 = vunpack.c.l.b16 %v598
      %v636 = vpack.c.b16 %v635, %v634
      %v639 = vsel %vm232, %v614, 0
      %v642 = vsel %vm232, %v622, 0
      %v645 = vsel %vm232, %v631, 0
      %647 = vmatpush.bf16.msra.mxu0 0
      %648 = vmatpush.bf16.msra.mxu0 0
      %649 = vmatpush.bf16.msra.mxu0 0
      %650 = vmatpush.bf16.msra.mxu0 0
      %651 = vmatpush.bf16.msra.mxu0 0
      %652 = vmatpush.bf16.msra.mxu0 0
      %653 = vmatpush.bf16.msra.mxu0 0
      %654 = vmatpush.bf16.msra.mxu0 %v636
      %655 = vmatmul.bf16.gmra.mxu0 %v639
      %v656 = vpop.f32.mrf.mxu0
      %v657 = vadd.f32 0.0, %v656
      %v658 = vpop.f32.mrf.mxu0
      %v659 = vadd.f32 0.0, %v658
      %660 = vmatmul.bf16.gmra.mxu0 %v642
      %v661 = vpop.f32.mrf.mxu0
      %v662 = vadd.f32 0.0, %v661
      %v663 = vpop.f32.mrf.mxu0
      %v664 = vadd.f32 0.0, %v663
      %665 = vmatmul.bf16.gmra.mxu0 %v645
      %v666 = vpop.f32.mrf.mxu0
      %v667 = vadd.f32 0.0, %v666
      %v668 = vpop.f32.mrf.mxu0
      %v669 = vadd.f32 0.0, %v668
      %670 = vdwg.mxu0
      %v671 = vadd.f32 %v590, %v657
      %v672 = vadd.f32 %v591, %v659
      %v673 = vadd.f32 %v592, %v662
      %v674 = vadd.f32 %v593, %v664
      %v675 = vadd.f32 %v594, %v667
      %v676 = vadd.f32 %v595, %v669
      %s677 = scalar_lea.vmem %s1, 64
      %v678 = vld [vmem:[%s677] sm:$0xf]
      %v679 = vld [vmem:[%s677 + $0x4] sm:$0xf]
      %v680 = vrot.slane %v487, 3
      %v681 = vrot.slane %v488, 3
      %v682 = vsel %vm365, %v680, %v681
      %v683 = vrot.slane %v489, 3
      %v684 = vsel %vm365, %v681, %v683
      %v685 = vrot.slane %v538, 3
      %v686 = vsel %vm365, %v683, %v685
      %v689 = vunpack.c.l.b16 %v678
      %v690 = vunpack.c.l.b16 %v679
      %v691 = vpack.c.b16 %v690, %v689
      %v694 = vsel %vm232, %v682, 0
      %v697 = vsel %vm232, %v684, 0
      %v700 = vsel %vm232, %v686, 0
      %702 = vmatpush.bf16.msra.mxu0 0
      %703 = vmatpush.bf16.msra.mxu0 0
      %704 = vmatpush.bf16.msra.mxu0 0
      %705 = vmatpush.bf16.msra.mxu0 0
      %706 = vmatpush.bf16.msra.mxu0 0
      %707 = vmatpush.bf16.msra.mxu0 0
      %708 = vmatpush.bf16.msra.mxu0 0
      %709 = vmatpush.bf16.msra.mxu0 %v691
      %710 = vmatmul.bf16.gmra.mxu0 %v694
      %v711 = vpop.f32.mrf.mxu0
      %v712 = vadd.f32 0.0, %v711
      %v713 = vpop.f32.mrf.mxu0
      %v714 = vadd.f32 0.0, %v713
      %715 = vmatmul.bf16.gmra.mxu0 %v697
      %v716 = vpop.f32.mrf.mxu0
      %v717 = vadd.f32 0.0, %v716
      %v718 = vpop.f32.mrf.mxu0
      %v719 = vadd.f32 0.0, %v718
      %720 = vmatmul.bf16.gmra.mxu0 %v700
      %v721 = vpop.f32.mrf.mxu0
      %v722 = vadd.f32 0.0, %v721
      %v723 = vpop.f32.mrf.mxu0
      %v724 = vadd.f32 0.0, %v723
      %725 = vdwg.mxu0
      %v726 = vadd.f32 %v671, %v712
      %v727 = vadd.f32 %v672, %v714
      %v728 = vadd.f32 %v673, %v717
      %v729 = vadd.f32 %v674, %v719
      %v730 = vadd.f32 %v675, %v722
      %v731 = vadd.f32 %v676, %v724
      %v732 = vld [vmem:[%s2] sm:$0x1]
      %v734 = vperm.slane %v732, 0
      %v736 = vadd.f32 %v726, %v734
      %v737 = vadd.f32 %v727, %v734
      %v738 = vadd.f32 %v728, %v734
      %v739 = vadd.f32 %v729, %v734
      %v740 = vadd.f32 %v730, %v734
      %v741 = vadd.f32 %v731, %v734
      %v742 = vmax.f32 %v736, 0.0
      %v743 = vmax.f32 %v737, 0.0
      %v744 = vmax.f32 %v738, 0.0
      %v745 = vmax.f32 %v739, 0.0
      %v746 = vmax.f32 %v740, 0.0
      %v747 = vmax.f32 %v741, 0.0
      %v748 = vpack.c.bf16 %v742, %v742
      %v749 = vpack.c.bf16 %v743, %v743
      %v750 = vpack.c.bf16 %v744, %v744
      %v751 = vpack.c.bf16 %v745, %v745
      %v752 = vpack.c.bf16 %v746, %v746
      %v753 = vpack.c.bf16 %v747, %v747
      %vm754 = vcmask 257024
      %755 = vst.msk [vmem:[%s170] sm:$0xf] %vm754, %v748
      %756 = vst.msk [vmem:[%s170 + $0x4] sm:$0xf] %vm754, %v749
      %757 = vst.msk [vmem:[%s170 + $0x8] sm:$0xf] %vm754, %v750
      %758 = vst.msk [vmem:[%s170 + $0xc] sm:$0xf] %vm754, %v751
      %759 = vst.msk [vmem:[%s170 + $0x10] sm:$0xf] %vm754, %v752
      %760 = vst.msk [vmem:[%s170 + $0x14] sm:$0xf] %vm754, %v753
      %p761 = scmp.lt.s32.totalorder %s14, 1
      %s762 = scalar_select %p761, %s14, 1
      %s763 = smul.addr %s762, 6
      %s764 = smul.addr %s763, 4
      %s765 = scalar_lea.vmem %s3, %s764
      // Predicated region
      $region33: #{vggish_linear_forward.11} parent=31 // pred_check
        %p766 = pneg %p100
      $region34: #{vggish_linear_forward.11} parent=31 // pred_check_branch
        %768 = sbr.rel (%p766) target = $region36
      $region35: #{vggish_linear_forward.11} parent=31 // pred_region
        _
      $region36: #{vggish_linear_forward.11} parent=31 // pred_fallthru
        _
    $region32: #{vggish_linear_forward.11} parent=5 // pred_fallthru
      _
    %p769 = scmp.le.s32.totalorder 2, %s9
    // Predicated region
    $region37: #{vggish_linear_forward.11} parent=5 // pred_check
      %p770 = pneg %p769
    $region38: #{vggish_linear_forward.11} parent=5 // pred_check_branch
      %772 = sbr.rel (%p770) target = $region40
    $region39: #{vggish_linear_forward.11} parent=5 // pred_region
      %s773 = ssub.s32 %s9, 2
      // Predicated region
      $region41: #{vggish_linear_forward.11} parent=39 // pred_check
        %p774 = pneg %p106
      $region42: #{vggish_linear_forward.11} parent=39 // pred_check_branch
        %776 = sbr.rel (%p774) target = $region44
      $region43: #{vggish_linear_forward.11} parent=39 // pred_region
        %p777 = scmp.lt.s32.totalorder %s15, 1
        %s778 = scalar_select %p777, %s15, 1
        %s779 = smul.addr %s778, 6
        %s780 = smul.addr %s779, 4
        %s781 = scalar_lea.vmem %s3, %s780
      $region44: #{vggish_linear_forward.11} parent=39 // pred_fallthru
        _
    $region40: #{vggish_linear_forward.11} parent=5 // pred_fallthru
      _
  $region6: #{vggish_linear_forward.11} parent=0 // loop_footer
    %s13 = sadd.s32 1, %s9
  $region7: #{vggish_linear_forward.11} parent=0 // loop_footer_branch
    %8 = sbr.rel target = $region3
  $region8: #{vggish_linear_forward.11} parent=0 // loop_exit
    _

// kernel: vggish_linear_forward.9
$region0: #{vggish_linear_forward.9}
  #allocation0 [shape = 'u32[]', space=smem, size = 0x4, offset = 0x4, fixed_abs, tag = 'smem constant byte address 0x4 - core index']
  #allocation1 [shape = 'u32[72,128]{1,0:T(1,128)}', space=vmem, size = 0x9000, scoped, tag = 'internal scratch']
  %s0 = inlined_call_operand.vmem [shape: bf16[2,630,1], index: 0, kind: input, shape index: {}]
  %s1 = inlined_call_operand.vmem [shape: bf16[9,1,8], index: 1, kind: input, shape index: {}]
  %s2 = inlined_call_operand.vmem [shape: f32[1,8], index: 2, kind: input, shape index: {}]
  %s3 = inlined_call_operand.vmem [shape: bf16[2,576,8], index: 3, kind: output, shape index: {}]
  %s4 = sld [smem:[#allocation0]]
  $region45: #{vggish_linear_forward.9} parent=0
    _
  %s6 = ssub.s32 1, %s4
  %s7 = scalar_select 0, %s6, %s4
  loop: start=0, step=1, limit=4
  $region2: #{vggish_linear_forward.9} parent=0 // loop_pre_header
    _
  $region3: #{vggish_linear_forward.9} parent=0 // loop_header
    %s9 = sphi 0, %s13
    %p10 = scmp.ge.s32.totalorder %s9, 4
    %s19 = sphi 0, %s21
    %s22 = sphi 0, %s19
    %s23 = sphi 0, %s22
    %s39 = sphi 0, %s23
    %s43 = sphi 0, %s43
    %s45 = sphi 0, %s43
    %s46 = sphi 0, %s45
    %s60 = sphi 0, %s46
    %s64 = sphi 0, %s64
    %s66 = sphi 0, %s64
    %s67 = sphi 0, %s66
    %s81 = sphi 0, %s67
    %s87 = sphi 0, %s89
    %s90 = sphi 0, %s87
    %s91 = sphi 0, %s90
    %s107 = sphi 0, %s91
  $region4: #{vggish_linear_forward.9} parent=0 // loop_header_branch
    %12 = sbr.rel (%p10) target = $region8
  $region5: #{vggish_linear_forward.9} parent=0 // loop_body
    %s14 = ssub.s32 %s9, 1
    %s15 = ssub.s32 %s9, 2
    %s16 = sadd.s32 %s9, 1
    %s17 = ssub.s32 %s9, %s16
    %p18 = scmp.eq.s32.totalorder %s17, 0
    %s20 = sadd.s32 %s19, 1
    %s21 = scalar_select %p18, %s19, %s20
    %p24 = pneg %p18
    %p25 = scmp.eq.s32.totalorder %s9, 1
    %p26 = por %p24, %p25
    %p27 = scmp.ne.s32.totalorder %s19, %s22
    %p28 = scmp.eq.s32.totalorder %s9, 0
    %p29 = por %p27, %p28
    %p30 = scmp.ne.s32.totalorder %s19, %s22
    %p31 = scmp.eq.s32.totalorder %s14, 1
    %p32 = por %p30, %p31
    %p33 = scmp.ne.s32.totalorder %s22, %s23
    %p34 = scmp.eq.s32.totalorder %s14, 0
    %p35 = por %p33, %p34
    %p36 = scmp.ne.s32.totalorder %s22, %s23
    %p37 = scmp.eq.s32.totalorder %s15, 1
    %p38 = por %p36, %p37
    %p40 = scmp.ne.s32.totalorder %s23, %s39
    %p41 = scmp.eq.s32.totalorder %s15, 0
    %p42 = por %p40, %p41
    %s44 = sadd.s32 %s43, 1
    %p47 = scmp.eq.s32.totalorder %s9, 1
    %p48 = scmp.ne.s32.totalorder %s43, %s45
    %p49 = scmp.eq.s32.totalorder %s9, 0
    %p50 = por %p48, %p49
    %p51 = scmp.ne.s32.totalorder %s43, %s45
    %p52 = scmp.eq.s32.totalorder %s14, 1
    %p53 = por %p51, %p52
    %p54 = scmp.ne.s32.totalorder %s45, %s46
    %p55 = scmp.eq.s32.totalorder %s14, 0
    %p56 = por %p54, %p55
    %p57 = scmp.ne.s32.totalorder %s45, %s46
    %p58 = scmp.eq.s32.totalorder %s15, 1
    %p59 = por %p57, %p58
    %p61 = scmp.ne.s32.totalorder %s46, %s60
    %p62 = scmp.eq.s32.totalorder %s15, 0
    %p63 = por %p61, %p62
    %s65 = sadd.s32 %s64, 1
    %p68 = scmp.eq.s32.totalorder %s9, 1
    %p69 = scmp.ne.s32.totalorder %s64, %s66
    %p70 = scmp.eq.s32.totalorder %s9, 0
    %p71 = por %p69, %p70
    %p72 = scmp.ne.s32.totalorder %s64, %s66
    %p73 = scmp.eq.s32.totalorder %s14, 1
    %p74 = por %p72, %p73
    %p75 = scmp.ne.s32.totalorder %s66, %s67
    %p76 = scmp.eq.s32.totalorder %s14, 0
    %p77 = por %p75, %p76
    %p78 = scmp.ne.s32.totalorder %s66, %s67
    %p79 = scmp.eq.s32.totalorder %s15, 1
    %p80 = por %p78, %p79
    %p82 = scmp.ne.s32.totalorder %s67, %s81
    %p83 = scmp.eq.s32.totalorder %s15, 0
    %p84 = por %p82, %p83
    %s85 = ssub.s32 %s9, %s16
    %p86 = scmp.eq.s32.totalorder %s85, 0
    %s88 = sadd.s32 %s87, 1
    %s89 = scalar_select %p86, %s87, %s88
    %p92 = pneg %p86
    %p93 = scmp.eq.s32.totalorder %s9, 1
    %p94 = por %p92, %p93
    %p95 = scmp.ne.s32.totalorder %s87, %s90
    %p96 = scmp.eq.s32.totalorder %s9, 0
    %p97 = por %p95, %p96
    %p98 = scmp.ne.s32.totalorder %s87, %s90
    %p99 = scmp.eq.s32.totalorder %s14, 1
    %p100 = por %p98, %p99
    %p101 = scmp.ne.s32.totalorder %s90, %s91
    %p102 = scmp.eq.s32.totalorder %s14, 0
    %p103 = por %p101, %p102
    %p104 = scmp.ne.s32.totalorder %s90, %s91
    %p105 = scmp.eq.s32.totalorder %s15, 1
    %p106 = por %p104, %p105
    %p108 = scmp.ne.s32.totalorder %s91, %s107
    %p109 = scmp.eq.s32.totalorder %s15, 0
    %p110 = por %p108, %p109
    %p111 = scmp.le.s32.totalorder 1, %s9
    %p112 = scmp.lt.s32.totalorder %s9, 3
    %p113 = pnand %p111, %p112
    %p114 = pneg %p113
    // Predicated region
    $region9: #{vggish_linear_forward.9} parent=5 // pred_check
      _
    $region10: #{vggish_linear_forward.9} parent=5 // pred_check_branch
      %116 = sbr.rel (%p113) target = $region12
    $region11: #{vggish_linear_forward.9} parent=5 // pred_region
      %s117 = ssub.s32 %s9, 1
      // Predicated region
      $region13: #{vggish_linear_forward.9} parent=11 // pred_check
        %p118 = pneg %p56
      $region14: #{vggish_linear_forward.9} parent=11 // pred_check_branch
        %120 = sbr.rel (%p118) target = $region16
      $region15: #{vggish_linear_forward.9} parent=11 // pred_region
        _
      $region16: #{vggish_linear_forward.9} parent=11 // pred_fallthru
        _
      // Predicated region
      $region17: #{vggish_linear_forward.9} parent=11 // pred_check
        %p121 = pneg %p77
      $region18: #{vggish_linear_forward.9} parent=11 // pred_check_branch
        %123 = sbr.rel (%p121) target = $region20
      $region19: #{vggish_linear_forward.9} parent=11 // pred_region
        _
      $region20: #{vggish_linear_forward.9} parent=11 // pred_fallthru
        _
    $region12: #{vggish_linear_forward.9} parent=5 // pred_fallthru
      _
    %p124 = scmp.lt.s32.totalorder %s9, 2
    // Predicated region
    $region21: #{vggish_linear_forward.9} parent=5 // pred_check
      %p125 = pneg %p124
    $region22: #{vggish_linear_forward.9} parent=5 // pred_check_branch
      %127 = sbr.rel (%p125) target = $region24
    $region23: #{vggish_linear_forward.9} parent=5 // pred_region
      // Predicated region
      $region25: #{vggish_linear_forward.9} parent=23 // pred_check
        %p128 = pneg %p29
      $region26: #{vggish_linear_forward.9} parent=23 // pred_check_branch
        %130 = sbr.rel (%p128) target = $region28
      $region27: #{vggish_linear_forward.9} parent=23 // pred_region
        %p131 = scmp.lt.s32.totalorder %s9, 1
        %s132 = scalar_select %p131, %s9, 1
        %s133 = smul.addr %s132, 79
        %s134 = smul.addr %s133, 4
        %s135 = scalar_lea.vmem %s0, %s134
      $region28: #{vggish_linear_forward.9} parent=23 // pred_fallthru
        _
    $region24: #{vggish_linear_forward.9} parent=5 // pred_fallthru
      _
    %p136 = scmp.le.s32.totalorder 1, %s9
    %p137 = scmp.lt.s32.totalorder %s9, 3
    %p138 = pnand %p136, %p137
    %p139 = pneg %p138
    // Predicated region
    $region29: #{vggish_linear_forward.9} parent=5 // pred_check
      _
    $region30: #{vggish_linear_forward.9} parent=5 // pred_check_branch
      %141 = sbr.rel (%p138) target = $region32
    $region31: #{vggish_linear_forward.9} parent=5 // pred_region
      %s142 = ssub.s32 %s9, 1
      %p143 = scmp.lt.s32.totalorder %s14, 1
      %s144 = scalar_select %p143, %s14, 1
      %s145 = smul.addr %s144, 79
      %s146 = smul.addr %s145, 4
      %s147 = scalar_lea.vmem %s0, %s146
      %p148 = pneg %p35
      %p149 = pneg %p32
      %p150 = pneg %p56
      %p151 = pneg %p53
      %p152 = pneg %p77
      %p153 = pneg %p74
      %p154 = pneg %p103
      %p155 = pneg %p100
      %p156 = scmp.lt.s32.totalorder %s14, 1
      %s157 = scalar_select %p156, %s14, 1
      %s158 = smul.addr %s157, 72
      %s159 = smul.addr %s158, 4
      %s160 = scalar_lea.vmem %s3, %s159
      %p161 = scmp.lt.s32.totalorder %s14, 1
      %s162 = scalar_select %p161, %s14, 1
      %s163 = smul.addr %s162, 79
      %s164 = smul.addr %s163, 4
      %s165 = scalar_lea.vmem %s0, %s164
      %p166 = scmp.lt.s32.totalorder %s14, 1
      %s167 = scalar_select %p166, %s14, 1
      %s168 = smul.addr %s167, 72
      %s169 = smul.addr %s168, 4
      %s170 = scalar_lea.vmem %s3, %s169
      %v171 = vld [vmem:[%s165] sm:$0xf]
      %v172 = vld [vmem:[%s165 + $0x4] sm:$0xf]
      %v173 = vld [vmem:[%s165 + $0x8] sm:$0xf]
      %v174 = vld [vmem:[%s165 + $0xc] sm:$0xf]
      %v175 = vld [vmem:[%s165 + $0x10] sm:$0xf]
      %v176 = vld [vmem:[%s165 + $0x14] sm:$0xf]
      %v177 = vld [vmem:[%s165 + $0x18] sm:$0xf]
      %v178 = vld [vmem:[%s165 + $0x1c] sm:$0xf]
      %v179 = vld [vmem:[%s165 + $0x20] sm:$0xf]
      %v180 = vld [vmem:[%s165 + $0x24] sm:$0xf]
      %v181 = vld [vmem:[%s165 + $0x28] sm:$0xf]
      %v182 = vld [vmem:[%s165 + $0x2c] sm:$0xf]
      %v183 = vld [vmem:[%s165 + $0x30] sm:$0xf]
      %v184 = vld [vmem:[%s165 + $0x34] sm:$0xf]
      %v185 = vld [vmem:[%s165 + $0x38] sm:$0xf]
      %v186 = vld [vmem:[%s165 + $0x3c] sm:$0xf]
      %v187 = vld [vmem:[%s165 + $0x40] sm:$0xf]
      %v188 = vld [vmem:[%s165 + $0x44] sm:$0xf]
      %v189 = vld [vmem:[%s165 + $0x48] sm:$0xf]
      %v190 = vld [vmem:[%s165 + $0x4c] sm:$0xf]
      %v191 = vld [vmem:[%s165 + $0x50] sm:$0xf]
      %v192 = vld [vmem:[%s165 + $0x54] sm:$0xf]
      %v193 = vld [vmem:[%s165 + $0x58] sm:$0xf]
      %v194 = vld [vmem:[%s165 + $0x5c] sm:$0xf]
      %v195 = vld [vmem:[%s165 + $0x60] sm:$0xf]
      %v196 = vld [vmem:[%s165 + $0x64] sm:$0xf]
      %v197 = vld [vmem:[%s165 + $0x68] sm:$0xf]
      %v198 = vld [vmem:[%s165 + $0x6c] sm:$0xf]
      %v199 = vld [vmem:[%s165 + $0x70] sm:$0xf]
      %v200 = vld [vmem:[%s165 + $0x74] sm:$0xf]
      %v201 = vld [vmem:[%s165 + $0x78] sm:$0xf]
      %v202 = vld [vmem:[%s165 + $0x7c] sm:$0xf]
      %v203 = vld [vmem:[%s165 + $0x80] sm:$0xf]
      %v204 = vld [vmem:[%s165 + $0x84] sm:$0xf]
      %v205 = vld [vmem:[%s165 + $0x88] sm:$0xf]
      %v206 = vld [vmem:[%s165 + $0x8c] sm:$0xf]
      %v207 = vld [vmem:[%s165 + $0x90] sm:$0xf]
      %v208 = vld [vmem:[%s165 + $0x94] sm:$0xf]
      %v209 = vld [vmem:[%s165 + $0x98] sm:$0xf]
      %v210 = vld [vmem:[%s165 + $0x9c] sm:$0xf]
      %v211 = vld [vmem:[%s165 + $0xa0] sm:$0xf]
      %v212 = vld [vmem:[%s165 + $0xa4] sm:$0xf]
      %v213 = vld [vmem:[%s165 + $0xa8] sm:$0xf]
      %v214 = vld [vmem:[%s165 + $0xac] sm:$0xf]
      %v215 = vld [vmem:[%s165 + $0xb0] sm:$0xf]
      %v216 = vld [vmem:[%s165 + $0xb4] sm:$0xf]
      %v217 = vld [vmem:[%s165 + $0xb8] sm:$0xf]
      %v218 = vld [vmem:[%s165 + $0xbc] sm:$0xf]
      %v219 = vld [vmem:[%s165 + $0xc0] sm:$0xf]
      %v220 = vld [vmem:[%s165 + $0xc4] sm:$0xf]
      %v221 = vld [vmem:[%s165 + $0xc8] sm:$0xf]
      %v222 = vld [vmem:[%s165 + $0xcc] sm:$0xf]
      %v223 = vld [vmem:[%s165 + $0xd0] sm:$0xf]
      %v224 = vld [vmem:[%s165 + $0xd4] sm:$0xf]
      %v225 = vld [vmem:[%s165 + $0xd8] sm:$0xf]
      %v226 = vld [vmem:[%s165 + $0xdc] sm:$0xf]
      %v227 = vld [vmem:[%s165 + $0xe0] sm:$0xf]
      %v228 = vld [vmem:[%s165 + $0xe4] sm:$0xf]
      %v229 = vld [vmem:[%s165 + $0xe8] sm:$0xf]
      %v230 = vld [vmem:[%s165 + $0xec] sm:$0xf]
      %v231 = vld [vmem:[%s165 + $0xf0] sm:$0xf]
      %v232 = vld [vmem:[%s165 + $0xf4] sm:$0xf]
      %v233 = vld [vmem:[%s165 + $0xf8] sm:$0xf]
      %v234 = vld [vmem:[%s165 + $0xfc] sm:$0xf]
      %v235 = vld [vmem:[%s165 + $0x100] sm:$0xf]
      %v236 = vld [vmem:[%s165 + $0x104] sm:$0xf]
      %v237 = vld [vmem:[%s165 + $0x108] sm:$0xf]
      %v238 = vld [vmem:[%s165 + $0x10c] sm:$0xf]
      %v239 = vld [vmem:[%s165 + $0x110] sm:$0xf]
      %v240 = vld [vmem:[%s165 + $0x114] sm:$0xf]
      %v241 = vld [vmem:[%s165 + $0x118] sm:$0xf]
      %v242 = vld [vmem:[%s165 + $0x11c] sm:$0xf]
      %v243 = vld [vmem:[%s165 + $0x120] sm:$0xf]
      %v244 = vld [vmem:[%s165 + $0x124] sm:$0xf]
      %v245 = vld [vmem:[%s165 + $0x128] sm:$0xf]
      %v246 = vld [vmem:[%s165 + $0x12c] sm:$0xf]
      %v247 = vld [vmem:[%s165 + $0x130] sm:$0xf]
      %v248 = vunpack.c.l.bf16 %v171
      %v249 = vunpack.c.l.bf16 %v172
      %v250 = vunpack.c.l.bf16 %v173
      %v251 = vunpack.c.l.bf16 %v174
      %v252 = vunpack.c.l.bf16 %v175
      %v253 = vunpack.c.l.bf16 %v176
      %v254 = vunpack.c.l.bf16 %v177
      %v255 = vunpack.c.l.bf16 %v178
      %v256 = vunpack.c.l.bf16 %v179
      %v257 = vunpack.c.l.bf16 %v180
      %v258 = vunpack.c.l.bf16 %v181
      %v259 = vunpack.c.l.bf16 %v182
      %v260 = vunpack.c.l.bf16 %v183
      %v261 = vunpack.c.l.bf16 %v184
      %v262 = vunpack.c.l.bf16 %v185
      %v263 = vunpack.c.l.bf16 %v186
      %v264 = vunpack.c.l.bf16 %v187
      %v265 = vunpack.c.l.bf16 %v188
      %v266 = vunpack.c.l.bf16 %v189
      %v267 = vunpack.c.l.bf16 %v190
      %v268 = vunpack.c.l.bf16 %v191
      %v269 = vunpack.c.l.bf16 %v192
      %v270 = vunpack.c.l.bf16 %v193
      %v271 = vunpack.c.l.bf16 %v194
      %v272 = vunpack.c.l.bf16 %v195
      %v273 = vunpack.c.l.bf16 %v196
      %v274 = vunpack.c.l.bf16 %v197
      %v275 = vunpack.c.l.bf16 %v198
      %v276 = vunpack.c.l.bf16 %v199
      %v277 = vunpack.c.l.bf16 %v200
      %v278 = vunpack.c.l.bf16 %v201
      %v279 = vunpack.c.l.bf16 %v202
      %v280 = vunpack.c.l.bf16 %v203
      %v281 = vunpack.c.l.bf16 %v204
      %v282 = vunpack.c.l.bf16 %v205
      %v283 = vunpack.c.l.bf16 %v206
      %v284 = vunpack.c.l.bf16 %v207
      %v285 = vunpack.c.l.bf16 %v208
      %v286 = vunpack.c.l.bf16 %v209
      %v287 = vunpack.c.l.bf16 %v210
      %v288 = vunpack.c.l.bf16 %v211
      %v289 = vunpack.c.l.bf16 %v212
      %v290 = vunpack.c.l.bf16 %v213
      %v291 = vunpack.c.l.bf16 %v214
      %v292 = vunpack.c.l.bf16 %v215
      %v293 = vunpack.c.l.bf16 %v216
      %v294 = vunpack.c.l.bf16 %v217
      %v295 = vunpack.c.l.bf16 %v218
      %v296 = vunpack.c.l.bf16 %v219
      %v297 = vunpack.c.l.bf16 %v220
      %v298 = vunpack.c.l.bf16 %v221
      %v299 = vunpack.c.l.bf16 %v222
      %v300 = vunpack.c.l.bf16 %v223
      %v301 = vunpack.c.l.bf16 %v224
      %v302 = vunpack.c.l.bf16 %v225
      %v303 = vunpack.c.l.bf16 %v226
      %v304 = vunpack.c.l.bf16 %v227
      %v305 = vunpack.c.l.bf16 %v228
      %v306 = vunpack.c.l.bf16 %v229
      %v307 = vunpack.c.l.bf16 %v230
      %v308 = vunpack.c.l.bf16 %v231
      %v309 = vunpack.c.l.bf16 %v232
      %v310 = vunpack.c.l.bf16 %v233
      %v311 = vunpack.c.l.bf16 %v234
      %v312 = vunpack.c.l.bf16 %v235
      %v313 = vunpack.c.l.bf16 %v236
      %v314 = vunpack.c.l.bf16 %v237
      %v315 = vunpack.c.l.bf16 %v238
      %v316 = vunpack.c.l.bf16 %v239
      %v317 = vunpack.c.l.bf16 %v240
      %v318 = vunpack.c.l.bf16 %v241
      %v319 = vunpack.c.l.bf16 %v242
      %v320 = vunpack.c.l.bf16 %v243
      %v321 = vunpack.c.l.bf16 %v244
      %v322 = vunpack.c.l.bf16 %v245
      %v323 = vunpack.c.l.bf16 %v246
      %v324 = vunpack.c.l.bf16 %v247
      %v325 = vld [vmem:[%s1] sm:$0x1]
      %v326 = vunpack.c.l.bf16 %v325
      %328 = vset.pattern.permute.xlu0 0
      %329 = vperm.xlu0 %328, %v248
      %v330 = vpop.permute.xlu0 %329
      %333 = vset.pattern.permute.xlu0 0
      %334 = vperm.xlu0 %333, %v249
      %v335 = vpop.permute.xlu0 %334
      %338 = vset.pattern.permute.xlu0 0
      %339 = vperm.xlu0 %338, %v250
      %v340 = vpop.permute.xlu0 %339
      %343 = vset.pattern.permute.xlu0 0
      %344 = vperm.xlu0 %343, %v251
      %v345 = vpop.permute.xlu0 %344
      %348 = vset.pattern.permute.xlu0 0
      %349 = vperm.xlu0 %348, %v252
      %v350 = vpop.permute.xlu0 %349
      %353 = vset.pattern.permute.xlu0 0
      %354 = vperm.xlu0 %353, %v253
      %v355 = vpop.permute.xlu0 %354
      %358 = vset.pattern.permute.xlu0 0
      %359 = vperm.xlu0 %358, %v254
      %v360 = vpop.permute.xlu0 %359
      %363 = vset.pattern.permute.xlu0 0
      %364 = vperm.xlu0 %363, %v255
      %v365 = vpop.permute.xlu0 %364
      %368 = vset.pattern.permute.xlu0 0
      %369 = vperm.xlu0 %368, %v256
      %v370 = vpop.permute.xlu0 %369
      %373 = vset.pattern.permute.xlu0 0
      %374 = vperm.xlu0 %373, %v257
      %v375 = vpop.permute.xlu0 %374
      %378 = vset.pattern.permute.xlu0 0
      %379 = vperm.xlu0 %378, %v258
      %v380 = vpop.permute.xlu0 %379
      %383 = vset.pattern.permute.xlu0 0
      %384 = vperm.xlu0 %383, %v259
      %v385 = vpop.permute.xlu0 %384
      %388 = vset.pattern.permute.xlu0 0
      %389 = vperm.xlu0 %388, %v260
      %v390 = vpop.permute.xlu0 %389
      %393 = vset.pattern.permute.xlu0 0
      %394 = vperm.xlu0 %393, %v261
      %v395 = vpop.permute.xlu0 %394
      %398 = vset.pattern.permute.xlu0 0
      %399 = vperm.xlu0 %398, %v262
      %v400 = vpop.permute.xlu0 %399
      %403 = vset.pattern.permute.xlu0 0
      %404 = vperm.xlu0 %403, %v263
      %v405 = vpop.permute.xlu0 %404
      %408 = vset.pattern.permute.xlu0 0
      %409 = vperm.xlu0 %408, %v264
      %v410 = vpop.permute.xlu0 %409
      %413 = vset.pattern.permute.xlu0 0
      %414 = vperm.xlu0 %413, %v265
      %v415 = vpop.permute.xlu0 %414
      %418 = vset.pattern.permute.xlu0 0
      %419 = vperm.xlu0 %418, %v266
      %v420 = vpop.permute.xlu0 %419
      %423 = vset.pattern.permute.xlu0 0
      %424 = vperm.xlu0 %423, %v267
      %v425 = vpop.permute.xlu0 %424
      %428 = vset.pattern.permute.xlu0 0
      %429 = vperm.xlu0 %428, %v268
      %v430 = vpop.permute.xlu0 %429
      %433 = vset.pattern.permute.xlu0 0
      %434 = vperm.xlu0 %433, %v269
      %v435 = vpop.permute.xlu0 %434
      %438 = vset.pattern.permute.xlu0 0
      %439 = vperm.xlu0 %438, %v270
      %v440 = vpop.permute.xlu0 %439
      %443 = vset.pattern.permute.xlu0 0
      %444 = vperm.xlu0 %443, %v271
      %v445 = vpop.permute.xlu0 %444
      %448 = vset.pattern.permute.xlu0 0
      %449 = vperm.xlu0 %448, %v272
      %v450 = vpop.permute.xlu0 %449
      %453 = vset.pattern.permute.xlu0 0
      %454 = vperm.xlu0 %453, %v273
      %v455 = vpop.permute.xlu0 %454
      %458 = vset.pattern.permute.xlu0 0
      %459 = vperm.xlu0 %458, %v274
      %v460 = vpop.permute.xlu0 %459
      %463 = vset.pattern.permute.xlu0 0
      %464 = vperm.xlu0 %463, %v275
      %v465 = vpop.permute.xlu0 %464
      %468 = vset.pattern.permute.xlu0 0
      %469 = vperm.xlu0 %468, %v276
      %v470 = vpop.permute.xlu0 %469
      %473 = vset.pattern.permute.xlu0 0
      %474 = vperm.xlu0 %473, %v277
      %v475 = vpop.permute.xlu0 %474
      %478 = vset.pattern.permute.xlu0 0
      %479 = vperm.xlu0 %478, %v278
      %v480 = vpop.permute.xlu0 %479
      %483 = vset.pattern.permute.xlu0 0
      %484 = vperm.xlu0 %483, %v279
      %v485 = vpop.permute.xlu0 %484
      %488 = vset.pattern.permute.xlu0 0
      %489 = vperm.xlu0 %488, %v280
      %v490 = vpop.permute.xlu0 %489
      %493 = vset.pattern.permute.xlu0 0
      %494 = vperm.xlu0 %493, %v281
      %v495 = vpop.permute.xlu0 %494
      %498 = vset.pattern.permute.xlu0 0
      %499 = vperm.xlu0 %498, %v282
      %v500 = vpop.permute.xlu0 %499
      %503 = vset.pattern.permute.xlu0 0
      %504 = vperm.xlu0 %503, %v283
      %v505 = vpop.permute.xlu0 %504
      %508 = vset.pattern.permute.xlu0 0
      %509 = vperm.xlu0 %508, %v284
      %v510 = vpop.permute.xlu0 %509
      %513 = vset.pattern.permute.xlu0 0
      %514 = vperm.xlu0 %513, %v285
      %v515 = vpop.permute.xlu0 %514
      %518 = vset.pattern.permute.xlu0 0
      %519 = vperm.xlu0 %518, %v286
      %v520 = vpop.permute.xlu0 %519
      %523 = vset.pattern.permute.xlu0 0
      %524 = vperm.xlu0 %523, %v287
      %v525 = vpop.permute.xlu0 %524
      %528 = vset.pattern.permute.xlu0 0
      %529 = vperm.xlu0 %528, %v288
      %v530 = vpop.permute.xlu0 %529
      %533 = vset.pattern.permute.xlu0 0
      %534 = vperm.xlu0 %533, %v289
      %v535 = vpop.permute.xlu0 %534
      %538 = vset.pattern.permute.xlu0 0
      %539 = vperm.xlu0 %538, %v290
      %v540 = vpop.permute.xlu0 %539
      %543 = vset.pattern.permute.xlu0 0
      %544 = vperm.xlu0 %543, %v291
      %v545 = vpop.permute.xlu0 %544
      %548 = vset.pattern.permute.xlu0 0
      %549 = vperm.xlu0 %548, %v292
      %v550 = vpop.permute.xlu0 %549
      %553 = vset.pattern.permute.xlu0 0
      %554 = vperm.xlu0 %553, %v293
      %v555 = vpop.permute.xlu0 %554
      %558 = vset.pattern.permute.xlu0 0
      %559 = vperm.xlu0 %558, %v294
      %v560 = vpop.permute.xlu0 %559
      %563 = vset.pattern.permute.xlu0 0
      %564 = vperm.xlu0 %563, %v295
      %v565 = vpop.permute.xlu0 %564
      %568 = vset.pattern.permute.xlu0 0
      %569 = vperm.xlu0 %568, %v296
      %v570 = vpop.permute.xlu0 %569
      %573 = vset.pattern.permute.xlu0 0
      %574 = vperm.xlu0 %573, %v297
      %v575 = vpop.permute.xlu0 %574
      %578 = vset.pattern.permute.xlu0 0
      %579 = vperm.xlu0 %578, %v298
      %v580 = vpop.permute.xlu0 %579
      %583 = vset.pattern.permute.xlu0 0
      %584 = vperm.xlu0 %583, %v299
      %v585 = vpop.permute.xlu0 %584
      %588 = vset.pattern.permute.xlu0 0
      %589 = vperm.xlu0 %588, %v300
      %v590 = vpop.permute.xlu0 %589
      %593 = vset.pattern.permute.xlu0 0
      %594 = vperm.xlu0 %593, %v301
      %v595 = vpop.permute.xlu0 %594
      %598 = vset.pattern.permute.xlu0 0
      %599 = vperm.xlu0 %598, %v302
      %v600 = vpop.permute.xlu0 %599
      %603 = vset.pattern.permute.xlu0 0
      %604 = vperm.xlu0 %603, %v303
      %v605 = vpop.permute.xlu0 %604
      %608 = vset.pattern.permute.xlu0 0
      %609 = vperm.xlu0 %608, %v304
      %v610 = vpop.permute.xlu0 %609
      %613 = vset.pattern.permute.xlu0 0
      %614 = vperm.xlu0 %613, %v305
      %v615 = vpop.permute.xlu0 %614
      %618 = vset.pattern.permute.xlu0 0
      %619 = vperm.xlu0 %618, %v306
      %v620 = vpop.permute.xlu0 %619
      %623 = vset.pattern.permute.xlu0 0
      %624 = vperm.xlu0 %623, %v307
      %v625 = vpop.permute.xlu0 %624
      %628 = vset.pattern.permute.xlu0 0
      %629 = vperm.xlu0 %628, %v308
      %v630 = vpop.permute.xlu0 %629
      %633 = vset.pattern.permute.xlu0 0
      %634 = vperm.xlu0 %633, %v309
      %v635 = vpop.permute.xlu0 %634
      %638 = vset.pattern.permute.xlu0 0
      %639 = vperm.xlu0 %638, %v310
      %v640 = vpop.permute.xlu0 %639
      %643 = vset.pattern.permute.xlu0 0
      %644 = vperm.xlu0 %643, %v311
      %v645 = vpop.permute.xlu0 %644
      %648 = vset.pattern.permute.xlu0 0
      %649 = vperm.xlu0 %648, %v312
      %v650 = vpop.permute.xlu0 %649
      %653 = vset.pattern.permute.xlu0 0
      %654 = vperm.xlu0 %653, %v313
      %v655 = vpop.permute.xlu0 %654
      %658 = vset.pattern.permute.xlu0 0
      %659 = vperm.xlu0 %658, %v314
      %v660 = vpop.permute.xlu0 %659
      %663 = vset.pattern.permute.xlu0 0
      %664 = vperm.xlu0 %663, %v315
      %v665 = vpop.permute.xlu0 %664
      %668 = vset.pattern.permute.xlu0 0
      %669 = vperm.xlu0 %668, %v316
      %v670 = vpop.permute.xlu0 %669
      %673 = vset.pattern.permute.xlu0 0
      %674 = vperm.xlu0 %673, %v317
      %v675 = vpop.permute.xlu0 %674
      %678 = vset.pattern.permute.xlu0 0
      %679 = vperm.xlu0 %678, %v318
      %v680 = vpop.permute.xlu0 %679
      %683 = vset.pattern.permute.xlu0 0
      %684 = vperm.xlu0 %683, %v319
      %v685 = vpop.permute.xlu0 %684
      %v687 = vperm.slane %v326, 0
      %v688 = vmul.f32 %v330, %v687
      %v689 = vmul.f32 %v335, %v687
      %v690 = vmul.f32 %v340, %v687
      %v691 = vmul.f32 %v345, %v687
      %v692 = vmul.f32 %v350, %v687
      %v693 = vmul.f32 %v355, %v687
      %v694 = vmul.f32 %v360, %v687
      %v695 = vmul.f32 %v365, %v687
      %v696 = vmul.f32 %v370, %v687
      %v697 = vmul.f32 %v375, %v687
      %v698 = vmul.f32 %v380, %v687
      %v699 = vmul.f32 %v385, %v687
      %v700 = vmul.f32 %v390, %v687
      %v701 = vmul.f32 %v395, %v687
      %v702 = vmul.f32 %v400, %v687
      %v703 = vmul.f32 %v405, %v687
      %v704 = vmul.f32 %v410, %v687
      %v705 = vmul.f32 %v415, %v687
      %v706 = vmul.f32 %v420, %v687
      %v707 = vmul.f32 %v425, %v687
      %v708 = vmul.f32 %v430, %v687
      %v709 = vmul.f32 %v435, %v687
      %v710 = vmul.f32 %v440, %v687
      %v711 = vmul.f32 %v445, %v687
      %v712 = vmul.f32 %v450, %v687
      %v713 = vmul.f32 %v455, %v687
      %v714 = vmul.f32 %v460, %v687
      %v715 = vmul.f32 %v465, %v687
      %v716 = vmul.f32 %v470, %v687
      %v717 = vmul.f32 %v475, %v687
      %v718 = vmul.f32 %v480, %v687
      %v719 = vmul.f32 %v485, %v687
      %v720 = vmul.f32 %v490, %v687
      %v721 = vmul.f32 %v495, %v687
      %v722 = vmul.f32 %v500, %v687
      %v723 = vmul.f32 %v505, %v687
      %v724 = vmul.f32 %v510, %v687
      %v725 = vmul.f32 %v515, %v687
      %v726 = vmul.f32 %v520, %v687
      %v727 = vmul.f32 %v525, %v687
      %v728 = vmul.f32 %v530, %v687
      %v729 = vmul.f32 %v535, %v687
      %v730 = vmul.f32 %v540, %v687
      %v731 = vmul.f32 %v545, %v687
      %v732 = vmul.f32 %v550, %v687
      %v733 = vmul.f32 %v555, %v687
      %v734 = vmul.f32 %v560, %v687
      %v735 = vmul.f32 %v565, %v687
      %v736 = vmul.f32 %v570, %v687
      %v737 = vmul.f32 %v575, %v687
      %v738 = vmul.f32 %v580, %v687
      %v739 = vmul.f32 %v585, %v687
      %v740 = vmul.f32 %v590, %v687
      %v741 = vmul.f32 %v595, %v687
      %v742 = vmul.f32 %v600, %v687
      %v743 = vmul.f32 %v605, %v687
      %v744 = vmul.f32 %v610, %v687
      %v745 = vmul.f32 %v615, %v687
      %v746 = vmul.f32 %v620, %v687
      %v747 = vmul.f32 %v625, %v687
      %v748 = vmul.f32 %v630, %v687
      %v749 = vmul.f32 %v635, %v687
      %v750 = vmul.f32 %v640, %v687
      %v751 = vmul.f32 %v645, %v687
      %v752 = vmul.f32 %v650, %v687
      %v753 = vmul.f32 %v655, %v687
      %v754 = vmul.f32 %v660, %v687
      %v755 = vmul.f32 %v665, %v687
      %v756 = vmul.f32 %v670, %v687
      %v757 = vmul.f32 %v675, %v687
      %v758 = vmul.f32 %v680, %v687
      %v759 = vmul.f32 %v685, %v687
      %s760 = scalar_lea.vmem %s1, 1
      %v761 = vld [vmem:[%s760] sm:$0x1]
      %v762 = vunpack.c.l.bf16 %v761
      %764 = vset.pattern.permute.xlu0 0
      %765 = vperm.xlu0 %764, %v320
      %v766 = vpop.permute.xlu0 %765
      %v768 = vperm.slane %v762, 0
      %v769 = vmul.f32 %v330, %v768
      %v770 = vmul.f32 %v335, %v768
      %v771 = vmul.f32 %v340, %v768
      %v772 = vmul.f32 %v345, %v768
      %v773 = vmul.f32 %v350, %v768
      %v774 = vmul.f32 %v355, %v768
      %v775 = vmul.f32 %v360, %v768
      %v776 = vmul.f32 %v365, %v768
      %v777 = vmul.f32 %v370, %v768
      %v778 = vmul.f32 %v375, %v768
      %v779 = vmul.f32 %v380, %v768
      %v780 = vmul.f32 %v385, %v768
      %v781 = vmul.f32 %v390, %v768
      %v782 = vmul.f32 %v395, %v768
      %v783 = vmul.f32 %v400, %v768
      %v784 = vmul.f32 %v405, %v768
      %v785 = vmul.f32 %v410, %v768
      %v786 = vmul.f32 %v415, %v768
      %v787 = vmul.f32 %v420, %v768
      %v788 = vmul.f32 %v425, %v768
      %v789 = vmul.f32 %v430, %v768
      %v790 = vmul.f32 %v435, %v768
      %v791 = vmul.f32 %v440, %v768
      %v792 = vmul.f32 %v445, %v768
      %v793 = vmul.f32 %v450, %v768
      %v794 = vmul.f32 %v455, %v768
      %v795 = vmul.f32 %v460, %v768
      %v796 = vmul.f32 %v465, %v768
      %v797 = vmul.f32 %v470, %v768
      %v798 = vmul.f32 %v475, %v768
      %v799 = vmul.f32 %v480, %v768
      %v800 = vmul.f32 %v485, %v768
      %v801 = vmul.f32 %v490, %v768
      %v802 = vmul.f32 %v495, %v768
      %v803 = vmul.f32 %v500, %v768
      %v804 = vmul.f32 %v505, %v768
      %v805 = vmul.f32 %v510, %v768
      %v806 = vmul.f32 %v515, %v768
      %v807 = vmul.f32 %v520, %v768
      %v808 = vmul.f32 %v525, %v768
      %v809 = vmul.f32 %v530, %v768
      %v810 = vmul.f32 %v535, %v768
      %v811 = vmul.f32 %v540, %v768
      %v812 = vmul.f32 %v545, %v768
      %v813 = vmul.f32 %v550, %v768
      %v814 = vmul.f32 %v555, %v768
      %v815 = vmul.f32 %v560, %v768
      %v816 = vmul.f32 %v565, %v768
      %v817 = vmul.f32 %v570, %v768
      %v818 = vmul.f32 %v575, %v768
      %v819 = vmul.f32 %v580, %v768
      %v820 = vmul.f32 %v585, %v768
      %v821 = vmul.f32 %v590, %v768
      %v822 = vmul.f32 %v595, %v768
      %v823 = vmul.f32 %v600, %v768
      %v824 = vmul.f32 %v605, %v768
      %v825 = vmul.f32 %v610, %v768
      %v826 = vmul.f32 %v615, %v768
      %v827 = vmul.f32 %v620, %v768
      %v828 = vmul.f32 %v625, %v768
      %v829 = vmul.f32 %v630, %v768
      %v830 = vmul.f32 %v635, %v768
      %v831 = vmul.f32 %v640, %v768
      %v832 = vmul.f32 %v645, %v768
      %v833 = vmul.f32 %v650, %v768
      %v834 = vmul.f32 %v655, %v768
      %v835 = vmul.f32 %v660, %v768
      %v836 = vmul.f32 %v665, %v768
      %v837 = vmul.f32 %v670, %v768
      %v838 = vmul.f32 %v675, %v768
      %v839 = vmul.f32 %v680, %v768
      %v840 = vmul.f32 %v685, %v768
      %v841 = vmul.f32 %v766, %v768
      %vm915 = vcmask 1046528
      %v916 = vrot.slane %v769, 1
      %v917 = vrot.slane %v770, 1
      %v918 = vsel %vm915, %v916, %v917
      %v919 = vrot.slane %v771, 1
      %v920 = vsel %vm915, %v917, %v919
      %v921 = vrot.slane %v772, 1
      %v922 = vsel %vm915, %v919, %v921
      %v923 = vrot.slane %v773, 1
      %v924 = vsel %vm915, %v921, %v923
      %v925 = vrot.slane %v774, 1
      %v926 = vsel %vm915, %v923, %v925
      %v927 = vrot.slane %v775, 1
      %v928 = vsel %vm915, %v925, %v927
      %v929 = vrot.slane %v776, 1
      %v930 = vsel %vm915, %v927, %v929
      %v931 = vrot.slane %v777, 1
      %v932 = vsel %vm915, %v929, %v931
      %v933 = vrot.slane %v778, 1
      %v934 = vsel %vm915, %v931, %v933
      %v935 = vrot.slane %v779, 1
      %v936 = vsel %vm915, %v933, %v935
      %v937 = vrot.slane %v780, 1
      %v938 = vsel %vm915, %v935, %v937
      %v939 = vrot.slane %v781, 1
      %v940 = vsel %vm915, %v937, %v939
      %v941 = vrot.slane %v782, 1
      %v942 = vsel %vm915, %v939, %v941
      %v943 = vrot.slane %v783, 1
      %v944 = vsel %vm915, %v941, %v943
      %v945 = vrot.slane %v784, 1
      %v946 = vsel %vm915, %v943, %v945
      %v947 = vrot.slane %v785, 1
      %v948 = vsel %vm915, %v945, %v947
      %v949 = vrot.slane %v786, 1
      %v950 = vsel %vm915, %v947, %v949
      %v951 = vrot.slane %v787, 1
      %v952 = vsel %vm915, %v949, %v951
      %v953 = vrot.slane %v788, 1
      %v954 = vsel %vm915, %v951, %v953
      %v955 = vrot.slane %v789, 1
      %v956 = vsel %vm915, %v953, %v955
      %v957 = vrot.slane %v790, 1
      %v958 = vsel %vm915, %v955, %v957
      %v959 = vrot.slane %v791, 1
      %v960 = vsel %vm915, %v957, %v959
      %v961 = vrot.slane %v792, 1
      %v962 = vsel %vm915, %v959, %v961
      %v963 = vrot.slane %v793, 1
      %v964 = vsel %vm915, %v961, %v963
      %v965 = vrot.slane %v794, 1
      %v966 = vsel %vm915, %v963, %v965
      %v967 = vrot.slane %v795, 1
      %v968 = vsel %vm915, %v965, %v967
      %v969 = vrot.slane %v796, 1
      %v970 = vsel %vm915, %v967, %v969
      %v971 = vrot.slane %v797, 1
      %v972 = vsel %vm915, %v969, %v971
      %v973 = vrot.slane %v798, 1
      %v974 = vsel %vm915, %v971, %v973
      %v975 = vrot.slane %v799, 1
      %v976 = vsel %vm915, %v973, %v975
      %v977 = vrot.slane %v800, 1
      %v978 = vsel %vm915, %v975, %v977
      %v979 = vrot.slane %v801, 1
      %v980 = vsel %vm915, %v977, %v979
      %v981 = vrot.slane %v802, 1
      %v982 = vsel %vm915, %v979, %v981
      %v983 = vrot.slane %v803, 1
      %v984 = vsel %vm915, %v981, %v983
      %v985 = vrot.slane %v804, 1
      %v986 = vsel %vm915, %v983, %v985
      %v987 = vrot.slane %v805, 1
      %v988 = vsel %vm915, %v985, %v987
      %v989 = vrot.slane %v806, 1
      %v990 = vsel %vm915, %v987, %v989
      %v991 = vrot.slane %v807, 1
      %v992 = vsel %vm915, %v989, %v991
      %v993 = vrot.slane %v808, 1
      %v994 = vsel %vm915, %v991, %v993
      %v995 = vrot.slane %v809, 1
      %v996 = vsel %vm915, %v993, %v995
      %v997 = vrot.slane %v810, 1
      %v998 = vsel %vm915, %v995, %v997
      %v999 = vrot.slane %v811, 1
      %v1000 = vsel %vm915, %v997, %v999
      %v1001 = vrot.slane %v812, 1
      %v1002 = vsel %vm915, %v999, %v1001
      %v1003 = vrot.slane %v813, 1
      %v1004 = vsel %vm915, %v1001, %v1003
      %v1005 = vrot.slane %v814, 1
      %v1006 = vsel %vm915, %v1003, %v1005
      %v1007 = vrot.slane %v815, 1
      %v1008 = vsel %vm915, %v1005, %v1007
      %v1009 = vrot.slane %v816, 1
      %v1010 = vsel %vm915, %v1007, %v1009
      %v1011 = vrot.slane %v817, 1
      %v1012 = vsel %vm915, %v1009, %v1011
      %v1013 = vrot.slane %v818, 1
      %v1014 = vsel %vm915, %v1011, %v1013
      %v1015 = vrot.slane %v819, 1
      %v1016 = vsel %vm915, %v1013, %v1015
      %v1017 = vrot.slane %v820, 1
      %v1018 = vsel %vm915, %v1015, %v1017
      %v1019 = vrot.slane %v821, 1
      %v1020 = vsel %vm915, %v1017, %v1019
      %v1021 = vrot.slane %v822, 1
      %v1022 = vsel %vm915, %v1019, %v1021
      %v1023 = vrot.slane %v823, 1
      %v1024 = vsel %vm915, %v1021, %v1023
      %v1025 = vrot.slane %v824, 1
      %v1026 = vsel %vm915, %v1023, %v1025
      %v1027 = vrot.slane %v825, 1
      %v1028 = vsel %vm915, %v1025, %v1027
      %v1029 = vrot.slane %v826, 1
      %v1030 = vsel %vm915, %v1027, %v1029
      %v1031 = vrot.slane %v827, 1
      %v1032 = vsel %vm915, %v1029, %v1031
      %v1033 = vrot.slane %v828, 1
      %v1034 = vsel %vm915, %v1031, %v1033
      %v1035 = vrot.slane %v829, 1
      %v1036 = vsel %vm915, %v1033, %v1035
      %v1037 = vrot.slane %v830, 1
      %v1038 = vsel %vm915, %v1035, %v1037
      %v1039 = vrot.slane %v831, 1
      %v1040 = vsel %vm915, %v1037, %v1039
      %v1041 = vrot.slane %v832, 1
      %v1042 = vsel %vm915, %v1039, %v1041
      %v1043 = vrot.slane %v833, 1
      %v1044 = vsel %vm915, %v1041, %v1043
      %v1045 = vrot.slane %v834, 1
      %v1046 = vsel %vm915, %v1043, %v1045
      %v1047 = vrot.slane %v835, 1
      %v1048 = vsel %vm915, %v1045, %v1047
      %v1049 = vrot.slane %v836, 1
      %v1050 = vsel %vm915, %v1047, %v1049
      %v1051 = vrot.slane %v837, 1
      %v1052 = vsel %vm915, %v1049, %v1051
      %v1053 = vrot.slane %v838, 1
      %v1054 = vsel %vm915, %v1051, %v1053
      %v1055 = vrot.slane %v839, 1
      %v1056 = vsel %vm915, %v1053, %v1055
      %v1057 = vrot.slane %v840, 1
      %v1058 = vsel %vm915, %v1055, %v1057
      %v1059 = vrot.slane %v841, 1
      %v1060 = vsel %vm915, %v1057, %v1059
      %v1133 = vadd.f32 %v688, %v918
      %v1134 = vadd.f32 %v689, %v920
      %v1135 = vadd.f32 %v690, %v922
      %v1136 = vadd.f32 %v691, %v924
      %v1137 = vadd.f32 %v692, %v926
      %v1138 = vadd.f32 %v693, %v928
      %v1139 = vadd.f32 %v694, %v930
      %v1140 = vadd.f32 %v695, %v932
      %v1141 = vadd.f32 %v696, %v934
      %v1142 = vadd.f32 %v697, %v936
      %v1143 = vadd.f32 %v698, %v938
      %v1144 = vadd.f32 %v699, %v940
      %v1145 = vadd.f32 %v700, %v942
      %v1146 = vadd.f32 %v701, %v944
      %v1147 = vadd.f32 %v702, %v946
      %v1148 = vadd.f32 %v703, %v948
      %v1149 = vadd.f32 %v704, %v950
      %v1150 = vadd.f32 %v705, %v952
      %v1151 = vadd.f32 %v706, %v954
      %v1152 = vadd.f32 %v707, %v956
      %v1153 = vadd.f32 %v708, %v958
      %v1154 = vadd.f32 %v709, %v960
      %v1155 = vadd.f32 %v710, %v962
      %v1156 = vadd.f32 %v711, %v964
      %v1157 = vadd.f32 %v712, %v966
      %v1158 = vadd.f32 %v713, %v968
      %v1159 = vadd.f32 %v714, %v970
      %v1160 = vadd.f32 %v715, %v972
      %v1161 = vadd.f32 %v716, %v974
      %v1162 = vadd.f32 %v717, %v976
      %v1163 = vadd.f32 %v718, %v978
      %v1164 = vadd.f32 %v719, %v980
      %v1165 = vadd.f32 %v720, %v982
      %v1166 = vadd.f32 %v721, %v984
      %v1167 = vadd.f32 %v722, %v986
      %v1168 = vadd.f32 %v723, %v988
      %v1169 = vadd.f32 %v724, %v990
      %v1170 = vadd.f32 %v725, %v992
      %v1171 = vadd.f32 %v726, %v994
      %v1172 = vadd.f32 %v727, %v996
      %v1173 = vadd.f32 %v728, %v998
      %v1174 = vadd.f32 %v729, %v1000
      %v1175 = vadd.f32 %v730, %v1002
      %v1176 = vadd.f32 %v731, %v1004
      %v1177 = vadd.f32 %v732, %v1006
      %v1178 = vadd.f32 %v733, %v1008
      %v1179 = vadd.f32 %v734, %v1010
      %v1180 = vadd.f32 %v735, %v1012
      %v1181 = vadd.f32 %v736, %v1014
      %v1182 = vadd.f32 %v737, %v1016
      %v1183 = vadd.f32 %v738, %v1018
      %v1184 = vadd.f32 %v739, %v1020
      %v1185 = vadd.f32 %v740, %v1022
      %v1186 = vadd.f32 %v741, %v1024
      %v1187 = vadd.f32 %v742, %v1026
      %v1188 = vadd.f32 %v743, %v1028
      %v1189 = vadd.f32 %v744, %v1030
      %v1190 = vadd.f32 %v745, %v1032
      %v1191 = vadd.f32 %v746, %v1034
      %v1192 = vadd.f32 %v747, %v1036
      %v1193 = vadd.f32 %v748, %v1038
      %v1194 = vadd.f32 %v749, %v1040
      %v1195 = vadd.f32 %v750, %v1042
      %v1196 = vadd.f32 %v751, %v1044
      %v1197 = vadd.f32 %v752, %v1046
      %v1198 = vadd.f32 %v753, %v1048
      %v1199 = vadd.f32 %v754, %v1050
      %v1200 = vadd.f32 %v755, %v1052
      %v1201 = vadd.f32 %v756, %v1054
      %v1202 = vadd.f32 %v757, %v1056
      %v1203 = vadd.f32 %v758, %v1058
      %v1204 = vadd.f32 %v759, %v1060
      %s1205 = scalar_lea.vmem %s1, 2
      %v1206 = vld [vmem:[%s1205] sm:$0x1]
      %v1207 = vunpack.c.l.bf16 %v1206
      %v1208 = vperm.slane %v1207, 0
      %v1209 = vmul.f32 %v330, %v1208
      %v1210 = vmul.f32 %v335, %v1208
      %v1211 = vmul.f32 %v340, %v1208
      %v1212 = vmul.f32 %v345, %v1208
      %v1213 = vmul.f32 %v350, %v1208
      %v1214 = vmul.f32 %v355, %v1208
      %v1215 = vmul.f32 %v360, %v1208
      %v1216 = vmul.f32 %v365, %v1208
      %v1217 = vmul.f32 %v370, %v1208
      %v1218 = vmul.f32 %v375, %v1208
      %v1219 = vmul.f32 %v380, %v1208
      %v1220 = vmul.f32 %v385, %v1208
      %v1221 = vmul.f32 %v390, %v1208
      %v1222 = vmul.f32 %v395, %v1208
      %v1223 = vmul.f32 %v400, %v1208
      %v1224 = vmul.f32 %v405, %v1208
      %v1225 = vmul.f32 %v410, %v1208
      %v1226 = vmul.f32 %v415, %v1208
      %v1227 = vmul.f32 %v420, %v1208
      %v1228 = vmul.f32 %v425, %v1208
      %v1229 = vmul.f32 %v430, %v1208
      %v1230 = vmul.f32 %v435, %v1208
      %v1231 = vmul.f32 %v440, %v1208
      %v1232 = vmul.f32 %v445, %v1208
      %v1233 = vmul.f32 %v450, %v1208
      %v1234 = vmul.f32 %v455, %v1208
      %v1235 = vmul.f32 %v460, %v1208
      %v1236 = vmul.f32 %v465, %v1208
      %v1237 = vmul.f32 %v470, %v1208
      %v1238 = vmul.f32 %v475, %v1208
      %v1239 = vmul.f32 %v480, %v1208
      %v1240 = vmul.f32 %v485, %v1208
      %v1241 = vmul.f32 %v490, %v1208
      %v1242 = vmul.f32 %v495, %v1208
      %v1243 = vmul.f32 %v500, %v1208
      %v1244 = vmul.f32 %v505, %v1208
      %v1245 = vmul.f32 %v510, %v1208
      %v1246 = vmul.f32 %v515, %v1208
      %v1247 = vmul.f32 %v520, %v1208
      %v1248 = vmul.f32 %v525, %v1208
      %v1249 = vmul.f32 %v530, %v1208
      %v1250 = vmul.f32 %v535, %v1208
      %v1251 = vmul.f32 %v540, %v1208
      %v1252 = vmul.f32 %v545, %v1208
      %v1253 = vmul.f32 %v550, %v1208
      %v1254 = vmul.f32 %v555, %v1208
      %v1255 = vmul.f32 %v560, %v1208
      %v1256 = vmul.f32 %v565, %v1208
      %v1257 = vmul.f32 %v570, %v1208
      %v1258 = vmul.f32 %v575, %v1208
      %v1259 = vmul.f32 %v580, %v1208
      %v1260 = vmul.f32 %v585, %v1208
      %v1261 = vmul.f32 %v590, %v1208
      %v1262 = vmul.f32 %v595, %v1208
      %v1263 = vmul.f32 %v600, %v1208
      %v1264 = vmul.f32 %v605, %v1208
      %v1265 = vmul.f32 %v610, %v1208
      %v1266 = vmul.f32 %v615, %v1208
      %v1267 = vmul.f32 %v620, %v1208
      %v1268 = vmul.f32 %v625, %v1208
      %v1269 = vmul.f32 %v630, %v1208
      %v1270 = vmul.f32 %v635, %v1208
      %v1271 = vmul.f32 %v640, %v1208
      %v1272 = vmul.f32 %v645, %v1208
      %v1273 = vmul.f32 %v650, %v1208
      %v1274 = vmul.f32 %v655, %v1208
      %v1275 = vmul.f32 %v660, %v1208
      %v1276 = vmul.f32 %v665, %v1208
      %v1277 = vmul.f32 %v670, %v1208
      %v1278 = vmul.f32 %v675, %v1208
      %v1279 = vmul.f32 %v680, %v1208
      %v1280 = vmul.f32 %v685, %v1208
      %v1281 = vmul.f32 %v766, %v1208
      %vm1355 = vcmask 1045504
      %v1356 = vrot.slane %v1209, 2
      %v1357 = vrot.slane %v1210, 2
      %v1358 = vsel %vm1355, %v1356, %v1357
      %v1359 = vrot.slane %v1211, 2
      %v1360 = vsel %vm1355, %v1357, %v1359
      %v1361 = vrot.slane %v1212, 2
      %v1362 = vsel %vm1355, %v1359, %v1361
      %v1363 = vrot.slane %v1213, 2
      %v1364 = vsel %vm1355, %v1361, %v1363
      %v1365 = vrot.slane %v1214, 2
      %v1366 = vsel %vm1355, %v1363, %v1365
      %v1367 = vrot.slane %v1215, 2
      %v1368 = vsel %vm1355, %v1365, %v1367
      %v1369 = vrot.slane %v1216, 2
      %v1370 = vsel %vm1355, %v1367, %v1369
      %v1371 = vrot.slane %v1217, 2
      %v1372 = vsel %vm1355, %v1369, %v1371
      %v1373 = vrot.slane %v1218, 2
      %v1374 = vsel %vm1355, %v1371, %v1373
      %v1375 = vrot.slane %v1219, 2
      %v1376 = vsel %vm1355, %v1373, %v1375
      %v1377 = vrot.slane %v1220, 2
      %v1378 = vsel %vm1355, %v1375, %v1377
      %v1379 = vrot.slane %v1221, 2
      %v1380 = vsel %vm1355, %v1377, %v1379
      %v1381 = vrot.slane %v1222, 2
      %v1382 = vsel %vm1355, %v1379, %v1381
      %v1383 = vrot.slane %v1223, 2
      %v1384 = vsel %vm1355, %v1381, %v1383
      %v1385 = vrot.slane %v1224, 2
      %v1386 = vsel %vm1355, %v1383, %v1385
      %v1387 = vrot.slane %v1225, 2
      %v1388 = vsel %vm1355, %v1385, %v1387
      %v1389 = vrot.slane %v1226, 2
      %v1390 = vsel %vm1355, %v1387, %v1389
      %v1391 = vrot.slane %v1227, 2
      %v1392 = vsel %vm1355, %v1389, %v1391
      %v1393 = vrot.slane %v1228, 2
      %v1394 = vsel %vm1355, %v1391, %v1393
      %v1395 = vrot.slane %v1229, 2
      %v1396 = vsel %vm1355, %v1393, %v1395
      %v1397 = vrot.slane %v1230, 2
      %v1398 = vsel %vm1355, %v1395, %v1397
      %v1399 = vrot.slane %v1231, 2
      %v1400 = vsel %vm1355, %v1397, %v1399
      %v1401 = vrot.slane %v1232, 2
      %v1402 = vsel %vm1355, %v1399, %v1401
      %v1403 = vrot.slane %v1233, 2
      %v1404 = vsel %vm1355, %v1401, %v1403
      %v1405 = vrot.slane %v1234, 2
      %v1406 = vsel %vm1355, %v1403, %v1405
      %v1407 = vrot.slane %v1235, 2
      %v1408 = vsel %vm1355, %v1405, %v1407
      %v1409 = vrot.slane %v1236, 2
      %v1410 = vsel %vm1355, %v1407, %v1409
      %v1411 = vrot.slane %v1237, 2
      %v1412 = vsel %vm1355, %v1409, %v1411
      %v1413 = vrot.slane %v1238, 2
      %v1414 = vsel %vm1355, %v1411, %v1413
      %v1415 = vrot.slane %v1239, 2
      %v1416 = vsel %vm1355, %v1413, %v1415
      %v1417 = vrot.slane %v1240, 2
      %v1418 = vsel %vm1355, %v1415, %v1417
      %v1419 = vrot.slane %v1241, 2
      %v1420 = vsel %vm1355, %v1417, %v1419
      %v1421 = vrot.slane %v1242, 2
      %v1422 = vsel %vm1355, %v1419, %v1421
      %v1423 = vrot.slane %v1243, 2
      %v1424 = vsel %vm1355, %v1421, %v1423
      %v1425 = vrot.slane %v1244, 2
      %v1426 = vsel %vm1355, %v1423, %v1425
      %v1427 = vrot.slane %v1245, 2
      %v1428 = vsel %vm1355, %v1425, %v1427
      %v1429 = vrot.slane %v1246, 2
      %v1430 = vsel %vm1355, %v1427, %v1429
      %v1431 = vrot.slane %v1247, 2
      %v1432 = vsel %vm1355, %v1429, %v1431
      %v1433 = vrot.slane %v1248, 2
      %v1434 = vsel %vm1355, %v1431, %v1433
      %v1435 = vrot.slane %v1249, 2
      %v1436 = vsel %vm1355, %v1433, %v1435
      %v1437 = vrot.slane %v1250, 2
      %v1438 = vsel %vm1355, %v1435, %v1437
      %v1439 = vrot.slane %v1251, 2
      %v1440 = vsel %vm1355, %v1437, %v1439
      %v1441 = vrot.slane %v1252, 2
      %v1442 = vsel %vm1355, %v1439, %v1441
      %v1443 = vrot.slane %v1253, 2
      %v1444 = vsel %vm1355, %v1441, %v1443
      %v1445 = vrot.slane %v1254, 2
      %v1446 = vsel %vm1355, %v1443, %v1445
      %v1447 = vrot.slane %v1255, 2
      %v1448 = vsel %vm1355, %v1445, %v1447
      %v1449 = vrot.slane %v1256, 2
      %v1450 = vsel %vm1355, %v1447, %v1449
      %v1451 = vrot.slane %v1257, 2
      %v1452 = vsel %vm1355, %v1449, %v1451
      %v1453 = vrot.slane %v1258, 2
      %v1454 = vsel %vm1355, %v1451, %v1453
      %v1455 = vrot.slane %v1259, 2
      %v1456 = vsel %vm1355, %v1453, %v1455
      %v1457 = vrot.slane %v1260, 2
      %v1458 = vsel %vm1355, %v1455, %v1457
      %v1459 = vrot.slane %v1261, 2
      %v1460 = vsel %vm1355, %v1457, %v1459
      %v1461 = vrot.slane %v1262, 2
      %v1462 = vsel %vm1355, %v1459, %v1461
      %v1463 = vrot.slane %v1263, 2
      %v1464 = vsel %vm1355, %v1461, %v1463
      %v1465 = vrot.slane %v1264, 2
      %v1466 = vsel %vm1355, %v1463, %v1465
      %v1467 = vrot.slane %v1265, 2
      %v1468 = vsel %vm1355, %v1465, %v1467
      %v1469 = vrot.slane %v1266, 2
      %v1470 = vsel %vm1355, %v1467, %v1469
      %v1471 = vrot.slane %v1267, 2
      %v1472 = vsel %vm1355, %v1469, %v1471
      %v1473 = vrot.slane %v1268, 2
      %v1474 = vsel %vm1355, %v1471, %v1473
      %v1475 = vrot.slane %v1269, 2
      %v1476 = vsel %vm1355, %v1473, %v1475
      %v1477 = vrot.slane %v1270, 2
      %v1478 = vsel %vm1355, %v1475, %v1477
      %v1479 = vrot.slane %v1271, 2
      %v1480 = vsel %vm1355, %v1477, %v1479
      %v1481 = vrot.slane %v1272, 2
      %v1482 = vsel %vm1355, %v1479, %v1481
      %v1483 = vrot.slane %v1273, 2
      %v1484 = vsel %vm1355, %v1481, %v1483
      %v1485 = vrot.slane %v1274, 2
      %v1486 = vsel %vm1355, %v1483, %v1485
      %v1487 = vrot.slane %v1275, 2
      %v1488 = vsel %vm1355, %v1485, %v1487
      %v1489 = vrot.slane %v1276, 2
      %v1490 = vsel %vm1355, %v1487, %v1489
      %v1491 = vrot.slane %v1277, 2
      %v1492 = vsel %vm1355, %v1489, %v1491
      %v1493 = vrot.slane %v1278, 2
      %v1494 = vsel %vm1355, %v1491, %v1493
      %v1495 = vrot.slane %v1279, 2
      %v1496 = vsel %vm1355, %v1493, %v1495
      %v1497 = vrot.slane %v1280, 2
      %v1498 = vsel %vm1355, %v1495, %v1497
      %v1499 = vrot.slane %v1281, 2
      %v1500 = vsel %vm1355, %v1497, %v1499
      %v1573 = vadd.f32 %v1133, %v1358
      %v1574 = vadd.f32 %v1134, %v1360
      %v1575 = vadd.f32 %v1135, %v1362
      %v1576 = vadd.f32 %v1136, %v1364
      %v1577 = vadd.f32 %v1137, %v1366
      %v1578 = vadd.f32 %v1138, %v1368
      %v1579 = vadd.f32 %v1139, %v1370
      %v1580 = vadd.f32 %v1140, %v1372
      %v1581 = vadd.f32 %v1141, %v1374
      %v1582 = vadd.f32 %v1142, %v1376
      %v1583 = vadd.f32 %v1143, %v1378
      %v1584 = vadd.f32 %v1144, %v1380
      %v1585 = vadd.f32 %v1145, %v1382
      %v1586 = vadd.f32 %v1146, %v1384
      %v1587 = vadd.f32 %v1147, %v1386
      %v1588 = vadd.f32 %v1148, %v1388
      %v1589 = vadd.f32 %v1149, %v1390
      %v1590 = vadd.f32 %v1150, %v1392
      %v1591 = vadd.f32 %v1151, %v1394
      %v1592 = vadd.f32 %v1152, %v1396
      %v1593 = vadd.f32 %v1153, %v1398
      %v1594 = vadd.f32 %v1154, %v1400
      %v1595 = vadd.f32 %v1155, %v1402
      %v1596 = vadd.f32 %v1156, %v1404
      %v1597 = vadd.f32 %v1157, %v1406
      %v1598 = vadd.f32 %v1158, %v1408
      %v1599 = vadd.f32 %v1159, %v1410
      %v1600 = vadd.f32 %v1160, %v1412
      %v1601 = vadd.f32 %v1161, %v1414
      %v1602 = vadd.f32 %v1162, %v1416
      %v1603 = vadd.f32 %v1163, %v1418
      %v1604 = vadd.f32 %v1164, %v1420
      %v1605 = vadd.f32 %v1165, %v1422
      %v1606 = vadd.f32 %v1166, %v1424
      %v1607 = vadd.f32 %v1167, %v1426
      %v1608 = vadd.f32 %v1168, %v1428
      %v1609 = vadd.f32 %v1169, %v1430
      %v1610 = vadd.f32 %v1170, %v1432
      %v1611 = vadd.f32 %v1171, %v1434
      %v1612 = vadd.f32 %v1172, %v1436
      %v1613 = vadd.f32 %v1173, %v1438
      %v1614 = vadd.f32 %v1174, %v1440
      %v1615 = vadd.f32 %v1175, %v1442
      %v1616 = vadd.f32 %v1176, %v1444
      %v1617 = vadd.f32 %v1177, %v1446
      %v1618 = vadd.f32 %v1178, %v1448
      %v1619 = vadd.f32 %v1179, %v1450
      %v1620 = vadd.f32 %v1180, %v1452
      %v1621 = vadd.f32 %v1181, %v1454
      %v1622 = vadd.f32 %v1182, %v1456
      %v1623 = vadd.f32 %v1183, %v1458
      %v1624 = vadd.f32 %v1184, %v1460
      %v1625 = vadd.f32 %v1185, %v1462
      %v1626 = vadd.f32 %v1186, %v1464
      %v1627 = vadd.f32 %v1187, %v1466
      %v1628 = vadd.f32 %v1188, %v1468
      %v1629 = vadd.f32 %v1189, %v1470
      %v1630 = vadd.f32 %v1190, %v1472
      %v1631 = vadd.f32 %v1191, %v1474
      %v1632 = vadd.f32 %v1192, %v1476
      %v1633 = vadd.f32 %v1193, %v1478
      %v1634 = vadd.f32 %v1194, %v1480
      %v1635 = vadd.f32 %v1195, %v1482
      %v1636 = vadd.f32 %v1196, %v1484
      %v1637 = vadd.f32 %v1197, %v1486
      %v1638 = vadd.f32 %v1198, %v1488
      %v1639 = vadd.f32 %v1199, %v1490
      %v1640 = vadd.f32 %v1200, %v1492
      %v1641 = vadd.f32 %v1201, %v1494
      %v1642 = vadd.f32 %v1202, %v1496
      %v1643 = vadd.f32 %v1203, %v1498
      %v1644 = vadd.f32 %v1204, %v1500
      %s1645 = scalar_lea.vmem %s1, 3
      %v1646 = vld [vmem:[%s1645] sm:$0x1]
      %v1647 = vunpack.c.l.bf16 %v1646
      %1649 = vset.pattern.permute.xlu0 0
      %1650 = vperm.xlu0 %1649, %v321
      %v1651 = vpop.permute.xlu0 %1650
      %1654 = vset.pattern.permute.xlu0 0
      %1655 = vperm.xlu0 %1654, %v322
      %v1656 = vpop.permute.xlu0 %1655
      %v1658 = vperm.slane %v1647, 0
      %v1659 = vmul.f32 %v340, %v1658
      %v1660 = vmul.f32 %v345, %v1658
      %v1661 = vmul.f32 %v350, %v1658
      %v1662 = vmul.f32 %v355, %v1658
      %v1663 = vmul.f32 %v360, %v1658
      %v1664 = vmul.f32 %v365, %v1658
      %v1665 = vmul.f32 %v370, %v1658
      %v1666 = vmul.f32 %v375, %v1658
      %v1667 = vmul.f32 %v380, %v1658
      %v1668 = vmul.f32 %v385, %v1658
      %v1669 = vmul.f32 %v390, %v1658
      %v1670 = vmul.f32 %v395, %v1658
      %v1671 = vmul.f32 %v400, %v1658
      %v1672 = vmul.f32 %v405, %v1658
      %v1673 = vmul.f32 %v410, %v1658
      %v1674 = vmul.f32 %v415, %v1658
      %v1675 = vmul.f32 %v420, %v1658
      %v1676 = vmul.f32 %v425, %v1658
      %v1677 = vmul.f32 %v430, %v1658
      %v1678 = vmul.f32 %v435, %v1658
      %v1679 = vmul.f32 %v440, %v1658
      %v1680 = vmul.f32 %v445, %v1658
      %v1681 = vmul.f32 %v450, %v1658
      %v1682 = vmul.f32 %v455, %v1658
      %v1683 = vmul.f32 %v460, %v1658
      %v1684 = vmul.f32 %v465, %v1658
      %v1685 = vmul.f32 %v470, %v1658
      %v1686 = vmul.f32 %v475, %v1658
      %v1687 = vmul.f32 %v480, %v1658
      %v1688 = vmul.f32 %v485, %v1658
      %v1689 = vmul.f32 %v490, %v1658
      %v1690 = vmul.f32 %v495, %v1658
      %v1691 = vmul.f32 %v500, %v1658
      %v1692 = vmul.f32 %v505, %v1658
      %v1693 = vmul.f32 %v510, %v1658
      %v1694 = vmul.f32 %v515, %v1658
      %v1695 = vmul.f32 %v520, %v1658
      %v1696 = vmul.f32 %v525, %v1658
      %v1697 = vmul.f32 %v530, %v1658
      %v1698 = vmul.f32 %v535, %v1658
      %v1699 = vmul.f32 %v540, %v1658
      %v1700 = vmul.f32 %v545, %v1658
      %v1701 = vmul.f32 %v550, %v1658
      %v1702 = vmul.f32 %v555, %v1658
      %v1703 = vmul.f32 %v560, %v1658
      %v1704 = vmul.f32 %v565, %v1658
      %v1705 = vmul.f32 %v570, %v1658
      %v1706 = vmul.f32 %v575, %v1658
      %v1707 = vmul.f32 %v580, %v1658
      %v1708 = vmul.f32 %v585, %v1658
      %v1709 = vmul.f32 %v590, %v1658
      %v1710 = vmul.f32 %v595, %v1658
      %v1711 = vmul.f32 %v600, %v1658
      %v1712 = vmul.f32 %v605, %v1658
      %v1713 = vmul.f32 %v610, %v1658
      %v1714 = vmul.f32 %v615, %v1658
      %v1715 = vmul.f32 %v620, %v1658
      %v1716 = vmul.f32 %v625, %v1658
      %v1717 = vmul.f32 %v630, %v1658
      %v1718 = vmul.f32 %v635, %v1658
      %v1719 = vmul.f32 %v640, %v1658
      %v1720 = vmul.f32 %v645, %v1658
      %v1721 = vmul.f32 %v650, %v1658
      %v1722 = vmul.f32 %v655, %v1658
      %v1723 = vmul.f32 %v660, %v1658
      %v1724 = vmul.f32 %v665, %v1658
      %v1725 = vmul.f32 %v670, %v1658
      %v1726 = vmul.f32 %v675, %v1658
      %v1727 = vmul.f32 %v680, %v1658
      %v1728 = vmul.f32 %v685, %v1658
      %v1729 = vmul.f32 %v766, %v1658
      %v1730 = vmul.f32 %v1651, %v1658
      %v1731 = vmul.f32 %v1656, %v1658
      %v1805 = vrot.slane %v1659, 2
      %v1806 = vrot.slane %v1660, 2
      %v1807 = vsel %vm1355, %v1805, %v1806
      %v1808 = vrot.slane %v1661, 2
      %v1809 = vsel %vm1355, %v1806, %v1808
      %v1810 = vrot.slane %v1662, 2
      %v1811 = vsel %vm1355, %v1808, %v1810
      %v1812 = vrot.slane %v1663, 2
      %v1813 = vsel %vm1355, %v1810, %v1812
      %v1814 = vrot.slane %v1664, 2
      %v1815 = vsel %vm1355, %v1812, %v1814
      %v1816 = vrot.slane %v1665, 2
      %v1817 = vsel %vm1355, %v1814, %v1816
      %v1818 = vrot.slane %v1666, 2
      %v1819 = vsel %vm1355, %v1816, %v1818
      %v1820 = vrot.slane %v1667, 2
      %v1821 = vsel %vm1355, %v1818, %v1820
      %v1822 = vrot.slane %v1668, 2
      %v1823 = vsel %vm1355, %v1820, %v1822
      %v1824 = vrot.slane %v1669, 2
      %v1825 = vsel %vm1355, %v1822, %v1824
      %v1826 = vrot.slane %v1670, 2
      %v1827 = vsel %vm1355, %v1824, %v1826
      %v1828 = vrot.slane %v1671, 2
      %v1829 = vsel %vm1355, %v1826, %v1828
      %v1830 = vrot.slane %v1672, 2
      %v1831 = vsel %vm1355, %v1828, %v1830
      %v1832 = vrot.slane %v1673, 2
      %v1833 = vsel %vm1355, %v1830, %v1832
      %v1834 = vrot.slane %v1674, 2
      %v1835 = vsel %vm1355, %v1832, %v1834
      %v1836 = vrot.slane %v1675, 2
      %v1837 = vsel %vm1355, %v1834, %v1836
      %v1838 = vrot.slane %v1676, 2
      %v1839 = vsel %vm1355, %v1836, %v1838
      %v1840 = vrot.slane %v1677, 2
      %v1841 = vsel %vm1355, %v1838, %v1840
      %v1842 = vrot.slane %v1678, 2
      %v1843 = vsel %vm1355, %v1840, %v1842
      %v1844 = vrot.slane %v1679, 2
      %v1845 = vsel %vm1355, %v1842, %v1844
      %v1846 = vrot.slane %v1680, 2
      %v1847 = vsel %vm1355, %v1844, %v1846
      %v1848 = vrot.slane %v1681, 2
      %v1849 = vsel %vm1355, %v1846, %v1848
      %v1850 = vrot.slane %v1682, 2
      %v1851 = vsel %vm1355, %v1848, %v1850
      %v1852 = vrot.slane %v1683, 2
      %v1853 = vsel %vm1355, %v1850, %v1852
      %v1854 = vrot.slane %v1684, 2
      %v1855 = vsel %vm1355, %v1852, %v1854
      %v1856 = vrot.slane %v1685, 2
      %v1857 = vsel %vm1355, %v1854, %v1856
      %v1858 = vrot.slane %v1686, 2
      %v1859 = vsel %vm1355, %v1856, %v1858
      %v1860 = vrot.slane %v1687, 2
      %v1861 = vsel %vm1355, %v1858, %v1860
      %v1862 = vrot.slane %v1688, 2
      %v1863 = vsel %vm1355, %v1860, %v1862
      %v1864 = vrot.slane %v1689, 2
      %v1865 = vsel %vm1355, %v1862, %v1864
      %v1866 = vrot.slane %v1690, 2
      %v1867 = vsel %vm1355, %v1864, %v1866
      %v1868 = vrot.slane %v1691, 2
      %v1869 = vsel %vm1355, %v1866, %v1868
      %v1870 = vrot.slane %v1692, 2
      %v1871 = vsel %vm1355, %v1868, %v1870
      %v1872 = vrot.slane %v1693, 2
      %v1873 = vsel %vm1355, %v1870, %v1872
      %v1874 = vrot.slane %v1694, 2
      %v1875 = vsel %vm1355, %v1872, %v1874
      %v1876 = vrot.slane %v1695, 2
      %v1877 = vsel %vm1355, %v1874, %v1876
      %v1878 = vrot.slane %v1696, 2
      %v1879 = vsel %vm1355, %v1876, %v1878
      %v1880 = vrot.slane %v1697, 2
      %v1881 = vsel %vm1355, %v1878, %v1880
      %v1882 = vrot.slane %v1698, 2
      %v1883 = vsel %vm1355, %v1880, %v1882
      %v1884 = vrot.slane %v1699, 2
      %v1885 = vsel %vm1355, %v1882, %v1884
      %v1886 = vrot.slane %v1700, 2
      %v1887 = vsel %vm1355, %v1884, %v1886
      %v1888 = vrot.slane %v1701, 2
      %v1889 = vsel %vm1355, %v1886, %v1888
      %v1890 = vrot.slane %v1702, 2
      %v1891 = vsel %vm1355, %v1888, %v1890
      %v1892 = vrot.slane %v1703, 2
      %v1893 = vsel %vm1355, %v1890, %v1892
      %v1894 = vrot.slane %v1704, 2
      %v1895 = vsel %vm1355, %v1892, %v1894
      %v1896 = vrot.slane %v1705, 2
      %v1897 = vsel %vm1355, %v1894, %v1896
      %v1898 = vrot.slane %v1706, 2
      %v1899 = vsel %vm1355, %v1896, %v1898
      %v1900 = vrot.slane %v1707, 2
      %v1901 = vsel %vm1355, %v1898, %v1900
      %v1902 = vrot.slane %v1708, 2
      %v1903 = vsel %vm1355, %v1900, %v1902
      %v1904 = vrot.slane %v1709, 2
      %v1905 = vsel %vm1355, %v1902, %v1904
      %v1906 = vrot.slane %v1710, 2
      %v1907 = vsel %vm1355, %v1904, %v1906
      %v1908 = vrot.slane %v1711, 2
      %v1909 = vsel %vm1355, %v1906, %v1908
      %v1910 = vrot.slane %v1712, 2
      %v1911 = vsel %vm1355, %v1908, %v1910
      %v1912 = vrot.slane %v1713, 2
      %v1913 = vsel %vm1355, %v1910, %v1912
      %v1914 = vrot.slane %v1714, 2
      %v1915 = vsel %vm1355, %v1912, %v1914
      %v1916 = vrot.slane %v1715, 2
      %v1917 = vsel %vm1355, %v1914, %v1916
      %v1918 = vrot.slane %v1716, 2
      %v1919 = vsel %vm1355, %v1916, %v1918
      %v1920 = vrot.slane %v1717, 2
      %v1921 = vsel %vm1355, %v1918, %v1920
      %v1922 = vrot.slane %v1718, 2
      %v1923 = vsel %vm1355, %v1920, %v1922
      %v1924 = vrot.slane %v1719, 2
      %v1925 = vsel %vm1355, %v1922, %v1924
      %v1926 = vrot.slane %v1720, 2
      %v1927 = vsel %vm1355, %v1924, %v1926
      %v1928 = vrot.slane %v1721, 2
      %v1929 = vsel %vm1355, %v1926, %v1928
      %v1930 = vrot.slane %v1722, 2
      %v1931 = vsel %vm1355, %v1928, %v1930
      %v1932 = vrot.slane %v1723, 2
      %v1933 = vsel %vm1355, %v1930, %v1932
      %v1934 = vrot.slane %v1724, 2
      %v1935 = vsel %vm1355, %v1932, %v1934
      %v1936 = vrot.slane %v1725, 2
      %v1937 = vsel %vm1355, %v1934, %v1936
      %v1938 = vrot.slane %v1726, 2
      %v1939 = vsel %vm1355, %v1936, %v1938
      %v1940 = vrot.slane %v1727, 2
      %v1941 = vsel %vm1355, %v1938, %v1940
      %v1942 = vrot.slane %v1728, 2
      %v1943 = vsel %vm1355, %v1940, %v1942
      %v1944 = vrot.slane %v1729, 2
      %v1945 = vsel %vm1355, %v1942, %v1944
      %v1946 = vrot.slane %v1730, 2
      %v1947 = vsel %vm1355, %v1944, %v1946
      %v1948 = vrot.slane %v1731, 2
      %v1949 = vsel %vm1355, %v1946, %v1948
      %v2022 = vadd.f32 %v1573, %v1807
      %v2023 = vadd.f32 %v1574, %v1809
      %v2024 = vadd.f32 %v1575, %v1811
      %v2025 = vadd.f32 %v1576, %v1813
      %v2026 = vadd.f32 %v1577, %v1815
      %v2027 = vadd.f32 %v1578, %v1817
      %v2028 = vadd.f32 %v1579, %v1819
      %v2029 = vadd.f32 %v1580, %v1821
      %v2030 = vadd.f32 %v1581, %v1823
      %v2031 = vadd.f32 %v1582, %v1825
      %v2032 = vadd.f32 %v1583, %v1827
      %v2033 = vadd.f32 %v1584, %v1829
      %v2034 = vadd.f32 %v1585, %v1831
      %v2035 = vadd.f32 %v1586, %v1833
      %v2036 = vadd.f32 %v1587, %v1835
      %v2037 = vadd.f32 %v1588, %v1837
      %v2038 = vadd.f32 %v1589, %v1839
      %v2039 = vadd.f32 %v1590, %v1841
      %v2040 = vadd.f32 %v1591, %v1843
      %v2041 = vadd.f32 %v1592, %v1845
      %v2042 = vadd.f32 %v1593, %v1847
      %v2043 = vadd.f32 %v1594, %v1849
      %v2044 = vadd.f32 %v1595, %v1851
      %v2045 = vadd.f32 %v1596, %v1853
      %v2046 = vadd.f32 %v1597, %v1855
      %v2047 = vadd.f32 %v1598, %v1857
      %v2048 = vadd.f32 %v1599, %v1859
      %v2049 = vadd.f32 %v1600, %v1861
      %v2050 = vadd.f32 %v1601, %v1863
      %v2051 = vadd.f32 %v1602, %v1865
      %v2052 = vadd.f32 %v1603, %v1867
      %v2053 = vadd.f32 %v1604, %v1869
      %v2054 = vadd.f32 %v1605, %v1871
      %v2055 = vadd.f32 %v1606, %v1873
      %v2056 = vadd.f32 %v1607, %v1875
      %v2057 = vadd.f32 %v1608, %v1877
      %v2058 = vadd.f32 %v1609, %v1879
      %v2059 = vadd.f32 %v1610, %v1881
      %v2060 = vadd.f32 %v1611, %v1883
      %v2061 = vadd.f32 %v1612, %v1885
      %v2062 = vadd.f32 %v1613, %v1887
      %v2063 = vadd.f32 %v1614, %v1889
      %v2064 = vadd.f32 %v1615, %v1891
      %v2065 = vadd.f32 %v1616, %v1893
      %v2066 = vadd.f32 %v1617, %v1895
      %v2067 = vadd.f32 %v1618, %v1897
      %v2068 = vadd.f32 %v1619, %v1899
      %v2069 = vadd.f32 %v1620, %v1901
      %v2070 = vadd.f32 %v1621, %v1903
      %v2071 = vadd.f32 %v1622, %v1905
      %v2072 = vadd.f32 %v1623, %v1907
      %v2073 = vadd.f32 %v1624, %v1909
      %v2074 = vadd.f32 %v1625, %v1911
      %v2075 = vadd.f32 %v1626, %v1913
      %v2076 = vadd.f32 %v1627, %v1915
      %v2077 = vadd.f32 %v1628, %v1917
      %v2078 = vadd.f32 %v1629, %v1919
      %v2079 = vadd.f32 %v1630, %v1921
      %v2080 = vadd.f32 %v1631, %v1923
      %v2081 = vadd.f32 %v1632, %v1925
      %v2082 = vadd.f32 %v1633, %v1927
      %v2083 = vadd.f32 %v1634, %v1929
      %v2084 = vadd.f32 %v1635, %v1931
      %v2085 = vadd.f32 %v1636, %v1933
      %v2086 = vadd.f32 %v1637, %v1935
      %v2087 = vadd.f32 %v1638, %v1937
      %v2088 = vadd.f32 %v1639, %v1939
      %v2089 = vadd.f32 %v1640, %v1941
      %v2090 = vadd.f32 %v1641, %v1943
      %v2091 = vadd.f32 %v1642, %v1945
      %v2092 = vadd.f32 %v1643, %v1947
      %v2093 = vadd.f32 %v1644, %v1949
      %s2094 = scalar_lea.vmem %s1, 4
      %v2095 = vld [vmem:[%s2094] sm:$0x1]
      %v2096 = vunpack.c.l.bf16 %v2095
      %v2097 = vperm.slane %v2096, 0
      %v2098 = vmul.f32 %v340, %v2097
      %v2099 = vmul.f32 %v345, %v2097
      %v2100 = vmul.f32 %v350, %v2097
      %v2101 = vmul.f32 %v355, %v2097
      %v2102 = vmul.f32 %v360, %v2097
      %v2103 = vmul.f32 %v365, %v2097
      %v2104 = vmul.f32 %v370, %v2097
      %v2105 = vmul.f32 %v375, %v2097
      %v2106 = vmul.f32 %v380, %v2097
      %v2107 = vmul.f32 %v385, %v2097
      %v2108 = vmul.f32 %v390, %v2097
      %v2109 = vmul.f32 %v395, %v2097
      %v2110 = vmul.f32 %v400, %v2097
      %v2111 = vmul.f32 %v405, %v2097
      %v2112 = vmul.f32 %v410, %v2097
      %v2113 = vmul.f32 %v415, %v2097
      %v2114 = vmul.f32 %v420, %v2097
      %v2115 = vmul.f32 %v425, %v2097
      %v2116 = vmul.f32 %v430, %v2097
      %v2117 = vmul.f32 %v435, %v2097
      %v2118 = vmul.f32 %v440, %v2097
      %v2119 = vmul.f32 %v445, %v2097
      %v2120 = vmul.f32 %v450, %v2097
      %v2121 = vmul.f32 %v455, %v2097
      %v2122 = vmul.f32 %v460, %v2097
      %v2123 = vmul.f32 %v465, %v2097
      %v2124 = vmul.f32 %v470, %v2097
      %v2125 = vmul.f32 %v475, %v2097
      %v2126 = vmul.f32 %v480, %v2097
      %v2127 = vmul.f32 %v485, %v2097
      %v2128 = vmul.f32 %v490, %v2097
      %v2129 = vmul.f32 %v495, %v2097
      %v2130 = vmul.f32 %v500, %v2097
      %v2131 = vmul.f32 %v505, %v2097
      %v2132 = vmul.f32 %v510, %v2097
      %v2133 = vmul.f32 %v515, %v2097
      %v2134 = vmul.f32 %v520, %v2097
      %v2135 = vmul.f32 %v525, %v2097
      %v2136 = vmul.f32 %v530, %v2097
      %v2137 = vmul.f32 %v535, %v2097
      %v2138 = vmul.f32 %v540, %v2097
      %v2139 = vmul.f32 %v545, %v2097
      %v2140 = vmul.f32 %v550, %v2097
      %v2141 = vmul.f32 %v555, %v2097
      %v2142 = vmul.f32 %v560, %v2097
      %v2143 = vmul.f32 %v565, %v2097
      %v2144 = vmul.f32 %v570, %v2097
      %v2145 = vmul.f32 %v575, %v2097
      %v2146 = vmul.f32 %v580, %v2097
      %v2147 = vmul.f32 %v585, %v2097
      %v2148 = vmul.f32 %v590, %v2097
      %v2149 = vmul.f32 %v595, %v2097
      %v2150 = vmul.f32 %v600, %v2097
      %v2151 = vmul.f32 %v605, %v2097
      %v2152 = vmul.f32 %v610, %v2097
      %v2153 = vmul.f32 %v615, %v2097
      %v2154 = vmul.f32 %v620, %v2097
      %v2155 = vmul.f32 %v625, %v2097
      %v2156 = vmul.f32 %v630, %v2097
      %v2157 = vmul.f32 %v635, %v2097
      %v2158 = vmul.f32 %v640, %v2097
      %v2159 = vmul.f32 %v645, %v2097
      %v2160 = vmul.f32 %v650, %v2097
      %v2161 = vmul.f32 %v655, %v2097
      %v2162 = vmul.f32 %v660, %v2097
      %v2163 = vmul.f32 %v665, %v2097
      %v2164 = vmul.f32 %v670, %v2097
      %v2165 = vmul.f32 %v675, %v2097
      %v2166 = vmul.f32 %v680, %v2097
      %v2167 = vmul.f32 %v685, %v2097
      %v2168 = vmul.f32 %v766, %v2097
      %v2169 = vmul.f32 %v1651, %v2097
      %v2170 = vmul.f32 %v1656, %v2097
      %vm2244 = vcmask 1044480
      %v2245 = vrot.slane %v2098, 3
      %v2246 = vrot.slane %v2099, 3
      %v2247 = vsel %vm2244, %v2245, %v2246
      %v2248 = vrot.slane %v2100, 3
      %v2249 = vsel %vm2244, %v2246, %v2248
      %v2250 = vrot.slane %v2101, 3
      %v2251 = vsel %vm2244, %v2248, %v2250
      %v2252 = vrot.slane %v2102, 3
      %v2253 = vsel %vm2244, %v2250, %v2252
      %v2254 = vrot.slane %v2103, 3
      %v2255 = vsel %vm2244, %v2252, %v2254
      %v2256 = vrot.slane %v2104, 3
      %v2257 = vsel %vm2244, %v2254, %v2256
      %v2258 = vrot.slane %v2105, 3
      %v2259 = vsel %vm2244, %v2256, %v2258
      %v2260 = vrot.slane %v2106, 3
      %v2261 = vsel %vm2244, %v2258, %v2260
      %v2262 = vrot.slane %v2107, 3
      %v2263 = vsel %vm2244, %v2260, %v2262
      %v2264 = vrot.slane %v2108, 3
      %v2265 = vsel %vm2244, %v2262, %v2264
      %v2266 = vrot.slane %v2109, 3
      %v2267 = vsel %vm2244, %v2264, %v2266
      %v2268 = vrot.slane %v2110, 3
      %v2269 = vsel %vm2244, %v2266, %v2268
      %v2270 = vrot.slane %v2111, 3
      %v2271 = vsel %vm2244, %v2268, %v2270
      %v2272 = vrot.slane %v2112, 3
      %v2273 = vsel %vm2244, %v2270, %v2272
      %v2274 = vrot.slane %v2113, 3
      %v2275 = vsel %vm2244, %v2272, %v2274
      %v2276 = vrot.slane %v2114, 3
      %v2277 = vsel %vm2244, %v2274, %v2276
      %v2278 = vrot.slane %v2115, 3
      %v2279 = vsel %vm2244, %v2276, %v2278
      %v2280 = vrot.slane %v2116, 3
      %v2281 = vsel %vm2244, %v2278, %v2280
      %v2282 = vrot.slane %v2117, 3
      %v2283 = vsel %vm2244, %v2280, %v2282
      %v2284 = vrot.slane %v2118, 3
      %v2285 = vsel %vm2244, %v2282, %v2284
      %v2286 = vrot.slane %v2119, 3
      %v2287 = vsel %vm2244, %v2284, %v2286
      %v2288 = vrot.slane %v2120, 3
      %v2289 = vsel %vm2244, %v2286, %v2288
      %v2290 = vrot.slane %v2121, 3
      %v2291 = vsel %vm2244, %v2288, %v2290
      %v2292 = vrot.slane %v2122, 3
      %v2293 = vsel %vm2244, %v2290, %v2292
      %v2294 = vrot.slane %v2123, 3
      %v2295 = vsel %vm2244, %v2292, %v2294
      %v2296 = vrot.slane %v2124, 3
      %v2297 = vsel %vm2244, %v2294, %v2296
      %v2298 = vrot.slane %v2125, 3
      %v2299 = vsel %vm2244, %v2296, %v2298
      %v2300 = vrot.slane %v2126, 3
      %v2301 = vsel %vm2244, %v2298, %v2300
      %v2302 = vrot.slane %v2127, 3
      %v2303 = vsel %vm2244, %v2300, %v2302
      %v2304 = vrot.slane %v2128, 3
      %v2305 = vsel %vm2244, %v2302, %v2304
      %v2306 = vrot.slane %v2129, 3
      %v2307 = vsel %vm2244, %v2304, %v2306
      %v2308 = vrot.slane %v2130, 3
      %v2309 = vsel %vm2244, %v2306, %v2308
      %v2310 = vrot.slane %v2131, 3
      %v2311 = vsel %vm2244, %v2308, %v2310
      %v2312 = vrot.slane %v2132, 3
      %v2313 = vsel %vm2244, %v2310, %v2312
      %v2314 = vrot.slane %v2133, 3
      %v2315 = vsel %vm2244, %v2312, %v2314
      %v2316 = vrot.slane %v2134, 3
      %v2317 = vsel %vm2244, %v2314, %v2316
      %v2318 = vrot.slane %v2135, 3
      %v2319 = vsel %vm2244, %v2316, %v2318
      %v2320 = vrot.slane %v2136, 3
      %v2321 = vsel %vm2244, %v2318, %v2320
      %v2322 = vrot.slane %v2137, 3
      %v2323 = vsel %vm2244, %v2320, %v2322
      %v2324 = vrot.slane %v2138, 3
      %v2325 = vsel %vm2244, %v2322, %v2324
      %v2326 = vrot.slane %v2139, 3
      %v2327 = vsel %vm2244, %v2324, %v2326
      %v2328 = vrot.slane %v2140, 3
      %v2329 = vsel %vm2244, %v2326, %v2328
      %v2330 = vrot.slane %v2141, 3
      %v2331 = vsel %vm2244, %v2328, %v2330
      %v2332 = vrot.slane %v2142, 3
      %v2333 = vsel %vm2244, %v2330, %v2332
      %v2334 = vrot.slane %v2143, 3
      %v2335 = vsel %vm2244, %v2332, %v2334
      %v2336 = vrot.slane %v2144, 3
      %v2337 = vsel %vm2244, %v2334, %v2336
      %v2338 = vrot.slane %v2145, 3
      %v2339 = vsel %vm2244, %v2336, %v2338
      %v2340 = vrot.slane %v2146, 3
      %v2341 = vsel %vm2244, %v2338, %v2340
      %v2342 = vrot.slane %v2147, 3
      %v2343 = vsel %vm2244, %v2340, %v2342
      %v2344 = vrot.slane %v2148, 3
      %v2345 = vsel %vm2244, %v2342, %v2344
      %v2346 = vrot.slane %v2149, 3
      %v2347 = vsel %vm2244, %v2344, %v2346
      %v2348 = vrot.slane %v2150, 3
      %v2349 = vsel %vm2244, %v2346, %v2348
      %v2350 = vrot.slane %v2151, 3
      %v2351 = vsel %vm2244, %v2348, %v2350
      %v2352 = vrot.slane %v2152, 3
      %v2353 = vsel %vm2244, %v2350, %v2352
      %v2354 = vrot.slane %v2153, 3
      %v2355 = vsel %vm2244, %v2352, %v2354
      %v2356 = vrot.slane %v2154, 3
      %v2357 = vsel %vm2244, %v2354, %v2356
      %v2358 = vrot.slane %v2155, 3
      %v2359 = vsel %vm2244, %v2356, %v2358
      %v2360 = vrot.slane %v2156, 3
      %v2361 = vsel %vm2244, %v2358, %v2360
      %v2362 = vrot.slane %v2157, 3
      %v2363 = vsel %vm2244, %v2360, %v2362
      %v2364 = vrot.slane %v2158, 3
      %v2365 = vsel %vm2244, %v2362, %v2364
      %v2366 = vrot.slane %v2159, 3
      %v2367 = vsel %vm2244, %v2364, %v2366
      %v2368 = vrot.slane %v2160, 3
      %v2369 = vsel %vm2244, %v2366, %v2368
      %v2370 = vrot.slane %v2161, 3
      %v2371 = vsel %vm2244, %v2368, %v2370
      %v2372 = vrot.slane %v2162, 3
      %v2373 = vsel %vm2244, %v2370, %v2372
      %v2374 = vrot.slane %v2163, 3
      %v2375 = vsel %vm2244, %v2372, %v2374
      %v2376 = vrot.slane %v2164, 3
      %v2377 = vsel %vm2244, %v2374, %v2376
      %v2378 = vrot.slane %v2165, 3
      %v2379 = vsel %vm2244, %v2376, %v2378
      %v2380 = vrot.slane %v2166, 3
      %v2381 = vsel %vm2244, %v2378, %v2380
      %v2382 = vrot.slane %v2167, 3
      %v2383 = vsel %vm2244, %v2380, %v2382
      %v2384 = vrot.slane %v2168, 3
      %v2385 = vsel %vm2244, %v2382, %v2384
      %v2386 = vrot.slane %v2169, 3
      %v2387 = vsel %vm2244, %v2384, %v2386
      %v2388 = vrot.slane %v2170, 3
      %v2389 = vsel %vm2244, %v2386, %v2388
      %v2462 = vadd.f32 %v2022, %v2247
      %v2463 = vadd.f32 %v2023, %v2249
      %v2464 = vadd.f32 %v2024, %v2251
      %v2465 = vadd.f32 %v2025, %v2253
      %v2466 = vadd.f32 %v2026, %v2255
      %v2467 = vadd.f32 %v2027, %v2257
      %v2468 = vadd.f32 %v2028, %v2259
      %v2469 = vadd.f32 %v2029, %v2261
      %v2470 = vadd.f32 %v2030, %v2263
      %v2471 = vadd.f32 %v2031, %v2265
      %v2472 = vadd.f32 %v2032, %v2267
      %v2473 = vadd.f32 %v2033, %v2269
      %v2474 = vadd.f32 %v2034, %v2271
      %v2475 = vadd.f32 %v2035, %v2273
      %v2476 = vadd.f32 %v2036, %v2275
      %v2477 = vadd.f32 %v2037, %v2277
      %v2478 = vadd.f32 %v2038, %v2279
      %v2479 = vadd.f32 %v2039, %v2281
      %v2480 = vadd.f32 %v2040, %v2283
      %v2481 = vadd.f32 %v2041, %v2285
      %v2482 = vadd.f32 %v2042, %v2287
      %v2483 = vadd.f32 %v2043, %v2289
      %v2484 = vadd.f32 %v2044, %v2291
      %v2485 = vadd.f32 %v2045, %v2293
      %v2486 = vadd.f32 %v2046, %v2295
      %v2487 = vadd.f32 %v2047, %v2297
      %v2488 = vadd.f32 %v2048, %v2299
      %v2489 = vadd.f32 %v2049, %v2301
      %v2490 = vadd.f32 %v2050, %v2303
      %v2491 = vadd.f32 %v2051, %v2305
      %v2492 = vadd.f32 %v2052, %v2307
      %v2493 = vadd.f32 %v2053, %v2309
      %v2494 = vadd.f32 %v2054, %v2311
      %v2495 = vadd.f32 %v2055, %v2313
      %v2496 = vadd.f32 %v2056, %v2315
      %v2497 = vadd.f32 %v2057, %v2317
      %v2498 = vadd.f32 %v2058, %v2319
      %v2499 = vadd.f32 %v2059, %v2321
      %v2500 = vadd.f32 %v2060, %v2323
      %v2501 = vadd.f32 %v2061, %v2325
      %v2502 = vadd.f32 %v2062, %v2327
      %v2503 = vadd.f32 %v2063, %v2329
      %v2504 = vadd.f32 %v2064, %v2331
      %v2505 = vadd.f32 %v2065, %v2333
      %v2506 = vadd.f32 %v2066, %v2335
      %v2507 = vadd.f32 %v2067, %v2337
      %v2508 = vadd.f32 %v2068, %v2339
      %v2509 = vadd.f32 %v2069, %v2341
      %v2510 = vadd.f32 %v2070, %v2343
      %v2511 = vadd.f32 %v2071, %v2345
      %v2512 = vadd.f32 %v2072, %v2347
      %v2513 = vadd.f32 %v2073, %v2349
      %v2514 = vadd.f32 %v2074, %v2351
      %v2515 = vadd.f32 %v2075, %v2353
      %v2516 = vadd.f32 %v2076, %v2355
      %v2517 = vadd.f32 %v2077, %v2357
      %v2518 = vadd.f32 %v2078, %v2359
      %v2519 = vadd.f32 %v2079, %v2361
      %v2520 = vadd.f32 %v2080, %v2363
      %v2521 = vadd.f32 %v2081, %v2365
      %v2522 = vadd.f32 %v2082, %v2367
      %v2523 = vadd.f32 %v2083, %v2369
      %v2524 = vadd.f32 %v2084, %v2371
      %v2525 = vadd.f32 %v2085, %v2373
      %v2526 = vadd.f32 %v2086, %v2375
      %v2527 = vadd.f32 %v2087, %v2377
      %v2528 = vadd.f32 %v2088, %v2379
      %v2529 = vadd.f32 %v2089, %v2381
      %v2530 = vadd.f32 %v2090, %v2383
      %v2531 = vadd.f32 %v2091, %v2385
      %v2532 = vadd.f32 %v2092, %v2387
      %v2533 = vadd.f32 %v2093, %v2389
      %s2534 = scalar_lea.vmem %s1, 5
      %v2535 = vld [vmem:[%s2534] sm:$0x1]
      %v2536 = vunpack.c.l.bf16 %v2535
      %v2537 = vperm.slane %v2536, 0
      %v2538 = vmul.f32 %v340, %v2537
      %v2539 = vmul.f32 %v345, %v2537
      %v2540 = vmul.f32 %v350, %v2537
      %v2541 = vmul.f32 %v355, %v2537
      %v2542 = vmul.f32 %v360, %v2537
      %v2543 = vmul.f32 %v365, %v2537
      %v2544 = vmul.f32 %v370, %v2537
      %v2545 = vmul.f32 %v375, %v2537
      %v2546 = vmul.f32 %v380, %v2537
      %v2547 = vmul.f32 %v385, %v2537
      %v2548 = vmul.f32 %v390, %v2537
      %v2549 = vmul.f32 %v395, %v2537
      %v2550 = vmul.f32 %v400, %v2537
      %v2551 = vmul.f32 %v405, %v2537
      %v2552 = vmul.f32 %v410, %v2537
      %v2553 = vmul.f32 %v415, %v2537
      %v2554 = vmul.f32 %v420, %v2537
      %v2555 = vmul.f32 %v425, %v2537
      %v2556 = vmul.f32 %v430, %v2537
      %v2557 = vmul.f32 %v435, %v2537
      %v2558 = vmul.f32 %v440, %v2537
      %v2559 = vmul.f32 %v445, %v2537
      %v2560 = vmul.f32 %v450, %v2537
      %v2561 = vmul.f32 %v455, %v2537
      %v2562 = vmul.f32 %v460, %v2537
      %v2563 = vmul.f32 %v465, %v2537
      %v2564 = vmul.f32 %v470, %v2537
      %v2565 = vmul.f32 %v475, %v2537
      %v2566 = vmul.f32 %v480, %v2537
      %v2567 = vmul.f32 %v485, %v2537
      %v2568 = vmul.f32 %v490, %v2537
      %v2569 = vmul.f32 %v495, %v2537
      %v2570 = vmul.f32 %v500, %v2537
      %v2571 = vmul.f32 %v505, %v2537
      %v2572 = vmul.f32 %v510, %v2537
      %v2573 = vmul.f32 %v515, %v2537
      %v2574 = vmul.f32 %v520, %v2537
      %v2575 = vmul.f32 %v525, %v2537
      %v2576 = vmul.f32 %v530, %v2537
      %v2577 = vmul.f32 %v535, %v2537
      %v2578 = vmul.f32 %v540, %v2537
      %v2579 = vmul.f32 %v545, %v2537
      %v2580 = vmul.f32 %v550, %v2537
      %v2581 = vmul.f32 %v555, %v2537
      %v2582 = vmul.f32 %v560, %v2537
      %v2583 = vmul.f32 %v565, %v2537
      %v2584 = vmul.f32 %v570, %v2537
      %v2585 = vmul.f32 %v575, %v2537
      %v2586 = vmul.f32 %v580, %v2537
      %v2587 = vmul.f32 %v585, %v2537
      %v2588 = vmul.f32 %v590, %v2537
      %v2589 = vmul.f32 %v595, %v2537
      %v2590 = vmul.f32 %v600, %v2537
      %v2591 = vmul.f32 %v605, %v2537
      %v2592 = vmul.f32 %v610, %v2537
      %v2593 = vmul.f32 %v615, %v2537
      %v2594 = vmul.f32 %v620, %v2537
      %v2595 = vmul.f32 %v625, %v2537
      %v2596 = vmul.f32 %v630, %v2537
      %v2597 = vmul.f32 %v635, %v2537
      %v2598 = vmul.f32 %v640, %v2537
      %v2599 = vmul.f32 %v645, %v2537
      %v2600 = vmul.f32 %v650, %v2537
      %v2601 = vmul.f32 %v655, %v2537
      %v2602 = vmul.f32 %v660, %v2537
      %v2603 = vmul.f32 %v665, %v2537
      %v2604 = vmul.f32 %v670, %v2537
      %v2605 = vmul.f32 %v675, %v2537
      %v2606 = vmul.f32 %v680, %v2537
      %v2607 = vmul.f32 %v685, %v2537
      %v2608 = vmul.f32 %v766, %v2537
      %v2609 = vmul.f32 %v1651, %v2537
      %v2610 = vmul.f32 %v1656, %v2537
      %vm2684 = vcmask 1043456
      %v2685 = vrot.slane %v2538, 4
      %v2686 = vrot.slane %v2539, 4
      %v2687 = vsel %vm2684, %v2685, %v2686
      %v2688 = vrot.slane %v2540, 4
      %v2689 = vsel %vm2684, %v2686, %v2688
      %v2690 = vrot.slane %v2541, 4
      %v2691 = vsel %vm2684, %v2688, %v2690
      %v2692 = vrot.slane %v2542, 4
      %v2693 = vsel %vm2684, %v2690, %v2692
      %v2694 = vrot.slane %v2543, 4
      %v2695 = vsel %vm2684, %v2692, %v2694
      %v2696 = vrot.slane %v2544, 4
      %v2697 = vsel %vm2684, %v2694, %v2696
      %v2698 = vrot.slane %v2545, 4
      %v2699 = vsel %vm2684, %v2696, %v2698
      %v2700 = vrot.slane %v2546, 4
      %v2701 = vsel %vm2684, %v2698, %v2700
      %v2702 = vrot.slane %v2547, 4
      %v2703 = vsel %vm2684, %v2700, %v2702
      %v2704 = vrot.slane %v2548, 4
      %v2705 = vsel %vm2684, %v2702, %v2704
      %v2706 = vrot.slane %v2549, 4
      %v2707 = vsel %vm2684, %v2704, %v2706
      %v2708 = vrot.slane %v2550, 4
      %v2709 = vsel %vm2684, %v2706, %v2708
      %v2710 = vrot.slane %v2551, 4
      %v2711 = vsel %vm2684, %v2708, %v2710
      %v2712 = vrot.slane %v2552, 4
      %v2713 = vsel %vm2684, %v2710, %v2712
      %v2714 = vrot.slane %v2553, 4
      %v2715 = vsel %vm2684, %v2712, %v2714
      %v2716 = vrot.slane %v2554, 4
      %v2717 = vsel %vm2684, %v2714, %v2716
      %v2718 = vrot.slane %v2555, 4
      %v2719 = vsel %vm2684, %v2716, %v2718
      %v2720 = vrot.slane %v2556, 4
      %v2721 = vsel %vm2684, %v2718, %v2720
      %v2722 = vrot.slane %v2557, 4
      %v2723 = vsel %vm2684, %v2720, %v2722
      %v2724 = vrot.slane %v2558, 4
      %v2725 = vsel %vm2684, %v2722, %v2724
      %v2726 = vrot.slane %v2559, 4
      %v2727 = vsel %vm2684, %v2724, %v2726
      %v2728 = vrot.slane %v2560, 4
      %v2729 = vsel %vm2684, %v2726, %v2728
      %v2730 = vrot.slane %v2561, 4
      %v2731 = vsel %vm2684, %v2728, %v2730
      %v2732 = vrot.slane %v2562, 4
      %v2733 = vsel %vm2684, %v2730, %v2732
      %v2734 = vrot.slane %v2563, 4
      %v2735 = vsel %vm2684, %v2732, %v2734
      %v2736 = vrot.slane %v2564, 4
      %v2737 = vsel %vm2684, %v2734, %v2736
      %v2738 = vrot.slane %v2565, 4
      %v2739 = vsel %vm2684, %v2736, %v2738
      %v2740 = vrot.slane %v2566, 4
      %v2741 = vsel %vm2684, %v2738, %v2740
      %v2742 = vrot.slane %v2567, 4
      %v2743 = vsel %vm2684, %v2740, %v2742
      %v2744 = vrot.slane %v2568, 4
      %v2745 = vsel %vm2684, %v2742, %v2744
      %v2746 = vrot.slane %v2569, 4
      %v2747 = vsel %vm2684, %v2744, %v2746
      %v2748 = vrot.slane %v2570, 4
      %v2749 = vsel %vm2684, %v2746, %v2748
      %v2750 = vrot.slane %v2571, 4
      %v2751 = vsel %vm2684, %v2748, %v2750
      %v2752 = vrot.slane %v2572, 4
      %v2753 = vsel %vm2684, %v2750, %v2752
      %v2754 = vrot.slane %v2573, 4
      %v2755 = vsel %vm2684, %v2752, %v2754
      %v2756 = vrot.slane %v2574, 4
      %v2757 = vsel %vm2684, %v2754, %v2756
      %v2758 = vrot.slane %v2575, 4
      %v2759 = vsel %vm2684, %v2756, %v2758
      %v2760 = vrot.slane %v2576, 4
      %v2761 = vsel %vm2684, %v2758, %v2760
      %v2762 = vrot.slane %v2577, 4
      %v2763 = vsel %vm2684, %v2760, %v2762
      %v2764 = vrot.slane %v2578, 4
      %v2765 = vsel %vm2684, %v2762, %v2764
      %v2766 = vrot.slane %v2579, 4
      %v2767 = vsel %vm2684, %v2764, %v2766
      %v2768 = vrot.slane %v2580, 4
      %v2769 = vsel %vm2684, %v2766, %v2768
      %v2770 = vrot.slane %v2581, 4
      %v2771 = vsel %vm2684, %v2768, %v2770
      %v2772 = vrot.slane %v2582, 4
      %v2773 = vsel %vm2684, %v2770, %v2772
      %v2774 = vrot.slane %v2583, 4
      %v2775 = vsel %vm2684, %v2772, %v2774
      %v2776 = vrot.slane %v2584, 4
      %v2777 = vsel %vm2684, %v2774, %v2776
      %v2778 = vrot.slane %v2585, 4
      %v2779 = vsel %vm2684, %v2776, %v2778
      %v2780 = vrot.slane %v2586, 4
      %v2781 = vsel %vm2684, %v2778, %v2780
      %v2782 = vrot.slane %v2587, 4
      %v2783 = vsel %vm2684, %v2780, %v2782
      %v2784 = vrot.slane %v2588, 4
      %v2785 = vsel %vm2684, %v2782, %v2784
      %v2786 = vrot.slane %v2589, 4
      %v2787 = vsel %vm2684, %v2784, %v2786
      %v2788 = vrot.slane %v2590, 4
      %v2789 = vsel %vm2684, %v2786, %v2788
      %v2790 = vrot.slane %v2591, 4
      %v2791 = vsel %vm2684, %v2788, %v2790
      %v2792 = vrot.slane %v2592, 4
      %v2793 = vsel %vm2684, %v2790, %v2792
      %v2794 = vrot.slane %v2593, 4
      %v2795 = vsel %vm2684, %v2792, %v2794
      %v2796 = vrot.slane %v2594, 4
      %v2797 = vsel %vm2684, %v2794, %v2796
      %v2798 = vrot.slane %v2595, 4
      %v2799 = vsel %vm2684, %v2796, %v2798
      %v2800 = vrot.slane %v2596, 4
      %v2801 = vsel %vm2684, %v2798, %v2800
      %v2802 = vrot.slane %v2597, 4
      %v2803 = vsel %vm2684, %v2800, %v2802
      %v2804 = vrot.slane %v2598, 4
      %v2805 = vsel %vm2684, %v2802, %v2804
      %v2806 = vrot.slane %v2599, 4
      %v2807 = vsel %vm2684, %v2804, %v2806
      %v2808 = vrot.slane %v2600, 4
      %v2809 = vsel %vm2684, %v2806, %v2808
      %v2810 = vrot.slane %v2601, 4
      %v2811 = vsel %vm2684, %v2808, %v2810
      %v2812 = vrot.slane %v2602, 4
      %v2813 = vsel %vm2684, %v2810, %v2812
      %v2814 = vrot.slane %v2603, 4
      %v2815 = vsel %vm2684, %v2812, %v2814
      %v2816 = vrot.slane %v2604, 4
      %v2817 = vsel %vm2684, %v2814, %v2816
      %v2818 = vrot.slane %v2605, 4
      %v2819 = vsel %vm2684, %v2816, %v2818
      %v2820 = vrot.slane %v2606, 4
      %v2821 = vsel %vm2684, %v2818, %v2820
      %v2822 = vrot.slane %v2607, 4
      %v2823 = vsel %vm2684, %v2820, %v2822
      %v2824 = vrot.slane %v2608, 4
      %v2825 = vsel %vm2684, %v2822, %v2824
      %v2826 = vrot.slane %v2609, 4
      %v2827 = vsel %vm2684, %v2824, %v2826
      %v2828 = vrot.slane %v2610, 4
      %v2829 = vsel %vm2684, %v2826, %v2828
      %v2902 = vadd.f32 %v2462, %v2687
      %v2903 = vadd.f32 %v2463, %v2689
      %v2904 = vadd.f32 %v2464, %v2691
      %v2905 = vadd.f32 %v2465, %v2693
      %v2906 = vadd.f32 %v2466, %v2695
      %v2907 = vadd.f32 %v2467, %v2697
      %v2908 = vadd.f32 %v2468, %v2699
      %v2909 = vadd.f32 %v2469, %v2701
      %v2910 = vadd.f32 %v2470, %v2703
      %v2911 = vadd.f32 %v2471, %v2705
      %v2912 = vadd.f32 %v2472, %v2707
      %v2913 = vadd.f32 %v2473, %v2709
      %v2914 = vadd.f32 %v2474, %v2711
      %v2915 = vadd.f32 %v2475, %v2713
      %v2916 = vadd.f32 %v2476, %v2715
      %v2917 = vadd.f32 %v2477, %v2717
      %v2918 = vadd.f32 %v2478, %v2719
      %v2919 = vadd.f32 %v2479, %v2721
      %v2920 = vadd.f32 %v2480, %v2723
      %v2921 = vadd.f32 %v2481, %v2725
      %v2922 = vadd.f32 %v2482, %v2727
      %v2923 = vadd.f32 %v2483, %v2729
      %v2924 = vadd.f32 %v2484, %v2731
      %v2925 = vadd.f32 %v2485, %v2733
      %v2926 = vadd.f32 %v2486, %v2735
      %v2927 = vadd.f32 %v2487, %v2737
      %v2928 = vadd.f32 %v2488, %v2739
      %v2929 = vadd.f32 %v2489, %v2741
      %v2930 = vadd.f32 %v2490, %v2743
      %v2931 = vadd.f32 %v2491, %v2745
      %v2932 = vadd.f32 %v2492, %v2747
      %v2933 = vadd.f32 %v2493, %v2749
      %v2934 = vadd.f32 %v2494, %v2751
      %v2935 = vadd.f32 %v2495, %v2753
      %v2936 = vadd.f32 %v2496, %v2755
      %v2937 = vadd.f32 %v2497, %v2757
      %v2938 = vadd.f32 %v2498, %v2759
      %v2939 = vadd.f32 %v2499, %v2761
      %v2940 = vadd.f32 %v2500, %v2763
      %v2941 = vadd.f32 %v2501, %v2765
      %v2942 = vadd.f32 %v2502, %v2767
      %v2943 = vadd.f32 %v2503, %v2769
      %v2944 = vadd.f32 %v2504, %v2771
      %v2945 = vadd.f32 %v2505, %v2773
      %v2946 = vadd.f32 %v2506, %v2775
      %v2947 = vadd.f32 %v2507, %v2777
      %v2948 = vadd.f32 %v2508, %v2779
      %v2949 = vadd.f32 %v2509, %v2781
      %v2950 = vadd.f32 %v2510, %v2783
      %v2951 = vadd.f32 %v2511, %v2785
      %v2952 = vadd.f32 %v2512, %v2787
      %v2953 = vadd.f32 %v2513, %v2789
      %v2954 = vadd.f32 %v2514, %v2791
      %v2955 = vadd.f32 %v2515, %v2793
      %v2956 = vadd.f32 %v2516, %v2795
      %v2957 = vadd.f32 %v2517, %v2797
      %v2958 = vadd.f32 %v2518, %v2799
      %v2959 = vadd.f32 %v2519, %v2801
      %v2960 = vadd.f32 %v2520, %v2803
      %v2961 = vadd.f32 %v2521, %v2805
      %v2962 = vadd.f32 %v2522, %v2807
      %v2963 = vadd.f32 %v2523, %v2809
      %v2964 = vadd.f32 %v2524, %v2811
      %v2965 = vadd.f32 %v2525, %v2813
      %v2966 = vadd.f32 %v2526, %v2815
      %v2967 = vadd.f32 %v2527, %v2817
      %v2968 = vadd.f32 %v2528, %v2819
      %v2969 = vadd.f32 %v2529, %v2821
      %v2970 = vadd.f32 %v2530, %v2823
      %v2971 = vadd.f32 %v2531, %v2825
      %v2972 = vadd.f32 %v2532, %v2827
      %v2973 = vadd.f32 %v2533, %v2829
      %s2974 = scalar_lea.vmem %s1, 6
      %v2975 = vld [vmem:[%s2974] sm:$0x1]
      %v2976 = vunpack.c.l.bf16 %v2975
      %2978 = vset.pattern.permute.xlu0 0
      %2979 = vperm.xlu0 %2978, %v323
      %v2980 = vpop.permute.xlu0 %2979
      %2983 = vset.pattern.permute.xlu0 0
      %2984 = vperm.xlu0 %2983, %v324
      %v2985 = vpop.permute.xlu0 %2984
      %v2987 = vperm.slane %v2976, 0
      %v2988 = vmul.f32 %v350, %v2987
      %v2989 = vmul.f32 %v355, %v2987
      %v2990 = vmul.f32 %v360, %v2987
      %v2991 = vmul.f32 %v365, %v2987
      %v2992 = vmul.f32 %v370, %v2987
      %v2993 = vmul.f32 %v375, %v2987
      %v2994 = vmul.f32 %v380, %v2987
      %v2995 = vmul.f32 %v385, %v2987
      %v2996 = vmul.f32 %v390, %v2987
      %v2997 = vmul.f32 %v395, %v2987
      %v2998 = vmul.f32 %v400, %v2987
      %v2999 = vmul.f32 %v405, %v2987
      %v3000 = vmul.f32 %v410, %v2987
      %v3001 = vmul.f32 %v415, %v2987
      %v3002 = vmul.f32 %v420, %v2987
      %v3003 = vmul.f32 %v425, %v2987
      %v3004 = vmul.f32 %v430, %v2987
      %v3005 = vmul.f32 %v435, %v2987
      %v3006 = vmul.f32 %v440, %v2987
      %v3007 = vmul.f32 %v445, %v2987
      %v3008 = vmul.f32 %v450, %v2987
      %v3009 = vmul.f32 %v455, %v2987
      %v3010 = vmul.f32 %v460, %v2987
      %v3011 = vmul.f32 %v465, %v2987
      %v3012 = vmul.f32 %v470, %v2987
      %v3013 = vmul.f32 %v475, %v2987
      %v3014 = vmul.f32 %v480, %v2987
      %v3015 = vmul.f32 %v485, %v2987
      %v3016 = vmul.f32 %v490, %v2987
      %v3017 = vmul.f32 %v495, %v2987
      %v3018 = vmul.f32 %v500, %v2987
      %v3019 = vmul.f32 %v505, %v2987
      %v3020 = vmul.f32 %v510, %v2987
      %v3021 = vmul.f32 %v515, %v2987
      %v3022 = vmul.f32 %v520, %v2987
      %v3023 = vmul.f32 %v525, %v2987
      %v3024 = vmul.f32 %v530, %v2987
      %v3025 = vmul.f32 %v535, %v2987
      %v3026 = vmul.f32 %v540, %v2987
      %v3027 = vmul.f32 %v545, %v2987
      %v3028 = vmul.f32 %v550, %v2987
      %v3029 = vmul.f32 %v555, %v2987
      %v3030 = vmul.f32 %v560, %v2987
      %v3031 = vmul.f32 %v565, %v2987
      %v3032 = vmul.f32 %v570, %v2987
      %v3033 = vmul.f32 %v575, %v2987
      %v3034 = vmul.f32 %v580, %v2987
      %v3035 = vmul.f32 %v585, %v2987
      %v3036 = vmul.f32 %v590, %v2987
      %v3037 = vmul.f32 %v595, %v2987
      %v3038 = vmul.f32 %v600, %v2987
      %v3039 = vmul.f32 %v605, %v2987
      %v3040 = vmul.f32 %v610, %v2987
      %v3041 = vmul.f32 %v615, %v2987
      %v3042 = vmul.f32 %v620, %v2987
      %v3043 = vmul.f32 %v625, %v2987
      %v3044 = vmul.f32 %v630, %v2987
      %v3045 = vmul.f32 %v635, %v2987
      %v3046 = vmul.f32 %v640, %v2987
      %v3047 = vmul.f32 %v645, %v2987
      %v3048 = vmul.f32 %v650, %v2987
      %v3049 = vmul.f32 %v655, %v2987
      %v3050 = vmul.f32 %v660, %v2987
      %v3051 = vmul.f32 %v665, %v2987
      %v3052 = vmul.f32 %v670, %v2987
      %v3053 = vmul.f32 %v675, %v2987
      %v3054 = vmul.f32 %v680, %v2987
      %v3055 = vmul.f32 %v685, %v2987
      %v3056 = vmul.f32 %v766, %v2987
      %v3057 = vmul.f32 %v1651, %v2987
      %v3058 = vmul.f32 %v1656, %v2987
      %v3059 = vmul.f32 %v2980, %v2987
      %v3060 = vmul.f32 %v2985, %v2987
      %v3134 = vrot.slane %v2988, 4
      %v3135 = vrot.slane %v2989, 4
      %v3136 = vsel %vm2684, %v3134, %v3135
      %v3137 = vrot.slane %v2990, 4
      %v3138 = vsel %vm2684, %v3135, %v3137
      %v3139 = vrot.slane %v2991, 4
      %v3140 = vsel %vm2684, %v3137, %v3139
      %v3141 = vrot.slane %v2992, 4
      %v3142 = vsel %vm2684, %v3139, %v3141
      %v3143 = vrot.slane %v2993, 4
      %v3144 = vsel %vm2684, %v3141, %v3143
      %v3145 = vrot.slane %v2994, 4
      %v3146 = vsel %vm2684, %v3143, %v3145
      %v3147 = vrot.slane %v2995, 4
      %v3148 = vsel %vm2684, %v3145, %v3147
      %v3149 = vrot.slane %v2996, 4
      %v3150 = vsel %vm2684, %v3147, %v3149
      %v3151 = vrot.slane %v2997, 4
      %v3152 = vsel %vm2684, %v3149, %v3151
      %v3153 = vrot.slane %v2998, 4
      %v3154 = vsel %vm2684, %v3151, %v3153
      %v3155 = vrot.slane %v2999, 4
      %v3156 = vsel %vm2684, %v3153, %v3155
      %v3157 = vrot.slane %v3000, 4
      %v3158 = vsel %vm2684, %v3155, %v3157
      %v3159 = vrot.slane %v3001, 4
      %v3160 = vsel %vm2684, %v3157, %v3159
      %v3161 = vrot.slane %v3002, 4
      %v3162 = vsel %vm2684, %v3159, %v3161
      %v3163 = vrot.slane %v3003, 4
      %v3164 = vsel %vm2684, %v3161, %v3163
      %v3165 = vrot.slane %v3004, 4
      %v3166 = vsel %vm2684, %v3163, %v3165
      %v3167 = vrot.slane %v3005, 4
      %v3168 = vsel %vm2684, %v3165, %v3167
      %v3169 = vrot.slane %v3006, 4
      %v3170 = vsel %vm2684, %v3167, %v3169
      %v3171 = vrot.slane %v3007, 4
      %v3172 = vsel %vm2684, %v3169, %v3171
      %v3173 = vrot.slane %v3008, 4
      %v3174 = vsel %vm2684, %v3171, %v3173
      %v3175 = vrot.slane %v3009, 4
      %v3176 = vsel %vm2684, %v3173, %v3175
      %v3177 = vrot.slane %v3010, 4
      %v3178 = vsel %vm2684, %v3175, %v3177
      %v3179 = vrot.slane %v3011, 4
      %v3180 = vsel %vm2684, %v3177, %v3179
      %v3181 = vrot.slane %v3012, 4
      %v3182 = vsel %vm2684, %v3179, %v3181
      %v3183 = vrot.slane %v3013, 4
      %v3184 = vsel %vm2684, %v3181, %v3183
      %v3185 = vrot.slane %v3014, 4
      %v3186 = vsel %vm2684, %v3183, %v3185
      %v3187 = vrot.slane %v3015, 4
      %v3188 = vsel %vm2684, %v3185, %v3187
      %v3189 = vrot.slane %v3016, 4
      %v3190 = vsel %vm2684, %v3187, %v3189
      %v3191 = vrot.slane %v3017, 4
      %v3192 = vsel %vm2684, %v3189, %v3191
      %v3193 = vrot.slane %v3018, 4
      %v3194 = vsel %vm2684, %v3191, %v3193
      %v3195 = vrot.slane %v3019, 4
      %v3196 = vsel %vm2684, %v3193, %v3195
      %v3197 = vrot.slane %v3020, 4
      %v3198 = vsel %vm2684, %v3195, %v3197
      %v3199 = vrot.slane %v3021, 4
      %v3200 = vsel %vm2684, %v3197, %v3199
      %v3201 = vrot.slane %v3022, 4
      %v3202 = vsel %vm2684, %v3199, %v3201
      %v3203 = vrot.slane %v3023, 4
      %v3204 = vsel %vm2684, %v3201, %v3203
      %v3205 = vrot.slane %v3024, 4
      %v3206 = vsel %vm2684, %v3203, %v3205
      %v3207 = vrot.slane %v3025, 4
      %v3208 = vsel %vm2684, %v3205, %v3207
      %v3209 = vrot.slane %v3026, 4
      %v3210 = vsel %vm2684, %v3207, %v3209
      %v3211 = vrot.slane %v3027, 4
      %v3212 = vsel %vm2684, %v3209, %v3211
      %v3213 = vrot.slane %v3028, 4
      %v3214 = vsel %vm2684, %v3211, %v3213
      %v3215 = vrot.slane %v3029, 4
      %v3216 = vsel %vm2684, %v3213, %v3215
      %v3217 = vrot.slane %v3030, 4
      %v3218 = vsel %vm2684, %v3215, %v3217
      %v3219 = vrot.slane %v3031, 4
      %v3220 = vsel %vm2684, %v3217, %v3219
      %v3221 = vrot.slane %v3032, 4
      %v3222 = vsel %vm2684, %v3219, %v3221
      %v3223 = vrot.slane %v3033, 4
      %v3224 = vsel %vm2684, %v3221, %v3223
      %v3225 = vrot.slane %v3034, 4
      %v3226 = vsel %vm2684, %v3223, %v3225
      %v3227 = vrot.slane %v3035, 4
      %v3228 = vsel %vm2684, %v3225, %v3227
      %v3229 = vrot.slane %v3036, 4
      %v3230 = vsel %vm2684, %v3227, %v3229
      %v3231 = vrot.slane %v3037, 4
      %v3232 = vsel %vm2684, %v3229, %v3231
      %v3233 = vrot.slane %v3038, 4
      %v3234 = vsel %vm2684, %v3231, %v3233
      %v3235 = vrot.slane %v3039, 4
      %v3236 = vsel %vm2684, %v3233, %v3235
      %v3237 = vrot.slane %v3040, 4
      %v3238 = vsel %vm2684, %v3235, %v3237
      %v3239 = vrot.slane %v3041, 4
      %v3240 = vsel %vm2684, %v3237, %v3239
      %v3241 = vrot.slane %v3042, 4
      %v3242 = vsel %vm2684, %v3239, %v3241
      %v3243 = vrot.slane %v3043, 4
      %v3244 = vsel %vm2684, %v3241, %v3243
      %v3245 = vrot.slane %v3044, 4
      %v3246 = vsel %vm2684, %v3243, %v3245
      %v3247 = vrot.slane %v3045, 4
      %v3248 = vsel %vm2684, %v3245, %v3247
      %v3249 = vrot.slane %v3046, 4
      %v3250 = vsel %vm2684, %v3247, %v3249
      %v3251 = vrot.slane %v3047, 4
      %v3252 = vsel %vm2684, %v3249, %v3251
      %v3253 = vrot.slane %v3048, 4
      %v3254 = vsel %vm2684, %v3251, %v3253
      %v3255 = vrot.slane %v3049, 4
      %v3256 = vsel %vm2684, %v3253, %v3255
      %v3257 = vrot.slane %v3050, 4
      %v3258 = vsel %vm2684, %v3255, %v3257
      %v3259 = vrot.slane %v3051, 4
      %v3260 = vsel %vm2684, %v3257, %v3259
      %v3261 = vrot.slane %v3052, 4
      %v3262 = vsel %vm2684, %v3259, %v3261
      %v3263 = vrot.slane %v3053, 4
      %v3264 = vsel %vm2684, %v3261, %v3263
      %v3265 = vrot.slane %v3054, 4
      %v3266 = vsel %vm2684, %v3263, %v3265
      %v3267 = vrot.slane %v3055, 4
      %v3268 = vsel %vm2684, %v3265, %v3267
      %v3269 = vrot.slane %v3056, 4
      %v3270 = vsel %vm2684, %v3267, %v3269
      %v3271 = vrot.slane %v3057, 4
      %v3272 = vsel %vm2684, %v3269, %v3271
      %v3273 = vrot.slane %v3058, 4
      %v3274 = vsel %vm2684, %v3271, %v3273
      %v3275 = vrot.slane %v3059, 4
      %v3276 = vsel %vm2684, %v3273, %v3275
      %v3277 = vrot.slane %v3060, 4
      %v3278 = vsel %vm2684, %v3275, %v3277
      %v3351 = vadd.f32 %v2902, %v3136
      %v3352 = vadd.f32 %v2903, %v3138
      %v3353 = vadd.f32 %v2904, %v3140
      %v3354 = vadd.f32 %v2905, %v3142
      %v3355 = vadd.f32 %v2906, %v3144
      %v3356 = vadd.f32 %v2907, %v3146
      %v3357 = vadd.f32 %v2908, %v3148
      %v3358 = vadd.f32 %v2909, %v3150
      %v3359 = vadd.f32 %v2910, %v3152
      %v3360 = vadd.f32 %v2911, %v3154
      %v3361 = vadd.f32 %v2912, %v3156
      %v3362 = vadd.f32 %v2913, %v3158
      %v3363 = vadd.f32 %v2914, %v3160
      %v3364 = vadd.f32 %v2915, %v3162
      %v3365 = vadd.f32 %v2916, %v3164
      %v3366 = vadd.f32 %v2917, %v3166
      %v3367 = vadd.f32 %v2918, %v3168
      %v3368 = vadd.f32 %v2919, %v3170
      %v3369 = vadd.f32 %v2920, %v3172
      %v3370 = vadd.f32 %v2921, %v3174
      %v3371 = vadd.f32 %v2922, %v3176
      %v3372 = vadd.f32 %v2923, %v3178
      %v3373 = vadd.f32 %v2924, %v3180
      %v3374 = vadd.f32 %v2925, %v3182
      %v3375 = vadd.f32 %v2926, %v3184
      %v3376 = vadd.f32 %v2927, %v3186
      %v3377 = vadd.f32 %v2928, %v3188
      %v3378 = vadd.f32 %v2929, %v3190
      %v3379 = vadd.f32 %v2930, %v3192
      %v3380 = vadd.f32 %v2931, %v3194
      %v3381 = vadd.f32 %v2932, %v3196
      %v3382 = vadd.f32 %v2933, %v3198
      %v3383 = vadd.f32 %v2934, %v3200
      %v3384 = vadd.f32 %v2935, %v3202
      %v3385 = vadd.f32 %v2936, %v3204
      %v3386 = vadd.f32 %v2937, %v3206
      %v3387 = vadd.f32 %v2938, %v3208
      %v3388 = vadd.f32 %v2939, %v3210
      %v3389 = vadd.f32 %v2940, %v3212
      %v3390 = vadd.f32 %v2941, %v3214
      %v3391 = vadd.f32 %v2942, %v3216
      %v3392 = vadd.f32 %v2943, %v3218
      %v3393 = vadd.f32 %v2944, %v3220
      %v3394 = vadd.f32 %v2945, %v3222
      %v3395 = vadd.f32 %v2946, %v3224
      %v3396 = vadd.f32 %v2947, %v3226
      %v3397 = vadd.f32 %v2948, %v3228
      %v3398 = vadd.f32 %v2949, %v3230
      %v3399 = vadd.f32 %v2950, %v3232
      %v3400 = vadd.f32 %v2951, %v3234
      %v3401 = vadd.f32 %v2952, %v3236
      %v3402 = vadd.f32 %v2953, %v3238
      %v3403 = vadd.f32 %v2954, %v3240
      %v3404 = vadd.f32 %v2955, %v3242
      %v3405 = vadd.f32 %v2956, %v3244
      %v3406 = vadd.f32 %v2957, %v3246
      %v3407 = vadd.f32 %v2958, %v3248
      %v3408 = vadd.f32 %v2959, %v3250
      %v3409 = vadd.f32 %v2960, %v3252
      %v3410 = vadd.f32 %v2961, %v3254
      %v3411 = vadd.f32 %v2962, %v3256
      %v3412 = vadd.f32 %v2963, %v3258
      %v3413 = vadd.f32 %v2964, %v3260
      %v3414 = vadd.f32 %v2965, %v3262
      %v3415 = vadd.f32 %v2966, %v3264
      %v3416 = vadd.f32 %v2967, %v3266
      %v3417 = vadd.f32 %v2968, %v3268
      %v3418 = vadd.f32 %v2969, %v3270
      %v3419 = vadd.f32 %v2970, %v3272
      %v3420 = vadd.f32 %v2971, %v3274
      %v3421 = vadd.f32 %v2972, %v3276
      %v3422 = vadd.f32 %v2973, %v3278
      %s3423 = scalar_lea.vmem %s1, 7
      %v3424 = vld [vmem:[%s3423] sm:$0x1]
      %v3425 = vunpack.c.l.bf16 %v3424
      %v3426 = vperm.slane %v3425, 0
      %v3427 = vmul.f32 %v350, %v3426
      %v3428 = vmul.f32 %v355, %v3426
      %v3429 = vmul.f32 %v360, %v3426
      %v3430 = vmul.f32 %v365, %v3426
      %v3431 = vmul.f32 %v370, %v3426
      %v3432 = vmul.f32 %v375, %v3426
      %v3433 = vmul.f32 %v380, %v3426
      %v3434 = vmul.f32 %v385, %v3426
      %v3435 = vmul.f32 %v390, %v3426
      %v3436 = vmul.f32 %v395, %v3426
      %v3437 = vmul.f32 %v400, %v3426
      %v3438 = vmul.f32 %v405, %v3426
      %v3439 = vmul.f32 %v410, %v3426
      %v3440 = vmul.f32 %v415, %v3426
      %v3441 = vmul.f32 %v420, %v3426
      %v3442 = vmul.f32 %v425, %v3426
      %v3443 = vmul.f32 %v430, %v3426
      %v3444 = vmul.f32 %v435, %v3426
      %v3445 = vmul.f32 %v440, %v3426
      %v3446 = vmul.f32 %v445, %v3426
      %v3447 = vmul.f32 %v450, %v3426
      %v3448 = vmul.f32 %v455, %v3426
      %v3449 = vmul.f32 %v460, %v3426
      %v3450 = vmul.f32 %v465, %v3426
      %v3451 = vmul.f32 %v470, %v3426
      %v3452 = vmul.f32 %v475, %v3426
      %v3453 = vmul.f32 %v480, %v3426
      %v3454 = vmul.f32 %v485, %v3426
      %v3455 = vmul.f32 %v490, %v3426
      %v3456 = vmul.f32 %v495, %v3426
      %v3457 = vmul.f32 %v500, %v3426
      %v3458 = vmul.f32 %v505, %v3426
      %v3459 = vmul.f32 %v510, %v3426
      %v3460 = vmul.f32 %v515, %v3426
      %v3461 = vmul.f32 %v520, %v3426
      %v3462 = vmul.f32 %v525, %v3426
      %v3463 = vmul.f32 %v530, %v3426
      %v3464 = vmul.f32 %v535, %v3426
      %v3465 = vmul.f32 %v540, %v3426
      %v3466 = vmul.f32 %v545, %v3426
      %v3467 = vmul.f32 %v550, %v3426
      %v3468 = vmul.f32 %v555, %v3426
      %v3469 = vmul.f32 %v560, %v3426
      %v3470 = vmul.f32 %v565, %v3426
      %v3471 = vmul.f32 %v570, %v3426
      %v3472 = vmul.f32 %v575, %v3426
      %v3473 = vmul.f32 %v580, %v3426
      %v3474 = vmul.f32 %v585, %v3426
      %v3475 = vmul.f32 %v590, %v3426
      %v3476 = vmul.f32 %v595, %v3426
      %v3477 = vmul.f32 %v600, %v3426
      %v3478 = vmul.f32 %v605, %v3426
      %v3479 = vmul.f32 %v610, %v3426
      %v3480 = vmul.f32 %v615, %v3426
      %v3481 = vmul.f32 %v620, %v3426
      %v3482 = vmul.f32 %v625, %v3426
      %v3483 = vmul.f32 %v630, %v3426
      %v3484 = vmul.f32 %v635, %v3426
      %v3485 = vmul.f32 %v640, %v3426
      %v3486 = vmul.f32 %v645, %v3426
      %v3487 = vmul.f32 %v650, %v3426
      %v3488 = vmul.f32 %v655, %v3426
      %v3489 = vmul.f32 %v660, %v3426
      %v3490 = vmul.f32 %v665, %v3426
      %v3491 = vmul.f32 %v670, %v3426
      %v3492 = vmul.f32 %v675, %v3426
      %v3493 = vmul.f32 %v680, %v3426
      %v3494 = vmul.f32 %v685, %v3426
      %v3495 = vmul.f32 %v766, %v3426
      %v3496 = vmul.f32 %v1651, %v3426
      %v3497 = vmul.f32 %v1656, %v3426
      %v3498 = vmul.f32 %v2980, %v3426
      %v3499 = vmul.f32 %v2985, %v3426
      %vm3573 = vcmask 1042432
      %v3574 = vrot.slane %v3427, 5
      %v3575 = vrot.slane %v3428, 5
      %v3576 = vsel %vm3573, %v3574, %v3575
      %v3577 = vrot.slane %v3429, 5
      %v3578 = vsel %vm3573, %v3575, %v3577
      %v3579 = vrot.slane %v3430, 5
      %v3580 = vsel %vm3573, %v3577, %v3579
      %v3581 = vrot.slane %v3431, 5
      %v3582 = vsel %vm3573, %v3579, %v3581
      %v3583 = vrot.slane %v3432, 5
      %v3584 = vsel %vm3573, %v3581, %v3583
      %v3585 = vrot.slane %v3433, 5
      %v3586 = vsel %vm3573, %v3583, %v3585
      %v3587 = vrot.slane %v3434, 5
      %v3588 = vsel %vm3573, %v3585, %v3587
      %v3589 = vrot.slane %v3435, 5
      %v3590 = vsel %vm3573, %v3587, %v3589
      %v3591 = vrot.slane %v3436, 5
      %v3592 = vsel %vm3573, %v3589, %v3591
      %v3593 = vrot.slane %v3437, 5
      %v3594 = vsel %vm3573, %v3591, %v3593
      %v3595 = vrot.slane %v3438, 5
      %v3596 = vsel %vm3573, %v3593, %v3595
      %v3597 = vrot.slane %v3439, 5
      %v3598 = vsel %vm3573, %v3595, %v3597
      %v3599 = vrot.slane %v3440, 5
      %v3600 = vsel %vm3573, %v3597, %v3599
      %v3601 = vrot.slane %v3441, 5
      %v3602 = vsel %vm3573, %v3599, %v3601
      %v3603 = vrot.slane %v3442, 5
      %v3604 = vsel %vm3573, %v3601, %v3603
      %v3605 = vrot.slane %v3443, 5
      %v3606 = vsel %vm3573, %v3603, %v3605
      %v3607 = vrot.slane %v3444, 5
      %v3608 = vsel %vm3573, %v3605, %v3607
      %v3609 = vrot.slane %v3445, 5
      %v3610 = vsel %vm3573, %v3607, %v3609
      %v3611 = vrot.slane %v3446, 5
      %v3612 = vsel %vm3573, %v3609, %v3611
      %v3613 = vrot.slane %v3447, 5
      %v3614 = vsel %vm3573, %v3611, %v3613
      %v3615 = vrot.slane %v3448, 5
      %v3616 = vsel %vm3573, %v3613, %v3615
      %v3617 = vrot.slane %v3449, 5
      %v3618 = vsel %vm3573, %v3615, %v3617
      %v3619 = vrot.slane %v3450, 5
      %v3620 = vsel %vm3573, %v3617, %v3619
      %v3621 = vrot.slane %v3451, 5
      %v3622 = vsel %vm3573, %v3619, %v3621
      %v3623 = vrot.slane %v3452, 5
      %v3624 = vsel %vm3573, %v3621, %v3623
      %v3625 = vrot.slane %v3453, 5
      %v3626 = vsel %vm3573, %v3623, %v3625
      %v3627 = vrot.slane %v3454, 5
      %v3628 = vsel %vm3573, %v3625, %v3627
      %v3629 = vrot.slane %v3455, 5
      %v3630 = vsel %vm3573, %v3627, %v3629
      %v3631 = vrot.slane %v3456, 5
      %v3632 = vsel %vm3573, %v3629, %v3631
      %v3633 = vrot.slane %v3457, 5
      %v3634 = vsel %vm3573, %v3631, %v3633
      %v3635 = vrot.slane %v3458, 5
      %v3636 = vsel %vm3573, %v3633, %v3635
      %v3637 = vrot.slane %v3459, 5
      %v3638 = vsel %vm3573, %v3635, %v3637
      %v3639 = vrot.slane %v3460, 5
      %v3640 = vsel %vm3573, %v3637, %v3639
      %v3641 = vrot.slane %v3461, 5
      %v3642 = vsel %vm3573, %v3639, %v3641
      %v3643 = vrot.slane %v3462, 5
      %v3644 = vsel %vm3573, %v3641, %v3643
      %v3645 = vrot.slane %v3463, 5
      %v3646 = vsel %vm3573, %v3643, %v3645
      %v3647 = vrot.slane %v3464, 5
      %v3648 = vsel %vm3573, %v3645, %v3647
      %v3649 = vrot.slane %v3465, 5
      %v3650 = vsel %vm3573, %v3647, %v3649
      %v3651 = vrot.slane %v3466, 5
      %v3652 = vsel %vm3573, %v3649, %v3651
      %v3653 = vrot.slane %v3467, 5
      %v3654 = vsel %vm3573, %v3651, %v3653
      %v3655 = vrot.slane %v3468, 5
      %v3656 = vsel %vm3573, %v3653, %v3655
      %v3657 = vrot.slane %v3469, 5
      %v3658 = vsel %vm3573, %v3655, %v3657
      %v3659 = vrot.slane %v3470, 5
      %v3660 = vsel %vm3573, %v3657, %v3659
      %v3661 = vrot.slane %v3471, 5
      %v3662 = vsel %vm3573, %v3659, %v3661
      %v3663 = vrot.slane %v3472, 5
      %v3664 = vsel %vm3573, %v3661, %v3663
      %v3665 = vrot.slane %v3473, 5
      %v3666 = vsel %vm3573, %v3663, %v3665
      %v3667 = vrot.slane %v3474, 5
      %v3668 = vsel %vm3573, %v3665, %v3667
      %v3669 = vrot.slane %v3475, 5
      %v3670 = vsel %vm3573, %v3667, %v3669
      %v3671 = vrot.slane %v3476, 5
      %v3672 = vsel %vm3573, %v3669, %v3671
      %v3673 = vrot.slane %v3477, 5
      %v3674 = vsel %vm3573, %v3671, %v3673
      %v3675 = vrot.slane %v3478, 5
      %v3676 = vsel %vm3573, %v3673, %v3675
      %v3677 = vrot.slane %v3479, 5
      %v3678 = vsel %vm3573, %v3675, %v3677
      %v3679 = vrot.slane %v3480, 5
      %v3680 = vsel %vm3573, %v3677, %v3679
      %v3681 = vrot.slane %v3481, 5
      %v3682 = vsel %vm3573, %v3679, %v3681
      %v3683 = vrot.slane %v3482, 5
      %v3684 = vsel %vm3573, %v3681, %v3683
      %v3685 = vrot.slane %v3483, 5
      %v3686 = vsel %vm3573, %v3683, %v3685
      %v3687 = vrot.slane %v3484, 5
      %v3688 = vsel %vm3573, %v3685, %v3687
      %v3689 = vrot.slane %v3485, 5
      %v3690 = vsel %vm3573, %v3687, %v3689
      %v3691 = vrot.slane %v3486, 5
      %v3692 = vsel %vm3573, %v3689, %v3691
      %v3693 = vrot.slane %v3487, 5
      %v3694 = vsel %vm3573, %v3691, %v3693
      %v3695 = vrot.slane %v3488, 5
      %v3696 = vsel %vm3573, %v3693, %v3695
      %v3697 = vrot.slane %v3489, 5
      %v3698 = vsel %vm3573, %v3695, %v3697
      %v3699 = vrot.slane %v3490, 5
      %v3700 = vsel %vm3573, %v3697, %v3699
      %v3701 = vrot.slane %v3491, 5
      %v3702 = vsel %vm3573, %v3699, %v3701
      %v3703 = vrot.slane %v3492, 5
      %v3704 = vsel %vm3573, %v3701, %v3703
      %v3705 = vrot.slane %v3493, 5
      %v3706 = vsel %vm3573, %v3703, %v3705
      %v3707 = vrot.slane %v3494, 5
      %v3708 = vsel %vm3573, %v3705, %v3707
      %v3709 = vrot.slane %v3495, 5
      %v3710 = vsel %vm3573, %v3707, %v3709
      %v3711 = vrot.slane %v3496, 5
      %v3712 = vsel %vm3573, %v3709, %v3711
      %v3713 = vrot.slane %v3497, 5
      %v3714 = vsel %vm3573, %v3711, %v3713
      %v3715 = vrot.slane %v3498, 5
      %v3716 = vsel %vm3573, %v3713, %v3715
      %v3717 = vrot.slane %v3499, 5
      %v3718 = vsel %vm3573, %v3715, %v3717
      %v3791 = vadd.f32 %v3351, %v3576
      %v3792 = vadd.f32 %v3352, %v3578
      %v3793 = vadd.f32 %v3353, %v3580
      %v3794 = vadd.f32 %v3354, %v3582
      %v3795 = vadd.f32 %v3355, %v3584
      %v3796 = vadd.f32 %v3356, %v3586
      %v3797 = vadd.f32 %v3357, %v3588
      %v3798 = vadd.f32 %v3358, %v3590
      %v3799 = vadd.f32 %v3359, %v3592
      %v3800 = vadd.f32 %v3360, %v3594
      %v3801 = vadd.f32 %v3361, %v3596
      %v3802 = vadd.f32 %v3362, %v3598
      %v3803 = vadd.f32 %v3363, %v3600
      %v3804 = vadd.f32 %v3364, %v3602
      %v3805 = vadd.f32 %v3365, %v3604
      %v3806 = vadd.f32 %v3366, %v3606
      %v3807 = vadd.f32 %v3367, %v3608
      %v3808 = vadd.f32 %v3368, %v3610
      %v3809 = vadd.f32 %v3369, %v3612
      %v3810 = vadd.f32 %v3370, %v3614
      %v3811 = vadd.f32 %v3371, %v3616
      %v3812 = vadd.f32 %v3372, %v3618
      %v3813 = vadd.f32 %v3373, %v3620
      %v3814 = vadd.f32 %v3374, %v3622
      %v3815 = vadd.f32 %v3375, %v3624
      %v3816 = vadd.f32 %v3376, %v3626
      %v3817 = vadd.f32 %v3377, %v3628
      %v3818 = vadd.f32 %v3378, %v3630
      %v3819 = vadd.f32 %v3379, %v3632
      %v3820 = vadd.f32 %v3380, %v3634
      %v3821 = vadd.f32 %v3381, %v3636
      %v3822 = vadd.f32 %v3382, %v3638
      %v3823 = vadd.f32 %v3383, %v3640
      %v3824 = vadd.f32 %v3384, %v3642
      %v3825 = vadd.f32 %v3385, %v3644
      %v3826 = vadd.f32 %v3386, %v3646
      %v3827 = vadd.f32 %v3387, %v3648
      %v3828 = vadd.f32 %v3388, %v3650
      %v3829 = vadd.f32 %v3389, %v3652
      %v3830 = vadd.f32 %v3390, %v3654
      %v3831 = vadd.f32 %v3391, %v3656
      %v3832 = vadd.f32 %v3392, %v3658
      %v3833 = vadd.f32 %v3393, %v3660
      %v3834 = vadd.f32 %v3394, %v3662
      %v3835 = vadd.f32 %v3395, %v3664
      %v3836 = vadd.f32 %v3396, %v3666
      %v3837 = vadd.f32 %v3397, %v3668
      %v3838 = vadd.f32 %v3398, %v3670
      %v3839 = vadd.f32 %v3399, %v3672
      %v3840 = vadd.f32 %v3400, %v3674
      %v3841 = vadd.f32 %v3401, %v3676
      %v3842 = vadd.f32 %v3402, %v3678
      %v3843 = vadd.f32 %v3403, %v3680
      %v3844 = vadd.f32 %v3404, %v3682
      %v3845 = vadd.f32 %v3405, %v3684
      %v3846 = vadd.f32 %v3406, %v3686
      %v3847 = vadd.f32 %v3407, %v3688
      %v3848 = vadd.f32 %v3408, %v3690
      %v3849 = vadd.f32 %v3409, %v3692
      %v3850 = vadd.f32 %v3410, %v3694
      %v3851 = vadd.f32 %v3411, %v3696
      %v3852 = vadd.f32 %v3412, %v3698
      %v3853 = vadd.f32 %v3413, %v3700
      %v3854 = vadd.f32 %v3414, %v3702
      %v3855 = vadd.f32 %v3415, %v3704
      %v3856 = vadd.f32 %v3416, %v3706
      %v3857 = vadd.f32 %v3417, %v3708
      %v3858 = vadd.f32 %v3418, %v3710
      %v3859 = vadd.f32 %v3419, %v3712
      %v3860 = vadd.f32 %v3420, %v3714
      %v3861 = vadd.f32 %v3421, %v3716
      %v3862 = vadd.f32 %v3422, %v3718
      %s3863 = scalar_lea.vmem %s1, 8
      %v3864 = vld [vmem:[%s3863] sm:$0x1]
      %v3865 = vunpack.c.l.bf16 %v3864
      %v3866 = vperm.slane %v3865, 0
      %v3867 = vmul.f32 %v350, %v3866
      %v3868 = vmul.f32 %v355, %v3866
      %v3869 = vmul.f32 %v360, %v3866
      %v3870 = vmul.f32 %v365, %v3866
      %v3871 = vmul.f32 %v370, %v3866
      %v3872 = vmul.f32 %v375, %v3866
      %v3873 = vmul.f32 %v380, %v3866
      %v3874 = vmul.f32 %v385, %v3866
      %v3875 = vmul.f32 %v390, %v3866
      %v3876 = vmul.f32 %v395, %v3866
      %v3877 = vmul.f32 %v400, %v3866
      %v3878 = vmul.f32 %v405, %v3866
      %v3879 = vmul.f32 %v410, %v3866
      %v3880 = vmul.f32 %v415, %v3866
      %v3881 = vmul.f32 %v420, %v3866
      %v3882 = vmul.f32 %v425, %v3866
      %v3883 = vmul.f32 %v430, %v3866
      %v3884 = vmul.f32 %v435, %v3866
      %v3885 = vmul.f32 %v440, %v3866
      %v3886 = vmul.f32 %v445, %v3866
      %v3887 = vmul.f32 %v450, %v3866
      %v3888 = vmul.f32 %v455, %v3866
      %v3889 = vmul.f32 %v460, %v3866
      %v3890 = vmul.f32 %v465, %v3866
      %v3891 = vmul.f32 %v470, %v3866
      %v3892 = vmul.f32 %v475, %v3866
      %v3893 = vmul.f32 %v480, %v3866
      %v3894 = vmul.f32 %v485, %v3866
      %v3895 = vmul.f32 %v490, %v3866
      %v3896 = vmul.f32 %v495, %v3866
      %v3897 = vmul.f32 %v500, %v3866
      %v3898 = vmul.f32 %v505, %v3866
      %v3899 = vmul.f32 %v510, %v3866
      %v3900 = vmul.f32 %v515, %v3866
      %v3901 = vmul.f32 %v520, %v3866
      %v3902 = vmul.f32 %v525, %v3866
      %v3903 = vmul.f32 %v530, %v3866
      %v3904 = vmul.f32 %v535, %v3866
      %v3905 = vmul.f32 %v540, %v3866
      %v3906 = vmul.f32 %v545, %v3866
      %v3907 = vmul.f32 %v550, %v3866
      %v3908 = vmul.f32 %v555, %v3866
      %v3909 = vmul.f32 %v560, %v3866
      %v3910 = vmul.f32 %v565, %v3866
      %v3911 = vmul.f32 %v570, %v3866
      %v3912 = vmul.f32 %v575, %v3866
      %v3913 = vmul.f32 %v580, %v3866
      %v3914 = vmul.f32 %v585, %v3866
      %v3915 = vmul.f32 %v590, %v3866
      %v3916 = vmul.f32 %v595, %v3866
      %v3917 = vmul.f32 %v600, %v3866
      %v3918 = vmul.f32 %v605, %v3866
      %v3919 = vmul.f32 %v610, %v3866
      %v3920 = vmul.f32 %v615, %v3866
      %v3921 = vmul.f32 %v620, %v3866
      %v3922 = vmul.f32 %v625, %v3866
      %v3923 = vmul.f32 %v630, %v3866
      %v3924 = vmul.f32 %v635, %v3866
      %v3925 = vmul.f32 %v640, %v3866
      %v3926 = vmul.f32 %v645, %v3866
      %v3927 = vmul.f32 %v650, %v3866
      %v3928 = vmul.f32 %v655, %v3866
      %v3929 = vmul.f32 %v660, %v3866
      %v3930 = vmul.f32 %v665, %v3866
      %v3931 = vmul.f32 %v670, %v3866
      %v3932 = vmul.f32 %v675, %v3866
      %v3933 = vmul.f32 %v680, %v3866
      %v3934 = vmul.f32 %v685, %v3866
      %v3935 = vmul.f32 %v766, %v3866
      %v3936 = vmul.f32 %v1651, %v3866
      %v3937 = vmul.f32 %v1656, %v3866
      %v3938 = vmul.f32 %v2980, %v3866
      %v3939 = vmul.f32 %v2985, %v3866
      %vm4013 = vcmask 1041408
      %v4014 = vrot.slane %v3867, 6
      %v4015 = vrot.slane %v3868, 6
      %v4016 = vsel %vm4013, %v4014, %v4015
      %v4017 = vrot.slane %v3869, 6
      %v4018 = vsel %vm4013, %v4015, %v4017
      %v4019 = vrot.slane %v3870, 6
      %v4020 = vsel %vm4013, %v4017, %v4019
      %v4021 = vrot.slane %v3871, 6
      %v4022 = vsel %vm4013, %v4019, %v4021
      %v4023 = vrot.slane %v3872, 6
      %v4024 = vsel %vm4013, %v4021, %v4023
      %v4025 = vrot.slane %v3873, 6
      %v4026 = vsel %vm4013, %v4023, %v4025
      %v4027 = vrot.slane %v3874, 6
      %v4028 = vsel %vm4013, %v4025, %v4027
      %v4029 = vrot.slane %v3875, 6
      %v4030 = vsel %vm4013, %v4027, %v4029
      %v4031 = vrot.slane %v3876, 6
      %v4032 = vsel %vm4013, %v4029, %v4031
      %v4033 = vrot.slane %v3877, 6
      %v4034 = vsel %vm4013, %v4031, %v4033
      %v4035 = vrot.slane %v3878, 6
      %v4036 = vsel %vm4013, %v4033, %v4035
      %v4037 = vrot.slane %v3879, 6
      %v4038 = vsel %vm4013, %v4035, %v4037
      %v4039 = vrot.slane %v3880, 6
      %v4040 = vsel %vm4013, %v4037, %v4039
      %v4041 = vrot.slane %v3881, 6
      %v4042 = vsel %vm4013, %v4039, %v4041
      %v4043 = vrot.slane %v3882, 6
      %v4044 = vsel %vm4013, %v4041, %v4043
      %v4045 = vrot.slane %v3883, 6
      %v4046 = vsel %vm4013, %v4043, %v4045
      %v4047 = vrot.slane %v3884, 6
      %v4048 = vsel %vm4013, %v4045, %v4047
      %v4049 = vrot.slane %v3885, 6
      %v4050 = vsel %vm4013, %v4047, %v4049
      %v4051 = vrot.slane %v3886, 6
      %v4052 = vsel %vm4013, %v4049, %v4051
      %v4053 = vrot.slane %v3887, 6
      %v4054 = vsel %vm4013, %v4051, %v4053
      %v4055 = vrot.slane %v3888, 6
      %v4056 = vsel %vm4013, %v4053, %v4055
      %v4057 = vrot.slane %v3889, 6
      %v4058 = vsel %vm4013, %v4055, %v4057
      %v4059 = vrot.slane %v3890, 6
      %v4060 = vsel %vm4013, %v4057, %v4059
      %v4061 = vrot.slane %v3891, 6
      %v4062 = vsel %vm4013, %v4059, %v4061
      %v4063 = vrot.slane %v3892, 6
      %v4064 = vsel %vm4013, %v4061, %v4063
      %v4065 = vrot.slane %v3893, 6
      %v4066 = vsel %vm4013, %v4063, %v4065
      %v4067 = vrot.slane %v3894, 6
      %v4068 = vsel %vm4013, %v4065, %v4067
      %v4069 = vrot.slane %v3895, 6
      %v4070 = vsel %vm4013, %v4067, %v4069
      %v4071 = vrot.slane %v3896, 6
      %v4072 = vsel %vm4013, %v4069, %v4071
      %v4073 = vrot.slane %v3897, 6
      %v4074 = vsel %vm4013, %v4071, %v4073
      %v4075 = vrot.slane %v3898, 6
      %v4076 = vsel %vm4013, %v4073, %v4075
      %v4077 = vrot.slane %v3899, 6
      %v4078 = vsel %vm4013, %v4075, %v4077
      %v4079 = vrot.slane %v3900, 6
      %v4080 = vsel %vm4013, %v4077, %v4079
      %v4081 = vrot.slane %v3901, 6
      %v4082 = vsel %vm4013, %v4079, %v4081
      %v4083 = vrot.slane %v3902, 6
      %v4084 = vsel %vm4013, %v4081, %v4083
      %v4085 = vrot.slane %v3903, 6
      %v4086 = vsel %vm4013, %v4083, %v4085
      %v4087 = vrot.slane %v3904, 6
      %v4088 = vsel %vm4013, %v4085, %v4087
      %v4089 = vrot.slane %v3905, 6
      %v4090 = vsel %vm4013, %v4087, %v4089
      %v4091 = vrot.slane %v3906, 6
      %v4092 = vsel %vm4013, %v4089, %v4091
      %v4093 = vrot.slane %v3907, 6
      %v4094 = vsel %vm4013, %v4091, %v4093
      %v4095 = vrot.slane %v3908, 6
      %v4096 = vsel %vm4013, %v4093, %v4095
      %v4097 = vrot.slane %v3909, 6
      %v4098 = vsel %vm4013, %v4095, %v4097
      %v4099 = vrot.slane %v3910, 6
      %v4100 = vsel %vm4013, %v4097, %v4099
      %v4101 = vrot.slane %v3911, 6
      %v4102 = vsel %vm4013, %v4099, %v4101
      %v4103 = vrot.slane %v3912, 6
      %v4104 = vsel %vm4013, %v4101, %v4103
      %v4105 = vrot.slane %v3913, 6
      %v4106 = vsel %vm4013, %v4103, %v4105
      %v4107 = vrot.slane %v3914, 6
      %v4108 = vsel %vm4013, %v4105, %v4107
      %v4109 = vrot.slane %v3915, 6
      %v4110 = vsel %vm4013, %v4107, %v4109
      %v4111 = vrot.slane %v3916, 6
      %v4112 = vsel %vm4013, %v4109, %v4111
      %v4113 = vrot.slane %v3917, 6
      %v4114 = vsel %vm4013, %v4111, %v4113
      %v4115 = vrot.slane %v3918, 6
      %v4116 = vsel %vm4013, %v4113, %v4115
      %v4117 = vrot.slane %v3919, 6
      %v4118 = vsel %vm4013, %v4115, %v4117
      %v4119 = vrot.slane %v3920, 6
      %v4120 = vsel %vm4013, %v4117, %v4119
      %v4121 = vrot.slane %v3921, 6
      %v4122 = vsel %vm4013, %v4119, %v4121
      %v4123 = vrot.slane %v3922, 6
      %v4124 = vsel %vm4013, %v4121, %v4123
      %v4125 = vrot.slane %v3923, 6
      %v4126 = vsel %vm4013, %v4123, %v4125
      %v4127 = vrot.slane %v3924, 6
      %v4128 = vsel %vm4013, %v4125, %v4127
      %v4129 = vrot.slane %v3925, 6
      %v4130 = vsel %vm4013, %v4127, %v4129
      %v4131 = vrot.slane %v3926, 6
      %v4132 = vsel %vm4013, %v4129, %v4131
      %v4133 = vrot.slane %v3927, 6
      %v4134 = vsel %vm4013, %v4131, %v4133
      %v4135 = vrot.slane %v3928, 6
      %v4136 = vsel %vm4013, %v4133, %v4135
      %v4137 = vrot.slane %v3929, 6
      %v4138 = vsel %vm4013, %v4135, %v4137
      %v4139 = vrot.slane %v3930, 6
      %v4140 = vsel %vm4013, %v4137, %v4139
      %v4141 = vrot.slane %v3931, 6
      %v4142 = vsel %vm4013, %v4139, %v4141
      %v4143 = vrot.slane %v3932, 6
      %v4144 = vsel %vm4013, %v4141, %v4143
      %v4145 = vrot.slane %v3933, 6
      %v4146 = vsel %vm4013, %v4143, %v4145
      %v4147 = vrot.slane %v3934, 6
      %v4148 = vsel %vm4013, %v4145, %v4147
      %v4149 = vrot.slane %v3935, 6
      %v4150 = vsel %vm4013, %v4147, %v4149
      %v4151 = vrot.slane %v3936, 6
      %v4152 = vsel %vm4013, %v4149, %v4151
      %v4153 = vrot.slane %v3937, 6
      %v4154 = vsel %vm4013, %v4151, %v4153
      %v4155 = vrot.slane %v3938, 6
      %v4156 = vsel %vm4013, %v4153, %v4155
      %v4157 = vrot.slane %v3939, 6
      %v4158 = vsel %vm4013, %v4155, %v4157
      %v4231 = vadd.f32 %v3791, %v4016
      %v4232 = vadd.f32 %v3792, %v4018
      %v4233 = vadd.f32 %v3793, %v4020
      %v4234 = vadd.f32 %v3794, %v4022
      %v4235 = vadd.f32 %v3795, %v4024
      %v4236 = vadd.f32 %v3796, %v4026
      %v4237 = vadd.f32 %v3797, %v4028
      %v4238 = vadd.f32 %v3798, %v4030
      %v4239 = vadd.f32 %v3799, %v4032
      %v4240 = vadd.f32 %v3800, %v4034
      %v4241 = vadd.f32 %v3801, %v4036
      %v4242 = vadd.f32 %v3802, %v4038
      %v4243 = vadd.f32 %v3803, %v4040
      %v4244 = vadd.f32 %v3804, %v4042
      %v4245 = vadd.f32 %v3805, %v4044
      %v4246 = vadd.f32 %v3806, %v4046
      %v4247 = vadd.f32 %v3807, %v4048
      %v4248 = vadd.f32 %v3808, %v4050
      %v4249 = vadd.f32 %v3809, %v4052
      %v4250 = vadd.f32 %v3810, %v4054
      %v4251 = vadd.f32 %v3811, %v4056
      %v4252 = vadd.f32 %v3812, %v4058
      %v4253 = vadd.f32 %v3813, %v4060
      %v4254 = vadd.f32 %v3814, %v4062
      %v4255 = vadd.f32 %v3815, %v4064
      %v4256 = vadd.f32 %v3816, %v4066
      %v4257 = vadd.f32 %v3817, %v4068
      %v4258 = vadd.f32 %v3818, %v4070
      %v4259 = vadd.f32 %v3819, %v4072
      %v4260 = vadd.f32 %v3820, %v4074
      %v4261 = vadd.f32 %v3821, %v4076
      %v4262 = vadd.f32 %v3822, %v4078
      %v4263 = vadd.f32 %v3823, %v4080
      %v4264 = vadd.f32 %v3824, %v4082
      %v4265 = vadd.f32 %v3825, %v4084
      %v4266 = vadd.f32 %v3826, %v4086
      %v4267 = vadd.f32 %v3827, %v4088
      %v4268 = vadd.f32 %v3828, %v4090
      %v4269 = vadd.f32 %v3829, %v4092
      %v4270 = vadd.f32 %v3830, %v4094
      %v4271 = vadd.f32 %v3831, %v4096
      %v4272 = vadd.f32 %v3832, %v4098
      %v4273 = vadd.f32 %v3833, %v4100
      %v4274 = vadd.f32 %v3834, %v4102
      %v4275 = vadd.f32 %v3835, %v4104
      %v4276 = vadd.f32 %v3836, %v4106
      %v4277 = vadd.f32 %v3837, %v4108
      %v4278 = vadd.f32 %v3838, %v4110
      %v4279 = vadd.f32 %v3839, %v4112
      %v4280 = vadd.f32 %v3840, %v4114
      %v4281 = vadd.f32 %v3841, %v4116
      %v4282 = vadd.f32 %v3842, %v4118
      %v4283 = vadd.f32 %v3843, %v4120
      %v4284 = vadd.f32 %v3844, %v4122
      %v4285 = vadd.f32 %v3845, %v4124
      %v4286 = vadd.f32 %v3846, %v4126
      %v4287 = vadd.f32 %v3847, %v4128
      %v4288 = vadd.f32 %v3848, %v4130
      %v4289 = vadd.f32 %v3849, %v4132
      %v4290 = vadd.f32 %v3850, %v4134
      %v4291 = vadd.f32 %v3851, %v4136
      %v4292 = vadd.f32 %v3852, %v4138
      %v4293 = vadd.f32 %v3853, %v4140
      %v4294 = vadd.f32 %v3854, %v4142
      %v4295 = vadd.f32 %v3855, %v4144
      %v4296 = vadd.f32 %v3856, %v4146
      %v4297 = vadd.f32 %v3857, %v4148
      %v4298 = vadd.f32 %v3858, %v4150
      %v4299 = vadd.f32 %v3859, %v4152
      %v4300 = vadd.f32 %v3860, %v4154
      %v4301 = vadd.f32 %v3861, %v4156
      %v4302 = vadd.f32 %v3862, %v4158
      %v4303 = vld [vmem:[%s2] sm:$0x1]
      %v4305 = vperm.slane %v4303, 0
      %v4307 = vadd.f32 %v4231, %v4305
      %v4308 = vadd.f32 %v4232, %v4305
      %v4309 = vadd.f32 %v4233, %v4305
      %v4310 = vadd.f32 %v4234, %v4305
      %v4311 = vadd.f32 %v4235, %v4305
      %v4312 = vadd.f32 %v4236, %v4305
      %v4313 = vadd.f32 %v4237, %v4305
      %v4314 = vadd.f32 %v4238, %v4305
      %v4315 = vadd.f32 %v4239, %v4305
      %v4316 = vadd.f32 %v4240, %v4305
      %v4317 = vadd.f32 %v4241, %v4305
      %v4318 = vadd.f32 %v4242, %v4305
      %v4319 = vadd.f32 %v4243, %v4305
      %v4320 = vadd.f32 %v4244, %v4305
      %v4321 = vadd.f32 %v4245, %v4305
      %v4322 = vadd.f32 %v4246, %v4305
      %v4323 = vadd.f32 %v4247, %v4305
      %v4324 = vadd.f32 %v4248, %v4305
      %v4325 = vadd.f32 %v4249, %v4305
      %v4326 = vadd.f32 %v4250, %v4305
      %v4327 = vadd.f32 %v4251, %v4305
      %v4328 = vadd.f32 %v4252, %v4305
      %v4329 = vadd.f32 %v4253, %v4305
      %v4330 = vadd.f32 %v4254, %v4305
      %v4331 = vadd.f32 %v4255, %v4305
      %v4332 = vadd.f32 %v4256, %v4305
      %v4333 = vadd.f32 %v4257, %v4305
      %v4334 = vadd.f32 %v4258, %v4305
      %v4335 = vadd.f32 %v4259, %v4305
      %v4336 = vadd.f32 %v4260, %v4305
      %v4337 = vadd.f32 %v4261, %v4305
      %v4338 = vadd.f32 %v4262, %v4305
      %v4339 = vadd.f32 %v4263, %v4305
      %v4340 = vadd.f32 %v4264, %v4305
      %v4341 = vadd.f32 %v4265, %v4305
      %v4342 = vadd.f32 %v4266, %v4305
      %v4343 = vadd.f32 %v4267, %v4305
      %v4344 = vadd.f32 %v4268, %v4305
      %v4345 = vadd.f32 %v4269, %v4305
      %v4346 = vadd.f32 %v4270, %v4305
      %v4347 = vadd.f32 %v4271, %v4305
      %v4348 = vadd.f32 %v4272, %v4305
      %v4349 = vadd.f32 %v4273, %v4305
      %v4350 = vadd.f32 %v4274, %v4305
      %v4351 = vadd.f32 %v4275, %v4305
      %v4352 = vadd.f32 %v4276, %v4305
      %v4353 = vadd.f32 %v4277, %v4305
      %v4354 = vadd.f32 %v4278, %v4305
      %v4355 = vadd.f32 %v4279, %v4305
      %v4356 = vadd.f32 %v4280, %v4305
      %v4357 = vadd.f32 %v4281, %v4305
      %v4358 = vadd.f32 %v4282, %v4305
      %v4359 = vadd.f32 %v4283, %v4305
      %v4360 = vadd.f32 %v4284, %v4305
      %v4361 = vadd.f32 %v4285, %v4305
      %v4362 = vadd.f32 %v4286, %v4305
      %v4363 = vadd.f32 %v4287, %v4305
      %v4364 = vadd.f32 %v4288, %v4305
      %v4365 = vadd.f32 %v4289, %v4305
      %v4366 = vadd.f32 %v4290, %v4305
      %v4367 = vadd.f32 %v4291, %v4305
      %v4368 = vadd.f32 %v4292, %v4305
      %v4369 = vadd.f32 %v4293, %v4305
      %v4370 = vadd.f32 %v4294, %v4305
      %v4371 = vadd.f32 %v4295, %v4305
      %v4372 = vadd.f32 %v4296, %v4305
      %v4373 = vadd.f32 %v4297, %v4305
      %v4374 = vadd.f32 %v4298, %v4305
      %v4375 = vadd.f32 %v4299, %v4305
      %v4376 = vadd.f32 %v4300, %v4305
      %v4377 = vadd.f32 %v4301, %v4305
      %v4378 = vadd.f32 %v4302, %v4305
      %v4379 = vmax.f32 %v4307, 0.0
      %v4380 = vmax.f32 %v4308, 0.0
      %v4381 = vmax.f32 %v4309, 0.0
      %v4382 = vmax.f32 %v4310, 0.0
      %v4383 = vmax.f32 %v4311, 0.0
      %v4384 = vmax.f32 %v4312, 0.0
      %v4385 = vmax.f32 %v4313, 0.0
      %v4386 = vmax.f32 %v4314, 0.0
      %v4387 = vmax.f32 %v4315, 0.0
      %v4388 = vmax.f32 %v4316, 0.0
      %v4389 = vmax.f32 %v4317, 0.0
      %v4390 = vmax.f32 %v4318, 0.0
      %v4391 = vmax.f32 %v4319, 0.0
      %v4392 = vmax.f32 %v4320, 0.0
      %v4393 = vmax.f32 %v4321, 0.0
      %v4394 = vmax.f32 %v4322, 0.0
      %v4395 = vmax.f32 %v4323, 0.0
      %v4396 = vmax.f32 %v4324, 0.0
      %v4397 = vmax.f32 %v4325, 0.0
      %v4398 = vmax.f32 %v4326, 0.0
      %v4399 = vmax.f32 %v4327, 0.0
      %v4400 = vmax.f32 %v4328, 0.0
      %v4401 = vmax.f32 %v4329, 0.0
      %v4402 = vmax.f32 %v4330, 0.0
      %v4403 = vmax.f32 %v4331, 0.0
      %v4404 = vmax.f32 %v4332, 0.0
      %v4405 = vmax.f32 %v4333, 0.0
      %v4406 = vmax.f32 %v4334, 0.0
      %v4407 = vmax.f32 %v4335, 0.0
      %v4408 = vmax.f32 %v4336, 0.0
      %v4409 = vmax.f32 %v4337, 0.0
      %v4410 = vmax.f32 %v4338, 0.0
      %v4411 = vmax.f32 %v4339, 0.0
      %v4412 = vmax.f32 %v4340, 0.0
      %v4413 = vmax.f32 %v4341, 0.0
      %v4414 = vmax.f32 %v4342, 0.0
      %v4415 = vmax.f32 %v4343, 0.0
      %v4416 = vmax.f32 %v4344, 0.0
      %v4417 = vmax.f32 %v4345, 0.0
      %v4418 = vmax.f32 %v4346, 0.0
      %v4419 = vmax.f32 %v4347, 0.0
      %v4420 = vmax.f32 %v4348, 0.0
      %v4421 = vmax.f32 %v4349, 0.0
      %v4422 = vmax.f32 %v4350, 0.0
      %v4423 = vmax.f32 %v4351, 0.0
      %v4424 = vmax.f32 %v4352, 0.0
      %v4425 = vmax.f32 %v4353, 0.0
      %v4426 = vmax.f32 %v4354, 0.0
      %v4427 = vmax.f32 %v4355, 0.0
      %v4428 = vmax.f32 %v4356, 0.0
      %v4429 = vmax.f32 %v4357, 0.0
      %v4430 = vmax.f32 %v4358, 0.0
      %v4431 = vmax.f32 %v4359, 0.0
      %v4432 = vmax.f32 %v4360, 0.0
      %v4433 = vmax.f32 %v4361, 0.0
      %v4434 = vmax.f32 %v4362, 0.0
      %v4435 = vmax.f32 %v4363, 0.0
      %v4436 = vmax.f32 %v4364, 0.0
      %v4437 = vmax.f32 %v4365, 0.0
      %v4438 = vmax.f32 %v4366, 0.0
      %v4439 = vmax.f32 %v4367, 0.0
      %v4440 = vmax.f32 %v4368, 0.0
      %v4441 = vmax.f32 %v4369, 0.0
      %v4442 = vmax.f32 %v4370, 0.0
      %v4443 = vmax.f32 %v4371, 0.0
      %v4444 = vmax.f32 %v4372, 0.0
      %v4445 = vmax.f32 %v4373, 0.0
      %v4446 = vmax.f32 %v4374, 0.0
      %v4447 = vmax.f32 %v4375, 0.0
      %v4448 = vmax.f32 %v4376, 0.0
      %v4449 = vmax.f32 %v4377, 0.0
      %v4450 = vmax.f32 %v4378, 0.0
      %v4451 = vrot.slane %v4379, 1
      %v4452 = vrot.slane %v4380, 1
      %v4453 = vrot.slane %v4381, 1
      %v4454 = vrot.slane %v4382, 1
      %v4455 = vrot.slane %v4383, 1
      %v4456 = vrot.slane %v4384, 1
      %v4457 = vrot.slane %v4385, 1
      %v4458 = vrot.slane %v4386, 1
      %v4459 = vrot.slane %v4387, 1
      %v4460 = vrot.slane %v4388, 1
      %v4461 = vrot.slane %v4389, 1
      %v4462 = vrot.slane %v4390, 1
      %v4463 = vrot.slane %v4391, 1
      %v4464 = vrot.slane %v4392, 1
      %v4465 = vrot.slane %v4393, 1
      %v4466 = vrot.slane %v4394, 1
      %v4467 = vrot.slane %v4395, 1
      %v4468 = vrot.slane %v4396, 1
      %v4469 = vrot.slane %v4397, 1
      %v4470 = vrot.slane %v4398, 1
      %v4471 = vrot.slane %v4399, 1
      %v4472 = vrot.slane %v4400, 1
      %v4473 = vrot.slane %v4401, 1
      %v4474 = vrot.slane %v4402, 1
      %v4475 = vrot.slane %v4403, 1
      %v4476 = vrot.slane %v4404, 1
      %v4477 = vrot.slane %v4405, 1
      %v4478 = vrot.slane %v4406, 1
      %v4479 = vrot.slane %v4407, 1
      %v4480 = vrot.slane %v4408, 1
      %v4481 = vrot.slane %v4409, 1
      %v4482 = vrot.slane %v4410, 1
      %v4483 = vrot.slane %v4411, 1
      %v4484 = vrot.slane %v4412, 1
      %v4485 = vrot.slane %v4413, 1
      %v4486 = vrot.slane %v4414, 1
      %v4487 = vrot.slane %v4415, 1
      %v4488 = vrot.slane %v4416, 1
      %v4489 = vrot.slane %v4417, 1
      %v4490 = vrot.slane %v4418, 1
      %v4491 = vrot.slane %v4419, 1
      %v4492 = vrot.slane %v4420, 1
      %v4493 = vrot.slane %v4421, 1
      %v4494 = vrot.slane %v4422, 1
      %v4495 = vrot.slane %v4423, 1
      %v4496 = vrot.slane %v4424, 1
      %v4497 = vrot.slane %v4425, 1
      %v4498 = vrot.slane %v4426, 1
      %v4499 = vrot.slane %v4427, 1
      %v4500 = vrot.slane %v4428, 1
      %v4501 = vrot.slane %v4429, 1
      %v4502 = vrot.slane %v4430, 1
      %v4503 = vrot.slane %v4431, 1
      %v4504 = vrot.slane %v4432, 1
      %v4505 = vrot.slane %v4433, 1
      %v4506 = vrot.slane %v4434, 1
      %v4507 = vrot.slane %v4435, 1
      %v4508 = vrot.slane %v4436, 1
      %v4509 = vrot.slane %v4437, 1
      %v4510 = vrot.slane %v4438, 1
      %v4511 = vrot.slane %v4439, 1
      %v4512 = vrot.slane %v4440, 1
      %v4513 = vrot.slane %v4441, 1
      %v4514 = vrot.slane %v4442, 1
      %v4515 = vrot.slane %v4443, 1
      %v4516 = vrot.slane %v4444, 1
      %v4517 = vrot.slane %v4445, 1
      %v4518 = vrot.slane %v4446, 1
      %v4519 = vrot.slane %v4447, 1
      %v4520 = vrot.slane %v4448, 1
      %v4521 = vrot.slane %v4449, 1
      %v4522 = vrot.slane %v4450, 1
      %v4523 = vlaneseq
      %v4524 = vshrl.u32 %v4523, 7
      %vm4525 = vcmp.lt.s32.totalorder %v4524, 7
      %v4526 = vsel %vm4525, %v4521, %v4522
      %v4527 = vsel %vm4525, %v4520, %v4521
      %v4528 = vsel %vm4525, %v4519, %v4520
      %v4529 = vsel %vm4525, %v4518, %v4519
      %v4530 = vsel %vm4525, %v4517, %v4518
      %v4531 = vsel %vm4525, %v4516, %v4517
      %v4532 = vsel %vm4525, %v4515, %v4516
      %v4533 = vsel %vm4525, %v4514, %v4515
      %v4534 = vsel %vm4525, %v4513, %v4514
      %v4535 = vsel %vm4525, %v4512, %v4513
      %v4536 = vsel %vm4525, %v4511, %v4512
      %v4537 = vsel %vm4525, %v4510, %v4511
      %v4538 = vsel %vm4525, %v4509, %v4510
      %v4539 = vsel %vm4525, %v4508, %v4509
      %v4540 = vsel %vm4525, %v4507, %v4508
      %v4541 = vsel %vm4525, %v4506, %v4507
      %v4542 = vsel %vm4525, %v4505, %v4506
      %v4543 = vsel %vm4525, %v4504, %v4505
      %v4544 = vsel %vm4525, %v4503, %v4504
      %v4545 = vsel %vm4525, %v4502, %v4503
      %v4546 = vsel %vm4525, %v4501, %v4502
      %v4547 = vsel %vm4525, %v4500, %v4501
      %v4548 = vsel %vm4525, %v4499, %v4500
      %v4549 = vsel %vm4525, %v4498, %v4499
      %v4550 = vsel %vm4525, %v4497, %v4498
      %v4551 = vsel %vm4525, %v4496, %v4497
      %v4552 = vsel %vm4525, %v4495, %v4496
      %v4553 = vsel %vm4525, %v4494, %v4495
      %v4554 = vsel %vm4525, %v4493, %v4494
      %v4555 = vsel %vm4525, %v4492, %v4493
      %v4556 = vsel %vm4525, %v4491, %v4492
      %v4557 = vsel %vm4525, %v4490, %v4491
      %v4558 = vsel %vm4525, %v4489, %v4490
      %v4559 = vsel %vm4525, %v4488, %v4489
      %v4560 = vsel %vm4525, %v4487, %v4488
      %v4561 = vsel %vm4525, %v4486, %v4487
      %v4562 = vsel %vm4525, %v4485, %v4486
      %v4563 = vsel %vm4525, %v4484, %v4485
      %v4564 = vsel %vm4525, %v4483, %v4484
      %v4565 = vsel %vm4525, %v4482, %v4483
      %v4566 = vsel %vm4525, %v4481, %v4482
      %v4567 = vsel %vm4525, %v4480, %v4481
      %v4568 = vsel %vm4525, %v4479, %v4480
      %v4569 = vsel %vm4525, %v4478, %v4479
      %v4570 = vsel %vm4525, %v4477, %v4478
      %v4571 = vsel %vm4525, %v4476, %v4477
      %v4572 = vsel %vm4525, %v4475, %v4476
      %v4573 = vsel %vm4525, %v4474, %v4475
      %v4574 = vsel %vm4525, %v4473, %v4474
      %v4575 = vsel %vm4525, %v4472, %v4473
      %v4576 = vsel %vm4525, %v4471, %v4472
      %v4577 = vsel %vm4525, %v4470, %v4471
      %v4578 = vsel %vm4525, %v4469, %v4470
      %v4579 = vsel %vm4525, %v4468, %v4469
      %v4580 = vsel %vm4525, %v4467, %v4468
      %v4581 = vsel %vm4525, %v4466, %v4467
      %v4582 = vsel %vm4525, %v4465, %v4466
      %v4583 = vsel %vm4525, %v4464, %v4465
      %v4584 = vsel %vm4525, %v4463, %v4464
      %v4585 = vsel %vm4525, %v4462, %v4463
      %v4586 = vsel %vm4525, %v4461, %v4462
      %v4587 = vsel %vm4525, %v4460, %v4461
      %v4588 = vsel %vm4525, %v4459, %v4460
      %v4589 = vsel %vm4525, %v4458, %v4459
      %v4590 = vsel %vm4525, %v4457, %v4458
      %v4591 = vsel %vm4525, %v4456, %v4457
      %v4592 = vsel %vm4525, %v4455, %v4456
      %v4593 = vsel %vm4525, %v4454, %v4455
      %v4594 = vsel %vm4525, %v4453, %v4454
      %v4595 = vsel %vm4525, %v4452, %v4453
      %v4596 = vsel %vm4525, %v4451, %v4452
      %v4597 = vsel %vm4525, %v4522, %v4451
      %v4598 = vmax.f32 %v4379, %v4596
      %v4599 = vmax.f32 %v4380, %v4595
      %v4600 = vmax.f32 %v4381, %v4594
      %v4601 = vmax.f32 %v4382, %v4593
      %v4602 = vmax.f32 %v4383, %v4592
      %v4603 = vmax.f32 %v4384, %v4591
      %v4604 = vmax.f32 %v4385, %v4590
      %v4605 = vmax.f32 %v4386, %v4589
      %v4606 = vmax.f32 %v4387, %v4588
      %v4607 = vmax.f32 %v4388, %v4587
      %v4608 = vmax.f32 %v4389, %v4586
      %v4609 = vmax.f32 %v4390, %v4585
      %v4610 = vmax.f32 %v4391, %v4584
      %v4611 = vmax.f32 %v4392, %v4583
      %v4612 = vmax.f32 %v4393, %v4582
      %v4613 = vmax.f32 %v4394, %v4581
      %v4614 = vmax.f32 %v4395, %v4580
      %v4615 = vmax.f32 %v4396, %v4579
      %v4616 = vmax.f32 %v4397, %v4578
      %v4617 = vmax.f32 %v4398, %v4577
      %v4618 = vmax.f32 %v4399, %v4576
      %v4619 = vmax.f32 %v4400, %v4575
      %v4620 = vmax.f32 %v4401, %v4574
      %v4621 = vmax.f32 %v4402, %v4573
      %v4622 = vmax.f32 %v4403, %v4572
      %v4623 = vmax.f32 %v4404, %v4571
      %v4624 = vmax.f32 %v4405, %v4570
      %v4625 = vmax.f32 %v4406, %v4569
      %v4626 = vmax.f32 %v4407, %v4568
      %v4627 = vmax.f32 %v4408, %v4567
      %v4628 = vmax.f32 %v4409, %v4566
      %v4629 = vmax.f32 %v4410, %v4565
      %v4630 = vmax.f32 %v4411, %v4564
      %v4631 = vmax.f32 %v4412, %v4563
      %v4632 = vmax.f32 %v4413, %v4562
      %v4633 = vmax.f32 %v4414, %v4561
      %v4634 = vmax.f32 %v4415, %v4560
      %v4635 = vmax.f32 %v4416, %v4559
      %v4636 = vmax.f32 %v4417, %v4558
      %v4637 = vmax.f32 %v4418, %v4557
      %v4638 = vmax.f32 %v4419, %v4556
      %v4639 = vmax.f32 %v4420, %v4555
      %v4640 = vmax.f32 %v4421, %v4554
      %v4641 = vmax.f32 %v4422, %v4553
      %v4642 = vmax.f32 %v4423, %v4552
      %v4643 = vmax.f32 %v4424, %v4551
      %v4644 = vmax.f32 %v4425, %v4550
      %v4645 = vmax.f32 %v4426, %v4549
      %v4646 = vmax.f32 %v4427, %v4548
      %v4647 = vmax.f32 %v4428, %v4547
      %v4648 = vmax.f32 %v4429, %v4546
      %v4649 = vmax.f32 %v4430, %v4545
      %v4650 = vmax.f32 %v4431, %v4544
      %v4651 = vmax.f32 %v4432, %v4543
      %v4652 = vmax.f32 %v4433, %v4542
      %v4653 = vmax.f32 %v4434, %v4541
      %v4654 = vmax.f32 %v4435, %v4540
      %v4655 = vmax.f32 %v4436, %v4539
      %v4656 = vmax.f32 %v4437, %v4538
      %v4657 = vmax.f32 %v4438, %v4537
      %v4658 = vmax.f32 %v4439, %v4536
      %v4659 = vmax.f32 %v4440, %v4535
      %v4660 = vmax.f32 %v4441, %v4534
      %v4661 = vmax.f32 %v4442, %v4533
      %v4662 = vmax.f32 %v4443, %v4532
      %v4663 = vmax.f32 %v4444, %v4531
      %v4664 = vmax.f32 %v4445, %v4530
      %v4665 = vmax.f32 %v4446, %v4529
      %v4666 = vmax.f32 %v4447, %v4528
      %v4667 = vmax.f32 %v4448, %v4527
      %v4668 = vmax.f32 %v4449, %v4526
      %v4669 = vmax.f32 %v4450, %v4597
      %v4670 = vrot.slane %v4598, 2
      %v4671 = vrot.slane %v4599, 2
      %v4672 = vrot.slane %v4600, 2
      %v4673 = vrot.slane %v4601, 2
      %v4674 = vrot.slane %v4602, 2
      %v4675 = vrot.slane %v4603, 2
      %v4676 = vrot.slane %v4604, 2
      %v4677 = vrot.slane %v4605, 2
      %v4678 = vrot.slane %v4606, 2
      %v4679 = vrot.slane %v4607, 2
      %v4680 = vrot.slane %v4608, 2
      %v4681 = vrot.slane %v4609, 2
      %v4682 = vrot.slane %v4610, 2
      %v4683 = vrot.slane %v4611, 2
      %v4684 = vrot.slane %v4612, 2
      %v4685 = vrot.slane %v4613, 2
      %v4686 = vrot.slane %v4614, 2
      %v4687 = vrot.slane %v4615, 2
      %v4688 = vrot.slane %v4616, 2
      %v4689 = vrot.slane %v4617, 2
      %v4690 = vrot.slane %v4618, 2
      %v4691 = vrot.slane %v4619, 2
      %v4692 = vrot.slane %v4620, 2
      %v4693 = vrot.slane %v4621, 2
      %v4694 = vrot.slane %v4622, 2
      %v4695 = vrot.slane %v4623, 2
      %v4696 = vrot.slane %v4624, 2
      %v4697 = vrot.slane %v4625, 2
      %v4698 = vrot.slane %v4626, 2
      %v4699 = vrot.slane %v4627, 2
      %v4700 = vrot.slane %v4628, 2
      %v4701 = vrot.slane %v4629, 2
      %v4702 = vrot.slane %v4630, 2
      %v4703 = vrot.slane %v4631, 2
      %v4704 = vrot.slane %v4632, 2
      %v4705 = vrot.slane %v4633, 2
      %v4706 = vrot.slane %v4634, 2
      %v4707 = vrot.slane %v4635, 2
      %v4708 = vrot.slane %v4636, 2
      %v4709 = vrot.slane %v4637, 2
      %v4710 = vrot.slane %v4638, 2
      %v4711 = vrot.slane %v4639, 2
      %v4712 = vrot.slane %v4640, 2
      %v4713 = vrot.slane %v4641, 2
      %v4714 = vrot.slane %v4642, 2
      %v4715 = vrot.slane %v4643, 2
      %v4716 = vrot.slane %v4644, 2
      %v4717 = vrot.slane %v4645, 2
      %v4718 = vrot.slane %v4646, 2
      %v4719 = vrot.slane %v4647, 2
      %v4720 = vrot.slane %v4648, 2
      %v4721 = vrot.slane %v4649, 2
      %v4722 = vrot.slane %v4650, 2
      %v4723 = vrot.slane %v4651, 2
      %v4724 = vrot.slane %v4652, 2
      %v4725 = vrot.slane %v4653, 2
      %v4726 = vrot.slane %v4654, 2
      %v4727 = vrot.slane %v4655, 2
      %v4728 = vrot.slane %v4656, 2
      %v4729 = vrot.slane %v4657, 2
      %v4730 = vrot.slane %v4658, 2
      %v4731 = vrot.slane %v4659, 2
      %v4732 = vrot.slane %v4660, 2
      %v4733 = vrot.slane %v4661, 2
      %v4734 = vrot.slane %v4662, 2
      %v4735 = vrot.slane %v4663, 2
      %v4736 = vrot.slane %v4664, 2
      %v4737 = vrot.slane %v4665, 2
      %v4738 = vrot.slane %v4666, 2
      %v4739 = vrot.slane %v4667, 2
      %v4740 = vrot.slane %v4668, 2
      %v4741 = vrot.slane %v4669, 2
      %vm4742 = vcmp.lt.s32.totalorder %v4524, 6
      %v4743 = vsel %vm4742, %v4740, %v4741
      %v4744 = vsel %vm4742, %v4739, %v4740
      %v4745 = vsel %vm4742, %v4738, %v4739
      %v4746 = vsel %vm4742, %v4737, %v4738
      %v4747 = vsel %vm4742, %v4736, %v4737
      %v4748 = vsel %vm4742, %v4735, %v4736
      %v4749 = vsel %vm4742, %v4734, %v4735
      %v4750 = vsel %vm4742, %v4733, %v4734
      %v4751 = vsel %vm4742, %v4732, %v4733
      %v4752 = vsel %vm4742, %v4731, %v4732
      %v4753 = vsel %vm4742, %v4730, %v4731
      %v4754 = vsel %vm4742, %v4729, %v4730
      %v4755 = vsel %vm4742, %v4728, %v4729
      %v4756 = vsel %vm4742, %v4727, %v4728
      %v4757 = vsel %vm4742, %v4726, %v4727
      %v4758 = vsel %vm4742, %v4725, %v4726
      %v4759 = vsel %vm4742, %v4724, %v4725
      %v4760 = vsel %vm4742, %v4723, %v4724
      %v4761 = vsel %vm4742, %v4722, %v4723
      %v4762 = vsel %vm4742, %v4721, %v4722
      %v4763 = vsel %vm4742, %v4720, %v4721
      %v4764 = vsel %vm4742, %v4719, %v4720
      %v4765 = vsel %vm4742, %v4718, %v4719
      %v4766 = vsel %vm4742, %v4717, %v4718
      %v4767 = vsel %vm4742, %v4716, %v4717
      %v4768 = vsel %vm4742, %v4715, %v4716
      %v4769 = vsel %vm4742, %v4714, %v4715
      %v4770 = vsel %vm4742, %v4713, %v4714
      %v4771 = vsel %vm4742, %v4712, %v4713
      %v4772 = vsel %vm4742, %v4711, %v4712
      %v4773 = vsel %vm4742, %v4710, %v4711
      %v4774 = vsel %vm4742, %v4709, %v4710
      %v4775 = vsel %vm4742, %v4708, %v4709
      %v4776 = vsel %vm4742, %v4707, %v4708
      %v4777 = vsel %vm4742, %v4706, %v4707
      %v4778 = vsel %vm4742, %v4705, %v4706
      %v4779 = vsel %vm4742, %v4704, %v4705
      %v4780 = vsel %vm4742, %v4703, %v4704
      %v4781 = vsel %vm4742, %v4702, %v4703
      %v4782 = vsel %vm4742, %v4701, %v4702
      %v4783 = vsel %vm4742, %v4700, %v4701
      %v4784 = vsel %vm4742, %v4699, %v4700
      %v4785 = vsel %vm4742, %v4698, %v4699
      %v4786 = vsel %vm4742, %v4697, %v4698
      %v4787 = vsel %vm4742, %v4696, %v4697
      %v4788 = vsel %vm4742, %v4695, %v4696
      %v4789 = vsel %vm4742, %v4694, %v4695
      %v4790 = vsel %vm4742, %v4693, %v4694
      %v4791 = vsel %vm4742, %v4692, %v4693
      %v4792 = vsel %vm4742, %v4691, %v4692
      %v4793 = vsel %vm4742, %v4690, %v4691
      %v4794 = vsel %vm4742, %v4689, %v4690
      %v4795 = vsel %vm4742, %v4688, %v4689
      %v4796 = vsel %vm4742, %v4687, %v4688
      %v4797 = vsel %vm4742, %v4686, %v4687
      %v4798 = vsel %vm4742, %v4685, %v4686
      %v4799 = vsel %vm4742, %v4684, %v4685
      %v4800 = vsel %vm4742, %v4683, %v4684
      %v4801 = vsel %vm4742, %v4682, %v4683
      %v4802 = vsel %vm4742, %v4681, %v4682
      %v4803 = vsel %vm4742, %v4680, %v4681
      %v4804 = vsel %vm4742, %v4679, %v4680
      %v4805 = vsel %vm4742, %v4678, %v4679
      %v4806 = vsel %vm4742, %v4677, %v4678
      %v4807 = vsel %vm4742, %v4676, %v4677
      %v4808 = vsel %vm4742, %v4675, %v4676
      %v4809 = vsel %vm4742, %v4674, %v4675
      %v4810 = vsel %vm4742, %v4673, %v4674
      %v4811 = vsel %vm4742, %v4672, %v4673
      %v4812 = vsel %vm4742, %v4671, %v4672
      %v4813 = vsel %vm4742, %v4670, %v4671
      %v4814 = vsel %vm4742, %v4741, %v4670
      %v4815 = vmax.f32 %v4598, %v4811
      %v4816 = vmax.f32 %v4599, %v4810
      %v4817 = vmax.f32 %v4600, %v4809
      %v4818 = vmax.f32 %v4601, %v4808
      %v4819 = vmax.f32 %v4602, %v4807
      %v4820 = vmax.f32 %v4603, %v4806
      %v4821 = vmax.f32 %v4604, %v4805
      %v4822 = vmax.f32 %v4605, %v4804
      %v4823 = vmax.f32 %v4606, %v4803
      %v4824 = vmax.f32 %v4607, %v4802
      %v4825 = vmax.f32 %v4608, %v4801
      %v4826 = vmax.f32 %v4609, %v4800
      %v4827 = vmax.f32 %v4610, %v4799
      %v4828 = vmax.f32 %v4611, %v4798
      %v4829 = vmax.f32 %v4612, %v4797
      %v4830 = vmax.f32 %v4613, %v4796
      %v4831 = vmax.f32 %v4614, %v4795
      %v4832 = vmax.f32 %v4615, %v4794
      %v4833 = vmax.f32 %v4616, %v4793
      %v4834 = vmax.f32 %v4617, %v4792
      %v4835 = vmax.f32 %v4618, %v4791
      %v4836 = vmax.f32 %v4619, %v4790
      %v4837 = vmax.f32 %v4620, %v4789
      %v4838 = vmax.f32 %v4621, %v4788
      %v4839 = vmax.f32 %v4622, %v4787
      %v4840 = vmax.f32 %v4623, %v4786
      %v4841 = vmax.f32 %v4624, %v4785
      %v4842 = vmax.f32 %v4625, %v4784
      %v4843 = vmax.f32 %v4626, %v4783
      %v4844 = vmax.f32 %v4627, %v4782
      %v4845 = vmax.f32 %v4628, %v4781
      %v4846 = vmax.f32 %v4629, %v4780
      %v4847 = vmax.f32 %v4630, %v4779
      %v4848 = vmax.f32 %v4631, %v4778
      %v4849 = vmax.f32 %v4632, %v4777
      %v4850 = vmax.f32 %v4633, %v4776
      %v4851 = vmax.f32 %v4634, %v4775
      %v4852 = vmax.f32 %v4635, %v4774
      %v4853 = vmax.f32 %v4636, %v4773
      %v4854 = vmax.f32 %v4637, %v4772
      %v4855 = vmax.f32 %v4638, %v4771
      %v4856 = vmax.f32 %v4639, %v4770
      %v4857 = vmax.f32 %v4640, %v4769
      %v4858 = vmax.f32 %v4641, %v4768
      %v4859 = vmax.f32 %v4642, %v4767
      %v4860 = vmax.f32 %v4643, %v4766
      %v4861 = vmax.f32 %v4644, %v4765
      %v4862 = vmax.f32 %v4645, %v4764
      %v4863 = vmax.f32 %v4646, %v4763
      %v4864 = vmax.f32 %v4647, %v4762
      %v4865 = vmax.f32 %v4648, %v4761
      %v4866 = vmax.f32 %v4649, %v4760
      %v4867 = vmax.f32 %v4650, %v4759
      %v4868 = vmax.f32 %v4651, %v4758
      %v4869 = vmax.f32 %v4652, %v4757
      %v4870 = vmax.f32 %v4653, %v4756
      %v4871 = vmax.f32 %v4654, %v4755
      %v4872 = vmax.f32 %v4655, %v4754
      %v4873 = vmax.f32 %v4656, %v4753
      %v4874 = vmax.f32 %v4657, %v4752
      %v4875 = vmax.f32 %v4658, %v4751
      %v4876 = vmax.f32 %v4659, %v4750
      %v4877 = vmax.f32 %v4660, %v4749
      %v4878 = vmax.f32 %v4661, %v4748
      %v4879 = vmax.f32 %v4662, %v4747
      %v4880 = vmax.f32 %v4663, %v4746
      %v4881 = vmax.f32 %v4664, %v4745
      %v4882 = vmax.f32 %v4665, %v4744
      %v4883 = vmax.f32 %v4666, %v4743
      %v4884 = vmax.f32 %v4667, %v4814
      %v4885 = vmax.f32 %v4668, %v4813
      %v4886 = vmax.f32 %v4669, %v4812
      %v4887 = vpack.c.bf16 %v4815, %v4815
      %v4888 = vpack.c.bf16 %v4816, %v4816
      %v4889 = vpack.c.bf16 %v4817, %v4817
      %v4890 = vpack.c.bf16 %v4818, %v4818
      %v4891 = vpack.c.bf16 %v4819, %v4819
      %v4892 = vpack.c.bf16 %v4820, %v4820
      %v4893 = vpack.c.bf16 %v4821, %v4821
      %v4894 = vpack.c.bf16 %v4822, %v4822
      %v4895 = vpack.c.bf16 %v4823, %v4823
      %v4896 = vpack.c.bf16 %v4824, %v4824
      %v4897 = vpack.c.bf16 %v4825, %v4825
      %v4898 = vpack.c.bf16 %v4826, %v4826
      %v4899 = vpack.c.bf16 %v4827, %v4827
      %v4900 = vpack.c.bf16 %v4828, %v4828
      %v4901 = vpack.c.bf16 %v4829, %v4829
      %v4902 = vpack.c.bf16 %v4830, %v4830
      %v4903 = vpack.c.bf16 %v4831, %v4831
      %v4904 = vpack.c.bf16 %v4832, %v4832
      %v4905 = vpack.c.bf16 %v4833, %v4833
      %v4906 = vpack.c.bf16 %v4834, %v4834
      %v4907 = vpack.c.bf16 %v4835, %v4835
      %v4908 = vpack.c.bf16 %v4836, %v4836
      %v4909 = vpack.c.bf16 %v4837, %v4837
      %v4910 = vpack.c.bf16 %v4838, %v4838
      %v4911 = vpack.c.bf16 %v4839, %v4839
      %v4912 = vpack.c.bf16 %v4840, %v4840
      %v4913 = vpack.c.bf16 %v4841, %v4841
      %v4914 = vpack.c.bf16 %v4842, %v4842
      %v4915 = vpack.c.bf16 %v4843, %v4843
      %v4916 = vpack.c.bf16 %v4844, %v4844
      %v4917 = vpack.c.bf16 %v4845, %v4845
      %v4918 = vpack.c.bf16 %v4846, %v4846
      %v4919 = vpack.c.bf16 %v4847, %v4847
      %v4920 = vpack.c.bf16 %v4848, %v4848
      %v4921 = vpack.c.bf16 %v4849, %v4849
      %v4922 = vpack.c.bf16 %v4850, %v4850
      %v4923 = vpack.c.bf16 %v4851, %v4851
      %v4924 = vpack.c.bf16 %v4852, %v4852
      %v4925 = vpack.c.bf16 %v4853, %v4853
      %v4926 = vpack.c.bf16 %v4854, %v4854
      %v4927 = vpack.c.bf16 %v4855, %v4855
      %v4928 = vpack.c.bf16 %v4856, %v4856
      %v4929 = vpack.c.bf16 %v4857, %v4857
      %v4930 = vpack.c.bf16 %v4858, %v4858
      %v4931 = vpack.c.bf16 %v4859, %v4859
      %v4932 = vpack.c.bf16 %v4860, %v4860
      %v4933 = vpack.c.bf16 %v4861, %v4861
      %v4934 = vpack.c.bf16 %v4862, %v4862
      %v4935 = vpack.c.bf16 %v4863, %v4863
      %v4936 = vpack.c.bf16 %v4864, %v4864
      %v4937 = vpack.c.bf16 %v4865, %v4865
      %v4938 = vpack.c.bf16 %v4866, %v4866
      %v4939 = vpack.c.bf16 %v4867, %v4867
      %v4940 = vpack.c.bf16 %v4868, %v4868
      %v4941 = vpack.c.bf16 %v4869, %v4869
      %v4942 = vpack.c.bf16 %v4870, %v4870
      %v4943 = vpack.c.bf16 %v4871, %v4871
      %v4944 = vpack.c.bf16 %v4872, %v4872
      %v4945 = vpack.c.bf16 %v4873, %v4873
      %v4946 = vpack.c.bf16 %v4874, %v4874
      %v4947 = vpack.c.bf16 %v4875, %v4875
      %v4948 = vpack.c.bf16 %v4876, %v4876
      %v4949 = vpack.c.bf16 %v4877, %v4877
      %v4950 = vpack.c.bf16 %v4878, %v4878
      %v4951 = vpack.c.bf16 %v4879, %v4879
      %v4952 = vpack.c.bf16 %v4880, %v4880
      %v4953 = vpack.c.bf16 %v4881, %v4881
      %v4954 = vpack.c.bf16 %v4882, %v4882
      %v4955 = vpack.c.bf16 %v4883, %v4883
      %v4956 = vpack.c.bf16 %v4884, %v4884
      %v4957 = vpack.c.bf16 %v4885, %v4885
      %v4958 = vpack.c.bf16 %v4886, %v4886
      %vm4959 = vcmask 60416
      %4960 = vst.msk [vmem:[%s170] sm:$0xf] %vm4959, %v4887
      %4961 = vst.msk [vmem:[%s170 + $0x4] sm:$0xf] %vm4959, %v4888
      %4962 = vst.msk [vmem:[%s170 + $0x8] sm:$0xf] %vm4959, %v4889
      %4963 = vst.msk [vmem:[%s170 + $0xc] sm:$0xf] %vm4959, %v4890
      %4964 = vst.msk [vmem:[%s170 + $0x10] sm:$0xf] %vm4959, %v4891
      %4965 = vst.msk [vmem:[%s170 + $0x14] sm:$0xf] %vm4959, %v4892
      %4966 = vst.msk [vmem:[%s170 + $0x18] sm:$0xf] %vm4959, %v4893
      %4967 = vst.msk [vmem:[%s170 + $0x1c] sm:$0xf] %vm4959, %v4894
      %4968 = vst.msk [vmem:[%s170 + $0x20] sm:$0xf] %vm4959, %v4895
      %4969 = vst.msk [vmem:[%s170 + $0x24] sm:$0xf] %vm4959, %v4896
      %4970 = vst.msk [vmem:[%s170 + $0x28] sm:$0xf] %vm4959, %v4897
      %4971 = vst.msk [vmem:[%s170 + $0x2c] sm:$0xf] %vm4959, %v4898
      %4972 = vst.msk [vmem:[%s170 + $0x30] sm:$0xf] %vm4959, %v4899
      %4973 = vst.msk [vmem:[%s170 + $0x34] sm:$0xf] %vm4959, %v4900
      %4974 = vst.msk [vmem:[%s170 + $0x38] sm:$0xf] %vm4959, %v4901
      %4975 = vst.msk [vmem:[%s170 + $0x3c] sm:$0xf] %vm4959, %v4902
      %4976 = vst.msk [vmem:[%s170 + $0x40] sm:$0xf] %vm4959, %v4903
      %4977 = vst.msk [vmem:[%s170 + $0x44] sm:$0xf] %vm4959, %v4904
      %4978 = vst.msk [vmem:[%s170 + $0x48] sm:$0xf] %vm4959, %v4905
      %4979 = vst.msk [vmem:[%s170 + $0x4c] sm:$0xf] %vm4959, %v4906
      %4980 = vst.msk [vmem:[%s170 + $0x50] sm:$0xf] %vm4959, %v4907
      %4981 = vst.msk [vmem:[%s170 + $0x54] sm:$0xf] %vm4959, %v4908
      %4982 = vst.msk [vmem:[%s170 + $0x58] sm:$0xf] %vm4959, %v4909
      %4983 = vst.msk [vmem:[%s170 + $0x5c] sm:$0xf] %vm4959, %v4910
      %4984 = vst.msk [vmem:[%s170 + $0x60] sm:$0xf] %vm4959, %v4911
      %4985 = vst.msk [vmem:[%s170 + $0x64] sm:$0xf] %vm4959, %v4912
      %4986 = vst.msk [vmem:[%s170 + $0x68] sm:$0xf] %vm4959, %v4913
      %4987 = vst.msk [vmem:[%s170 + $0x6c] sm:$0xf] %vm4959, %v4914
      %4988 = vst.msk [vmem:[%s170 + $0x70] sm:$0xf] %vm4959, %v4915
      %4989 = vst.msk [vmem:[%s170 + $0x74] sm:$0xf] %vm4959, %v4916
      %4990 = vst.msk [vmem:[%s170 + $0x78] sm:$0xf] %vm4959, %v4917
      %4991 = vst.msk [vmem:[%s170 + $0x7c] sm:$0xf] %vm4959, %v4918
      %4992 = vst.msk [vmem:[%s170 + $0x80] sm:$0xf] %vm4959, %v4919
      %4993 = vst.msk [vmem:[%s170 + $0x84] sm:$0xf] %vm4959, %v4920
      %4994 = vst.msk [vmem:[%s170 + $0x88] sm:$0xf] %vm4959, %v4921
      %4995 = vst.msk [vmem:[%s170 + $0x8c] sm:$0xf] %vm4959, %v4922
      %4996 = vst.msk [vmem:[%s170 + $0x90] sm:$0xf] %vm4959, %v4923
      %4997 = vst.msk [vmem:[%s170 + $0x94] sm:$0xf] %vm4959, %v4924
      %4998 = vst.msk [vmem:[%s170 + $0x98] sm:$0xf] %vm4959, %v4925
      %4999 = vst.msk [vmem:[%s170 + $0x9c] sm:$0xf] %vm4959, %v4926
      %5000 = vst.msk [vmem:[%s170 + $0xa0] sm:$0xf] %vm4959, %v4927
      %5001 = vst.msk [vmem:[%s170 + $0xa4] sm:$0xf] %vm4959, %v4928
      %5002 = vst.msk [vmem:[%s170 + $0xa8] sm:$0xf] %vm4959, %v4929
      %5003 = vst.msk [vmem:[%s170 + $0xac] sm:$0xf] %vm4959, %v4930
      %5004 = vst.msk [vmem:[%s170 + $0xb0] sm:$0xf] %vm4959, %v4931
      %5005 = vst.msk [vmem:[%s170 + $0xb4] sm:$0xf] %vm4959, %v4932
      %5006 = vst.msk [vmem:[%s170 + $0xb8] sm:$0xf] %vm4959, %v4933
      %5007 = vst.msk [vmem:[%s170 + $0xbc] sm:$0xf] %vm4959, %v4934
      %5008 = vst.msk [vmem:[%s170 + $0xc0] sm:$0xf] %vm4959, %v4935
      %5009 = vst.msk [vmem:[%s170 + $0xc4] sm:$0xf] %vm4959, %v4936
      %5010 = vst.msk [vmem:[%s170 + $0xc8] sm:$0xf] %vm4959, %v4937
      %5011 = vst.msk [vmem:[%s170 + $0xcc] sm:$0xf] %vm4959, %v4938
      %5012 = vst.msk [vmem:[%s170 + $0xd0] sm:$0xf] %vm4959, %v4939
      %5013 = vst.msk [vmem:[%s170 + $0xd4] sm:$0xf] %vm4959, %v4940
      %5014 = vst.msk [vmem:[%s170 + $0xd8] sm:$0xf] %vm4959, %v4941
      %5015 = vst.msk [vmem:[%s170 + $0xdc] sm:$0xf] %vm4959, %v4942
      %5016 = vst.msk [vmem:[%s170 + $0xe0] sm:$0xf] %vm4959, %v4943
      %5017 = vst.msk [vmem:[%s170 + $0xe4] sm:$0xf] %vm4959, %v4944
      %5018 = vst.msk [vmem:[%s170 + $0xe8] sm:$0xf] %vm4959, %v4945
      %5019 = vst.msk [vmem:[%s170 + $0xec] sm:$0xf] %vm4959, %v4946
      %5020 = vst.msk [vmem:[%s170 + $0xf0] sm:$0xf] %vm4959, %v4947
      %5021 = vst.msk [vmem:[%s170 + $0xf4] sm:$0xf] %vm4959, %v4948
      %5022 = vst.msk [vmem:[%s170 + $0xf8] sm:$0xf] %vm4959, %v4949
      %5023 = vst.msk [vmem:[%s170 + $0xfc] sm:$0xf] %vm4959, %v4950
      %5024 = vst.msk [vmem:[%s170 + $0x100] sm:$0xf] %vm4959, %v4951
      %5025 = vst.msk [vmem:[%s170 + $0x104] sm:$0xf] %vm4959, %v4952
      %5026 = vst.msk [vmem:[%s170 + $0x108] sm:$0xf] %vm4959, %v4953
      %5027 = vst.msk [vmem:[%s170 + $0x10c] sm:$0xf] %vm4959, %v4954
      %5028 = vst.msk [vmem:[%s170 + $0x110] sm:$0xf] %vm4959, %v4955
      %5029 = vst.msk [vmem:[%s170 + $0x114] sm:$0xf] %vm4959, %v4956
      %5030 = vst.msk [vmem:[%s170 + $0x118] sm:$0xf] %vm4959, %v4957
      %5031 = vst.msk [vmem:[%s170 + $0x11c] sm:$0xf] %vm4959, %v4958
      %p5032 = scmp.lt.s32.totalorder %s14, 1
      %s5033 = scalar_select %p5032, %s14, 1
      %s5034 = smul.addr %s5033, 72
      %s5035 = smul.addr %s5034, 4
      %s5036 = scalar_lea.vmem %s3, %s5035
      // Predicated region
      $region33: #{vggish_linear_forward.9} parent=31 // pred_check
        %p5037 = pneg %p100
      $region34: #{vggish_linear_forward.9} parent=31 // pred_check_branch
        %5039 = sbr.rel (%p5037) target = $region36
      $region35: #{vggish_linear_forward.9} parent=31 // pred_region
        _
      $region36: #{vggish_linear_forward.9} parent=31 // pred_fallthru
        _
    $region32: #{vggish_linear_forward.9} parent=5 // pred_fallthru
      _
    %p5040 = scmp.le.s32.totalorder 2, %s9
    // Predicated region
    $region37: #{vggish_linear_forward.9} parent=5 // pred_check
      %p5041 = pneg %p5040
    $region38: #{vggish_linear_forward.9} parent=5 // pred_check_branch
      %5043 = sbr.rel (%p5041) target = $region40
    $region39: #{vggish_linear_forward.9} parent=5 // pred_region
      %s5044 = ssub.s32 %s9, 2
      // Predicated region
      $region41: #{vggish_linear_forward.9} parent=39 // pred_check
        %p5045 = pneg %p106
      $region42: #{vggish_linear_forward.9} parent=39 // pred_check_branch
        %5047 = sbr.rel (%p5045) target = $region44
      $region43: #{vggish_linear_forward.9} parent=39 // pred_region
        %p5048 = scmp.lt.s32.totalorder %s15, 1
        %s5049 = scalar_select %p5048, %s15, 1
        %s5050 = smul.addr %s5049, 72
        %s5051 = smul.addr %s5050, 4
        %s5052 = scalar_lea.vmem %s3, %s5051
      $region44: #{vggish_linear_forward.9} parent=39 // pred_fallthru
        _
    $region40: #{vggish_linear_forward.9} parent=5 // pred_fallthru
      _
  $region6: #{vggish_linear_forward.9} parent=0 // loop_footer
    %s13 = sadd.s32 1, %s9
  $region7: #{vggish_linear_forward.9} parent=0 // loop_footer_branch
    %8 = sbr.rel target = $region3
  $region8: #{vggish_linear_forward.9} parent=0 // loop_exit
    _

// kernel: vggish_linear_forward.12
$region0: #{vggish_linear_forward.12}
  #allocation0 [shape = 'u32[]', space=smem, size = 0x4, offset = 0x4, fixed_abs, tag = 'smem constant byte address 0x4 - core index']
  #allocation1 [shape = 'u32[72,128]{1,0:T(1,128)}', space=vmem, size = 0x9000, scoped, tag = 'internal scratch']
  %s0 = inlined_call_operand.vmem [shape: bf16[2,66,32], index: 0, kind: input, shape index: {}]
  %s1 = inlined_call_operand.vmem [shape: bf16[9,32,32], index: 1, kind: input, shape index: {}]
  %s2 = inlined_call_operand.vmem [shape: f32[1,32], index: 2, kind: input, shape index: {}]
  %s3 = inlined_call_operand.vmem [shape: bf16[2,48,32], index: 3, kind: output, shape index: {}]
  %s4 = sld [smem:[#allocation0]]
  $region45: #{vggish_linear_forward.12} parent=0
    _
  %s6 = ssub.s32 1, %s4
  %s7 = scalar_select 0, %s6, %s4
  loop: start=0, step=1, limit=4
  $region2: #{vggish_linear_forward.12} parent=0 // loop_pre_header
    _
  $region3: #{vggish_linear_forward.12} parent=0 // loop_header
    %s9 = sphi 0, %s13
    %p10 = scmp.ge.s32.totalorder %s9, 4
    %s19 = sphi 0, %s21
    %s22 = sphi 0, %s19
    %s23 = sphi 0, %s22
    %s39 = sphi 0, %s23
    %s43 = sphi 0, %s43
    %s45 = sphi 0, %s43
    %s46 = sphi 0, %s45
    %s60 = sphi 0, %s46
    %s64 = sphi 0, %s64
    %s66 = sphi 0, %s64
    %s67 = sphi 0, %s66
    %s81 = sphi 0, %s67
    %s87 = sphi 0, %s89
    %s90 = sphi 0, %s87
    %s91 = sphi 0, %s90
    %s107 = sphi 0, %s91
  $region4: #{vggish_linear_forward.12} parent=0 // loop_header_branch
    %12 = sbr.rel (%p10) target = $region8
  $region5: #{vggish_linear_forward.12} parent=0 // loop_body
    %s14 = ssub.s32 %s9, 1
    %s15 = ssub.s32 %s9, 2
    %s16 = sadd.s32 %s9, 1
    %s17 = ssub.s32 %s9, %s16
    %p18 = scmp.eq.s32.totalorder %s17, 0
    %s20 = sadd.s32 %s19, 1
    %s21 = scalar_select %p18, %s19, %s20
    %p24 = pneg %p18
    %p25 = scmp.eq.s32.totalorder %s9, 1
    %p26 = por %p24, %p25
    %p27 = scmp.ne.s32.totalorder %s19, %s22
    %p28 = scmp.eq.s32.totalorder %s9, 0
    %p29 = por %p27, %p28
    %p30 = scmp.ne.s32.totalorder %s19, %s22
    %p31 = scmp.eq.s32.totalorder %s14, 1
    %p32 = por %p30, %p31
    %p33 = scmp.ne.s32.totalorder %s22, %s23
    %p34 = scmp.eq.s32.totalorder %s14, 0
    %p35 = por %p33, %p34
    %p36 = scmp.ne.s32.totalorder %s22, %s23
    %p37 = scmp.eq.s32.totalorder %s15, 1
    %p38 = por %p36, %p37
    %p40 = scmp.ne.s32.totalorder %s23, %s39
    %p41 = scmp.eq.s32.totalorder %s15, 0
    %p42 = por %p40, %p41
    %s44 = sadd.s32 %s43, 1
    %p47 = scmp.eq.s32.totalorder %s9, 1
    %p48 = scmp.ne.s32.totalorder %s43, %s45
    %p49 = scmp.eq.s32.totalorder %s9, 0
    %p50 = por %p48, %p49
    %p51 = scmp.ne.s32.totalorder %s43, %s45
    %p52 = scmp.eq.s32.totalorder %s14, 1
    %p53 = por %p51, %p52
    %p54 = scmp.ne.s32.totalorder %s45, %s46
    %p55 = scmp.eq.s32.totalorder %s14, 0
    %p56 = por %p54, %p55
    %p57 = scmp.ne.s32.totalorder %s45, %s46
    %p58 = scmp.eq.s32.totalorder %s15, 1
    %p59 = por %p57, %p58
    %p61 = scmp.ne.s32.totalorder %s46, %s60
    %p62 = scmp.eq.s32.totalorder %s15, 0
    %p63 = por %p61, %p62
    %s65 = sadd.s32 %s64, 1
    %p68 = scmp.eq.s32.totalorder %s9, 1
    %p69 = scmp.ne.s32.totalorder %s64, %s66
    %p70 = scmp.eq.s32.totalorder %s9, 0
    %p71 = por %p69, %p70
    %p72 = scmp.ne.s32.totalorder %s64, %s66
    %p73 = scmp.eq.s32.totalorder %s14, 1
    %p74 = por %p72, %p73
    %p75 = scmp.ne.s32.totalorder %s66, %s67
    %p76 = scmp.eq.s32.totalorder %s14, 0
    %p77 = por %p75, %p76
    %p78 = scmp.ne.s32.totalorder %s66, %s67
    %p79 = scmp.eq.s32.totalorder %s15, 1
    %p80 = por %p78, %p79
    %p82 = scmp.ne.s32.totalorder %s67, %s81
    %p83 = scmp.eq.s32.totalorder %s15, 0
    %p84 = por %p82, %p83
    %s85 = ssub.s32 %s9, %s16
    %p86 = scmp.eq.s32.totalorder %s85, 0
    %s88 = sadd.s32 %s87, 1
    %s89 = scalar_select %p86, %s87, %s88
    %p92 = pneg %p86
    %p93 = scmp.eq.s32.totalorder %s9, 1
    %p94 = por %p92, %p93
    %p95 = scmp.ne.s32.totalorder %s87, %s90
    %p96 = scmp.eq.s32.totalorder %s9, 0
    %p97 = por %p95, %p96
    %p98 = scmp.ne.s32.totalorder %s87, %s90
    %p99 = scmp.eq.s32.totalorder %s14, 1
    %p100 = por %p98, %p99
    %p101 = scmp.ne.s32.totalorder %s90, %s91
    %p102 = scmp.eq.s32.totalorder %s14, 0
    %p103 = por %p101, %p102
    %p104 = scmp.ne.s32.totalorder %s90, %s91
    %p105 = scmp.eq.s32.totalorder %s15, 1
    %p106 = por %p104, %p105
    %p108 = scmp.ne.s32.totalorder %s91, %s107
    %p109 = scmp.eq.s32.totalorder %s15, 0
    %p110 = por %p108, %p109
    %p111 = scmp.le.s32.totalorder 1, %s9
    %p112 = scmp.lt.s32.totalorder %s9, 3
    %p113 = pnand %p111, %p112
    %p114 = pneg %p113
    // Predicated region
    $region9: #{vggish_linear_forward.12} parent=5 // pred_check
      _
    $region10: #{vggish_linear_forward.12} parent=5 // pred_check_branch
      %116 = sbr.rel (%p113) target = $region12
    $region11: #{vggish_linear_forward.12} parent=5 // pred_region
      %s117 = ssub.s32 %s9, 1
      // Predicated region
      $region13: #{vggish_linear_forward.12} parent=11 // pred_check
        %p118 = pneg %p56
      $region14: #{vggish_linear_forward.12} parent=11 // pred_check_branch
        %120 = sbr.rel (%p118) target = $region16
      $region15: #{vggish_linear_forward.12} parent=11 // pred_region
        _
      $region16: #{vggish_linear_forward.12} parent=11 // pred_fallthru
        _
      // Predicated region
      $region17: #{vggish_linear_forward.12} parent=11 // pred_check
        %p121 = pneg %p77
      $region18: #{vggish_linear_forward.12} parent=11 // pred_check_branch
        %123 = sbr.rel (%p121) target = $region20
      $region19: #{vggish_linear_forward.12} parent=11 // pred_region
        _
      $region20: #{vggish_linear_forward.12} parent=11 // pred_fallthru
        _
    $region12: #{vggish_linear_forward.12} parent=5 // pred_fallthru
      _
    %p124 = scmp.lt.s32.totalorder %s9, 2
    // Predicated region
    $region21: #{vggish_linear_forward.12} parent=5 // pred_check
      %p125 = pneg %p124
    $region22: #{vggish_linear_forward.12} parent=5 // pred_check_branch
      %127 = sbr.rel (%p125) target = $region24
    $region23: #{vggish_linear_forward.12} parent=5 // pred_region
      // Predicated region
      $region25: #{vggish_linear_forward.12} parent=23 // pred_check
        %p128 = pneg %p29
      $region26: #{vggish_linear_forward.12} parent=23 // pred_check_branch
        %130 = sbr.rel (%p128) target = $region28
      $region27: #{vggish_linear_forward.12} parent=23 // pred_region
        %p131 = scmp.lt.s32.totalorder %s9, 1
        %s132 = scalar_select %p131, %s9, 1
        %s133 = smul.addr %s132, 9
        %s134 = smul.addr %s133, 4
        %s135 = scalar_lea.vmem %s0, %s134
      $region28: #{vggish_linear_forward.12} parent=23 // pred_fallthru
        _
    $region24: #{vggish_linear_forward.12} parent=5 // pred_fallthru
      _
    %p136 = scmp.le.s32.totalorder 1, %s9
    %p137 = scmp.lt.s32.totalorder %s9, 3
    %p138 = pnand %p136, %p137
    %p139 = pneg %p138
    // Predicated region
    $region29: #{vggish_linear_forward.12} parent=5 // pred_check
      _
    $region30: #{vggish_linear_forward.12} parent=5 // pred_check_branch
      %141 = sbr.rel (%p138) target = $region32
    $region31: #{vggish_linear_forward.12} parent=5 // pred_region
      %s142 = ssub.s32 %s9, 1
      %p143 = scmp.lt.s32.totalorder %s14, 1
      %s144 = scalar_select %p143, %s14, 1
      %s145 = smul.addr %s144, 9
      %s146 = smul.addr %s145, 4
      %s147 = scalar_lea.vmem %s0, %s146
      %p148 = pneg %p35
      %p149 = pneg %p32
      %p150 = pneg %p56
      %p151 = pneg %p53
      %p152 = pneg %p77
      %p153 = pneg %p74
      %p154 = pneg %p103
      %p155 = pneg %p100
      %p156 = scmp.lt.s32.totalorder %s14, 1
      %s157 = scalar_select %p156, %s14, 1
      %s158 = smul.addr %s157, 6
      %s159 = smul.addr %s158, 4
      %s160 = scalar_lea.vmem %s3, %s159
      %p161 = scmp.lt.s32.totalorder %s14, 1
      %s162 = scalar_select %p161, %s14, 1
      %s163 = smul.addr %s162, 9
      %s164 = smul.addr %s163, 4
      %s165 = scalar_lea.vmem %s0, %s164
      %p166 = scmp.lt.s32.totalorder %s14, 1
      %s167 = scalar_select %p166, %s14, 1
      %s168 = smul.addr %s167, 6
      %s169 = smul.addr %s168, 4
      %s170 = scalar_lea.vmem %s3, %s169
      %v172 = vld [vmem:[%s165] sm:$0xf]
      %v173 = vld [vmem:[%s165 + $0x4] sm:$0xf]
      %v174 = vld [vmem:[%s165 + $0x8] sm:$0xf]
      %v175 = vld [vmem:[%s165 + $0xc] sm:$0xf]
      %v176 = vld [vmem:[%s165 + $0x10] sm:$0xf]
      %v177 = vld [vmem:[%s165 + $0x14] sm:$0xf]
      %v178 = vld [vmem:[%s165 + $0x18] sm:$0xf]
      %v179 = vld [vmem:[%s165 + $0x1c] sm:$0xf]
      %v180 = vunpack.c.l.bf16 %v172
      %v181 = vunpack.c.l.bf16 %v173
      %v182 = vunpack.c.l.bf16 %v174
      %v183 = vunpack.c.l.bf16 %v175
      %v184 = vunpack.c.l.bf16 %v176
      %v185 = vunpack.c.l.bf16 %v177
      %v186 = vunpack.c.l.bf16 %v178
      %v187 = vunpack.c.l.bf16 %v179
      %v188 = vld [vmem:[%s1] sm:$0xf]
      %v189 = vld [vmem:[%s1 + $0x4] sm:$0xf]
      %v190 = vld [vmem:[%s1 + $0x8] sm:$0xf]
      %v191 = vld [vmem:[%s1 + $0xc] sm:$0xf]
      %v192 = vpack.c.bf16 %v181, %v180
      %v193 = vpack.c.bf16 %v183, %v182
      %v194 = vpack.c.bf16 %v185, %v184
      %s195 = scalar_lea.vmem %s1, 16
      %v196 = vld [vmem:[%s195] sm:$0xf]
      %v197 = vld [vmem:[%s195 + $0x4] sm:$0xf]
      %v198 = vld [vmem:[%s195 + $0x8] sm:$0xf]
      %v199 = vld [vmem:[%s195 + $0xc] sm:$0xf]
      %v200 = vpack.c.bf16 %v186, %v186
      %vm201 = vsmask.f32 7424
      %v203 = vshrl.u32 %v192, 16
      %v205 = vshll.u32 %v192, 16
      %v207 = vrot.slane %v205, 1
      %v208 = vor.u32 %v203, %v207
      %v210 = vshll.u32 %v193, 16
      %v212 = vrot.slane %v210, 1
      %v213 = vsel %vm201, %v208, %v212
      %v214 = vshrl.u32 %v193, 16
      %v216 = vor.u32 %v214, %v212
      %v218 = vshll.u32 %v194, 16
      %v220 = vrot.slane %v218, 1
      %v221 = vsel %vm201, %v216, %v220
      %v222 = vshrl.u32 %v194, 16
      %v224 = vor.u32 %v222, %v220
      %v226 = vshll.u32 %v200, 16
      %v228 = vrot.slane %v226, 1
      %v229 = vsel %vm201, %v224, %v228
      %v234 = vunpack.c.l.b16 %v196
      %v235 = vunpack.c.l.b16 %v197
      %v236 = vunpack.c.l.b16 %v198
      %v237 = vunpack.c.l.b16 %v199
      %v238 = vpack.c.b16 %v235, %v234
      %v239 = vpack.c.b16 %v237, %v236
      %vm242 = vcmask 261120
      %v244 = vsel %vm242, %v213, 0
      %v247 = vsel %vm242, %v221, 0
      %v250 = vsel %vm242, %v229, 0
      %252 = vmatpush.bf16.msra.mxu0 0
      %253 = vmatpush.bf16.msra.mxu0 0
      %254 = vmatpush.bf16.msra.mxu0 0
      %255 = vmatpush.bf16.msra.mxu0 0
      %256 = vmatpush.bf16.msra.mxu0 0
      %257 = vmatpush.bf16.msra.mxu0 0
      %258 = vmatpush.bf16.msra.mxu0 %v239
      %259 = vmatpush.bf16.msra.mxu0 %v238
      %260 = vmatmul.bf16.gmra.mxu0 %v244
      %v261 = vpop.f32.mrf.mxu0
      %v262 = vadd.f32 0.0, %v261
      %v263 = vpop.f32.mrf.mxu0
      %v264 = vadd.f32 0.0, %v263
      %265 = vmatmul.bf16.gmra.mxu0 %v247
      %v266 = vpop.f32.mrf.mxu0
      %v267 = vadd.f32 0.0, %v266
      %v268 = vpop.f32.mrf.mxu0
      %v269 = vadd.f32 0.0, %v268
      %270 = vmatmul.bf16.gmra.mxu0 %v250
      %v271 = vpop.f32.mrf.mxu0
      %v272 = vadd.f32 0.0, %v271
      %v273 = vpop.f32.mrf.mxu0
      %v274 = vadd.f32 0.0, %v273
      %275 = vdwg.mxu0
      %v280 = vunpack.c.l.b16 %v188
      %v281 = vunpack.c.l.b16 %v189
      %v282 = vunpack.c.l.b16 %v190
      %v283 = vunpack.c.l.b16 %v191
      %v284 = vpack.c.b16 %v281, %v280
      %v285 = vpack.c.b16 %v283, %v282
      %v288 = vsel %vm242, %v192, 0
      %v290 = vsel %vm242, %v193, 0
      %v292 = vsel %vm242, %v194, 0
      %294 = vmatpush.bf16.msra.mxu0 0
      %295 = vmatpush.bf16.msra.mxu0 0
      %296 = vmatpush.bf16.msra.mxu0 0
      %297 = vmatpush.bf16.msra.mxu0 0
      %298 = vmatpush.bf16.msra.mxu0 0
      %299 = vmatpush.bf16.msra.mxu0 0
      %300 = vmatpush.bf16.msra.mxu0 %v285
      %301 = vmatpush.bf16.msra.mxu0 %v284
      %302 = vmatmul.bf16.gmra.mxu0 %v288
      %v303 = vpop.f32.mrf.mxu0
      %v304 = vadd.f32 %v262, %v303
      %v305 = vpop.f32.mrf.mxu0
      %v306 = vadd.f32 %v264, %v305
      %307 = vmatmul.bf16.gmra.mxu0 %v290
      %v308 = vpop.f32.mrf.mxu0
      %v309 = vadd.f32 %v267, %v308
      %v310 = vpop.f32.mrf.mxu0
      %v311 = vadd.f32 %v269, %v310
      %312 = vmatmul.bf16.gmra.mxu0 %v292
      %v313 = vpop.f32.mrf.mxu0
      %v314 = vadd.f32 %v272, %v313
      %v315 = vpop.f32.mrf.mxu0
      %v316 = vadd.f32 %v274, %v315
      %317 = vdwg.mxu0
      %s318 = scalar_lea.vmem %s1, 32
      %v319 = vld [vmem:[%s318] sm:$0xf]
      %v320 = vld [vmem:[%s318 + $0x4] sm:$0xf]
      %v321 = vld [vmem:[%s318 + $0x8] sm:$0xf]
      %v322 = vld [vmem:[%s318 + $0xc] sm:$0xf]
      %vm327 = vcmask 1046528
      %v328 = vrot.slane %v192, 1
      %v329 = vrot.slane %v193, 1
      %v330 = vsel %vm327, %v328, %v329
      %v331 = vrot.slane %v194, 1
      %v332 = vsel %vm327, %v329, %v331
      %v333 = vrot.slane %v200, 1
      %v334 = vsel %vm327, %v331, %v333
      %v339 = vunpack.c.l.b16 %v319
      %v340 = vunpack.c.l.b16 %v320
      %v341 = vunpack.c.l.b16 %v321
      %v342 = vunpack.c.l.b16 %v322
      %v343 = vpack.c.b16 %v340, %v339
      %v344 = vpack.c.b16 %v342, %v341
      %v348 = vsel %vm242, %v330, 0
      %v351 = vsel %vm242, %v332, 0
      %v354 = vsel %vm242, %v334, 0
      %356 = vmatpush.bf16.msra.mxu0 0
      %357 = vmatpush.bf16.msra.mxu0 0
      %358 = vmatpush.bf16.msra.mxu0 0
      %359 = vmatpush.bf16.msra.mxu0 0
      %360 = vmatpush.bf16.msra.mxu0 0
      %361 = vmatpush.bf16.msra.mxu0 0
      %362 = vmatpush.bf16.msra.mxu0 %v344
      %363 = vmatpush.bf16.msra.mxu0 %v343
      %364 = vmatmul.bf16.gmra.mxu0 %v348
      %v365 = vpop.f32.mrf.mxu0
      %v366 = vadd.f32 0.0, %v365
      %v367 = vpop.f32.mrf.mxu0
      %v368 = vadd.f32 0.0, %v367
      %369 = vmatmul.bf16.gmra.mxu0 %v351
      %v370 = vpop.f32.mrf.mxu0
      %v371 = vadd.f32 0.0, %v370
      %v372 = vpop.f32.mrf.mxu0
      %v373 = vadd.f32 0.0, %v372
      %374 = vmatmul.bf16.gmra.mxu0 %v354
      %v375 = vpop.f32.mrf.mxu0
      %v376 = vadd.f32 0.0, %v375
      %v377 = vpop.f32.mrf.mxu0
      %v378 = vadd.f32 0.0, %v377
      %379 = vdwg.mxu0
      %v380 = vadd.f32 %v304, %v366
      %v381 = vadd.f32 %v306, %v368
      %v382 = vadd.f32 %v309, %v371
      %v383 = vadd.f32 %v311, %v373
      %v384 = vadd.f32 %v314, %v376
      %v385 = vadd.f32 %v316, %v378
      %s386 = scalar_lea.vmem %s1, 48
      %v387 = vld [vmem:[%s386] sm:$0xf]
      %v388 = vld [vmem:[%s386 + $0x4] sm:$0xf]
      %v389 = vld [vmem:[%s386 + $0x8] sm:$0xf]
      %v390 = vld [vmem:[%s386 + $0xc] sm:$0xf]
      %vm391 = vcmask 1044480
      %v392 = vrot.slane %v192, 3
      %v393 = vrot.slane %v193, 3
      %v394 = vsel %vm391, %v392, %v393
      %v395 = vrot.slane %v194, 3
      %v396 = vsel %vm391, %v393, %v395
      %v397 = vrot.slane %v200, 3
      %v398 = vsel %vm391, %v395, %v397
      %v403 = vunpack.c.l.b16 %v387
      %v404 = vunpack.c.l.b16 %v388
      %v405 = vunpack.c.l.b16 %v389
      %v406 = vunpack.c.l.b16 %v390
      %v407 = vpack.c.b16 %v404, %v403
      %v408 = vpack.c.b16 %v406, %v405
      %v412 = vsel %vm242, %v394, 0
      %v415 = vsel %vm242, %v396, 0
      %v418 = vsel %vm242, %v398, 0
      %420 = vmatpush.bf16.msra.mxu0 0
      %421 = vmatpush.bf16.msra.mxu0 0
      %422 = vmatpush.bf16.msra.mxu0 0
      %423 = vmatpush.bf16.msra.mxu0 0
      %424 = vmatpush.bf16.msra.mxu0 0
      %425 = vmatpush.bf16.msra.mxu0 0
      %426 = vmatpush.bf16.msra.mxu0 %v408
      %427 = vmatpush.bf16.msra.mxu0 %v407
      %428 = vmatmul.bf16.gmra.mxu0 %v412
      %v429 = vpop.f32.mrf.mxu0
      %v430 = vadd.f32 0.0, %v429
      %v431 = vpop.f32.mrf.mxu0
      %v432 = vadd.f32 0.0, %v431
      %433 = vmatmul.bf16.gmra.mxu0 %v415
      %v434 = vpop.f32.mrf.mxu0
      %v435 = vadd.f32 0.0, %v434
      %v436 = vpop.f32.mrf.mxu0
      %v437 = vadd.f32 0.0, %v436
      %438 = vmatmul.bf16.gmra.mxu0 %v418
      %v439 = vpop.f32.mrf.mxu0
      %v440 = vadd.f32 0.0, %v439
      %v441 = vpop.f32.mrf.mxu0
      %v442 = vadd.f32 0.0, %v441
      %443 = vdwg.mxu0
      %v444 = vadd.f32 %v380, %v430
      %v445 = vadd.f32 %v381, %v432
      %v446 = vadd.f32 %v382, %v435
      %v447 = vadd.f32 %v383, %v437
      %v448 = vadd.f32 %v384, %v440
      %v449 = vadd.f32 %v385, %v442
      %s450 = scalar_lea.vmem %s1, 64
      %v451 = vld [vmem:[%s450] sm:$0xf]
      %v452 = vld [vmem:[%s450 + $0x4] sm:$0xf]
      %v453 = vld [vmem:[%s450 + $0x8] sm:$0xf]
      %v454 = vld [vmem:[%s450 + $0xc] sm:$0xf]
      %vm455 = vsmask.f32 4352
      %v456 = vrot.slane %v203, 3
      %v457 = vrot.slane %v205, 4
      %v458 = vor.u32 %v456, %v457
      %v459 = vrot.slane %v214, 3
      %v460 = vrot.slane %v210, 4
      %v461 = vor.u32 %v459, %v460
      %v462 = vsel %vm455, %v458, %v461
      %v463 = vrot.slane %v222, 3
      %v464 = vrot.slane %v218, 4
      %v465 = vor.u32 %v463, %v464
      %v466 = vsel %vm455, %v461, %v465
      %v467 = vshrl.u32 %v200, 16
      %v469 = vrot.slane %v467, 3
      %v470 = vrot.slane %v226, 4
      %v471 = vor.u32 %v469, %v470
      %v472 = vsel %vm455, %v465, %v471
      %v477 = vunpack.c.l.b16 %v451
      %v478 = vunpack.c.l.b16 %v452
      %v479 = vunpack.c.l.b16 %v453
      %v480 = vunpack.c.l.b16 %v454
      %v481 = vpack.c.b16 %v478, %v477
      %v482 = vpack.c.b16 %v480, %v479
      %v486 = vsel %vm242, %v462, 0
      %v489 = vsel %vm242, %v466, 0
      %v492 = vsel %vm242, %v472, 0
      %494 = vmatpush.bf16.msra.mxu0 0
      %495 = vmatpush.bf16.msra.mxu0 0
      %496 = vmatpush.bf16.msra.mxu0 0
      %497 = vmatpush.bf16.msra.mxu0 0
      %498 = vmatpush.bf16.msra.mxu0 0
      %499 = vmatpush.bf16.msra.mxu0 0
      %500 = vmatpush.bf16.msra.mxu0 %v482
      %501 = vmatpush.bf16.msra.mxu0 %v481
      %502 = vmatmul.bf16.gmra.mxu0 %v486
      %v503 = vpop.f32.mrf.mxu0
      %v504 = vadd.f32 0.0, %v503
      %v505 = vpop.f32.mrf.mxu0
      %v506 = vadd.f32 0.0, %v505
      %507 = vmatmul.bf16.gmra.mxu0 %v489
      %v508 = vpop.f32.mrf.mxu0
      %v509 = vadd.f32 0.0, %v508
      %v510 = vpop.f32.mrf.mxu0
      %v511 = vadd.f32 0.0, %v510
      %512 = vmatmul.bf16.gmra.mxu0 %v492
      %v513 = vpop.f32.mrf.mxu0
      %v514 = vadd.f32 0.0, %v513
      %v515 = vpop.f32.mrf.mxu0
      %v516 = vadd.f32 0.0, %v515
      %517 = vdwg.mxu0
      %v518 = vadd.f32 %v444, %v504
      %v519 = vadd.f32 %v445, %v506
      %v520 = vadd.f32 %v446, %v509
      %v521 = vadd.f32 %v447, %v511
      %v522 = vadd.f32 %v448, %v514
      %v523 = vadd.f32 %v449, %v516
      %s524 = scalar_lea.vmem %s1, 80
      %v525 = vld [vmem:[%s524] sm:$0xf]
      %v526 = vld [vmem:[%s524 + $0x4] sm:$0xf]
      %v527 = vld [vmem:[%s524 + $0x8] sm:$0xf]
      %v528 = vld [vmem:[%s524 + $0xc] sm:$0xf]
      %v529 = vpack.c.bf16 %v182, %v181
      %v530 = vpack.c.bf16 %v184, %v183
      %v531 = vpack.c.bf16 %v186, %v185
      %v536 = vunpack.c.l.b16 %v525
      %v537 = vunpack.c.l.b16 %v526
      %v538 = vunpack.c.l.b16 %v527
      %v539 = vunpack.c.l.b16 %v528
      %v540 = vpack.c.b16 %v537, %v536
      %v541 = vpack.c.b16 %v539, %v538
      %v545 = vsel %vm242, %v529, 0
      %v548 = vsel %vm242, %v530, 0
      %v551 = vsel %vm242, %v531, 0
      %553 = vmatpush.bf16.msra.mxu0 0
      %554 = vmatpush.bf16.msra.mxu0 0
      %555 = vmatpush.bf16.msra.mxu0 0
      %556 = vmatpush.bf16.msra.mxu0 0
      %557 = vmatpush.bf16.msra.mxu0 0
      %558 = vmatpush.bf16.msra.mxu0 0
      %559 = vmatpush.bf16.msra.mxu0 %v541
      %560 = vmatpush.bf16.msra.mxu0 %v540
      %561 = vmatmul.bf16.gmra.mxu0 %v545
      %v562 = vpop.f32.mrf.mxu0
      %v563 = vadd.f32 0.0, %v562
      %v564 = vpop.f32.mrf.mxu0
      %v565 = vadd.f32 0.0, %v564
      %566 = vmatmul.bf16.gmra.mxu0 %v548
      %v567 = vpop.f32.mrf.mxu0
      %v568 = vadd.f32 0.0, %v567
      %v569 = vpop.f32.mrf.mxu0
      %v570 = vadd.f32 0.0, %v569
      %571 = vmatmul.bf16.gmra.mxu0 %v551
      %v572 = vpop.f32.mrf.mxu0
      %v573 = vadd.f32 0.0, %v572
      %v574 = vpop.f32.mrf.mxu0
      %v575 = vadd.f32 0.0, %v574
      %576 = vdwg.mxu0
      %v577 = vadd.f32 %v518, %v563
      %v578 = vadd.f32 %v519, %v565
      %v579 = vadd.f32 %v520, %v568
      %v580 = vadd.f32 %v521, %v570
      %v581 = vadd.f32 %v522, %v573
      %v582 = vadd.f32 %v523, %v575
      %s583 = scalar_lea.vmem %s1, 96
      %v584 = vld [vmem:[%s583] sm:$0xf]
      %v585 = vld [vmem:[%s583 + $0x4] sm:$0xf]
      %v586 = vld [vmem:[%s583 + $0x8] sm:$0xf]
      %v587 = vld [vmem:[%s583 + $0xc] sm:$0xf]
      %v588 = vpack.c.bf16 %v187, %v187
      %vm593 = vcmask 1045504
      %v594 = vrot.slane %v529, 2
      %v595 = vrot.slane %v530, 2
      %v596 = vsel %vm593, %v594, %v595
      %v597 = vrot.slane %v531, 2
      %v598 = vsel %vm593, %v595, %v597
      %v599 = vrot.slane %v588, 2
      %v600 = vsel %vm593, %v597, %v599
      %v605 = vunpack.c.l.b16 %v584
      %v606 = vunpack.c.l.b16 %v585
      %v607 = vunpack.c.l.b16 %v586
      %v608 = vunpack.c.l.b16 %v587
      %v609 = vpack.c.b16 %v606, %v605
      %v610 = vpack.c.b16 %v608, %v607
      %v614 = vsel %vm242, %v596, 0
      %v617 = vsel %vm242, %v598, 0
      %v620 = vsel %vm242, %v600, 0
      %622 = vmatpush.bf16.msra.mxu0 0
      %623 = vmatpush.bf16.msra.mxu0 0
      %624 = vmatpush.bf16.msra.mxu0 0
      %625 = vmatpush.bf16.msra.mxu0 0
      %626 = vmatpush.bf16.msra.mxu0 0
      %627 = vmatpush.bf16.msra.mxu0 0
      %628 = vmatpush.bf16.msra.mxu0 %v610
      %629 = vmatpush.bf16.msra.mxu0 %v609
      %630 = vmatmul.bf16.gmra.mxu0 %v614
      %v631 = vpop.f32.mrf.mxu0
      %v632 = vadd.f32 0.0, %v631
      %v633 = vpop.f32.mrf.mxu0
      %v634 = vadd.f32 0.0, %v633
      %635 = vmatmul.bf16.gmra.mxu0 %v617
      %v636 = vpop.f32.mrf.mxu0
      %v637 = vadd.f32 0.0, %v636
      %v638 = vpop.f32.mrf.mxu0
      %v639 = vadd.f32 0.0, %v638
      %640 = vmatmul.bf16.gmra.mxu0 %v620
      %v641 = vpop.f32.mrf.mxu0
      %v642 = vadd.f32 0.0, %v641
      %v643 = vpop.f32.mrf.mxu0
      %v644 = vadd.f32 0.0, %v643
      %645 = vdwg.mxu0
      %v646 = vadd.f32 %v577, %v632
      %v647 = vadd.f32 %v578, %v634
      %v648 = vadd.f32 %v579, %v637
      %v649 = vadd.f32 %v580, %v639
      %v650 = vadd.f32 %v581, %v642
      %v651 = vadd.f32 %v582, %v644
      %s652 = scalar_lea.vmem %s1, 112
      %v653 = vld [vmem:[%s652] sm:$0xf]
      %v654 = vld [vmem:[%s652 + $0x4] sm:$0xf]
      %v655 = vld [vmem:[%s652 + $0x8] sm:$0xf]
      %v656 = vld [vmem:[%s652 + $0xc] sm:$0xf]
      %vm657 = vsmask.f32 5376
      %v658 = vshrl.u32 %v529, 16
      %v660 = vrot.slane %v658, 2
      %v661 = vshll.u32 %v529, 16
      %v663 = vrot.slane %v661, 3
      %v664 = vor.u32 %v660, %v663
      %v665 = vshrl.u32 %v530, 16
      %v667 = vrot.slane %v665, 2
      %v668 = vshll.u32 %v530, 16
      %v670 = vrot.slane %v668, 3
      %v671 = vor.u32 %v667, %v670
      %v672 = vsel %vm657, %v664, %v671
      %v673 = vshrl.u32 %v531, 16
      %v675 = vrot.slane %v673, 2
      %v676 = vshll.u32 %v531, 16
      %v678 = vrot.slane %v676, 3
      %v679 = vor.u32 %v675, %v678
      %v680 = vsel %vm657, %v671, %v679
      %v682 = vshrl.u32 %v588, 16
      %v684 = vrot.slane %v682, 2
      %v685 = vshll.u32 %v588, 16
      %v687 = vrot.slane %v685, 3
      %v688 = vor.u32 %v684, %v687
      %v689 = vsel %vm657, %v679, %v688
      %v694 = vunpack.c.l.b16 %v653
      %v695 = vunpack.c.l.b16 %v654
      %v696 = vunpack.c.l.b16 %v655
      %v697 = vunpack.c.l.b16 %v656
      %v698 = vpack.c.b16 %v695, %v694
      %v699 = vpack.c.b16 %v697, %v696
      %v703 = vsel %vm242, %v672, 0
      %v706 = vsel %vm242, %v680, 0
      %v709 = vsel %vm242, %v689, 0
      %711 = vmatpush.bf16.msra.mxu0 0
      %712 = vmatpush.bf16.msra.mxu0 0
      %713 = vmatpush.bf16.msra.mxu0 0
      %714 = vmatpush.bf16.msra.mxu0 0
      %715 = vmatpush.bf16.msra.mxu0 0
      %716 = vmatpush.bf16.msra.mxu0 0
      %717 = vmatpush.bf16.msra.mxu0 %v699
      %718 = vmatpush.bf16.msra.mxu0 %v698
      %719 = vmatmul.bf16.gmra.mxu0 %v703
      %v720 = vpop.f32.mrf.mxu0
      %v721 = vadd.f32 0.0, %v720
      %v722 = vpop.f32.mrf.mxu0
      %v723 = vadd.f32 0.0, %v722
      %724 = vmatmul.bf16.gmra.mxu0 %v706
      %v725 = vpop.f32.mrf.mxu0
      %v726 = vadd.f32 0.0, %v725
      %v727 = vpop.f32.mrf.mxu0
      %v728 = vadd.f32 0.0, %v727
      %729 = vmatmul.bf16.gmra.mxu0 %v709
      %v730 = vpop.f32.mrf.mxu0
      %v731 = vadd.f32 0.0, %v730
      %v732 = vpop.f32.mrf.mxu0
      %v733 = vadd.f32 0.0, %v732
      %734 = vdwg.mxu0
      %v735 = vadd.f32 %v646, %v721
      %v736 = vadd.f32 %v647, %v723
      %v737 = vadd.f32 %v648, %v726
      %v738 = vadd.f32 %v649, %v728
      %v739 = vadd.f32 %v650, %v731
      %v740 = vadd.f32 %v651, %v733
      %s741 = scalar_lea.vmem %s1, 128
      %v742 = vld [vmem:[%s741] sm:$0xf]
      %v743 = vld [vmem:[%s741 + $0x4] sm:$0xf]
      %v744 = vld [vmem:[%s741 + $0x8] sm:$0xf]
      %v745 = vld [vmem:[%s741 + $0xc] sm:$0xf]
      %v746 = vrot.slane %v529, 3
      %v747 = vrot.slane %v530, 3
      %v748 = vsel %vm391, %v746, %v747
      %v749 = vrot.slane %v531, 3
      %v750 = vsel %vm391, %v747, %v749
      %v751 = vrot.slane %v588, 3
      %v752 = vsel %vm391, %v749, %v751
      %v757 = vunpack.c.l.b16 %v742
      %v758 = vunpack.c.l.b16 %v743
      %v759 = vunpack.c.l.b16 %v744
      %v760 = vunpack.c.l.b16 %v745
      %v761 = vpack.c.b16 %v758, %v757
      %v762 = vpack.c.b16 %v760, %v759
      %v766 = vsel %vm242, %v748, 0
      %v769 = vsel %vm242, %v750, 0
      %v772 = vsel %vm242, %v752, 0
      %774 = vmatpush.bf16.msra.mxu0 0
      %775 = vmatpush.bf16.msra.mxu0 0
      %776 = vmatpush.bf16.msra.mxu0 0
      %777 = vmatpush.bf16.msra.mxu0 0
      %778 = vmatpush.bf16.msra.mxu0 0
      %779 = vmatpush.bf16.msra.mxu0 0
      %780 = vmatpush.bf16.msra.mxu0 %v762
      %781 = vmatpush.bf16.msra.mxu0 %v761
      %782 = vmatmul.bf16.gmra.mxu0 %v766
      %v783 = vpop.f32.mrf.mxu0
      %v784 = vadd.f32 0.0, %v783
      %v785 = vpop.f32.mrf.mxu0
      %v786 = vadd.f32 0.0, %v785
      %787 = vmatmul.bf16.gmra.mxu0 %v769
      %v788 = vpop.f32.mrf.mxu0
      %v789 = vadd.f32 0.0, %v788
      %v790 = vpop.f32.mrf.mxu0
      %v791 = vadd.f32 0.0, %v790
      %792 = vmatmul.bf16.gmra.mxu0 %v772
      %v793 = vpop.f32.mrf.mxu0
      %v794 = vadd.f32 0.0, %v793
      %v795 = vpop.f32.mrf.mxu0
      %v796 = vadd.f32 0.0, %v795
      %797 = vdwg.mxu0
      %v798 = vadd.f32 %v735, %v784
      %v799 = vadd.f32 %v736, %v786
      %v800 = vadd.f32 %v737, %v789
      %v801 = vadd.f32 %v738, %v791
      %v802 = vadd.f32 %v739, %v794
      %v803 = vadd.f32 %v740, %v796
      %v804 = vld [vmem:[%s2] sm:$0x1]
      %v806 = vperm.slane %v804, 0
      %v808 = vadd.f32 %v798, %v806
      %v809 = vadd.f32 %v799, %v806
      %v810 = vadd.f32 %v800, %v806
      %v811 = vadd.f32 %v801, %v806
      %v812 = vadd.f32 %v802, %v806
      %v813 = vadd.f32 %v803, %v806
      %v814 = vmax.f32 %v808, 0.0
      %v815 = vmax.f32 %v809, 0.0
      %v816 = vmax.f32 %v810, 0.0
      %v817 = vmax.f32 %v811, 0.0
      %v818 = vmax.f32 %v812, 0.0
      %v819 = vmax.f32 %v813, 0.0
      %v820 = vrot.slane %v814, 1
      %v821 = vrot.slane %v815, 1
      %v822 = vrot.slane %v816, 1
      %v823 = vrot.slane %v817, 1
      %v824 = vrot.slane %v818, 1
      %v825 = vrot.slane %v819, 1
      %v826 = vlaneseq
      %v827 = vshrl.u32 %v826, 7
      %vm828 = vcmp.lt.s32.totalorder %v827, 7
      %v829 = vsel %vm828, %v824, %v825
      %v830 = vsel %vm828, %v823, %v824
      %v831 = vsel %vm828, %v822, %v823
      %v832 = vsel %vm828, %v821, %v822
      %v833 = vsel %vm828, %v820, %v821
      %v834 = vsel %vm828, %v825, %v820
      %v835 = vmax.f32 %v814, %v833
      %v836 = vmax.f32 %v815, %v832
      %v837 = vmax.f32 %v816, %v831
      %v838 = vmax.f32 %v817, %v830
      %v839 = vmax.f32 %v818, %v829
      %v840 = vmax.f32 %v819, %v834
      %v841 = vrot.slane %v835, 6
      %v842 = vrot.slane %v836, 6
      %v843 = vrot.slane %v837, 6
      %v844 = vrot.slane %v838, 6
      %v845 = vrot.slane %v839, 6
      %v846 = vrot.slane %v840, 6
      %vm847 = vcmp.lt.s32.totalorder %v827, 2
      %v848 = vsel %vm847, %v845, %v846
      %v849 = vsel %vm847, %v844, %v845
      %v850 = vsel %vm847, %v843, %v844
      %v851 = vsel %vm847, %v842, %v843
      %v852 = vsel %vm847, %v841, %v842
      %v853 = vsel %vm847, %v846, %v841
      %v854 = vmax.f32 %v835, %v852
      %v855 = vmax.f32 %v836, %v851
      %v856 = vmax.f32 %v837, %v850
      %v857 = vmax.f32 %v838, %v849
      %v858 = vmax.f32 %v839, %v848
      %v859 = vmax.f32 %v840, %v853
      %v860 = vpack.c.bf16 %v854, %v854
      %v861 = vpack.c.bf16 %v855, %v855
      %v862 = vpack.c.bf16 %v856, %v856
      %v863 = vpack.c.bf16 %v857, %v857
      %v864 = vpack.c.bf16 %v858, %v858
      %v865 = vpack.c.bf16 %v859, %v859
      %vm866 = vcmask 257024
      %867 = vst.msk [vmem:[%s170] sm:$0xf] %vm866, %v860
      %868 = vst.msk [vmem:[%s170 + $0x4] sm:$0xf] %vm866, %v861
      %869 = vst.msk [vmem:[%s170 + $0x8] sm:$0xf] %vm866, %v862
      %870 = vst.msk [vmem:[%s170 + $0xc] sm:$0xf] %vm866, %v863
      %871 = vst.msk [vmem:[%s170 + $0x10] sm:$0xf] %vm866, %v864
      %872 = vst.msk [vmem:[%s170 + $0x14] sm:$0xf] %vm866, %v865
      %p873 = scmp.lt.s32.totalorder %s14, 1
      %s874 = scalar_select %p873, %s14, 1
      %s875 = smul.addr %s874, 6
      %s876 = smul.addr %s875, 4
      %s877 = scalar_lea.vmem %s3, %s876
      // Predicated region
      $region33: #{vggish_linear_forward.12} parent=31 // pred_check
        %p878 = pneg %p100
      $region34: #{vggish_linear_forward.12} parent=31 // pred_check_branch
        %880 = sbr.rel (%p878) target = $region36
      $region35: #{vggish_linear_forward.12} parent=31 // pred_region
        _
      $region36: #{vggish_linear_forward.12} parent=31 // pred_fallthru
        _
    $region32: #{vggish_linear_forward.12} parent=5 // pred_fallthru
      _
    %p881 = scmp.le.s32.totalorder 2, %s9
    // Predicated region
    $region37: #{vggish_linear_forward.12} parent=5 // pred_check
      %p882 = pneg %p881
    $region38: #{vggish_linear_forward.12} parent=5 // pred_check_branch
      %884 = sbr.rel (%p882) target = $region40
    $region39: #{vggish_linear_forward.12} parent=5 // pred_region
      %s885 = ssub.s32 %s9, 2
      // Predicated region
      $region41: #{vggish_linear_forward.12} parent=39 // pred_check
        %p886 = pneg %p106
      $region42: #{vggish_linear_forward.12} parent=39 // pred_check_branch
        %888 = sbr.rel (%p886) target = $region44
      $region43: #{vggish_linear_forward.12} parent=39 // pred_region
        %p889 = scmp.lt.s32.totalorder %s15, 1
        %s890 = scalar_select %p889, %s15, 1
        %s891 = smul.addr %s890, 6
        %s892 = smul.addr %s891, 4
        %s893 = scalar_lea.vmem %s3, %s892
      $region44: #{vggish_linear_forward.12} parent=39 // pred_fallthru
        _
    $region40: #{vggish_linear_forward.12} parent=5 // pred_fallthru
      _
  $region6: #{vggish_linear_forward.12} parent=0 // loop_footer
    %s13 = sadd.s32 1, %s9
  $region7: #{vggish_linear_forward.12} parent=0 // loop_footer_branch
    %8 = sbr.rel target = $region3
  $region8: #{vggish_linear_forward.12} parent=0 // loop_exit
    _

// kernel: vggish_linear_forward.13
$region0: #{vggish_linear_forward.13}
  #allocation0 [shape = 'u32[]', space=smem, size = 0x4, offset = 0x4, fixed_abs, tag = 'smem constant byte address 0x4 - core index']
  #allocation1 [shape = 'u32[72,128]{1,0:T(1,128)}', space=vmem, size = 0x9000, scoped, tag = 'internal scratch']
  %s0 = inlined_call_operand.vmem [shape: bf16[2,28,32], index: 0, kind: input, shape index: {}]
  %s1 = inlined_call_operand.vmem [shape: bf16[9,32,64], index: 1, kind: input, shape index: {}]
  %s2 = inlined_call_operand.vmem [shape: f32[1,64], index: 2, kind: input, shape index: {}]
  %s3 = inlined_call_operand.vmem [shape: bf16[2,16,64], index: 3, kind: output, shape index: {}]
  %s4 = sld [smem:[#allocation0]]
  $region45: #{vggish_linear_forward.13} parent=0
    _
  %s6 = ssub.s32 1, %s4
  %s7 = scalar_select 0, %s6, %s4
  loop: start=0, step=1, limit=4
  $region2: #{vggish_linear_forward.13} parent=0 // loop_pre_header
    _
  $region3: #{vggish_linear_forward.13} parent=0 // loop_header
    %s9 = sphi 0, %s13
    %p10 = scmp.ge.s32.totalorder %s9, 4
    %s19 = sphi 0, %s21
    %s22 = sphi 0, %s19
    %s23 = sphi 0, %s22
    %s39 = sphi 0, %s23
    %s43 = sphi 0, %s43
    %s45 = sphi 0, %s43
    %s46 = sphi 0, %s45
    %s60 = sphi 0, %s46
    %s64 = sphi 0, %s64
    %s66 = sphi 0, %s64
    %s67 = sphi 0, %s66
    %s81 = sphi 0, %s67
    %s87 = sphi 0, %s89
    %s90 = sphi 0, %s87
    %s91 = sphi 0, %s90
    %s107 = sphi 0, %s91
  $region4: #{vggish_linear_forward.13} parent=0 // loop_header_branch
    %12 = sbr.rel (%p10) target = $region8
  $region5: #{vggish_linear_forward.13} parent=0 // loop_body
    %s14 = ssub.s32 %s9, 1
    %s15 = ssub.s32 %s9, 2
    %s16 = sadd.s32 %s9, 1
    %s17 = ssub.s32 %s9, %s16
    %p18 = scmp.eq.s32.totalorder %s17, 0
    %s20 = sadd.s32 %s19, 1
    %s21 = scalar_select %p18, %s19, %s20
    %p24 = pneg %p18
    %p25 = scmp.eq.s32.totalorder %s9, 1
    %p26 = por %p24, %p25
    %p27 = scmp.ne.s32.totalorder %s19, %s22
    %p28 = scmp.eq.s32.totalorder %s9, 0
    %p29 = por %p27, %p28
    %p30 = scmp.ne.s32.totalorder %s19, %s22
    %p31 = scmp.eq.s32.totalorder %s14, 1
    %p32 = por %p30, %p31
    %p33 = scmp.ne.s32.totalorder %s22, %s23
    %p34 = scmp.eq.s32.totalorder %s14, 0
    %p35 = por %p33, %p34
    %p36 = scmp.ne.s32.totalorder %s22, %s23
    %p37 = scmp.eq.s32.totalorder %s15, 1
    %p38 = por %p36, %p37
    %p40 = scmp.ne.s32.totalorder %s23, %s39
    %p41 = scmp.eq.s32.totalorder %s15, 0
    %p42 = por %p40, %p41
    %s44 = sadd.s32 %s43, 1
    %p47 = scmp.eq.s32.totalorder %s9, 1
    %p48 = scmp.ne.s32.totalorder %s43, %s45
    %p49 = scmp.eq.s32.totalorder %s9, 0
    %p50 = por %p48, %p49
    %p51 = scmp.ne.s32.totalorder %s43, %s45
    %p52 = scmp.eq.s32.totalorder %s14, 1
    %p53 = por %p51, %p52
    %p54 = scmp.ne.s32.totalorder %s45, %s46
    %p55 = scmp.eq.s32.totalorder %s14, 0
    %p56 = por %p54, %p55
    %p57 = scmp.ne.s32.totalorder %s45, %s46
    %p58 = scmp.eq.s32.totalorder %s15, 1
    %p59 = por %p57, %p58
    %p61 = scmp.ne.s32.totalorder %s46, %s60
    %p62 = scmp.eq.s32.totalorder %s15, 0
    %p63 = por %p61, %p62
    %s65 = sadd.s32 %s64, 1
    %p68 = scmp.eq.s32.totalorder %s9, 1
    %p69 = scmp.ne.s32.totalorder %s64, %s66
    %p70 = scmp.eq.s32.totalorder %s9, 0
    %p71 = por %p69, %p70
    %p72 = scmp.ne.s32.totalorder %s64, %s66
    %p73 = scmp.eq.s32.totalorder %s14, 1
    %p74 = por %p72, %p73
    %p75 = scmp.ne.s32.totalorder %s66, %s67
    %p76 = scmp.eq.s32.totalorder %s14, 0
    %p77 = por %p75, %p76
    %p78 = scmp.ne.s32.totalorder %s66, %s67
    %p79 = scmp.eq.s32.totalorder %s15, 1
    %p80 = por %p78, %p79
    %p82 = scmp.ne.s32.totalorder %s67, %s81
    %p83 = scmp.eq.s32.totalorder %s15, 0
    %p84 = por %p82, %p83
    %s85 = ssub.s32 %s9, %s16
    %p86 = scmp.eq.s32.totalorder %s85, 0
    %s88 = sadd.s32 %s87, 1
    %s89 = scalar_select %p86, %s87, %s88
    %p92 = pneg %p86
    %p93 = scmp.eq.s32.totalorder %s9, 1
    %p94 = por %p92, %p93
    %p95 = scmp.ne.s32.totalorder %s87, %s90
    %p96 = scmp.eq.s32.totalorder %s9, 0
    %p97 = por %p95, %p96
    %p98 = scmp.ne.s32.totalorder %s87, %s90
    %p99 = scmp.eq.s32.totalorder %s14, 1
    %p100 = por %p98, %p99
    %p101 = scmp.ne.s32.totalorder %s90, %s91
    %p102 = scmp.eq.s32.totalorder %s14, 0
    %p103 = por %p101, %p102
    %p104 = scmp.ne.s32.totalorder %s90, %s91
    %p105 = scmp.eq.s32.totalorder %s15, 1
    %p106 = por %p104, %p105
    %p108 = scmp.ne.s32.totalorder %s91, %s107
    %p109 = scmp.eq.s32.totalorder %s15, 0
    %p110 = por %p108, %p109
    %p111 = scmp.le.s32.totalorder 1, %s9
    %p112 = scmp.lt.s32.totalorder %s9, 3
    %p113 = pnand %p111, %p112
    %p114 = pneg %p113
    // Predicated region
    $region9: #{vggish_linear_forward.13} parent=5 // pred_check
      _
    $region10: #{vggish_linear_forward.13} parent=5 // pred_check_branch
      %116 = sbr.rel (%p113) target = $region12
    $region11: #{vggish_linear_forward.13} parent=5 // pred_region
      %s117 = ssub.s32 %s9, 1
      // Predicated region
      $region13: #{vggish_linear_forward.13} parent=11 // pred_check
        %p118 = pneg %p56
      $region14: #{vggish_linear_forward.13} parent=11 // pred_check_branch
        %120 = sbr.rel (%p118) target = $region16
      $region15: #{vggish_linear_forward.13} parent=11 // pred_region
        _
      $region16: #{vggish_linear_forward.13} parent=11 // pred_fallthru
        _
      // Predicated region
      $region17: #{vggish_linear_forward.13} parent=11 // pred_check
        %p121 = pneg %p77
      $region18: #{vggish_linear_forward.13} parent=11 // pred_check_branch
        %123 = sbr.rel (%p121) target = $region20
      $region19: #{vggish_linear_forward.13} parent=11 // pred_region
        _
      $region20: #{vggish_linear_forward.13} parent=11 // pred_fallthru
        _
    $region12: #{vggish_linear_forward.13} parent=5 // pred_fallthru
      _
    %p124 = scmp.lt.s32.totalorder %s9, 2
    // Predicated region
    $region21: #{vggish_linear_forward.13} parent=5 // pred_check
      %p125 = pneg %p124
    $region22: #{vggish_linear_forward.13} parent=5 // pred_check_branch
      %127 = sbr.rel (%p125) target = $region24
    $region23: #{vggish_linear_forward.13} parent=5 // pred_region
      // Predicated region
      $region25: #{vggish_linear_forward.13} parent=23 // pred_check
        %p128 = pneg %p29
      $region26: #{vggish_linear_forward.13} parent=23 // pred_check_branch
        %130 = sbr.rel (%p128) target = $region28
      $region27: #{vggish_linear_forward.13} parent=23 // pred_region
        %p131 = scmp.lt.s32.totalorder %s9, 1
        %s132 = scalar_select %p131, %s9, 1
        %s133 = smul.addr %s132, 4
        %s134 = smul.addr %s133, 4
        %s135 = scalar_lea.vmem %s0, %s134
      $region28: #{vggish_linear_forward.13} parent=23 // pred_fallthru
        _
    $region24: #{vggish_linear_forward.13} parent=5 // pred_fallthru
      _
    %p136 = scmp.le.s32.totalorder 1, %s9
    %p137 = scmp.lt.s32.totalorder %s9, 3
    %p138 = pnand %p136, %p137
    %p139 = pneg %p138
    // Predicated region
    $region29: #{vggish_linear_forward.13} parent=5 // pred_check
      _
    $region30: #{vggish_linear_forward.13} parent=5 // pred_check_branch
      %141 = sbr.rel (%p138) target = $region32
    $region31: #{vggish_linear_forward.13} parent=5 // pred_region
      %s142 = ssub.s32 %s9, 1
      %p143 = scmp.lt.s32.totalorder %s14, 1
      %s144 = scalar_select %p143, %s14, 1
      %s145 = smul.addr %s144, 4
      %s146 = smul.addr %s145, 4
      %s147 = scalar_lea.vmem %s0, %s146
      %p148 = pneg %p35
      %p149 = pneg %p32
      %p150 = pneg %p56
      %p151 = pneg %p53
      %p152 = pneg %p77
      %p153 = pneg %p74
      %p154 = pneg %p103
      %p155 = pneg %p100
      %p156 = scmp.lt.s32.totalorder %s14, 1
      %s157 = scalar_select %p156, %s14, 1
      %s158 = smul.addr %s157, 2
      %s159 = smul.addr %s158, 4
      %s160 = scalar_lea.vmem %s3, %s159
      %p161 = scmp.lt.s32.totalorder %s14, 1
      %s162 = scalar_select %p161, %s14, 1
      %s163 = smul.addr %s162, 4
      %s164 = smul.addr %s163, 4
      %s165 = scalar_lea.vmem %s0, %s164
      %p166 = scmp.lt.s32.totalorder %s14, 1
      %s167 = scalar_select %p166, %s14, 1
      %s168 = smul.addr %s167, 2
      %s169 = smul.addr %s168, 4
      %s170 = scalar_lea.vmem %s3, %s169
      %v172 = vld [vmem:[%s165] sm:$0xf]
      %v173 = vld [vmem:[%s165 + $0x4] sm:$0xf]
      %v174 = vld [vmem:[%s165 + $0x8] sm:$0xf]
      %v175 = vld [vmem:[%s165 + $0xc] sm:$0x3]
      %v176 = vunpack.c.l.bf16 %v172
      %v177 = vunpack.c.l.bf16 %v173
      %v178 = vunpack.c.l.bf16 %v174
      %v179 = vunpack.c.l.bf16 %v175
      %v180 = vld [vmem:[%s1] sm:$0xf]
      %v181 = vld [vmem:[%s1 + $0x4] sm:$0xf]
      %v182 = vld [vmem:[%s1 + $0x8] sm:$0xf]
      %v183 = vld [vmem:[%s1 + $0xc] sm:$0xf]
      %v184 = vpack.c.bf16 %v177, %v176
      %s185 = scalar_lea.vmem %s1, 16
      %v186 = vld [vmem:[%s185] sm:$0xf]
      %v187 = vld [vmem:[%s185 + $0x4] sm:$0xf]
      %v188 = vld [vmem:[%s185 + $0x8] sm:$0xf]
      %v189 = vld [vmem:[%s185 + $0xc] sm:$0xf]
      %v190 = vpack.c.bf16 %v178, %v178
      %vm191 = vsmask.f32 7424
      %v193 = vshrl.u32 %v184, 16
      %v195 = vshll.u32 %v184, 16
      %v197 = vrot.slane %v195, 1
      %v198 = vor.u32 %v193, %v197
      %v200 = vshll.u32 %v190, 16
      %v202 = vrot.slane %v200, 1
      %v203 = vsel %vm191, %v198, %v202
      %v208 = vunpack.c.l.b16 %v186
      %v209 = vunpack.c.l.b16 %v187
      %v210 = vunpack.c.l.b16 %v188
      %v211 = vunpack.c.l.b16 %v189
      %v212 = vpack.c.b16 %v209, %v208
      %v213 = vpack.c.b16 %v211, %v210
      %vm216 = vcmask 261120
      %v218 = vsel %vm216, %v203, 0
      %220 = vmatpush.bf16.msra.mxu0 0
      %221 = vmatpush.bf16.msra.mxu0 0
      %222 = vmatpush.bf16.msra.mxu0 0
      %223 = vmatpush.bf16.msra.mxu0 0
      %224 = vmatpush.bf16.msra.mxu0 0
      %225 = vmatpush.bf16.msra.mxu0 0
      %226 = vmatpush.bf16.msra.mxu0 %v213
      %227 = vmatpush.bf16.msra.mxu0 %v212
      %228 = vmatmul.bf16.gmra.mxu0 %v218
      %v229 = vpop.f32.mrf.mxu0
      %v230 = vadd.f32 0.0, %v229
      %v231 = vpop.f32.mrf.mxu0
      %v232 = vadd.f32 0.0, %v231
      %233 = vdwg.mxu0
      %v238 = vunpack.c.l.b16 %v180
      %v239 = vunpack.c.l.b16 %v181
      %v240 = vunpack.c.l.b16 %v182
      %v241 = vunpack.c.l.b16 %v183
      %v242 = vpack.c.b16 %v239, %v238
      %v243 = vpack.c.b16 %v241, %v240
      %v246 = vsel %vm216, %v184, 0
      %248 = vmatpush.bf16.msra.mxu0 0
      %249 = vmatpush.bf16.msra.mxu0 0
      %250 = vmatpush.bf16.msra.mxu0 0
      %251 = vmatpush.bf16.msra.mxu0 0
      %252 = vmatpush.bf16.msra.mxu0 0
      %253 = vmatpush.bf16.msra.mxu0 0
      %254 = vmatpush.bf16.msra.mxu0 %v243
      %255 = vmatpush.bf16.msra.mxu0 %v242
      %256 = vmatmul.bf16.gmra.mxu0 %v246
      %v257 = vpop.f32.mrf.mxu0
      %v258 = vadd.f32 %v230, %v257
      %v259 = vpop.f32.mrf.mxu0
      %v260 = vadd.f32 %v232, %v259
      %261 = vdwg.mxu0
      %s262 = scalar_lea.vmem %s1, 32
      %v263 = vld [vmem:[%s262] sm:$0xf]
      %v264 = vld [vmem:[%s262 + $0x4] sm:$0xf]
      %v265 = vld [vmem:[%s262 + $0x8] sm:$0xf]
      %v266 = vld [vmem:[%s262 + $0xc] sm:$0xf]
      %vm269 = vcmask 1046528
      %v270 = vrot.slane %v184, 1
      %v271 = vrot.slane %v190, 1
      %v272 = vsel %vm269, %v270, %v271
      %v277 = vunpack.c.l.b16 %v263
      %v278 = vunpack.c.l.b16 %v264
      %v279 = vunpack.c.l.b16 %v265
      %v280 = vunpack.c.l.b16 %v266
      %v281 = vpack.c.b16 %v278, %v277
      %v282 = vpack.c.b16 %v280, %v279
      %v286 = vsel %vm216, %v272, 0
      %288 = vmatpush.bf16.msra.mxu0 0
      %289 = vmatpush.bf16.msra.mxu0 0
      %290 = vmatpush.bf16.msra.mxu0 0
      %291 = vmatpush.bf16.msra.mxu0 0
      %292 = vmatpush.bf16.msra.mxu0 0
      %293 = vmatpush.bf16.msra.mxu0 0
      %294 = vmatpush.bf16.msra.mxu0 %v282
      %295 = vmatpush.bf16.msra.mxu0 %v281
      %296 = vmatmul.bf16.gmra.mxu0 %v286
      %v297 = vpop.f32.mrf.mxu0
      %v298 = vadd.f32 0.0, %v297
      %v299 = vpop.f32.mrf.mxu0
      %v300 = vadd.f32 0.0, %v299
      %301 = vdwg.mxu0
      %v302 = vadd.f32 %v258, %v298
      %v303 = vadd.f32 %v260, %v300
      %s304 = scalar_lea.vmem %s1, 48
      %v305 = vld [vmem:[%s304] sm:$0xf]
      %v306 = vld [vmem:[%s304 + $0x4] sm:$0xf]
      %v307 = vld [vmem:[%s304 + $0x8] sm:$0xf]
      %v308 = vld [vmem:[%s304 + $0xc] sm:$0xf]
      %vm309 = vcmask 1045504
      %v310 = vrot.slane %v184, 2
      %v311 = vrot.slane %v190, 2
      %v312 = vsel %vm309, %v310, %v311
      %v317 = vunpack.c.l.b16 %v305
      %v318 = vunpack.c.l.b16 %v306
      %v319 = vunpack.c.l.b16 %v307
      %v320 = vunpack.c.l.b16 %v308
      %v321 = vpack.c.b16 %v318, %v317
      %v322 = vpack.c.b16 %v320, %v319
      %v326 = vsel %vm216, %v312, 0
      %328 = vmatpush.bf16.msra.mxu0 0
      %329 = vmatpush.bf16.msra.mxu0 0
      %330 = vmatpush.bf16.msra.mxu0 0
      %331 = vmatpush.bf16.msra.mxu0 0
      %332 = vmatpush.bf16.msra.mxu0 0
      %333 = vmatpush.bf16.msra.mxu0 0
      %334 = vmatpush.bf16.msra.mxu0 %v322
      %335 = vmatpush.bf16.msra.mxu0 %v321
      %336 = vmatmul.bf16.gmra.mxu0 %v326
      %v337 = vpop.f32.mrf.mxu0
      %v338 = vadd.f32 0.0, %v337
      %v339 = vpop.f32.mrf.mxu0
      %v340 = vadd.f32 0.0, %v339
      %341 = vdwg.mxu0
      %v342 = vadd.f32 %v302, %v338
      %v343 = vadd.f32 %v303, %v340
      %s344 = scalar_lea.vmem %s1, 64
      %v345 = vld [vmem:[%s344] sm:$0xf]
      %v346 = vld [vmem:[%s344 + $0x4] sm:$0xf]
      %v347 = vld [vmem:[%s344 + $0x8] sm:$0xf]
      %v348 = vld [vmem:[%s344 + $0xc] sm:$0xf]
      %vm349 = vsmask.f32 5376
      %v350 = vrot.slane %v193, 2
      %v351 = vrot.slane %v195, 3
      %v352 = vor.u32 %v350, %v351
      %v353 = vshrl.u32 %v190, 16
      %v355 = vrot.slane %v353, 2
      %v356 = vrot.slane %v200, 3
      %v357 = vor.u32 %v355, %v356
      %v358 = vsel %vm349, %v352, %v357
      %v363 = vunpack.c.l.b16 %v345
      %v364 = vunpack.c.l.b16 %v346
      %v365 = vunpack.c.l.b16 %v347
      %v366 = vunpack.c.l.b16 %v348
      %v367 = vpack.c.b16 %v364, %v363
      %v368 = vpack.c.b16 %v366, %v365
      %v372 = vsel %vm216, %v358, 0
      %374 = vmatpush.bf16.msra.mxu0 0
      %375 = vmatpush.bf16.msra.mxu0 0
      %376 = vmatpush.bf16.msra.mxu0 0
      %377 = vmatpush.bf16.msra.mxu0 0
      %378 = vmatpush.bf16.msra.mxu0 0
      %379 = vmatpush.bf16.msra.mxu0 0
      %380 = vmatpush.bf16.msra.mxu0 %v368
      %381 = vmatpush.bf16.msra.mxu0 %v367
      %382 = vmatmul.bf16.gmra.mxu0 %v372
      %v383 = vpop.f32.mrf.mxu0
      %v384 = vadd.f32 0.0, %v383
      %v385 = vpop.f32.mrf.mxu0
      %v386 = vadd.f32 0.0, %v385
      %387 = vdwg.mxu0
      %v388 = vadd.f32 %v342, %v384
      %v389 = vadd.f32 %v343, %v386
      %s390 = scalar_lea.vmem %s1, 80
      %v391 = vld [vmem:[%s390] sm:$0xf]
      %v392 = vld [vmem:[%s390 + $0x4] sm:$0xf]
      %v393 = vld [vmem:[%s390 + $0x8] sm:$0xf]
      %v394 = vld [vmem:[%s390 + $0xc] sm:$0xf]
      %vm395 = vcmask 1044480
      %v396 = vrot.slane %v184, 3
      %v397 = vrot.slane %v190, 3
      %v398 = vsel %vm395, %v396, %v397
      %v403 = vunpack.c.l.b16 %v391
      %v404 = vunpack.c.l.b16 %v392
      %v405 = vunpack.c.l.b16 %v393
      %v406 = vunpack.c.l.b16 %v394
      %v407 = vpack.c.b16 %v404, %v403
      %v408 = vpack.c.b16 %v406, %v405
      %v412 = vsel %vm216, %v398, 0
      %414 = vmatpush.bf16.msra.mxu0 0
      %415 = vmatpush.bf16.msra.mxu0 0
      %416 = vmatpush.bf16.msra.mxu0 0
      %417 = vmatpush.bf16.msra.mxu0 0
      %418 = vmatpush.bf16.msra.mxu0 0
      %419 = vmatpush.bf16.msra.mxu0 0
      %420 = vmatpush.bf16.msra.mxu0 %v408
      %421 = vmatpush.bf16.msra.mxu0 %v407
      %422 = vmatmul.bf16.gmra.mxu0 %v412
      %v423 = vpop.f32.mrf.mxu0
      %v424 = vadd.f32 0.0, %v423
      %v425 = vpop.f32.mrf.mxu0
      %v426 = vadd.f32 0.0, %v425
      %427 = vdwg.mxu0
      %v428 = vadd.f32 %v388, %v424
      %v429 = vadd.f32 %v389, %v426
      %s430 = scalar_lea.vmem %s1, 96
      %v431 = vld [vmem:[%s430] sm:$0xf]
      %v432 = vld [vmem:[%s430 + $0x4] sm:$0xf]
      %v433 = vld [vmem:[%s430 + $0x8] sm:$0xf]
      %v434 = vld [vmem:[%s430 + $0xc] sm:$0xf]
      %v435 = vpack.c.bf16 %v178, %v177
      %v440 = vunpack.c.l.b16 %v431
      %v441 = vunpack.c.l.b16 %v432
      %v442 = vunpack.c.l.b16 %v433
      %v443 = vunpack.c.l.b16 %v434
      %v444 = vpack.c.b16 %v441, %v440
      %v445 = vpack.c.b16 %v443, %v442
      %v449 = vsel %vm216, %v435, 0
      %451 = vmatpush.bf16.msra.mxu0 0
      %452 = vmatpush.bf16.msra.mxu0 0
      %453 = vmatpush.bf16.msra.mxu0 0
      %454 = vmatpush.bf16.msra.mxu0 0
      %455 = vmatpush.bf16.msra.mxu0 0
      %456 = vmatpush.bf16.msra.mxu0 0
      %457 = vmatpush.bf16.msra.mxu0 %v445
      %458 = vmatpush.bf16.msra.mxu0 %v444
      %459 = vmatmul.bf16.gmra.mxu0 %v449
      %v460 = vpop.f32.mrf.mxu0
      %v461 = vadd.f32 0.0, %v460
      %v462 = vpop.f32.mrf.mxu0
      %v463 = vadd.f32 0.0, %v462
      %464 = vdwg.mxu0
      %v465 = vadd.f32 %v428, %v461
      %v466 = vadd.f32 %v429, %v463
      %s467 = scalar_lea.vmem %s1, 112
      %v468 = vld [vmem:[%s467] sm:$0xf]
      %v469 = vld [vmem:[%s467 + $0x4] sm:$0xf]
      %v470 = vld [vmem:[%s467 + $0x8] sm:$0xf]
      %v471 = vld [vmem:[%s467 + $0xc] sm:$0xf]
      %v472 = vpack.c.bf16 %v179, %v179
      %v473 = vshrl.u32 %v435, 16
      %v475 = vshll.u32 %v435, 16
      %v477 = vrot.slane %v475, 1
      %v478 = vor.u32 %v473, %v477
      %v480 = vshll.u32 %v472, 16
      %v482 = vrot.slane %v480, 1
      %v483 = vsel %vm191, %v478, %v482
      %v488 = vunpack.c.l.b16 %v468
      %v489 = vunpack.c.l.b16 %v469
      %v490 = vunpack.c.l.b16 %v470
      %v491 = vunpack.c.l.b16 %v471
      %v492 = vpack.c.b16 %v489, %v488
      %v493 = vpack.c.b16 %v491, %v490
      %v497 = vsel %vm216, %v483, 0
      %499 = vmatpush.bf16.msra.mxu0 0
      %500 = vmatpush.bf16.msra.mxu0 0
      %501 = vmatpush.bf16.msra.mxu0 0
      %502 = vmatpush.bf16.msra.mxu0 0
      %503 = vmatpush.bf16.msra.mxu0 0
      %504 = vmatpush.bf16.msra.mxu0 0
      %505 = vmatpush.bf16.msra.mxu0 %v493
      %506 = vmatpush.bf16.msra.mxu0 %v492
      %507 = vmatmul.bf16.gmra.mxu0 %v497
      %v508 = vpop.f32.mrf.mxu0
      %v509 = vadd.f32 0.0, %v508
      %v510 = vpop.f32.mrf.mxu0
      %v511 = vadd.f32 0.0, %v510
      %512 = vdwg.mxu0
      %v513 = vadd.f32 %v465, %v509
      %v514 = vadd.f32 %v466, %v511
      %s515 = scalar_lea.vmem %s1, 128
      %v516 = vld [vmem:[%s515] sm:$0xf]
      %v517 = vld [vmem:[%s515 + $0x4] sm:$0xf]
      %v518 = vld [vmem:[%s515 + $0x8] sm:$0xf]
      %v519 = vld [vmem:[%s515 + $0xc] sm:$0xf]
      %v522 = vrot.slane %v435, 1
      %v523 = vrot.slane %v472, 1
      %v524 = vsel %vm269, %v522, %v523
      %v529 = vunpack.c.l.b16 %v516
      %v530 = vunpack.c.l.b16 %v517
      %v531 = vunpack.c.l.b16 %v518
      %v532 = vunpack.c.l.b16 %v519
      %v533 = vpack.c.b16 %v530, %v529
      %v534 = vpack.c.b16 %v532, %v531
      %v538 = vsel %vm216, %v524, 0
      %540 = vmatpush.bf16.msra.mxu0 0
      %541 = vmatpush.bf16.msra.mxu0 0
      %542 = vmatpush.bf16.msra.mxu0 0
      %543 = vmatpush.bf16.msra.mxu0 0
      %544 = vmatpush.bf16.msra.mxu0 0
      %545 = vmatpush.bf16.msra.mxu0 0
      %546 = vmatpush.bf16.msra.mxu0 %v534
      %547 = vmatpush.bf16.msra.mxu0 %v533
      %548 = vmatmul.bf16.gmra.mxu0 %v538
      %v549 = vpop.f32.mrf.mxu0
      %v550 = vadd.f32 0.0, %v549
      %v551 = vpop.f32.mrf.mxu0
      %v552 = vadd.f32 0.0, %v551
      %553 = vdwg.mxu0
      %v554 = vadd.f32 %v513, %v550
      %v555 = vadd.f32 %v514, %v552
      %v556 = vld [vmem:[%s2] sm:$0x1]
      %v558 = vperm.slane %v556, 0
      %v560 = vadd.f32 %v554, %v558
      %v561 = vadd.f32 %v555, %v558
      %v562 = vmax.f32 %v560, 0.0
      %v563 = vmax.f32 %v561, 0.0
      %v564 = vpack.c.bf16 %v562, %v562
      %v565 = vpack.c.bf16 %v563, %v563
      %vm566 = vcmask 519168
      %567 = vst.msk [vmem:[%s170] sm:$0xf] %vm566, %v564
      %568 = vst.msk [vmem:[%s170 + $0x4] sm:$0xf] %vm566, %v565
      %p569 = scmp.lt.s32.totalorder %s14, 1
      %s570 = scalar_select %p569, %s14, 1
      %s571 = smul.addr %s570, 2
      %s572 = smul.addr %s571, 4
      %s573 = scalar_lea.vmem %s3, %s572
      // Predicated region
      $region33: #{vggish_linear_forward.13} parent=31 // pred_check
        %p574 = pneg %p100
      $region34: #{vggish_linear_forward.13} parent=31 // pred_check_branch
        %576 = sbr.rel (%p574) target = $region36
      $region35: #{vggish_linear_forward.13} parent=31 // pred_region
        _
      $region36: #{vggish_linear_forward.13} parent=31 // pred_fallthru
        _
    $region32: #{vggish_linear_forward.13} parent=5 // pred_fallthru
      _
    %p577 = scmp.le.s32.totalorder 2, %s9
    // Predicated region
    $region37: #{vggish_linear_forward.13} parent=5 // pred_check
      %p578 = pneg %p577
    $region38: #{vggish_linear_forward.13} parent=5 // pred_check_branch
      %580 = sbr.rel (%p578) target = $region40
    $region39: #{vggish_linear_forward.13} parent=5 // pred_region
      %s581 = ssub.s32 %s9, 2
      // Predicated region
      $region41: #{vggish_linear_forward.13} parent=39 // pred_check
        %p582 = pneg %p106
      $region42: #{vggish_linear_forward.13} parent=39 // pred_check_branch
        %584 = sbr.rel (%p582) target = $region44
      $region43: #{vggish_linear_forward.13} parent=39 // pred_region
        %p585 = scmp.lt.s32.totalorder %s15, 1
        %s586 = scalar_select %p585, %s15, 1
        %s587 = smul.addr %s586, 2
        %s588 = smul.addr %s587, 4
        %s589 = scalar_lea.vmem %s3, %s588
      $region44: #{vggish_linear_forward.13} parent=39 // pred_fallthru
        _
    $region40: #{vggish_linear_forward.13} parent=5 // pred_fallthru
      _
  $region6: #{vggish_linear_forward.13} parent=0 // loop_footer
    %s13 = sadd.s32 1, %s9
  $region7: #{vggish_linear_forward.13} parent=0 // loop_footer_branch
    %8 = sbr.rel target = $region3
  $region8: #{vggish_linear_forward.13} parent=0 // loop_exit
    _

// kernel: vggish_linear_forward.15
$region0: #{vggish_linear_forward.15}
  #allocation0 [shape = 'u32[]', space=smem, size = 0x4, offset = 0x4, fixed_abs, tag = 'smem constant byte address 0x4 - core index']
  #allocation1 [shape = 'u32[72,128]{1,0:T(1,128)}', space=vmem, size = 0x9000, scoped, tag = 'internal scratch']
  #allocation2 [shape = 'f32[2,128]{1,0:T(2,128)}', space=vmem, size = 0x400, scoped, tag = 'scratch operand']
  %s0 = inlined_call_operand.vmem [shape: bf16[2,128], index: 0, kind: input, shape index: {}]
  %s1 = inlined_call_operand.vmem [shape: bf16[128,256], index: 1, kind: input, shape index: {}]
  %s2 = inlined_call_operand.vmem [shape: f32[1,256], index: 2, kind: input, shape index: {}]
  %s3 = inlined_call_operand.vmem [shape: bf16[2,256], index: 3, kind: output, shape index: {}]
  %s4 = sld [smem:[#allocation0]]
  $region94: #{vggish_linear_forward.15} parent=0
    _
  %s6 = ssub.s32 1, %s4
  %s7 = scalar_select 0, %s6, %s4
  $region1: #{vggish_linear_forward.15} parent=0
    #allocation3 [shape = 'u8[65536]{0}', space=vmem, size = 0x10000, scoped, tag = 'input window, operand 1']
    loop: start=0, step=1, limit=4
    $region2: #{vggish_linear_forward.15} parent=1 // loop_pre_header
      _
    $region3: #{vggish_linear_forward.15} parent=1 // loop_header
      %s9 = sphi 0, %s13
      %p10 = scmp.ge.s32.totalorder %s9, 4
      %s16 = sphi 0, %s28
      %s17 = sphi 0, %s24
      %s18 = sphi 0, %s16
      %s19 = sphi 0, %s17
      %s20 = sphi 0, %s18
      %s21 = sphi 0, %s19
      %s31 = sphi 0, %s33
      %s34 = sphi 0, %s31
      %s35 = sphi 0, %s34
      %s51 = sphi 0, %s35
      %s59 = sphi 0, %s61
      %s62 = sphi 0, %s59
      %s63 = sphi 0, %s62
      %s79 = sphi 0, %s63
      %s85 = sphi 0, %s87
      %s88 = sphi 0, %s85
      %s89 = sphi 0, %s88
      %s105 = sphi 0, %s89
      %s111 = sphi 0, %s113
      %s114 = sphi 0, %s111
      %s115 = sphi 0, %s114
      %s131 = sphi 0, %s115
    $region4: #{vggish_linear_forward.15} parent=1 // loop_header_branch
      %12 = sbr.rel (%p10) target = $region8
    $region5: #{vggish_linear_forward.15} parent=1 // loop_body
      %s14 = ssub.s32 %s9, 1
      %s15 = ssub.s32 %s9, 2
      %s22 = sadd.s32 1, %s17
      %p23 = scmp.ge.s32.totalorder %s22, 1
      %s24 = scalar_select %p23, 0, %s22
      %s25 = sadd.s32 1, %s16
      %s26 = scalar_select %p23, %s25, %s16
      %p27 = scmp.ge.s32.totalorder %s26, 2
      %s28 = scalar_select %p27, 0, %s26
      %s29 = ssub.s32 %s17, %s24
      %p30 = scmp.eq.s32.totalorder %s29, 0
      %s32 = sadd.s32 %s31, 1
      %s33 = scalar_select %p30, %s31, %s32
      %p36 = pneg %p30
      %p37 = scmp.eq.s32.totalorder %s9, 1
      %p38 = por %p36, %p37
      %p39 = scmp.ne.s32.totalorder %s31, %s34
      %p40 = scmp.eq.s32.totalorder %s9, 0
      %p41 = por %p39, %p40
      %p42 = scmp.ne.s32.totalorder %s31, %s34
      %p43 = scmp.eq.s32.totalorder %s14, 1
      %p44 = por %p42, %p43
      %p45 = scmp.ne.s32.totalorder %s34, %s35
      %p46 = scmp.eq.s32.totalorder %s14, 0
      %p47 = por %p45, %p46
      %p48 = scmp.ne.s32.totalorder %s34, %s35
      %p49 = scmp.eq.s32.totalorder %s15, 1
      %p50 = por %p48, %p49
      %p52 = scmp.ne.s32.totalorder %s35, %s51
      %p53 = scmp.eq.s32.totalorder %s15, 0
      %p54 = por %p52, %p53
      %s55 = ssub.s32 %s17, %s24
      %s56 = ssub.s32 %s16, %s28
      %s57 = sor.u32 %s55, %s56
      %p58 = scmp.eq.s32.totalorder %s57, 0
      %s60 = sadd.s32 %s59, 1
      %s61 = scalar_select %p58, %s59, %s60
      %p64 = pneg %p58
      %p65 = scmp.eq.s32.totalorder %s9, 1
      %p66 = por %p64, %p65
      %p67 = scmp.ne.s32.totalorder %s59, %s62
      %p68 = scmp.eq.s32.totalorder %s9, 0
      %p69 = por %p67, %p68
      %p70 = scmp.ne.s32.totalorder %s59, %s62
      %p71 = scmp.eq.s32.totalorder %s14, 1
      %p72 = por %p70, %p71
      %p73 = scmp.ne.s32.totalorder %s62, %s63
      %p74 = scmp.eq.s32.totalorder %s14, 0
      %p75 = por %p73, %p74
      %p76 = scmp.ne.s32.totalorder %s62, %s63
      %p77 = scmp.eq.s32.totalorder %s15, 1
      %p78 = por %p76, %p77
      %p80 = scmp.ne.s32.totalorder %s63, %s79
      %p81 = scmp.eq.s32.totalorder %s15, 0
      %p82 = por %p80, %p81
      %s83 = ssub.s32 %s16, %s28
      %p84 = scmp.eq.s32.totalorder %s83, 0
      %s86 = sadd.s32 %s85, 1
      %s87 = scalar_select %p84, %s85, %s86
      %p90 = pneg %p84
      %p91 = scmp.eq.s32.totalorder %s9, 1
      %p92 = por %p90, %p91
      %p93 = scmp.ne.s32.totalorder %s85, %s88
      %p94 = scmp.eq.s32.totalorder %s9, 0
      %p95 = por %p93, %p94
      %p96 = scmp.ne.s32.totalorder %s85, %s88
      %p97 = scmp.eq.s32.totalorder %s14, 1
      %p98 = por %p96, %p97
      %p99 = scmp.ne.s32.totalorder %s88, %s89
      %p100 = scmp.eq.s32.totalorder %s14, 0
      %p101 = por %p99, %p100
      %p102 = scmp.ne.s32.totalorder %s88, %s89
      %p103 = scmp.eq.s32.totalorder %s15, 1
      %p104 = por %p102, %p103
      %p106 = scmp.ne.s32.totalorder %s89, %s105
      %p107 = scmp.eq.s32.totalorder %s15, 0
      %p108 = por %p106, %p107
      %s109 = ssub.s32 %s16, %s28
      %p110 = scmp.eq.s32.totalorder %s109, 0
      %s112 = sadd.s32 %s111, 1
      %s113 = scalar_select %p110, %s111, %s112
      %p116 = pneg %p110
      %p117 = scmp.eq.s32.totalorder %s9, 1
      %p118 = por %p116, %p117
      %p119 = scmp.ne.s32.totalorder %s111, %s114
      %p120 = scmp.eq.s32.totalorder %s9, 0
      %p121 = por %p119, %p120
      %p122 = scmp.ne.s32.totalorder %s111, %s114
      %p123 = scmp.eq.s32.totalorder %s14, 1
      %p124 = por %p122, %p123
      %p125 = scmp.ne.s32.totalorder %s114, %s115
      %p126 = scmp.eq.s32.totalorder %s14, 0
      %p127 = por %p125, %p126
      %p128 = scmp.ne.s32.totalorder %s114, %s115
      %p129 = scmp.eq.s32.totalorder %s15, 1
      %p130 = por %p128, %p129
      %p132 = scmp.ne.s32.totalorder %s115, %s131
      %p133 = scmp.eq.s32.totalorder %s15, 0
      %p134 = por %p132, %p133
      %p135 = scmp.le.s32.totalorder 1, %s9
      %p136 = scmp.lt.s32.totalorder %s9, 3
      %p137 = pnand %p135, %p136
      %p138 = pneg %p137
      // Predicated region
      $region9: #{vggish_linear_forward.15} parent=5 // pred_check
        _
      $region10: #{vggish_linear_forward.15} parent=5 // pred_check_branch
        %140 = sbr.rel (%p137) target = $region12
      $region11: #{vggish_linear_forward.15} parent=5 // pred_region
        %s141 = ssub.s32 %s9, 1
        // Predicated region
        $region13: #{vggish_linear_forward.15} parent=11 // pred_check
          %p142 = pneg %p47
        $region14: #{vggish_linear_forward.15} parent=11 // pred_check_branch
          %144 = sbr.rel (%p142) target = $region16
        $region15: #{vggish_linear_forward.15} parent=11 // pred_region
          %p145 = scmp.lt.s32.totalorder %s19, 0
          %s146 = scalar_select %p145, %s19, 0
          %s147 = scalar_lea.vmem %s0, %s146
        $region16: #{vggish_linear_forward.15} parent=11 // pred_fallthru
          _
      $region12: #{vggish_linear_forward.15} parent=5 // pred_fallthru
        _
      %p148 = scmp.lt.s32.totalorder %s9, 2
      // Predicated region
      $region17: #{vggish_linear_forward.15} parent=5 // pred_check
        %p149 = pneg %p148
      $region18: #{vggish_linear_forward.15} parent=5 // pred_check_branch
        %151 = sbr.rel (%p149) target = $region20
      $region19: #{vggish_linear_forward.15} parent=5 // pred_region
        // Predicated region
        $region21: #{vggish_linear_forward.15} parent=19 // pred_check
          %p152 = pneg %p69
        $region22: #{vggish_linear_forward.15} parent=19 // pred_check_branch
          %154 = sbr.rel (%p152) target = $region24
        $region23: #{vggish_linear_forward.15} parent=19 // pred_region
          %s155 = sand.u32 %s59, 1
          %s156 = sand.u32 %s59, 1
          %s157 = smul.addr %s156, 64
          %s158 = scalar_lea.vmem [#allocation3], %s157
          %s159 = smul.u32 16, %s17
          %s160 = smul.addr %s159, 2
          %s161 = sadd.s32 %s16, %s160
          %s162 = smul.addr %s161, 4
          %s163 = scalar_lea.vmem %s1, %s162
          // Predicated region
          $region25: #{vggish_linear_forward.15} parent=23 // pred_check
            _
          $region26: #{vggish_linear_forward.15} parent=23 // pred_check_branch
            %165 = sbr.rel (0) target = $region28
          $region27: #{vggish_linear_forward.15} parent=23 // pred_region
            // Predicated region
            $region29: #{vggish_linear_forward.15} parent=27 // pred_check
              _
            $region30: #{vggish_linear_forward.15} parent=27 // pred_check_branch
              %167 = sbr.rel target = $region32
            $region31: #{vggish_linear_forward.15} parent=27 // pred_region
              // Predicated region
              $region44: #{vggish_linear_forward.15} parent=31 // pred_check
                _
              $region45: #{vggish_linear_forward.15} parent=31 // pred_check_branch
                %213 = sbr.rel (0) target = $region47
              $region46: #{vggish_linear_forward.15} parent=31 // pred_region
                loop: start=0, step=1, limit=1
                $region48: #{vggish_linear_forward.15} parent=46 // loop_pre_header
                  _
                $region49: #{vggish_linear_forward.15} parent=46 // loop_header
                  %s215 = sphi 0, %s219
                  %p216 = scmp.ge.s32.totalorder %s215, 1
                  %s220 = sphi %s163, %s163
                  %s221 = sphi %s158, %s158
                $region50: #{vggish_linear_forward.15} parent=46 // loop_header_branch
                  %218 = sbr.rel (%p216) target = $region54
                $region51: #{vggish_linear_forward.15} parent=46 // loop_body
                  _
                $region52: #{vggish_linear_forward.15} parent=46 // loop_footer
                  %s219 = sadd.s32 1, %s215
                $region53: #{vggish_linear_forward.15} parent=46 // loop_footer_branch
                  %214 = sbr.rel target = $region49
                $region54: #{vggish_linear_forward.15} parent=46 // loop_exit
                  _
                %s223 = ssub.s32 16, 1
                loop: start=0, step=1, limit=1
                $region55: #{vggish_linear_forward.15} parent=46 // loop_pre_header
                  _
                $region56: #{vggish_linear_forward.15} parent=46 // loop_header
                  %s225 = sphi 0, %s229
                  %p226 = scmp.ge.s32.totalorder %s225, 1
                  %s230 = sphi %s163, %s163
                  %s231 = sphi %s158, %s158
                $region57: #{vggish_linear_forward.15} parent=46 // loop_header_branch
                  %228 = sbr.rel (%p226) target = $region61
                $region58: #{vggish_linear_forward.15} parent=46 // loop_body
                  %v232 = vld [vmem:[%s230] sm:%s223]
                  %233 = vst [vmem:[%s231] sm:%s223] %v232
                  %v234 = vld [vmem:[%s230 + $0x8] sm:%s223]
                  %235 = vst [vmem:[%s231 + $0x4] sm:%s223] %v234
                  %v236 = vld [vmem:[%s230 + $0x10] sm:%s223]
                  %237 = vst [vmem:[%s231 + $0x8] sm:%s223] %v236
                  %v238 = vld [vmem:[%s230 + $0x18] sm:%s223]
                  %239 = vst [vmem:[%s231 + $0xc] sm:%s223] %v238
                  %v240 = vld [vmem:[%s230 + $0x20] sm:%s223]
                  %241 = vst [vmem:[%s231 + $0x10] sm:%s223] %v240
                  %v242 = vld [vmem:[%s230 + $0x28] sm:%s223]
                  %243 = vst [vmem:[%s231 + $0x14] sm:%s223] %v242
                  %v244 = vld [vmem:[%s230 + $0x30] sm:%s223]
                  %245 = vst [vmem:[%s231 + $0x18] sm:%s223] %v244
                  %v246 = vld [vmem:[%s230 + $0x38] sm:%s223]
                  %247 = vst [vmem:[%s231 + $0x1c] sm:%s223] %v246
                  %v248 = vld [vmem:[%s230 + $0x40] sm:%s223]
                  %249 = vst [vmem:[%s231 + $0x20] sm:%s223] %v248
                  %v250 = vld [vmem:[%s230 + $0x48] sm:%s223]
                  %251 = vst [vmem:[%s231 + $0x24] sm:%s223] %v250
                  %v252 = vld [vmem:[%s230 + $0x50] sm:%s223]
                  %253 = vst [vmem:[%s231 + $0x28] sm:%s223] %v252
                  %v254 = vld [vmem:[%s230 + $0x58] sm:%s223]
                  %255 = vst [vmem:[%s231 + $0x2c] sm:%s223] %v254
                  %v256 = vld [vmem:[%s230 + $0x60] sm:%s223]
                  %257 = vst [vmem:[%s231 + $0x30] sm:%s223] %v256
                  %v258 = vld [vmem:[%s230 + $0x68] sm:%s223]
                  %259 = vst [vmem:[%s231 + $0x34] sm:%s223] %v258
                  %v260 = vld [vmem:[%s230 + $0x70] sm:%s223]
                  %261 = vst [vmem:[%s231 + $0x38] sm:%s223] %v260
                  %v262 = vld [vmem:[%s230 + $0x78] sm:%s223]
                  %263 = vst [vmem:[%s231 + $0x3c] sm:%s223] %v262
                $region59: #{vggish_linear_forward.15} parent=46 // loop_footer
                  %s229 = sadd.s32 1, %s225
                $region60: #{vggish_linear_forward.15} parent=46 // loop_footer_branch
                  %224 = sbr.rel target = $region56
                $region61: #{vggish_linear_forward.15} parent=46 // loop_exit
                  _
              $region47: #{vggish_linear_forward.15} parent=31 // pred_fallthru
                _
            $region32: #{vggish_linear_forward.15} parent=27 // pred_fallthru
              _
            // Predicated region
            $region33: #{vggish_linear_forward.15} parent=27 // pred_check
              _
            $region34: #{vggish_linear_forward.15} parent=27 // pred_check_branch
              %169 = sbr.rel (0) target = $region36
            $region35: #{vggish_linear_forward.15} parent=27 // pred_region
              %s171 = ssub.s32 16, 1
              loop: start=0, step=1, limit=1
              $region37: #{vggish_linear_forward.15} parent=35 // loop_pre_header
                _
              $region38: #{vggish_linear_forward.15} parent=35 // loop_header
                %s173 = sphi 0, %s177
                %p174 = scmp.ge.s32.totalorder %s173, 1
                %s178 = sphi %s163, %s163
                %s179 = sphi %s158, %s158
              $region39: #{vggish_linear_forward.15} parent=35 // loop_header_branch
                %176 = sbr.rel (%p174) target = $region43
              $region40: #{vggish_linear_forward.15} parent=35 // loop_body
                %v180 = vld [vmem:[%s178] sm:%s171]
                %181 = vst [vmem:[%s179] sm:%s171] %v180
                %v182 = vld [vmem:[%s178 + $0x8] sm:%s171]
                %183 = vst [vmem:[%s179 + $0x4] sm:%s171] %v182
                %v184 = vld [vmem:[%s178 + $0x10] sm:%s171]
                %185 = vst [vmem:[%s179 + $0x8] sm:%s171] %v184
                %v186 = vld [vmem:[%s178 + $0x18] sm:%s171]
                %187 = vst [vmem:[%s179 + $0xc] sm:%s171] %v186
                %v188 = vld [vmem:[%s178 + $0x20] sm:%s171]
                %189 = vst [vmem:[%s179 + $0x10] sm:%s171] %v188
                %v190 = vld [vmem:[%s178 + $0x28] sm:%s171]
                %191 = vst [vmem:[%s179 + $0x14] sm:%s171] %v190
                %v192 = vld [vmem:[%s178 + $0x30] sm:%s171]
                %193 = vst [vmem:[%s179 + $0x18] sm:%s171] %v192
                %v194 = vld [vmem:[%s178 + $0x38] sm:%s171]
                %195 = vst [vmem:[%s179 + $0x1c] sm:%s171] %v194
                %v196 = vld [vmem:[%s178 + $0x40] sm:%s171]
                %197 = vst [vmem:[%s179 + $0x20] sm:%s171] %v196
                %v198 = vld [vmem:[%s178 + $0x48] sm:%s171]
                %199 = vst [vmem:[%s179 + $0x24] sm:%s171] %v198
                %v200 = vld [vmem:[%s178 + $0x50] sm:%s171]
                %201 = vst [vmem:[%s179 + $0x28] sm:%s171] %v200
                %v202 = vld [vmem:[%s178 + $0x58] sm:%s171]
                %203 = vst [vmem:[%s179 + $0x2c] sm:%s171] %v202
                %v204 = vld [vmem:[%s178 + $0x60] sm:%s171]
                %205 = vst [vmem:[%s179 + $0x30] sm:%s171] %v204
                %v206 = vld [vmem:[%s178 + $0x68] sm:%s171]
                %207 = vst [vmem:[%s179 + $0x34] sm:%s171] %v206
                %v208 = vld [vmem:[%s178 + $0x70] sm:%s171]
                %209 = vst [vmem:[%s179 + $0x38] sm:%s171] %v208
                %v210 = vld [vmem:[%s178 + $0x78] sm:%s171]
                %211 = vst [vmem:[%s179 + $0x3c] sm:%s171] %v210
              $region41: #{vggish_linear_forward.15} parent=35 // loop_footer
                %s177 = sadd.s32 1, %s173
              $region42: #{vggish_linear_forward.15} parent=35 // loop_footer_branch
                %172 = sbr.rel target = $region38
              $region43: #{vggish_linear_forward.15} parent=35 // loop_exit
                _
            $region36: #{vggish_linear_forward.15} parent=27 // pred_fallthru
              _
          $region28: #{vggish_linear_forward.15} parent=23 // pred_fallthru
            _
          %264 = vnop
        $region24: #{vggish_linear_forward.15} parent=19 // pred_fallthru
          _
        // Predicated region
        $region62: #{vggish_linear_forward.15} parent=19 // pred_check
          %p265 = pneg %p95
        $region63: #{vggish_linear_forward.15} parent=19 // pred_check_branch
          %267 = sbr.rel (%p265) target = $region65
        $region64: #{vggish_linear_forward.15} parent=19 // pred_region
          %p268 = scmp.lt.s32.totalorder %s16, 1
          %s269 = scalar_select %p268, %s16, 1
          %s270 = scalar_lea.vmem %s2, %s269
        $region65: #{vggish_linear_forward.15} parent=19 // pred_fallthru
          _
      $region20: #{vggish_linear_forward.15} parent=5 // pred_fallthru
        _
      %p271 = scmp.le.s32.totalorder 1, %s9
      %p272 = scmp.lt.s32.totalorder %s9, 3
      %p273 = pnand %p271, %p272
      %p274 = pneg %p273
      // Predicated region
      $region66: #{vggish_linear_forward.15} parent=5 // pred_check
        _
      $region67: #{vggish_linear_forward.15} parent=5 // pred_check_branch
        %276 = sbr.rel (%p273) target = $region69
      $region68: #{vggish_linear_forward.15} parent=5 // pred_region
        %s277 = ssub.s32 %s9, 1
        %s278 = sand.u32 %s62, 1
        %s279 = sand.u32 %s62, 1
        %s280 = smul.addr %s279, 64
        %s281 = scalar_lea.vmem [#allocation3], %s280
        // Predicated region
        $region70: #{vggish_linear_forward.15} parent=68 // pred_check
          %p282 = pneg %p75
        $region71: #{vggish_linear_forward.15} parent=68 // pred_check_branch
          %284 = sbr.rel (%p282) target = $region73
        $region72: #{vggish_linear_forward.15} parent=68 // pred_region
          _
        $region73: #{vggish_linear_forward.15} parent=68 // pred_fallthru
          _
        %p285 = scmp.lt.s32.totalorder %s19, 0
        %s286 = scalar_select %p285, %s19, 0
        %s287 = scalar_lea.vmem %s0, %s286
        %p288 = pneg %p47
        %p289 = pneg %p44
        %s290 = sand.u32 %s62, 1
        %s291 = sand.u32 %s62, 1
        %s292 = smul.addr %s291, 64
        %s293 = scalar_lea.vmem [#allocation3], %s292
        %p294 = pneg %p75
        %p295 = pneg %p72
        %p296 = scmp.lt.s32.totalorder %s18, 1
        %s297 = scalar_select %p296, %s18, 1
        %s298 = scalar_lea.vmem %s2, %s297
        %p299 = pneg %p101
        %p300 = pneg %p98
        %p301 = pneg %p127
        %p302 = pneg %p124
        %p303 = scmp.lt.s32.totalorder %s18, 1
        %s304 = scalar_select %p303, %s18, 1
        %s305 = scalar_lea.vmem %s3, %s304
        %p306 = scmp.lt.s32.totalorder %s19, 0
        %s307 = scalar_select %p306, %s19, 0
        %s308 = scalar_lea.vmem %s0, %s307
        %s309 = smul.u32 16, %s19
        %p310 = scmp.lt.s32.totalorder %s18, 1
        %s311 = scalar_select %p310, %s18, 1
        %s312 = scalar_lea.vmem %s2, %s311
        %p313 = scmp.lt.s32.totalorder %s18, 1
        %s314 = scalar_select %p313, %s18, 1
        %s315 = scalar_lea.vmem %s3, %s314
        %p316 = scmp.eq.s32.totalorder %s19, 0
        // Predicated region
        $region74: #{vggish_linear_forward.15} parent=68 // pred_check
          %p317 = pneg %p316
        $region75: #{vggish_linear_forward.15} parent=68 // pred_check_branch
          %319 = sbr.rel (%p317) target = $region77
        $region76: #{vggish_linear_forward.15} parent=68 // pred_region
          %320 = vst [vmem:[#allocation2] sm:$0x3] 0.0
        $region77: #{vggish_linear_forward.15} parent=68 // pred_fallthru
          _
        %v321 = vld [vmem:[#allocation2] sm:$0x3]
        %v322 = vld [vmem:[%s308] sm:$0x1]
        %v323 = vld [vmem:[%s281] sm:$0xf]
        %v324 = vld [vmem:[%s281 + $0x4] sm:$0xf]
        %v325 = vld [vmem:[%s281 + $0x8] sm:$0xf]
        %v326 = vld [vmem:[%s281 + $0xc] sm:$0xf]
        %v327 = vld [vmem:[%s281 + $0x10] sm:$0xf]
        %v328 = vld [vmem:[%s281 + $0x14] sm:$0xf]
        %v329 = vld [vmem:[%s281 + $0x18] sm:$0xf]
        %v330 = vld [vmem:[%s281 + $0x1c] sm:$0xf]
        %v331 = vld [vmem:[%s281 + $0x20] sm:$0xf]
        %v332 = vld [vmem:[%s281 + $0x24] sm:$0xf]
        %v333 = vld [vmem:[%s281 + $0x28] sm:$0xf]
        %v334 = vld [vmem:[%s281 + $0x2c] sm:$0xf]
        %v335 = vld [vmem:[%s281 + $0x30] sm:$0xf]
        %v336 = vld [vmem:[%s281 + $0x34] sm:$0xf]
        %v337 = vld [vmem:[%s281 + $0x38] sm:$0xf]
        %v338 = vld [vmem:[%s281 + $0x3c] sm:$0xf]
        %v355 = vunpack.c.l.b16 %v323
        %v356 = vunpack.c.l.b16 %v324
        %v357 = vunpack.c.l.b16 %v325
        %v358 = vunpack.c.l.b16 %v326
        %v359 = vunpack.c.l.b16 %v327
        %v360 = vunpack.c.l.b16 %v328
        %v361 = vunpack.c.l.b16 %v329
        %v362 = vunpack.c.l.b16 %v330
        %v363 = vunpack.c.l.b16 %v331
        %v364 = vunpack.c.l.b16 %v332
        %v365 = vunpack.c.l.b16 %v333
        %v366 = vunpack.c.l.b16 %v334
        %v367 = vunpack.c.l.b16 %v335
        %v368 = vunpack.c.l.b16 %v336
        %v369 = vunpack.c.l.b16 %v337
        %v370 = vunpack.c.l.b16 %v338
        %v371 = vpack.c.b16 %v356, %v355
        %v372 = vpack.c.b16 %v358, %v357
        %v373 = vpack.c.b16 %v360, %v359
        %v374 = vpack.c.b16 %v362, %v361
        %v375 = vpack.c.b16 %v364, %v363
        %v376 = vpack.c.b16 %v366, %v365
        %v377 = vpack.c.b16 %v368, %v367
        %v378 = vpack.c.b16 %v370, %v369
        %387 = vmatpush.bf16.msra.mxu0 %v378
        %388 = vmatpush.bf16.msra.mxu0 %v377
        %389 = vmatpush.bf16.msra.mxu0 %v376
        %390 = vmatpush.bf16.msra.mxu0 %v375
        %391 = vmatpush.bf16.msra.mxu0 %v374
        %392 = vmatpush.bf16.msra.mxu0 %v373
        %393 = vmatpush.bf16.msra.mxu0 %v372
        %394 = vmatpush.bf16.msra.mxu0 %v371
        %395 = vmatmul.bf16.gmra.mxu0 %v322
        %v396 = vpop.f32.mrf.mxu0
        %v397 = vadd.f32 0.0, %v396
        %v398 = vpop.f32.mrf.mxu0
        %399 = vdwg.mxu0
        %v400 = vadd.f32 %v321, %v397
        %401 = vst [vmem:[#allocation2] sm:$0x3] %v400
        // Predicated region
        $region78: #{vggish_linear_forward.15} parent=68 // pred_check
          %p402 = pneg %p316
        $region79: #{vggish_linear_forward.15} parent=68 // pred_check_branch
          %404 = sbr.rel (%p402) target = $region81
        $region80: #{vggish_linear_forward.15} parent=68 // pred_region
          %v405 = vld [vmem:[#allocation2] sm:$0x3]
          %v406 = vld [vmem:[%s312] sm:$0x1]
          %v408 = vperm.slane %v406, 0
          %v410 = vadd.f32 %v405, %v408
          %v411 = vmax.f32 %v410, 0.0
          %v412 = vpack.c.bf16 %v411, %v411
          %413 = vst [vmem:[%s315] sm:$0x1] %v412
        $region81: #{vggish_linear_forward.15} parent=68 // pred_fallthru
          _
        %p414 = scmp.lt.s32.totalorder %s18, 1
        %s415 = scalar_select %p414, %s18, 1
        %s416 = scalar_lea.vmem %s3, %s415
        // Predicated region
        $region82: #{vggish_linear_forward.15} parent=68 // pred_check
          %p417 = pneg %p124
        $region83: #{vggish_linear_forward.15} parent=68 // pred_check_branch
          %419 = sbr.rel (%p417) target = $region85
        $region84: #{vggish_linear_forward.15} parent=68 // pred_region
          _
        $region85: #{vggish_linear_forward.15} parent=68 // pred_fallthru
          _
      $region69: #{vggish_linear_forward.15} parent=5 // pred_fallthru
        _
      %p420 = scmp.le.s32.totalorder 2, %s9
      // Predicated region
      $region86: #{vggish_linear_forward.15} parent=5 // pred_check
        %p421 = pneg %p420
      $region87: #{vggish_linear_forward.15} parent=5 // pred_check_branch
        %423 = sbr.rel (%p421) target = $region89
      $region88: #{vggish_linear_forward.15} parent=5 // pred_region
        %s424 = ssub.s32 %s9, 2
        // Predicated region
        $region90: #{vggish_linear_forward.15} parent=88 // pred_check
          %p425 = pneg %p130
        $region91: #{vggish_linear_forward.15} parent=88 // pred_check_branch
          %427 = sbr.rel (%p425) target = $region93
        $region92: #{vggish_linear_forward.15} parent=88 // pred_region
          %p428 = scmp.lt.s32.totalorder %s20, 1
          %s429 = scalar_select %p428, %s20, 1
          %s430 = scalar_lea.vmem %s3, %s429
        $region93: #{vggish_linear_forward.15} parent=88 // pred_fallthru
          _
      $region89: #{vggish_linear_forward.15} parent=5 // pred_fallthru
        _
    $region6: #{vggish_linear_forward.15} parent=1 // loop_footer
      %s13 = sadd.s32 1, %s9
    $region7: #{vggish_linear_forward.15} parent=1 // loop_footer_branch
      %8 = sbr.rel target = $region3
    $region8: #{vggish_linear_forward.15} parent=1 // loop_exit
      _

// kernel: vggish_linear_forward.14
$region0: #{vggish_linear_forward.14}
  #allocation0 [shape = 'u32[]', space=smem, size = 0x4, offset = 0x4, fixed_abs, tag = 'smem constant byte address 0x4 - core index']
  #allocation1 [shape = 'u32[72,128]{1,0:T(1,128)}', space=vmem, size = 0x9000, scoped, tag = 'internal scratch']
  %s0 = inlined_call_operand.vmem [shape: bf16[2,28,64], index: 0, kind: input, shape index: {}]
  %s1 = inlined_call_operand.vmem [shape: bf16[9,64,64], index: 1, kind: input, shape index: {}]
  %s2 = inlined_call_operand.vmem [shape: f32[1,64], index: 2, kind: input, shape index: {}]
  %s3 = inlined_call_operand.vmem [shape: bf16[2,16,64], index: 3, kind: output, shape index: {}]
  %s4 = sld [smem:[#allocation0]]
  $region45: #{vggish_linear_forward.14} parent=0
    _
  %s6 = ssub.s32 1, %s4
  %s7 = scalar_select 0, %s6, %s4
  loop: start=0, step=1, limit=4
  $region2: #{vggish_linear_forward.14} parent=0 // loop_pre_header
    _
  $region3: #{vggish_linear_forward.14} parent=0 // loop_header
    %s9 = sphi 0, %s13
    %p10 = scmp.ge.s32.totalorder %s9, 4
    %s19 = sphi 0, %s21
    %s22 = sphi 0, %s19
    %s23 = sphi 0, %s22
    %s39 = sphi 0, %s23
    %s43 = sphi 0, %s43
    %s45 = sphi 0, %s43
    %s46 = sphi 0, %s45
    %s60 = sphi 0, %s46
    %s64 = sphi 0, %s64
    %s66 = sphi 0, %s64
    %s67 = sphi 0, %s66
    %s81 = sphi 0, %s67
    %s87 = sphi 0, %s89
    %s90 = sphi 0, %s87
    %s91 = sphi 0, %s90
    %s107 = sphi 0, %s91
  $region4: #{vggish_linear_forward.14} parent=0 // loop_header_branch
    %12 = sbr.rel (%p10) target = $region8
  $region5: #{vggish_linear_forward.14} parent=0 // loop_body
    %s14 = ssub.s32 %s9, 1
    %s15 = ssub.s32 %s9, 2
    %s16 = sadd.s32 %s9, 1
    %s17 = ssub.s32 %s9, %s16
    %p18 = scmp.eq.s32.totalorder %s17, 0
    %s20 = sadd.s32 %s19, 1
    %s21 = scalar_select %p18, %s19, %s20
    %p24 = pneg %p18
    %p25 = scmp.eq.s32.totalorder %s9, 1
    %p26 = por %p24, %p25
    %p27 = scmp.ne.s32.totalorder %s19, %s22
    %p28 = scmp.eq.s32.totalorder %s9, 0
    %p29 = por %p27, %p28
    %p30 = scmp.ne.s32.totalorder %s19, %s22
    %p31 = scmp.eq.s32.totalorder %s14, 1
    %p32 = por %p30, %p31
    %p33 = scmp.ne.s32.totalorder %s22, %s23
    %p34 = scmp.eq.s32.totalorder %s14, 0
    %p35 = por %p33, %p34
    %p36 = scmp.ne.s32.totalorder %s22, %s23
    %p37 = scmp.eq.s32.totalorder %s15, 1
    %p38 = por %p36, %p37
    %p40 = scmp.ne.s32.totalorder %s23, %s39
    %p41 = scmp.eq.s32.totalorder %s15, 0
    %p42 = por %p40, %p41
    %s44 = sadd.s32 %s43, 1
    %p47 = scmp.eq.s32.totalorder %s9, 1
    %p48 = scmp.ne.s32.totalorder %s43, %s45
    %p49 = scmp.eq.s32.totalorder %s9, 0
    %p50 = por %p48, %p49
    %p51 = scmp.ne.s32.totalorder %s43, %s45
    %p52 = scmp.eq.s32.totalorder %s14, 1
    %p53 = por %p51, %p52
    %p54 = scmp.ne.s32.totalorder %s45, %s46
    %p55 = scmp.eq.s32.totalorder %s14, 0
    %p56 = por %p54, %p55
    %p57 = scmp.ne.s32.totalorder %s45, %s46
    %p58 = scmp.eq.s32.totalorder %s15, 1
    %p59 = por %p57, %p58
    %p61 = scmp.ne.s32.totalorder %s46, %s60
    %p62 = scmp.eq.s32.totalorder %s15, 0
    %p63 = por %p61, %p62
    %s65 = sadd.s32 %s64, 1
    %p68 = scmp.eq.s32.totalorder %s9, 1
    %p69 = scmp.ne.s32.totalorder %s64, %s66
    %p70 = scmp.eq.s32.totalorder %s9, 0
    %p71 = por %p69, %p70
    %p72 = scmp.ne.s32.totalorder %s64, %s66
    %p73 = scmp.eq.s32.totalorder %s14, 1
    %p74 = por %p72, %p73
    %p75 = scmp.ne.s32.totalorder %s66, %s67
    %p76 = scmp.eq.s32.totalorder %s14, 0
    %p77 = por %p75, %p76
    %p78 = scmp.ne.s32.totalorder %s66, %s67
    %p79 = scmp.eq.s32.totalorder %s15, 1
    %p80 = por %p78, %p79
    %p82 = scmp.ne.s32.totalorder %s67, %s81
    %p83 = scmp.eq.s32.totalorder %s15, 0
    %p84 = por %p82, %p83
    %s85 = ssub.s32 %s9, %s16
    %p86 = scmp.eq.s32.totalorder %s85, 0
    %s88 = sadd.s32 %s87, 1
    %s89 = scalar_select %p86, %s87, %s88
    %p92 = pneg %p86
    %p93 = scmp.eq.s32.totalorder %s9, 1
    %p94 = por %p92, %p93
    %p95 = scmp.ne.s32.totalorder %s87, %s90
    %p96 = scmp.eq.s32.totalorder %s9, 0
    %p97 = por %p95, %p96
    %p98 = scmp.ne.s32.totalorder %s87, %s90
    %p99 = scmp.eq.s32.totalorder %s14, 1
    %p100 = por %p98, %p99
    %p101 = scmp.ne.s32.totalorder %s90, %s91
    %p102 = scmp.eq.s32.totalorder %s14, 0
    %p103 = por %p101, %p102
    %p104 = scmp.ne.s32.totalorder %s90, %s91
    %p105 = scmp.eq.s32.totalorder %s15, 1
    %p106 = por %p104, %p105
    %p108 = scmp.ne.s32.totalorder %s91, %s107
    %p109 = scmp.eq.s32.totalorder %s15, 0
    %p110 = por %p108, %p109
    %p111 = scmp.le.s32.totalorder 1, %s9
    %p112 = scmp.lt.s32.totalorder %s9, 3
    %p113 = pnand %p111, %p112
    %p114 = pneg %p113
    // Predicated region
    $region9: #{vggish_linear_forward.14} parent=5 // pred_check
      _
    $region10: #{vggish_linear_forward.14} parent=5 // pred_check_branch
      %116 = sbr.rel (%p113) target = $region12
    $region11: #{vggish_linear_forward.14} parent=5 // pred_region
      %s117 = ssub.s32 %s9, 1
      // Predicated region
      $region13: #{vggish_linear_forward.14} parent=11 // pred_check
        %p118 = pneg %p56
      $region14: #{vggish_linear_forward.14} parent=11 // pred_check_branch
        %120 = sbr.rel (%p118) target = $region16
      $region15: #{vggish_linear_forward.14} parent=11 // pred_region
        _
      $region16: #{vggish_linear_forward.14} parent=11 // pred_fallthru
        _
      // Predicated region
      $region17: #{vggish_linear_forward.14} parent=11 // pred_check
        %p121 = pneg %p77
      $region18: #{vggish_linear_forward.14} parent=11 // pred_check_branch
        %123 = sbr.rel (%p121) target = $region20
      $region19: #{vggish_linear_forward.14} parent=11 // pred_region
        _
      $region20: #{vggish_linear_forward.14} parent=11 // pred_fallthru
        _
    $region12: #{vggish_linear_forward.14} parent=5 // pred_fallthru
      _
    %p124 = scmp.lt.s32.totalorder %s9, 2
    // Predicated region
    $region21: #{vggish_linear_forward.14} parent=5 // pred_check
      %p125 = pneg %p124
    $region22: #{vggish_linear_forward.14} parent=5 // pred_check_branch
      %127 = sbr.rel (%p125) target = $region24
    $region23: #{vggish_linear_forward.14} parent=5 // pred_region
      // Predicated region
      $region25: #{vggish_linear_forward.14} parent=23 // pred_check
        %p128 = pneg %p29
      $region26: #{vggish_linear_forward.14} parent=23 // pred_check_branch
        %130 = sbr.rel (%p128) target = $region28
      $region27: #{vggish_linear_forward.14} parent=23 // pred_region
        %p131 = scmp.lt.s32.totalorder %s9, 1
        %s132 = scalar_select %p131, %s9, 1
        %s133 = smul.addr %s132, 4
        %s134 = smul.addr %s133, 4
        %s135 = scalar_lea.vmem %s0, %s134
      $region28: #{vggish_linear_forward.14} parent=23 // pred_fallthru
        _
    $region24: #{vggish_linear_forward.14} parent=5 // pred_fallthru
      _
    %p136 = scmp.le.s32.totalorder 1, %s9
    %p137 = scmp.lt.s32.totalorder %s9, 3
    %p138 = pnand %p136, %p137
    %p139 = pneg %p138
    // Predicated region
    $region29: #{vggish_linear_forward.14} parent=5 // pred_check
      _
    $region30: #{vggish_linear_forward.14} parent=5 // pred_check_branch
      %141 = sbr.rel (%p138) target = $region32
    $region31: #{vggish_linear_forward.14} parent=5 // pred_region
      %s142 = ssub.s32 %s9, 1
      %p143 = scmp.lt.s32.totalorder %s14, 1
      %s144 = scalar_select %p143, %s14, 1
      %s145 = smul.addr %s144, 4
      %s146 = smul.addr %s145, 4
      %s147 = scalar_lea.vmem %s0, %s146
      %p148 = pneg %p35
      %p149 = pneg %p32
      %p150 = pneg %p56
      %p151 = pneg %p53
      %p152 = pneg %p77
      %p153 = pneg %p74
      %p154 = pneg %p103
      %p155 = pneg %p100
      %p156 = scmp.lt.s32.totalorder %s14, 1
      %s157 = scalar_select %p156, %s14, 1
      %s158 = smul.addr %s157, 2
      %s159 = smul.addr %s158, 4
      %s160 = scalar_lea.vmem %s3, %s159
      %p161 = scmp.lt.s32.totalorder %s14, 1
      %s162 = scalar_select %p161, %s14, 1
      %s163 = smul.addr %s162, 4
      %s164 = smul.addr %s163, 4
      %s165 = scalar_lea.vmem %s0, %s164
      %p166 = scmp.lt.s32.totalorder %s14, 1
      %s167 = scalar_select %p166, %s14, 1
      %s168 = smul.addr %s167, 2
      %s169 = smul.addr %s168, 4
      %s170 = scalar_lea.vmem %s3, %s169
      %v172 = vld [vmem:[%s165] sm:$0xf]
      %v173 = vld [vmem:[%s165 + $0x4] sm:$0xf]
      %v174 = vld [vmem:[%s165 + $0x8] sm:$0xf]
      %v175 = vld [vmem:[%s165 + $0xc] sm:$0x3]
      %v176 = vunpack.c.l.bf16 %v172
      %v177 = vunpack.c.l.bf16 %v173
      %v178 = vunpack.c.l.bf16 %v174
      %v179 = vunpack.c.l.bf16 %v175
      %v180 = vld [vmem:[%s1] sm:$0xf]
      %v181 = vld [vmem:[%s1 + $0x4] sm:$0xf]
      %v182 = vld [vmem:[%s1 + $0x8] sm:$0xf]
      %v183 = vld [vmem:[%s1 + $0xc] sm:$0xf]
      %v184 = vld [vmem:[%s1 + $0x10] sm:$0xf]
      %v185 = vld [vmem:[%s1 + $0x14] sm:$0xf]
      %v186 = vld [vmem:[%s1 + $0x18] sm:$0xf]
      %v187 = vld [vmem:[%s1 + $0x1c] sm:$0xf]
      %v188 = vpack.c.bf16 %v177, %v176
      %s189 = scalar_lea.vmem %s1, 32
      %v190 = vld [vmem:[%s189] sm:$0xf]
      %v191 = vld [vmem:[%s189 + $0x4] sm:$0xf]
      %v192 = vld [vmem:[%s189 + $0x8] sm:$0xf]
      %v193 = vld [vmem:[%s189 + $0xc] sm:$0xf]
      %v194 = vld [vmem:[%s189 + $0x10] sm:$0xf]
      %v195 = vld [vmem:[%s189 + $0x14] sm:$0xf]
      %v196 = vld [vmem:[%s189 + $0x18] sm:$0xf]
      %v197 = vld [vmem:[%s189 + $0x1c] sm:$0xf]
      %v198 = vpack.c.bf16 %v178, %v178
      %vm199 = vsmask.f32 7424
      %v201 = vshrl.u32 %v188, 16
      %v203 = vshll.u32 %v188, 16
      %v205 = vrot.slane %v203, 1
      %v206 = vor.u32 %v201, %v205
      %v208 = vshll.u32 %v198, 16
      %v210 = vrot.slane %v208, 1
      %v211 = vsel %vm199, %v206, %v210
      %v220 = vunpack.c.l.b16 %v190
      %v221 = vunpack.c.l.b16 %v191
      %v222 = vunpack.c.l.b16 %v192
      %v223 = vunpack.c.l.b16 %v193
      %v224 = vunpack.c.l.b16 %v194
      %v225 = vunpack.c.l.b16 %v195
      %v226 = vunpack.c.l.b16 %v196
      %v227 = vunpack.c.l.b16 %v197
      %v228 = vpack.c.b16 %v221, %v220
      %v229 = vpack.c.b16 %v223, %v222
      %v230 = vpack.c.b16 %v225, %v224
      %v231 = vpack.c.b16 %v227, %v226
      %vm236 = vcmask 523264
      %v238 = vsel %vm236, %v211, 0
      %240 = vmatpush.bf16.msra.mxu0 0
      %241 = vmatpush.bf16.msra.mxu0 0
      %242 = vmatpush.bf16.msra.mxu0 0
      %243 = vmatpush.bf16.msra.mxu0 0
      %244 = vmatpush.bf16.msra.mxu0 %v231
      %245 = vmatpush.bf16.msra.mxu0 %v230
      %246 = vmatpush.bf16.msra.mxu0 %v229
      %247 = vmatpush.bf16.msra.mxu0 %v228
      %248 = vmatmul.bf16.gmra.mxu0 %v238
      %v249 = vpop.f32.mrf.mxu0
      %v250 = vadd.f32 0.0, %v249
      %v251 = vpop.f32.mrf.mxu0
      %v252 = vadd.f32 0.0, %v251
      %253 = vdwg.mxu0
      %v262 = vunpack.c.l.b16 %v180
      %v263 = vunpack.c.l.b16 %v181
      %v264 = vunpack.c.l.b16 %v182
      %v265 = vunpack.c.l.b16 %v183
      %v266 = vunpack.c.l.b16 %v184
      %v267 = vunpack.c.l.b16 %v185
      %v268 = vunpack.c.l.b16 %v186
      %v269 = vunpack.c.l.b16 %v187
      %v270 = vpack.c.b16 %v263, %v262
      %v271 = vpack.c.b16 %v265, %v264
      %v272 = vpack.c.b16 %v267, %v266
      %v273 = vpack.c.b16 %v269, %v268
      %v278 = vsel %vm236, %v188, 0
      %280 = vmatpush.bf16.msra.mxu0 0
      %281 = vmatpush.bf16.msra.mxu0 0
      %282 = vmatpush.bf16.msra.mxu0 0
      %283 = vmatpush.bf16.msra.mxu0 0
      %284 = vmatpush.bf16.msra.mxu0 %v273
      %285 = vmatpush.bf16.msra.mxu0 %v272
      %286 = vmatpush.bf16.msra.mxu0 %v271
      %287 = vmatpush.bf16.msra.mxu0 %v270
      %288 = vmatmul.bf16.gmra.mxu0 %v278
      %v289 = vpop.f32.mrf.mxu0
      %v290 = vadd.f32 %v250, %v289
      %v291 = vpop.f32.mrf.mxu0
      %v292 = vadd.f32 %v252, %v291
      %293 = vdwg.mxu0
      %s294 = scalar_lea.vmem %s1, 64
      %v295 = vld [vmem:[%s294] sm:$0xf]
      %v296 = vld [vmem:[%s294 + $0x4] sm:$0xf]
      %v297 = vld [vmem:[%s294 + $0x8] sm:$0xf]
      %v298 = vld [vmem:[%s294 + $0xc] sm:$0xf]
      %v299 = vld [vmem:[%s294 + $0x10] sm:$0xf]
      %v300 = vld [vmem:[%s294 + $0x14] sm:$0xf]
      %v301 = vld [vmem:[%s294 + $0x18] sm:$0xf]
      %v302 = vld [vmem:[%s294 + $0x1c] sm:$0xf]
      %vm305 = vcmask 1046528
      %v306 = vrot.slane %v188, 1
      %v307 = vrot.slane %v198, 1
      %v308 = vsel %vm305, %v306, %v307
      %v317 = vunpack.c.l.b16 %v295
      %v318 = vunpack.c.l.b16 %v296
      %v319 = vunpack.c.l.b16 %v297
      %v320 = vunpack.c.l.b16 %v298
      %v321 = vunpack.c.l.b16 %v299
      %v322 = vunpack.c.l.b16 %v300
      %v323 = vunpack.c.l.b16 %v301
      %v324 = vunpack.c.l.b16 %v302
      %v325 = vpack.c.b16 %v318, %v317
      %v326 = vpack.c.b16 %v320, %v319
      %v327 = vpack.c.b16 %v322, %v321
      %v328 = vpack.c.b16 %v324, %v323
      %v334 = vsel %vm236, %v308, 0
      %336 = vmatpush.bf16.msra.mxu0 0
      %337 = vmatpush.bf16.msra.mxu0 0
      %338 = vmatpush.bf16.msra.mxu0 0
      %339 = vmatpush.bf16.msra.mxu0 0
      %340 = vmatpush.bf16.msra.mxu0 %v328
      %341 = vmatpush.bf16.msra.mxu0 %v327
      %342 = vmatpush.bf16.msra.mxu0 %v326
      %343 = vmatpush.bf16.msra.mxu0 %v325
      %344 = vmatmul.bf16.gmra.mxu0 %v334
      %v345 = vpop.f32.mrf.mxu0
      %v346 = vadd.f32 0.0, %v345
      %v347 = vpop.f32.mrf.mxu0
      %v348 = vadd.f32 0.0, %v347
      %349 = vdwg.mxu0
      %v350 = vadd.f32 %v290, %v346
      %v351 = vadd.f32 %v292, %v348
      %s352 = scalar_lea.vmem %s1, 96
      %v353 = vld [vmem:[%s352] sm:$0xf]
      %v354 = vld [vmem:[%s352 + $0x4] sm:$0xf]
      %v355 = vld [vmem:[%s352 + $0x8] sm:$0xf]
      %v356 = vld [vmem:[%s352 + $0xc] sm:$0xf]
      %v357 = vld [vmem:[%s352 + $0x10] sm:$0xf]
      %v358 = vld [vmem:[%s352 + $0x14] sm:$0xf]
      %v359 = vld [vmem:[%s352 + $0x18] sm:$0xf]
      %v360 = vld [vmem:[%s352 + $0x1c] sm:$0xf]
      %vm361 = vcmask 1045504
      %v362 = vrot.slane %v188, 2
      %v363 = vrot.slane %v198, 2
      %v364 = vsel %vm361, %v362, %v363
      %v373 = vunpack.c.l.b16 %v353
      %v374 = vunpack.c.l.b16 %v354
      %v375 = vunpack.c.l.b16 %v355
      %v376 = vunpack.c.l.b16 %v356
      %v377 = vunpack.c.l.b16 %v357
      %v378 = vunpack.c.l.b16 %v358
      %v379 = vunpack.c.l.b16 %v359
      %v380 = vunpack.c.l.b16 %v360
      %v381 = vpack.c.b16 %v374, %v373
      %v382 = vpack.c.b16 %v376, %v375
      %v383 = vpack.c.b16 %v378, %v377
      %v384 = vpack.c.b16 %v380, %v379
      %v390 = vsel %vm236, %v364, 0
      %392 = vmatpush.bf16.msra.mxu0 0
      %393 = vmatpush.bf16.msra.mxu0 0
      %394 = vmatpush.bf16.msra.mxu0 0
      %395 = vmatpush.bf16.msra.mxu0 0
      %396 = vmatpush.bf16.msra.mxu0 %v384
      %397 = vmatpush.bf16.msra.mxu0 %v383
      %398 = vmatpush.bf16.msra.mxu0 %v382
      %399 = vmatpush.bf16.msra.mxu0 %v381
      %400 = vmatmul.bf16.gmra.mxu0 %v390
      %v401 = vpop.f32.mrf.mxu0
      %v402 = vadd.f32 0.0, %v401
      %v403 = vpop.f32.mrf.mxu0
      %v404 = vadd.f32 0.0, %v403
      %405 = vdwg.mxu0
      %v406 = vadd.f32 %v350, %v402
      %v407 = vadd.f32 %v351, %v404
      %s408 = scalar_lea.vmem %s1, 128
      %v409 = vld [vmem:[%s408] sm:$0xf]
      %v410 = vld [vmem:[%s408 + $0x4] sm:$0xf]
      %v411 = vld [vmem:[%s408 + $0x8] sm:$0xf]
      %v412 = vld [vmem:[%s408 + $0xc] sm:$0xf]
      %v413 = vld [vmem:[%s408 + $0x10] sm:$0xf]
      %v414 = vld [vmem:[%s408 + $0x14] sm:$0xf]
      %v415 = vld [vmem:[%s408 + $0x18] sm:$0xf]
      %v416 = vld [vmem:[%s408 + $0x1c] sm:$0xf]
      %vm417 = vsmask.f32 5376
      %v418 = vrot.slane %v201, 2
      %v419 = vrot.slane %v203, 3
      %v420 = vor.u32 %v418, %v419
      %v421 = vshrl.u32 %v198, 16
      %v423 = vrot.slane %v421, 2
      %v424 = vrot.slane %v208, 3
      %v425 = vor.u32 %v423, %v424
      %v426 = vsel %vm417, %v420, %v425
      %v435 = vunpack.c.l.b16 %v409
      %v436 = vunpack.c.l.b16 %v410
      %v437 = vunpack.c.l.b16 %v411
      %v438 = vunpack.c.l.b16 %v412
      %v439 = vunpack.c.l.b16 %v413
      %v440 = vunpack.c.l.b16 %v414
      %v441 = vunpack.c.l.b16 %v415
      %v442 = vunpack.c.l.b16 %v416
      %v443 = vpack.c.b16 %v436, %v435
      %v444 = vpack.c.b16 %v438, %v437
      %v445 = vpack.c.b16 %v440, %v439
      %v446 = vpack.c.b16 %v442, %v441
      %v452 = vsel %vm236, %v426, 0
      %454 = vmatpush.bf16.msra.mxu0 0
      %455 = vmatpush.bf16.msra.mxu0 0
      %456 = vmatpush.bf16.msra.mxu0 0
      %457 = vmatpush.bf16.msra.mxu0 0
      %458 = vmatpush.bf16.msra.mxu0 %v446
      %459 = vmatpush.bf16.msra.mxu0 %v445
      %460 = vmatpush.bf16.msra.mxu0 %v444
      %461 = vmatpush.bf16.msra.mxu0 %v443
      %462 = vmatmul.bf16.gmra.mxu0 %v452
      %v463 = vpop.f32.mrf.mxu0
      %v464 = vadd.f32 0.0, %v463
      %v465 = vpop.f32.mrf.mxu0
      %v466 = vadd.f32 0.0, %v465
      %467 = vdwg.mxu0
      %v468 = vadd.f32 %v406, %v464
      %v469 = vadd.f32 %v407, %v466
      %s470 = scalar_lea.vmem %s1, 160
      %v471 = vld [vmem:[%s470] sm:$0xf]
      %v472 = vld [vmem:[%s470 + $0x4] sm:$0xf]
      %v473 = vld [vmem:[%s470 + $0x8] sm:$0xf]
      %v474 = vld [vmem:[%s470 + $0xc] sm:$0xf]
      %v475 = vld [vmem:[%s470 + $0x10] sm:$0xf]
      %v476 = vld [vmem:[%s470 + $0x14] sm:$0xf]
      %v477 = vld [vmem:[%s470 + $0x18] sm:$0xf]
      %v478 = vld [vmem:[%s470 + $0x1c] sm:$0xf]
      %vm479 = vcmask 1044480
      %v480 = vrot.slane %v188, 3
      %v481 = vrot.slane %v198, 3
      %v482 = vsel %vm479, %v480, %v481
      %v491 = vunpack.c.l.b16 %v471
      %v492 = vunpack.c.l.b16 %v472
      %v493 = vunpack.c.l.b16 %v473
      %v494 = vunpack.c.l.b16 %v474
      %v495 = vunpack.c.l.b16 %v475
      %v496 = vunpack.c.l.b16 %v476
      %v497 = vunpack.c.l.b16 %v477
      %v498 = vunpack.c.l.b16 %v478
      %v499 = vpack.c.b16 %v492, %v491
      %v500 = vpack.c.b16 %v494, %v493
      %v501 = vpack.c.b16 %v496, %v495
      %v502 = vpack.c.b16 %v498, %v497
      %v508 = vsel %vm236, %v482, 0
      %510 = vmatpush.bf16.msra.mxu0 0
      %511 = vmatpush.bf16.msra.mxu0 0
      %512 = vmatpush.bf16.msra.mxu0 0
      %513 = vmatpush.bf16.msra.mxu0 0
      %514 = vmatpush.bf16.msra.mxu0 %v502
      %515 = vmatpush.bf16.msra.mxu0 %v501
      %516 = vmatpush.bf16.msra.mxu0 %v500
      %517 = vmatpush.bf16.msra.mxu0 %v499
      %518 = vmatmul.bf16.gmra.mxu0 %v508
      %v519 = vpop.f32.mrf.mxu0
      %v520 = vadd.f32 0.0, %v519
      %v521 = vpop.f32.mrf.mxu0
      %v522 = vadd.f32 0.0, %v521
      %523 = vdwg.mxu0
      %v524 = vadd.f32 %v468, %v520
      %v525 = vadd.f32 %v469, %v522
      %s526 = scalar_lea.vmem %s1, 192
      %v527 = vld [vmem:[%s526] sm:$0xf]
      %v528 = vld [vmem:[%s526 + $0x4] sm:$0xf]
      %v529 = vld [vmem:[%s526 + $0x8] sm:$0xf]
      %v530 = vld [vmem:[%s526 + $0xc] sm:$0xf]
      %v531 = vld [vmem:[%s526 + $0x10] sm:$0xf]
      %v532 = vld [vmem:[%s526 + $0x14] sm:$0xf]
      %v533 = vld [vmem:[%s526 + $0x18] sm:$0xf]
      %v534 = vld [vmem:[%s526 + $0x1c] sm:$0xf]
      %v535 = vpack.c.bf16 %v178, %v177
      %v544 = vunpack.c.l.b16 %v527
      %v545 = vunpack.c.l.b16 %v528
      %v546 = vunpack.c.l.b16 %v529
      %v547 = vunpack.c.l.b16 %v530
      %v548 = vunpack.c.l.b16 %v531
      %v549 = vunpack.c.l.b16 %v532
      %v550 = vunpack.c.l.b16 %v533
      %v551 = vunpack.c.l.b16 %v534
      %v552 = vpack.c.b16 %v545, %v544
      %v553 = vpack.c.b16 %v547, %v546
      %v554 = vpack.c.b16 %v549, %v548
      %v555 = vpack.c.b16 %v551, %v550
      %v561 = vsel %vm236, %v535, 0
      %563 = vmatpush.bf16.msra.mxu0 0
      %564 = vmatpush.bf16.msra.mxu0 0
      %565 = vmatpush.bf16.msra.mxu0 0
      %566 = vmatpush.bf16.msra.mxu0 0
      %567 = vmatpush.bf16.msra.mxu0 %v555
      %568 = vmatpush.bf16.msra.mxu0 %v554
      %569 = vmatpush.bf16.msra.mxu0 %v553
      %570 = vmatpush.bf16.msra.mxu0 %v552
      %571 = vmatmul.bf16.gmra.mxu0 %v561
      %v572 = vpop.f32.mrf.mxu0
      %v573 = vadd.f32 0.0, %v572
      %v574 = vpop.f32.mrf.mxu0
      %v575 = vadd.f32 0.0, %v574
      %576 = vdwg.mxu0
      %v577 = vadd.f32 %v524, %v573
      %v578 = vadd.f32 %v525, %v575
      %s579 = scalar_lea.vmem %s1, 224
      %v580 = vld [vmem:[%s579] sm:$0xf]
      %v581 = vld [vmem:[%s579 + $0x4] sm:$0xf]
      %v582 = vld [vmem:[%s579 + $0x8] sm:$0xf]
      %v583 = vld [vmem:[%s579 + $0xc] sm:$0xf]
      %v584 = vld [vmem:[%s579 + $0x10] sm:$0xf]
      %v585 = vld [vmem:[%s579 + $0x14] sm:$0xf]
      %v586 = vld [vmem:[%s579 + $0x18] sm:$0xf]
      %v587 = vld [vmem:[%s579 + $0x1c] sm:$0xf]
      %v588 = vpack.c.bf16 %v179, %v179
      %v589 = vshrl.u32 %v535, 16
      %v591 = vshll.u32 %v535, 16
      %v593 = vrot.slane %v591, 1
      %v594 = vor.u32 %v589, %v593
      %v596 = vshll.u32 %v588, 16
      %v598 = vrot.slane %v596, 1
      %v599 = vsel %vm199, %v594, %v598
      %v608 = vunpack.c.l.b16 %v580
      %v609 = vunpack.c.l.b16 %v581
      %v610 = vunpack.c.l.b16 %v582
      %v611 = vunpack.c.l.b16 %v583
      %v612 = vunpack.c.l.b16 %v584
      %v613 = vunpack.c.l.b16 %v585
      %v614 = vunpack.c.l.b16 %v586
      %v615 = vunpack.c.l.b16 %v587
      %v616 = vpack.c.b16 %v609, %v608
      %v617 = vpack.c.b16 %v611, %v610
      %v618 = vpack.c.b16 %v613, %v612
      %v619 = vpack.c.b16 %v615, %v614
      %v625 = vsel %vm236, %v599, 0
      %627 = vmatpush.bf16.msra.mxu0 0
      %628 = vmatpush.bf16.msra.mxu0 0
      %629 = vmatpush.bf16.msra.mxu0 0
      %630 = vmatpush.bf16.msra.mxu0 0
      %631 = vmatpush.bf16.msra.mxu0 %v619
      %632 = vmatpush.bf16.msra.mxu0 %v618
      %633 = vmatpush.bf16.msra.mxu0 %v617
      %634 = vmatpush.bf16.msra.mxu0 %v616
      %635 = vmatmul.bf16.gmra.mxu0 %v625
      %v636 = vpop.f32.mrf.mxu0
      %v637 = vadd.f32 0.0, %v636
      %v638 = vpop.f32.mrf.mxu0
      %v639 = vadd.f32 0.0, %v638
      %640 = vdwg.mxu0
      %v641 = vadd.f32 %v577, %v637
      %v642 = vadd.f32 %v578, %v639
      %s643 = scalar_lea.vmem %s1, 256
      %v644 = vld [vmem:[%s643] sm:$0xf]
      %v645 = vld [vmem:[%s643 + $0x4] sm:$0xf]
      %v646 = vld [vmem:[%s643 + $0x8] sm:$0xf]
      %v647 = vld [vmem:[%s643 + $0xc] sm:$0xf]
      %v648 = vld [vmem:[%s643 + $0x10] sm:$0xf]
      %v649 = vld [vmem:[%s643 + $0x14] sm:$0xf]
      %v650 = vld [vmem:[%s643 + $0x18] sm:$0xf]
      %v651 = vld [vmem:[%s643 + $0x1c] sm:$0xf]
      %v654 = vrot.slane %v535, 1
      %v655 = vrot.slane %v588, 1
      %v656 = vsel %vm305, %v654, %v655
      %v665 = vunpack.c.l.b16 %v644
      %v666 = vunpack.c.l.b16 %v645
      %v667 = vunpack.c.l.b16 %v646
      %v668 = vunpack.c.l.b16 %v647
      %v669 = vunpack.c.l.b16 %v648
      %v670 = vunpack.c.l.b16 %v649
      %v671 = vunpack.c.l.b16 %v650
      %v672 = vunpack.c.l.b16 %v651
      %v673 = vpack.c.b16 %v666, %v665
      %v674 = vpack.c.b16 %v668, %v667
      %v675 = vpack.c.b16 %v670, %v669
      %v676 = vpack.c.b16 %v672, %v671
      %v682 = vsel %vm236, %v656, 0
      %684 = vmatpush.bf16.msra.mxu0 0
      %685 = vmatpush.bf16.msra.mxu0 0
      %686 = vmatpush.bf16.msra.mxu0 0
      %687 = vmatpush.bf16.msra.mxu0 0
      %688 = vmatpush.bf16.msra.mxu0 %v676
      %689 = vmatpush.bf16.msra.mxu0 %v675
      %690 = vmatpush.bf16.msra.mxu0 %v674
      %691 = vmatpush.bf16.msra.mxu0 %v673
      %692 = vmatmul.bf16.gmra.mxu0 %v682
      %v693 = vpop.f32.mrf.mxu0
      %v694 = vadd.f32 0.0, %v693
      %v695 = vpop.f32.mrf.mxu0
      %v696 = vadd.f32 0.0, %v695
      %697 = vdwg.mxu0
      %v698 = vadd.f32 %v641, %v694
      %v699 = vadd.f32 %v642, %v696
      %v700 = vld [vmem:[%s2] sm:$0x1]
      %v702 = vperm.slane %v700, 0
      %v704 = vadd.f32 %v698, %v702
      %v705 = vadd.f32 %v699, %v702
      %v706 = vmax.f32 %v704, 0.0
      %v707 = vmax.f32 %v705, 0.0
      %v708 = vrot.slane %v706, 1
      %v709 = vrot.slane %v707, 1
      %v710 = vlaneseq
      %v711 = vshrl.u32 %v710, 7
      %vm712 = vcmp.lt.s32.totalorder %v711, 7
      %v713 = vsel %vm712, %v708, %v709
      %v714 = vsel %vm712, %v709, %v708
      %v715 = vmax.f32 %v706, %v713
      %v716 = vmax.f32 %v707, %v714
      %v717 = vrot.slane %v715, 4
      %v718 = vrot.slane %v716, 4
      %vm719 = vcmp.lt.s32.totalorder %v711, 4
      %v720 = vsel %vm719, %v717, %v718
      %v721 = vsel %vm719, %v718, %v717
      %v722 = vmax.f32 %v715, %v720
      %v723 = vmax.f32 %v716, %v721
      %v724 = vpack.c.bf16 %v722, %v722
      %v725 = vpack.c.bf16 %v723, %v723
      %vm726 = vcmask 519168
      %727 = vst.msk [vmem:[%s170] sm:$0xf] %vm726, %v724
      %728 = vst.msk [vmem:[%s170 + $0x4] sm:$0xf] %vm726, %v725
      %p729 = scmp.lt.s32.totalorder %s14, 1
      %s730 = scalar_select %p729, %s14, 1
      %s731 = smul.addr %s730, 2
      %s732 = smul.addr %s731, 4
      %s733 = scalar_lea.vmem %s3, %s732
      // Predicated region
      $region33: #{vggish_linear_forward.14} parent=31 // pred_check
        %p734 = pneg %p100
      $region34: #{vggish_linear_forward.14} parent=31 // pred_check_branch
        %736 = sbr.rel (%p734) target = $region36
      $region35: #{vggish_linear_forward.14} parent=31 // pred_region
        _
      $region36: #{vggish_linear_forward.14} parent=31 // pred_fallthru
        _
    $region32: #{vggish_linear_forward.14} parent=5 // pred_fallthru
      _
    %p737 = scmp.le.s32.totalorder 2, %s9
    // Predicated region
    $region37: #{vggish_linear_forward.14} parent=5 // pred_check
      %p738 = pneg %p737
    $region38: #{vggish_linear_forward.14} parent=5 // pred_check_branch
      %740 = sbr.rel (%p738) target = $region40
    $region39: #{vggish_linear_forward.14} parent=5 // pred_region
      %s741 = ssub.s32 %s9, 2
      // Predicated region
      $region41: #{vggish_linear_forward.14} parent=39 // pred_check
        %p742 = pneg %p106
      $region42: #{vggish_linear_forward.14} parent=39 // pred_check_branch
        %744 = sbr.rel (%p742) target = $region44
      $region43: #{vggish_linear_forward.14} parent=39 // pred_region
        %p745 = scmp.lt.s32.totalorder %s15, 1
        %s746 = scalar_select %p745, %s15, 1
        %s747 = smul.addr %s746, 2
        %s748 = smul.addr %s747, 4
        %s749 = scalar_lea.vmem %s3, %s748
      $region44: #{vggish_linear_forward.14} parent=39 // pred_fallthru
        _
    $region40: #{vggish_linear_forward.14} parent=5 // pred_fallthru
      _
  $region6: #{vggish_linear_forward.14} parent=0 // loop_footer
    %s13 = sadd.s32 1, %s9
  $region7: #{vggish_linear_forward.14} parent=0 // loop_footer_branch
    %8 = sbr.rel target = $region3
  $region8: #{vggish_linear_forward.14} parent=0 // loop_exit
    _

// kernel: vggish_linear_forward.16
$region0: #{vggish_linear_forward.16}
  #allocation0 [shape = 'u32[]', space=smem, size = 0x4, offset = 0x4, fixed_abs, tag = 'smem constant byte address 0x4 - core index']
  #allocation1 [shape = 'u32[72,128]{1,0:T(1,128)}', space=vmem, size = 0x9000, scoped, tag = 'internal scratch']
  #allocation2 [shape = 'f32[2,128]{1,0:T(2,128)}', space=vmem, size = 0x400, scoped, tag = 'scratch operand']
  %s0 = inlined_call_operand.vmem [shape: bf16[2,256], index: 0, kind: input, shape index: {}]
  %s1 = inlined_call_operand.vmem [shape: bf16[256,256], index: 1, kind: input, shape index: {}]
  %s2 = inlined_call_operand.vmem [shape: f32[1,256], index: 2, kind: input, shape index: {}]
  %s3 = inlined_call_operand.vmem [shape: bf16[2,256], index: 3, kind: output, shape index: {}]
  %s4 = sld [smem:[#allocation0]]
  $region94: #{vggish_linear_forward.16} parent=0
    _
  %s6 = ssub.s32 1, %s4
  %s7 = scalar_select 0, %s6, %s4
  $region1: #{vggish_linear_forward.16} parent=0
    #allocation3 [shape = 'u8[65536]{0}', space=vmem, size = 0x10000, scoped, tag = 'input window, operand 1']
    loop: start=0, step=1, limit=6
    $region2: #{vggish_linear_forward.16} parent=1 // loop_pre_header
      _
    $region3: #{vggish_linear_forward.16} parent=1 // loop_header
      %s9 = sphi 0, %s13
      %p10 = scmp.ge.s32.totalorder %s9, 6
      %s16 = sphi 0, %s28
      %s17 = sphi 0, %s24
      %s18 = sphi 0, %s16
      %s19 = sphi 0, %s17
      %s20 = sphi 0, %s18
      %s21 = sphi 0, %s19
      %s31 = sphi 0, %s33
      %s34 = sphi 0, %s31
      %s35 = sphi 0, %s34
      %s51 = sphi 0, %s35
      %s59 = sphi 0, %s61
      %s62 = sphi 0, %s59
      %s63 = sphi 0, %s62
      %s79 = sphi 0, %s63
      %s85 = sphi 0, %s87
      %s88 = sphi 0, %s85
      %s89 = sphi 0, %s88
      %s105 = sphi 0, %s89
      %s111 = sphi 0, %s113
      %s114 = sphi 0, %s111
      %s115 = sphi 0, %s114
      %s131 = sphi 0, %s115
    $region4: #{vggish_linear_forward.16} parent=1 // loop_header_branch
      %12 = sbr.rel (%p10) target = $region8
    $region5: #{vggish_linear_forward.16} parent=1 // loop_body
      %s14 = ssub.s32 %s9, 1
      %s15 = ssub.s32 %s9, 2
      %s22 = sadd.s32 1, %s17
      %p23 = scmp.ge.s32.totalorder %s22, 2
      %s24 = scalar_select %p23, 0, %s22
      %s25 = sadd.s32 1, %s16
      %s26 = scalar_select %p23, %s25, %s16
      %p27 = scmp.ge.s32.totalorder %s26, 2
      %s28 = scalar_select %p27, 0, %s26
      %s29 = ssub.s32 %s17, %s24
      %p30 = scmp.eq.s32.totalorder %s29, 0
      %s32 = sadd.s32 %s31, 1
      %s33 = scalar_select %p30, %s31, %s32
      %p36 = pneg %p30
      %p37 = scmp.eq.s32.totalorder %s9, 3
      %p38 = por %p36, %p37
      %p39 = scmp.ne.s32.totalorder %s31, %s34
      %p40 = scmp.eq.s32.totalorder %s9, 0
      %p41 = por %p39, %p40
      %p42 = scmp.ne.s32.totalorder %s31, %s34
      %p43 = scmp.eq.s32.totalorder %s14, 3
      %p44 = por %p42, %p43
      %p45 = scmp.ne.s32.totalorder %s34, %s35
      %p46 = scmp.eq.s32.totalorder %s14, 0
      %p47 = por %p45, %p46
      %p48 = scmp.ne.s32.totalorder %s34, %s35
      %p49 = scmp.eq.s32.totalorder %s15, 3
      %p50 = por %p48, %p49
      %p52 = scmp.ne.s32.totalorder %s35, %s51
      %p53 = scmp.eq.s32.totalorder %s15, 0
      %p54 = por %p52, %p53
      %s55 = ssub.s32 %s17, %s24
      %s56 = ssub.s32 %s16, %s28
      %s57 = sor.u32 %s55, %s56
      %p58 = scmp.eq.s32.totalorder %s57, 0
      %s60 = sadd.s32 %s59, 1
      %s61 = scalar_select %p58, %s59, %s60
      %p64 = pneg %p58
      %p65 = scmp.eq.s32.totalorder %s9, 3
      %p66 = por %p64, %p65
      %p67 = scmp.ne.s32.totalorder %s59, %s62
      %p68 = scmp.eq.s32.totalorder %s9, 0
      %p69 = por %p67, %p68
      %p70 = scmp.ne.s32.totalorder %s59, %s62
      %p71 = scmp.eq.s32.totalorder %s14, 3
      %p72 = por %p70, %p71
      %p73 = scmp.ne.s32.totalorder %s62, %s63
      %p74 = scmp.eq.s32.totalorder %s14, 0
      %p75 = por %p73, %p74
      %p76 = scmp.ne.s32.totalorder %s62, %s63
      %p77 = scmp.eq.s32.totalorder %s15, 3
      %p78 = por %p76, %p77
      %p80 = scmp.ne.s32.totalorder %s63, %s79
      %p81 = scmp.eq.s32.totalorder %s15, 0
      %p82 = por %p80, %p81
      %s83 = ssub.s32 %s16, %s28
      %p84 = scmp.eq.s32.totalorder %s83, 0
      %s86 = sadd.s32 %s85, 1
      %s87 = scalar_select %p84, %s85, %s86
      %p90 = pneg %p84
      %p91 = scmp.eq.s32.totalorder %s9, 3
      %p92 = por %p90, %p91
      %p93 = scmp.ne.s32.totalorder %s85, %s88
      %p94 = scmp.eq.s32.totalorder %s9, 0
      %p95 = por %p93, %p94
      %p96 = scmp.ne.s32.totalorder %s85, %s88
      %p97 = scmp.eq.s32.totalorder %s14, 3
      %p98 = por %p96, %p97
      %p99 = scmp.ne.s32.totalorder %s88, %s89
      %p100 = scmp.eq.s32.totalorder %s14, 0
      %p101 = por %p99, %p100
      %p102 = scmp.ne.s32.totalorder %s88, %s89
      %p103 = scmp.eq.s32.totalorder %s15, 3
      %p104 = por %p102, %p103
      %p106 = scmp.ne.s32.totalorder %s89, %s105
      %p107 = scmp.eq.s32.totalorder %s15, 0
      %p108 = por %p106, %p107
      %s109 = ssub.s32 %s16, %s28
      %p110 = scmp.eq.s32.totalorder %s109, 0
      %s112 = sadd.s32 %s111, 1
      %s113 = scalar_select %p110, %s111, %s112
      %p116 = pneg %p110
      %p117 = scmp.eq.s32.totalorder %s9, 3
      %p118 = por %p116, %p117
      %p119 = scmp.ne.s32.totalorder %s111, %s114
      %p120 = scmp.eq.s32.totalorder %s9, 0
      %p121 = por %p119, %p120
      %p122 = scmp.ne.s32.totalorder %s111, %s114
      %p123 = scmp.eq.s32.totalorder %s14, 3
      %p124 = por %p122, %p123
      %p125 = scmp.ne.s32.totalorder %s114, %s115
      %p126 = scmp.eq.s32.totalorder %s14, 0
      %p127 = por %p125, %p126
      %p128 = scmp.ne.s32.totalorder %s114, %s115
      %p129 = scmp.eq.s32.totalorder %s15, 3
      %p130 = por %p128, %p129
      %p132 = scmp.ne.s32.totalorder %s115, %s131
      %p133 = scmp.eq.s32.totalorder %s15, 0
      %p134 = por %p132, %p133
      %p135 = scmp.le.s32.totalorder 1, %s9
      %p136 = scmp.lt.s32.totalorder %s9, 5
      %p137 = pnand %p135, %p136
      %p138 = pneg %p137
      // Predicated region
      $region9: #{vggish_linear_forward.16} parent=5 // pred_check
        _
      $region10: #{vggish_linear_forward.16} parent=5 // pred_check_branch
        %140 = sbr.rel (%p137) target = $region12
      $region11: #{vggish_linear_forward.16} parent=5 // pred_region
        %s141 = ssub.s32 %s9, 1
      $region12: #{vggish_linear_forward.16} parent=5 // pred_fallthru
        _
      %p142 = scmp.lt.s32.totalorder %s9, 4
      // Predicated region
      $region13: #{vggish_linear_forward.16} parent=5 // pred_check
        %p143 = pneg %p142
      $region14: #{vggish_linear_forward.16} parent=5 // pred_check_branch
        %145 = sbr.rel (%p143) target = $region16
      $region15: #{vggish_linear_forward.16} parent=5 // pred_region
        // Predicated region
        $region17: #{vggish_linear_forward.16} parent=15 // pred_check
          %p146 = pneg %p41
        $region18: #{vggish_linear_forward.16} parent=15 // pred_check_branch
          %148 = sbr.rel (%p146) target = $region20
        $region19: #{vggish_linear_forward.16} parent=15 // pred_region
          %p149 = scmp.lt.s32.totalorder %s17, 1
          %s150 = scalar_select %p149, %s17, 1
          %s151 = scalar_lea.vmem %s0, %s150
        $region20: #{vggish_linear_forward.16} parent=15 // pred_fallthru
          _
        // Predicated region
        $region21: #{vggish_linear_forward.16} parent=15 // pred_check
          %p152 = pneg %p69
        $region22: #{vggish_linear_forward.16} parent=15 // pred_check_branch
          %154 = sbr.rel (%p152) target = $region24
        $region23: #{vggish_linear_forward.16} parent=15 // pred_region
          %s155 = sand.u32 %s59, 1
          %s156 = sand.u32 %s59, 1
          %s157 = smul.addr %s156, 64
          %s158 = scalar_lea.vmem [#allocation3], %s157
          %s159 = smul.u32 16, %s17
          %s160 = smul.addr %s159, 2
          %s161 = sadd.s32 %s16, %s160
          %s162 = smul.addr %s161, 4
          %s163 = scalar_lea.vmem %s1, %s162
          // Predicated region
          $region25: #{vggish_linear_forward.16} parent=23 // pred_check
            _
          $region26: #{vggish_linear_forward.16} parent=23 // pred_check_branch
            %165 = sbr.rel (0) target = $region28
          $region27: #{vggish_linear_forward.16} parent=23 // pred_region
            // Predicated region
            $region29: #{vggish_linear_forward.16} parent=27 // pred_check
              _
            $region30: #{vggish_linear_forward.16} parent=27 // pred_check_branch
              %167 = sbr.rel target = $region32
            $region31: #{vggish_linear_forward.16} parent=27 // pred_region
              // Predicated region
              $region44: #{vggish_linear_forward.16} parent=31 // pred_check
                _
              $region45: #{vggish_linear_forward.16} parent=31 // pred_check_branch
                %213 = sbr.rel (0) target = $region47
              $region46: #{vggish_linear_forward.16} parent=31 // pred_region
                loop: start=0, step=1, limit=1
                $region48: #{vggish_linear_forward.16} parent=46 // loop_pre_header
                  _
                $region49: #{vggish_linear_forward.16} parent=46 // loop_header
                  %s215 = sphi 0, %s219
                  %p216 = scmp.ge.s32.totalorder %s215, 1
                  %s220 = sphi %s163, %s163
                  %s221 = sphi %s158, %s158
                $region50: #{vggish_linear_forward.16} parent=46 // loop_header_branch
                  %218 = sbr.rel (%p216) target = $region54
                $region51: #{vggish_linear_forward.16} parent=46 // loop_body
                  _
                $region52: #{vggish_linear_forward.16} parent=46 // loop_footer
                  %s219 = sadd.s32 1, %s215
                $region53: #{vggish_linear_forward.16} parent=46 // loop_footer_branch
                  %214 = sbr.rel target = $region49
                $region54: #{vggish_linear_forward.16} parent=46 // loop_exit
                  _
                %s223 = ssub.s32 16, 1
                loop: start=0, step=1, limit=1
                $region55: #{vggish_linear_forward.16} parent=46 // loop_pre_header
                  _
                $region56: #{vggish_linear_forward.16} parent=46 // loop_header
                  %s225 = sphi 0, %s229
                  %p226 = scmp.ge.s32.totalorder %s225, 1
                  %s230 = sphi %s163, %s163
                  %s231 = sphi %s158, %s158
                $region57: #{vggish_linear_forward.16} parent=46 // loop_header_branch
                  %228 = sbr.rel (%p226) target = $region61
                $region58: #{vggish_linear_forward.16} parent=46 // loop_body
                  %v232 = vld [vmem:[%s230] sm:%s223]
                  %233 = vst [vmem:[%s231] sm:%s223] %v232
                  %v234 = vld [vmem:[%s230 + $0x8] sm:%s223]
                  %235 = vst [vmem:[%s231 + $0x4] sm:%s223] %v234
                  %v236 = vld [vmem:[%s230 + $0x10] sm:%s223]
                  %237 = vst [vmem:[%s231 + $0x8] sm:%s223] %v236
                  %v238 = vld [vmem:[%s230 + $0x18] sm:%s223]
                  %239 = vst [vmem:[%s231 + $0xc] sm:%s223] %v238
                  %v240 = vld [vmem:[%s230 + $0x20] sm:%s223]
                  %241 = vst [vmem:[%s231 + $0x10] sm:%s223] %v240
                  %v242 = vld [vmem:[%s230 + $0x28] sm:%s223]
                  %243 = vst [vmem:[%s231 + $0x14] sm:%s223] %v242
                  %v244 = vld [vmem:[%s230 + $0x30] sm:%s223]
                  %245 = vst [vmem:[%s231 + $0x18] sm:%s223] %v244
                  %v246 = vld [vmem:[%s230 + $0x38] sm:%s223]
                  %247 = vst [vmem:[%s231 + $0x1c] sm:%s223] %v246
                  %v248 = vld [vmem:[%s230 + $0x40] sm:%s223]
                  %249 = vst [vmem:[%s231 + $0x20] sm:%s223] %v248
                  %v250 = vld [vmem:[%s230 + $0x48] sm:%s223]
                  %251 = vst [vmem:[%s231 + $0x24] sm:%s223] %v250
                  %v252 = vld [vmem:[%s230 + $0x50] sm:%s223]
                  %253 = vst [vmem:[%s231 + $0x28] sm:%s223] %v252
                  %v254 = vld [vmem:[%s230 + $0x58] sm:%s223]
                  %255 = vst [vmem:[%s231 + $0x2c] sm:%s223] %v254
                  %v256 = vld [vmem:[%s230 + $0x60] sm:%s223]
                  %257 = vst [vmem:[%s231 + $0x30] sm:%s223] %v256
                  %v258 = vld [vmem:[%s230 + $0x68] sm:%s223]
                  %259 = vst [vmem:[%s231 + $0x34] sm:%s223] %v258
                  %v260 = vld [vmem:[%s230 + $0x70] sm:%s223]
                  %261 = vst [vmem:[%s231 + $0x38] sm:%s223] %v260
                  %v262 = vld [vmem:[%s230 + $0x78] sm:%s223]
                  %263 = vst [vmem:[%s231 + $0x3c] sm:%s223] %v262
                $region59: #{vggish_linear_forward.16} parent=46 // loop_footer
                  %s229 = sadd.s32 1, %s225
                $region60: #{vggish_linear_forward.16} parent=46 // loop_footer_branch
                  %224 = sbr.rel target = $region56
                $region61: #{vggish_linear_forward.16} parent=46 // loop_exit
                  _
              $region47: #{vggish_linear_forward.16} parent=31 // pred_fallthru
                _
            $region32: #{vggish_linear_forward.16} parent=27 // pred_fallthru
              _
            // Predicated region
            $region33: #{vggish_linear_forward.16} parent=27 // pred_check
              _
            $region34: #{vggish_linear_forward.16} parent=27 // pred_check_branch
              %169 = sbr.rel (0) target = $region36
            $region35: #{vggish_linear_forward.16} parent=27 // pred_region
              %s171 = ssub.s32 16, 1
              loop: start=0, step=1, limit=1
              $region37: #{vggish_linear_forward.16} parent=35 // loop_pre_header
                _
              $region38: #{vggish_linear_forward.16} parent=35 // loop_header
                %s173 = sphi 0, %s177
                %p174 = scmp.ge.s32.totalorder %s173, 1
                %s178 = sphi %s163, %s163
                %s179 = sphi %s158, %s158
              $region39: #{vggish_linear_forward.16} parent=35 // loop_header_branch
                %176 = sbr.rel (%p174) target = $region43
              $region40: #{vggish_linear_forward.16} parent=35 // loop_body
                %v180 = vld [vmem:[%s178] sm:%s171]
                %181 = vst [vmem:[%s179] sm:%s171] %v180
                %v182 = vld [vmem:[%s178 + $0x8] sm:%s171]
                %183 = vst [vmem:[%s179 + $0x4] sm:%s171] %v182
                %v184 = vld [vmem:[%s178 + $0x10] sm:%s171]
                %185 = vst [vmem:[%s179 + $0x8] sm:%s171] %v184
                %v186 = vld [vmem:[%s178 + $0x18] sm:%s171]
                %187 = vst [vmem:[%s179 + $0xc] sm:%s171] %v186
                %v188 = vld [vmem:[%s178 + $0x20] sm:%s171]
                %189 = vst [vmem:[%s179 + $0x10] sm:%s171] %v188
                %v190 = vld [vmem:[%s178 + $0x28] sm:%s171]
                %191 = vst [vmem:[%s179 + $0x14] sm:%s171] %v190
                %v192 = vld [vmem:[%s178 + $0x30] sm:%s171]
                %193 = vst [vmem:[%s179 + $0x18] sm:%s171] %v192
                %v194 = vld [vmem:[%s178 + $0x38] sm:%s171]
                %195 = vst [vmem:[%s179 + $0x1c] sm:%s171] %v194
                %v196 = vld [vmem:[%s178 + $0x40] sm:%s171]
                %197 = vst [vmem:[%s179 + $0x20] sm:%s171] %v196
                %v198 = vld [vmem:[%s178 + $0x48] sm:%s171]
                %199 = vst [vmem:[%s179 + $0x24] sm:%s171] %v198
                %v200 = vld [vmem:[%s178 + $0x50] sm:%s171]
                %201 = vst [vmem:[%s179 + $0x28] sm:%s171] %v200
                %v202 = vld [vmem:[%s178 + $0x58] sm:%s171]
                %203 = vst [vmem:[%s179 + $0x2c] sm:%s171] %v202
                %v204 = vld [vmem:[%s178 + $0x60] sm:%s171]
                %205 = vst [vmem:[%s179 + $0x30] sm:%s171] %v204
                %v206 = vld [vmem:[%s178 + $0x68] sm:%s171]
                %207 = vst [vmem:[%s179 + $0x34] sm:%s171] %v206
                %v208 = vld [vmem:[%s178 + $0x70] sm:%s171]
                %209 = vst [vmem:[%s179 + $0x38] sm:%s171] %v208
                %v210 = vld [vmem:[%s178 + $0x78] sm:%s171]
                %211 = vst [vmem:[%s179 + $0x3c] sm:%s171] %v210
              $region41: #{vggish_linear_forward.16} parent=35 // loop_footer
                %s177 = sadd.s32 1, %s173
              $region42: #{vggish_linear_forward.16} parent=35 // loop_footer_branch
                %172 = sbr.rel target = $region38
              $region43: #{vggish_linear_forward.16} parent=35 // loop_exit
                _
            $region36: #{vggish_linear_forward.16} parent=27 // pred_fallthru
              _
          $region28: #{vggish_linear_forward.16} parent=23 // pred_fallthru
            _
          %264 = vnop
        $region24: #{vggish_linear_forward.16} parent=15 // pred_fallthru
          _
        // Predicated region
        $region62: #{vggish_linear_forward.16} parent=15 // pred_check
          %p265 = pneg %p95
        $region63: #{vggish_linear_forward.16} parent=15 // pred_check_branch
          %267 = sbr.rel (%p265) target = $region65
        $region64: #{vggish_linear_forward.16} parent=15 // pred_region
          %p268 = scmp.lt.s32.totalorder %s16, 1
          %s269 = scalar_select %p268, %s16, 1
          %s270 = scalar_lea.vmem %s2, %s269
        $region65: #{vggish_linear_forward.16} parent=15 // pred_fallthru
          _
      $region16: #{vggish_linear_forward.16} parent=5 // pred_fallthru
        _
      %p271 = scmp.le.s32.totalorder 1, %s9
      %p272 = scmp.lt.s32.totalorder %s9, 5
      %p273 = pnand %p271, %p272
      %p274 = pneg %p273
      // Predicated region
      $region66: #{vggish_linear_forward.16} parent=5 // pred_check
        _
      $region67: #{vggish_linear_forward.16} parent=5 // pred_check_branch
        %276 = sbr.rel (%p273) target = $region69
      $region68: #{vggish_linear_forward.16} parent=5 // pred_region
        %s277 = ssub.s32 %s9, 1
        %s278 = sand.u32 %s62, 1
        %s279 = sand.u32 %s62, 1
        %s280 = smul.addr %s279, 64
        %s281 = scalar_lea.vmem [#allocation3], %s280
        // Predicated region
        $region70: #{vggish_linear_forward.16} parent=68 // pred_check
          %p282 = pneg %p75
        $region71: #{vggish_linear_forward.16} parent=68 // pred_check_branch
          %284 = sbr.rel (%p282) target = $region73
        $region72: #{vggish_linear_forward.16} parent=68 // pred_region
          _
        $region73: #{vggish_linear_forward.16} parent=68 // pred_fallthru
          _
        %p285 = scmp.lt.s32.totalorder %s19, 1
        %s286 = scalar_select %p285, %s19, 1
        %s287 = scalar_lea.vmem %s0, %s286
        %p288 = pneg %p47
        %p289 = pneg %p44
        %s290 = sand.u32 %s62, 1
        %s291 = sand.u32 %s62, 1
        %s292 = smul.addr %s291, 64
        %s293 = scalar_lea.vmem [#allocation3], %s292
        %p294 = pneg %p75
        %p295 = pneg %p72
        %p296 = scmp.lt.s32.totalorder %s18, 1
        %s297 = scalar_select %p296, %s18, 1
        %s298 = scalar_lea.vmem %s2, %s297
        %p299 = pneg %p101
        %p300 = pneg %p98
        %p301 = pneg %p127
        %p302 = pneg %p124
        %p303 = scmp.lt.s32.totalorder %s18, 1
        %s304 = scalar_select %p303, %s18, 1
        %s305 = scalar_lea.vmem %s3, %s304
        %p306 = scmp.lt.s32.totalorder %s19, 1
        %s307 = scalar_select %p306, %s19, 1
        %s308 = scalar_lea.vmem %s0, %s307
        %s309 = smul.u32 16, %s19
        %p310 = scmp.lt.s32.totalorder %s18, 1
        %s311 = scalar_select %p310, %s18, 1
        %s312 = scalar_lea.vmem %s2, %s311
        %p313 = scmp.lt.s32.totalorder %s18, 1
        %s314 = scalar_select %p313, %s18, 1
        %s315 = scalar_lea.vmem %s3, %s314
        %p316 = scmp.eq.s32.totalorder %s19, 0
        // Predicated region
        $region74: #{vggish_linear_forward.16} parent=68 // pred_check
          %p317 = pneg %p316
        $region75: #{vggish_linear_forward.16} parent=68 // pred_check_branch
          %319 = sbr.rel (%p317) target = $region77
        $region76: #{vggish_linear_forward.16} parent=68 // pred_region
          %320 = vst [vmem:[#allocation2] sm:$0x3] 0.0
        $region77: #{vggish_linear_forward.16} parent=68 // pred_fallthru
          _
        %v321 = vld [vmem:[#allocation2] sm:$0x3]
        %v322 = vld [vmem:[%s308] sm:$0x1]
        %v323 = vld [vmem:[%s281] sm:$0xf]
        %v324 = vld [vmem:[%s281 + $0x4] sm:$0xf]
        %v325 = vld [vmem:[%s281 + $0x8] sm:$0xf]
        %v326 = vld [vmem:[%s281 + $0xc] sm:$0xf]
        %v327 = vld [vmem:[%s281 + $0x10] sm:$0xf]
        %v328 = vld [vmem:[%s281 + $0x14] sm:$0xf]
        %v329 = vld [vmem:[%s281 + $0x18] sm:$0xf]
        %v330 = vld [vmem:[%s281 + $0x1c] sm:$0xf]
        %v331 = vld [vmem:[%s281 + $0x20] sm:$0xf]
        %v332 = vld [vmem:[%s281 + $0x24] sm:$0xf]
        %v333 = vld [vmem:[%s281 + $0x28] sm:$0xf]
        %v334 = vld [vmem:[%s281 + $0x2c] sm:$0xf]
        %v335 = vld [vmem:[%s281 + $0x30] sm:$0xf]
        %v336 = vld [vmem:[%s281 + $0x34] sm:$0xf]
        %v337 = vld [vmem:[%s281 + $0x38] sm:$0xf]
        %v338 = vld [vmem:[%s281 + $0x3c] sm:$0xf]
        %v355 = vunpack.c.l.b16 %v323
        %v356 = vunpack.c.l.b16 %v324
        %v357 = vunpack.c.l.b16 %v325
        %v358 = vunpack.c.l.b16 %v326
        %v359 = vunpack.c.l.b16 %v327
        %v360 = vunpack.c.l.b16 %v328
        %v361 = vunpack.c.l.b16 %v329
        %v362 = vunpack.c.l.b16 %v330
        %v363 = vunpack.c.l.b16 %v331
        %v364 = vunpack.c.l.b16 %v332
        %v365 = vunpack.c.l.b16 %v333
        %v366 = vunpack.c.l.b16 %v334
        %v367 = vunpack.c.l.b16 %v335
        %v368 = vunpack.c.l.b16 %v336
        %v369 = vunpack.c.l.b16 %v337
        %v370 = vunpack.c.l.b16 %v338
        %v371 = vpack.c.b16 %v356, %v355
        %v372 = vpack.c.b16 %v358, %v357
        %v373 = vpack.c.b16 %v360, %v359
        %v374 = vpack.c.b16 %v362, %v361
        %v375 = vpack.c.b16 %v364, %v363
        %v376 = vpack.c.b16 %v366, %v365
        %v377 = vpack.c.b16 %v368, %v367
        %v378 = vpack.c.b16 %v370, %v369
        %387 = vmatpush.bf16.msra.mxu0 %v378
        %388 = vmatpush.bf16.msra.mxu0 %v377
        %389 = vmatpush.bf16.msra.mxu0 %v376
        %390 = vmatpush.bf16.msra.mxu0 %v375
        %391 = vmatpush.bf16.msra.mxu0 %v374
        %392 = vmatpush.bf16.msra.mxu0 %v373
        %393 = vmatpush.bf16.msra.mxu0 %v372
        %394 = vmatpush.bf16.msra.mxu0 %v371
        %395 = vmatmul.bf16.gmra.mxu0 %v322
        %v396 = vpop.f32.mrf.mxu0
        %v397 = vadd.f32 0.0, %v396
        %v398 = vpop.f32.mrf.mxu0
        %399 = vdwg.mxu0
        %v400 = vadd.f32 %v321, %v397
        %401 = vst [vmem:[#allocation2] sm:$0x3] %v400
        %p402 = scmp.eq.s32.totalorder %s19, 1
        // Predicated region
        $region78: #{vggish_linear_forward.16} parent=68 // pred_check
          %p403 = pneg %p402
        $region79: #{vggish_linear_forward.16} parent=68 // pred_check_branch
          %405 = sbr.rel (%p403) target = $region81
        $region80: #{vggish_linear_forward.16} parent=68 // pred_region
          %v406 = vld [vmem:[#allocation2] sm:$0x3]
          %v407 = vld [vmem:[%s312] sm:$0x1]
          %v409 = vperm.slane %v407, 0
          %v411 = vadd.f32 %v406, %v409
          %v412 = vmax.f32 %v411, 0.0
          %v413 = vpack.c.bf16 %v412, %v412
          %414 = vst [vmem:[%s315] sm:$0x1] %v413
        $region81: #{vggish_linear_forward.16} parent=68 // pred_fallthru
          _
        %p415 = scmp.lt.s32.totalorder %s18, 1
        %s416 = scalar_select %p415, %s18, 1
        %s417 = scalar_lea.vmem %s3, %s416
        // Predicated region
        $region82: #{vggish_linear_forward.16} parent=68 // pred_check
          %p418 = pneg %p124
        $region83: #{vggish_linear_forward.16} parent=68 // pred_check_branch
          %420 = sbr.rel (%p418) target = $region85
        $region84: #{vggish_linear_forward.16} parent=68 // pred_region
          _
        $region85: #{vggish_linear_forward.16} parent=68 // pred_fallthru
          _
      $region69: #{vggish_linear_forward.16} parent=5 // pred_fallthru
        _
      %p421 = scmp.le.s32.totalorder 2, %s9
      // Predicated region
      $region86: #{vggish_linear_forward.16} parent=5 // pred_check
        %p422 = pneg %p421
      $region87: #{vggish_linear_forward.16} parent=5 // pred_check_branch
        %424 = sbr.rel (%p422) target = $region89
      $region88: #{vggish_linear_forward.16} parent=5 // pred_region
        %s425 = ssub.s32 %s9, 2
        // Predicated region
        $region90: #{vggish_linear_forward.16} parent=88 // pred_check
          %p426 = pneg %p130
        $region91: #{vggish_linear_forward.16} parent=88 // pred_check_branch
          %428 = sbr.rel (%p426) target = $region93
        $region92: #{vggish_linear_forward.16} parent=88 // pred_region
          %p429 = scmp.lt.s32.totalorder %s20, 1
          %s430 = scalar_select %p429, %s20, 1
          %s431 = scalar_lea.vmem %s3, %s430
        $region93: #{vggish_linear_forward.16} parent=88 // pred_fallthru
          _
      $region89: #{vggish_linear_forward.16} parent=5 // pred_fallthru
        _
    $region6: #{vggish_linear_forward.16} parent=1 // loop_footer
      %s13 = sadd.s32 1, %s9
    $region7: #{vggish_linear_forward.16} parent=1 // loop_footer_branch
      %8 = sbr.rel target = $region3
    $region8: #{vggish_linear_forward.16} parent=1 // loop_exit
      _

// kernel: vggish_linear_forward.17
$region0: #{vggish_linear_forward.17}
  #allocation0 [shape = 'u32[]', space=smem, size = 0x4, offset = 0x4, fixed_abs, tag = 'smem constant byte address 0x4 - core index']
  #allocation1 [shape = 'u32[72,128]{1,0:T(1,128)}', space=vmem, size = 0x9000, scoped, tag = 'internal scratch']
  #allocation2 [shape = 'f32[2,128]{1,0:T(2,128)}', space=vmem, size = 0x400, scoped, tag = 'scratch operand']
  %s0 = inlined_call_operand.vmem [shape: bf16[2,256], index: 0, kind: input, shape index: {}]
  %s1 = inlined_call_operand.vmem [shape: bf16[256,128], index: 1, kind: input, shape index: {}]
  %s2 = inlined_call_operand.vmem [shape: f32[1,128], index: 2, kind: input, shape index: {}]
  %s3 = inlined_call_operand.vmem [shape: bf16[2,128], index: 3, kind: output, shape index: {}]
  %s4 = sld [smem:[#allocation0]]
  $region53: #{vggish_linear_forward.17} parent=0
    _
  %s6 = ssub.s32 1, %s4
  %s7 = scalar_select 0, %s6, %s4
  loop: start=0, step=1, limit=4
  $region2: #{vggish_linear_forward.17} parent=0 // loop_pre_header
    _
  $region3: #{vggish_linear_forward.17} parent=0 // loop_header
    %s9 = sphi 0, %s13
    %p10 = scmp.ge.s32.totalorder %s9, 4
    %s16 = sphi 0, %s28
    %s17 = sphi 0, %s24
    %s18 = sphi 0, %s16
    %s19 = sphi 0, %s17
    %s20 = sphi 0, %s18
    %s21 = sphi 0, %s19
    %s31 = sphi 0, %s33
    %s34 = sphi 0, %s31
    %s35 = sphi 0, %s34
    %s51 = sphi 0, %s35
    %s59 = sphi 0, %s61
    %s62 = sphi 0, %s59
    %s63 = sphi 0, %s62
    %s79 = sphi 0, %s63
    %s85 = sphi 0, %s87
    %s88 = sphi 0, %s85
    %s89 = sphi 0, %s88
    %s105 = sphi 0, %s89
    %s111 = sphi 0, %s113
    %s114 = sphi 0, %s111
    %s115 = sphi 0, %s114
    %s131 = sphi 0, %s115
  $region4: #{vggish_linear_forward.17} parent=0 // loop_header_branch
    %12 = sbr.rel (%p10) target = $region8
  $region5: #{vggish_linear_forward.17} parent=0 // loop_body
    %s14 = ssub.s32 %s9, 1
    %s15 = ssub.s32 %s9, 2
    %s22 = sadd.s32 1, %s17
    %p23 = scmp.ge.s32.totalorder %s22, 2
    %s24 = scalar_select %p23, 0, %s22
    %s25 = sadd.s32 1, %s16
    %s26 = scalar_select %p23, %s25, %s16
    %p27 = scmp.ge.s32.totalorder %s26, 1
    %s28 = scalar_select %p27, 0, %s26
    %s29 = ssub.s32 %s17, %s24
    %p30 = scmp.eq.s32.totalorder %s29, 0
    %s32 = sadd.s32 %s31, 1
    %s33 = scalar_select %p30, %s31, %s32
    %p36 = pneg %p30
    %p37 = scmp.eq.s32.totalorder %s9, 1
    %p38 = por %p36, %p37
    %p39 = scmp.ne.s32.totalorder %s31, %s34
    %p40 = scmp.eq.s32.totalorder %s9, 0
    %p41 = por %p39, %p40
    %p42 = scmp.ne.s32.totalorder %s31, %s34
    %p43 = scmp.eq.s32.totalorder %s14, 1
    %p44 = por %p42, %p43
    %p45 = scmp.ne.s32.totalorder %s34, %s35
    %p46 = scmp.eq.s32.totalorder %s14, 0
    %p47 = por %p45, %p46
    %p48 = scmp.ne.s32.totalorder %s34, %s35
    %p49 = scmp.eq.s32.totalorder %s15, 1
    %p50 = por %p48, %p49
    %p52 = scmp.ne.s32.totalorder %s35, %s51
    %p53 = scmp.eq.s32.totalorder %s15, 0
    %p54 = por %p52, %p53
    %s55 = ssub.s32 %s17, %s24
    %s56 = ssub.s32 %s16, %s28
    %s57 = sor.u32 %s55, %s56
    %p58 = scmp.eq.s32.totalorder %s57, 0
    %s60 = sadd.s32 %s59, 1
    %s61 = scalar_select %p58, %s59, %s60
    %p64 = pneg %p58
    %p65 = scmp.eq.s32.totalorder %s9, 1
    %p66 = por %p64, %p65
    %p67 = scmp.ne.s32.totalorder %s59, %s62
    %p68 = scmp.eq.s32.totalorder %s9, 0
    %p69 = por %p67, %p68
    %p70 = scmp.ne.s32.totalorder %s59, %s62
    %p71 = scmp.eq.s32.totalorder %s14, 1
    %p72 = por %p70, %p71
    %p73 = scmp.ne.s32.totalorder %s62, %s63
    %p74 = scmp.eq.s32.totalorder %s14, 0
    %p75 = por %p73, %p74
    %p76 = scmp.ne.s32.totalorder %s62, %s63
    %p77 = scmp.eq.s32.totalorder %s15, 1
    %p78 = por %p76, %p77
    %p80 = scmp.ne.s32.totalorder %s63, %s79
    %p81 = scmp.eq.s32.totalorder %s15, 0
    %p82 = por %p80, %p81
    %s83 = ssub.s32 %s16, %s28
    %p84 = scmp.eq.s32.totalorder %s83, 0
    %s86 = sadd.s32 %s85, 1
    %s87 = scalar_select %p84, %s85, %s86
    %p90 = pneg %p84
    %p91 = scmp.eq.s32.totalorder %s9, 1
    %p92 = por %p90, %p91
    %p93 = scmp.ne.s32.totalorder %s85, %s88
    %p94 = scmp.eq.s32.totalorder %s9, 0
    %p95 = por %p93, %p94
    %p96 = scmp.ne.s32.totalorder %s85, %s88
    %p97 = scmp.eq.s32.totalorder %s14, 1
    %p98 = por %p96, %p97
    %p99 = scmp.ne.s32.totalorder %s88, %s89
    %p100 = scmp.eq.s32.totalorder %s14, 0
    %p101 = por %p99, %p100
    %p102 = scmp.ne.s32.totalorder %s88, %s89
    %p103 = scmp.eq.s32.totalorder %s15, 1
    %p104 = por %p102, %p103
    %p106 = scmp.ne.s32.totalorder %s89, %s105
    %p107 = scmp.eq.s32.totalorder %s15, 0
    %p108 = por %p106, %p107
    %s109 = ssub.s32 %s16, %s28
    %p110 = scmp.eq.s32.totalorder %s109, 0
    %s112 = sadd.s32 %s111, 1
    %s113 = scalar_select %p110, %s111, %s112
    %p116 = pneg %p110
    %p117 = scmp.eq.s32.totalorder %s9, 1
    %p118 = por %p116, %p117
    %p119 = scmp.ne.s32.totalorder %s111, %s114
    %p120 = scmp.eq.s32.totalorder %s9, 0
    %p121 = por %p119, %p120
    %p122 = scmp.ne.s32.totalorder %s111, %s114
    %p123 = scmp.eq.s32.totalorder %s14, 1
    %p124 = por %p122, %p123
    %p125 = scmp.ne.s32.totalorder %s114, %s115
    %p126 = scmp.eq.s32.totalorder %s14, 0
    %p127 = por %p125, %p126
    %p128 = scmp.ne.s32.totalorder %s114, %s115
    %p129 = scmp.eq.s32.totalorder %s15, 1
    %p130 = por %p128, %p129
    %p132 = scmp.ne.s32.totalorder %s115, %s131
    %p133 = scmp.eq.s32.totalorder %s15, 0
    %p134 = por %p132, %p133
    %p135 = scmp.le.s32.totalorder 1, %s9
    %p136 = scmp.lt.s32.totalorder %s9, 3
    %p137 = pnand %p135, %p136
    %p138 = pneg %p137
    // Predicated region
    $region9: #{vggish_linear_forward.17} parent=5 // pred_check
      _
    $region10: #{vggish_linear_forward.17} parent=5 // pred_check_branch
      %140 = sbr.rel (%p137) target = $region12
    $region11: #{vggish_linear_forward.17} parent=5 // pred_region
      %s141 = ssub.s32 %s9, 1
      // Predicated region
      $region13: #{vggish_linear_forward.17} parent=11 // pred_check
        %p142 = pneg %p101
      $region14: #{vggish_linear_forward.17} parent=11 // pred_check_branch
        %144 = sbr.rel (%p142) target = $region16
      $region15: #{vggish_linear_forward.17} parent=11 // pred_region
        %p145 = scmp.lt.s32.totalorder %s18, 0
        %s146 = scalar_select %p145, %s18, 0
        %s147 = scalar_lea.vmem %s2, %s146
      $region16: #{vggish_linear_forward.17} parent=11 // pred_fallthru
        _
    $region12: #{vggish_linear_forward.17} parent=5 // pred_fallthru
      _
    %p148 = scmp.lt.s32.totalorder %s9, 2
    // Predicated region
    $region17: #{vggish_linear_forward.17} parent=5 // pred_check
      %p149 = pneg %p148
    $region18: #{vggish_linear_forward.17} parent=5 // pred_check_branch
      %151 = sbr.rel (%p149) target = $region20
    $region19: #{vggish_linear_forward.17} parent=5 // pred_region
      // Predicated region
      $region21: #{vggish_linear_forward.17} parent=19 // pred_check
        %p152 = pneg %p41
      $region22: #{vggish_linear_forward.17} parent=19 // pred_check_branch
        %154 = sbr.rel (%p152) target = $region24
      $region23: #{vggish_linear_forward.17} parent=19 // pred_region
        %p155 = scmp.lt.s32.totalorder %s17, 1
        %s156 = scalar_select %p155, %s17, 1
        %s157 = scalar_lea.vmem %s0, %s156
      $region24: #{vggish_linear_forward.17} parent=19 // pred_fallthru
        _
      // Predicated region
      $region25: #{vggish_linear_forward.17} parent=19 // pred_check
        %p158 = pneg %p69
      $region26: #{vggish_linear_forward.17} parent=19 // pred_check_branch
        %160 = sbr.rel (%p158) target = $region28
      $region27: #{vggish_linear_forward.17} parent=19 // pred_region
        %s161 = smul.u32 16, %s17
        %p162 = scmp.lt.s32.totalorder %s161, 31
        %s163 = scalar_select %p162, %s161, 31
        %p164 = scmp.lt.s32.totalorder %s16, 0
        %s165 = scalar_select %p164, %s16, 0
        %s166 = sadd.s32 %s165, %s163
        %s167 = smul.addr %s166, 4
        %s168 = scalar_lea.vmem %s1, %s167
        %s169 = smul.u32 16, %s17
      $region28: #{vggish_linear_forward.17} parent=19 // pred_fallthru
        _
    $region20: #{vggish_linear_forward.17} parent=5 // pred_fallthru
      _
    %p170 = scmp.le.s32.totalorder 1, %s9
    %p171 = scmp.lt.s32.totalorder %s9, 3
    %p172 = pnand %p170, %p171
    %p173 = pneg %p172
    // Predicated region
    $region29: #{vggish_linear_forward.17} parent=5 // pred_check
      _
    $region30: #{vggish_linear_forward.17} parent=5 // pred_check_branch
      %175 = sbr.rel (%p172) target = $region32
    $region31: #{vggish_linear_forward.17} parent=5 // pred_region
      %s176 = ssub.s32 %s9, 1
      %p177 = scmp.lt.s32.totalorder %s19, 1
      %s178 = scalar_select %p177, %s19, 1
      %s179 = scalar_lea.vmem %s0, %s178
      %p180 = pneg %p47
      %p181 = pneg %p44
      %s182 = smul.u32 16, %s19
      %p183 = scmp.lt.s32.totalorder %s182, 31
      %s184 = scalar_select %p183, %s182, 31
      %p185 = scmp.lt.s32.totalorder %s18, 0
      %s186 = scalar_select %p185, %s18, 0
      %s187 = sadd.s32 %s186, %s184
      %s188 = smul.addr %s187, 4
      %s189 = scalar_lea.vmem %s1, %s188
      %p190 = pneg %p75
      %p191 = pneg %p72
      %p192 = scmp.lt.s32.totalorder %s18, 0
      %s193 = scalar_select %p192, %s18, 0
      %s194 = scalar_lea.vmem %s2, %s193
      %p195 = pneg %p101
      %p196 = pneg %p98
      %p197 = pneg %p127
      %p198 = pneg %p124
      %p199 = scmp.lt.s32.totalorder %s18, 0
      %s200 = scalar_select %p199, %s18, 0
      %s201 = scalar_lea.vmem %s3, %s200
      %p202 = scmp.lt.s32.totalorder %s19, 1
      %s203 = scalar_select %p202, %s19, 1
      %s204 = scalar_lea.vmem %s0, %s203
      %s205 = smul.u32 16, %s19
      %p206 = scmp.lt.s32.totalorder %s205, 31
      %s207 = scalar_select %p206, %s205, 31
      %p208 = scmp.lt.s32.totalorder %s18, 0
      %s209 = scalar_select %p208, %s18, 0
      %s210 = sadd.s32 %s209, %s207
      %s211 = smul.addr %s210, 4
      %s212 = scalar_lea.vmem %s1, %s211
      %s213 = smul.u32 16, %s19
      %p214 = scmp.lt.s32.totalorder %s18, 0
      %s215 = scalar_select %p214, %s18, 0
      %s216 = scalar_lea.vmem %s2, %s215
      %p217 = scmp.lt.s32.totalorder %s18, 0
      %s218 = scalar_select %p217, %s18, 0
      %s219 = scalar_lea.vmem %s3, %s218
      %p220 = scmp.eq.s32.totalorder %s19, 0
      // Predicated region
      $region33: #{vggish_linear_forward.17} parent=31 // pred_check
        %p221 = pneg %p220
      $region34: #{vggish_linear_forward.17} parent=31 // pred_check_branch
        %223 = sbr.rel (%p221) target = $region36
      $region35: #{vggish_linear_forward.17} parent=31 // pred_region
        %224 = vst [vmem:[#allocation2] sm:$0x3] 0.0
      $region36: #{vggish_linear_forward.17} parent=31 // pred_fallthru
        _
      %v225 = vld [vmem:[#allocation2] sm:$0x3]
      %v226 = vld [vmem:[%s204] sm:$0x1]
      %v227 = vld [vmem:[%s212] sm:$0xf]
      %v228 = vld [vmem:[%s212 + $0x4] sm:$0xf]
      %v229 = vld [vmem:[%s212 + $0x8] sm:$0xf]
      %v230 = vld [vmem:[%s212 + $0xc] sm:$0xf]
      %v231 = vld [vmem:[%s212 + $0x10] sm:$0xf]
      %v232 = vld [vmem:[%s212 + $0x14] sm:$0xf]
      %v233 = vld [vmem:[%s212 + $0x18] sm:$0xf]
      %v234 = vld [vmem:[%s212 + $0x1c] sm:$0xf]
      %v235 = vld [vmem:[%s212 + $0x20] sm:$0xf]
      %v236 = vld [vmem:[%s212 + $0x24] sm:$0xf]
      %v237 = vld [vmem:[%s212 + $0x28] sm:$0xf]
      %v238 = vld [vmem:[%s212 + $0x2c] sm:$0xf]
      %v239 = vld [vmem:[%s212 + $0x30] sm:$0xf]
      %v240 = vld [vmem:[%s212 + $0x34] sm:$0xf]
      %v241 = vld [vmem:[%s212 + $0x38] sm:$0xf]
      %v242 = vld [vmem:[%s212 + $0x3c] sm:$0xf]
      %v259 = vunpack.c.l.b16 %v227
      %v260 = vunpack.c.l.b16 %v228
      %v261 = vunpack.c.l.b16 %v229
      %v262 = vunpack.c.l.b16 %v230
      %v263 = vunpack.c.l.b16 %v231
      %v264 = vunpack.c.l.b16 %v232
      %v265 = vunpack.c.l.b16 %v233
      %v266 = vunpack.c.l.b16 %v234
      %v267 = vunpack.c.l.b16 %v235
      %v268 = vunpack.c.l.b16 %v236
      %v269 = vunpack.c.l.b16 %v237
      %v270 = vunpack.c.l.b16 %v238
      %v271 = vunpack.c.l.b16 %v239
      %v272 = vunpack.c.l.b16 %v240
      %v273 = vunpack.c.l.b16 %v241
      %v274 = vunpack.c.l.b16 %v242
      %v275 = vpack.c.b16 %v260, %v259
      %v276 = vpack.c.b16 %v262, %v261
      %v277 = vpack.c.b16 %v264, %v263
      %v278 = vpack.c.b16 %v266, %v265
      %v279 = vpack.c.b16 %v268, %v267
      %v280 = vpack.c.b16 %v270, %v269
      %v281 = vpack.c.b16 %v272, %v271
      %v282 = vpack.c.b16 %v274, %v273
      %291 = vmatpush.bf16.msra.mxu0 %v282
      %292 = vmatpush.bf16.msra.mxu0 %v281
      %293 = vmatpush.bf16.msra.mxu0 %v280
      %294 = vmatpush.bf16.msra.mxu0 %v279
      %295 = vmatpush.bf16.msra.mxu0 %v278
      %296 = vmatpush.bf16.msra.mxu0 %v277
      %297 = vmatpush.bf16.msra.mxu0 %v276
      %298 = vmatpush.bf16.msra.mxu0 %v275
      %299 = vmatmul.bf16.gmra.mxu0 %v226
      %v300 = vpop.f32.mrf.mxu0
      %v301 = vadd.f32 0.0, %v300
      %v302 = vpop.f32.mrf.mxu0
      %303 = vdwg.mxu0
      %v304 = vadd.f32 %v225, %v301
      %305 = vst [vmem:[#allocation2] sm:$0x3] %v304
      %p306 = scmp.eq.s32.totalorder %s19, 1
      // Predicated region
      $region37: #{vggish_linear_forward.17} parent=31 // pred_check
        %p307 = pneg %p306
      $region38: #{vggish_linear_forward.17} parent=31 // pred_check_branch
        %309 = sbr.rel (%p307) target = $region40
      $region39: #{vggish_linear_forward.17} parent=31 // pred_region
        %v310 = vld [vmem:[#allocation2] sm:$0x3]
        %v311 = vld [vmem:[%s216] sm:$0x1]
        %v313 = vperm.slane %v311, 0
        %v315 = vadd.f32 %v310, %v313
        %v316 = vmax.f32 %v315, 0.0
        %v317 = vpack.c.bf16 %v316, %v316
        %318 = vst [vmem:[%s219] sm:$0x1] %v317
      $region40: #{vggish_linear_forward.17} parent=31 // pred_fallthru
        _
      %p319 = scmp.lt.s32.totalorder %s18, 0
      %s320 = scalar_select %p319, %s18, 0
      %s321 = scalar_lea.vmem %s3, %s320
      // Predicated region
      $region41: #{vggish_linear_forward.17} parent=31 // pred_check
        %p322 = pneg %p124
      $region42: #{vggish_linear_forward.17} parent=31 // pred_check_branch
        %324 = sbr.rel (%p322) target = $region44
      $region43: #{vggish_linear_forward.17} parent=31 // pred_region
        _
      $region44: #{vggish_linear_forward.17} parent=31 // pred_fallthru
        _
      // Predicated region
      $region45: #{vggish_linear_forward.17} parent=31 // pred_check
        %p325 = pneg %p124
      $region46: #{vggish_linear_forward.17} parent=31 // pred_check_branch
        %327 = sbr.rel (%p325) target = $region48
      $region47: #{vggish_linear_forward.17} parent=31 // pred_region
        %p328 = scmp.lt.s32.totalorder %s18, 0
        %s329 = scalar_select %p328, %s18, 0
        %s330 = scalar_lea.vmem %s3, %s329
      $region48: #{vggish_linear_forward.17} parent=31 // pred_fallthru
        _
    $region32: #{vggish_linear_forward.17} parent=5 // pred_fallthru
      _
    %p331 = scmp.le.s32.totalorder 2, %s9
    // Predicated region
    $region49: #{vggish_linear_forward.17} parent=5 // pred_check
      %p332 = pneg %p331
    $region50: #{vggish_linear_forward.17} parent=5 // pred_check_branch
      %334 = sbr.rel (%p332) target = $region52
    $region51: #{vggish_linear_forward.17} parent=5 // pred_region
      %s335 = ssub.s32 %s9, 2
    $region52: #{vggish_linear_forward.17} parent=5 // pred_fallthru
      _
  $region6: #{vggish_linear_forward.17} parent=0 // loop_footer
    %s13 = sadd.s32 1, %s9
  $region7: #{vggish_linear_forward.17} parent=0 // loop_footer_branch
    %8 = sbr.rel target = $region3
  $region8: #{vggish_linear_forward.17} parent=0 // loop_exit
    _

</llo_original>
